<compile_context>
chip_gen: v7x
topology: tpu7x:2x2x1
jax: 0.10.0
libtpu: 0.0.40
codegen_flags: <defaults>
</compile_context>

<pallas_src>
import functools

import jax
import jax.numpy as jnp
from jax.experimental import pallas as pl
from jax.experimental.pallas import tpu as pltpu  # noqa: F401  (TPU backend)

NEG_SLOPE = 0.01   # nn.LeakyReLU default
BN_EPS = 1e-5      # nn.BatchNorm2d default


# ----------------------------- in-kernel helpers ----------------------------

def _bn_scale_shift(accs, gamma, beta):
    """Single-pass per-row BatchNorm scale/shift over one or more f32 tiles.

    accs: list of [rows, M_i] f32 accumulators sharing the same rows; stats are
    taken over all of them jointly (used by the 4-parity deconv).  gamma/beta:
    [rows, 1] f32.  Returns (scale, shift) with y = acc * scale + shift.
    """
    cnt = float(sum(a.shape[-1] for a in accs))
    s = sum(jnp.sum(a, axis=-1, keepdims=True) for a in accs)
    ss = sum(jnp.sum(a * a, axis=-1, keepdims=True) for a in accs)
    mean = s * (1.0 / cnt)
    var = jnp.maximum(ss * (1.0 / cnt) - mean * mean, 0.0)
    inv = jax.lax.rsqrt(var + BN_EPS)
    scale = gamma * inv
    shift = beta - mean * scale
    return scale, shift


def _leaky(y):
    return jnp.where(y > 0, y, NEG_SLOPE * y)


# ------------------------------ Pallas kernels ------------------------------

def _conv_shared_bn_kernel(w_ref, c_ref, g_ref, bt_ref, o_ref):
    """Layer-0 conv: all heads folded into Cout, shared cols.

    w: [NH*C1, K] bf16 | c: [K, M] bf16 | g/bt: [NH*C1, 1] f32 | o: [NH*C1, M].
    Per-row BN over M = N*Ho*Wo lanes == exact batch statistics per channel.
    """
    acc = jnp.dot(w_ref[...], c_ref[...], preferred_element_type=jnp.float32)
    scale, shift = _bn_scale_shift([acc], g_ref[...], bt_ref[...])
    o_ref[...] = _leaky(acc * scale + shift).astype(o_ref.dtype)


def _conv_heads_bn_kernel(w_ref, c_ref, g_ref, bt_ref, o_ref, *, n_heads):
    """Per-head conv (each head has its own cols), unrolled in one invocation.

    w: [NH, Cout, K] bf16 | c: [NH, K, M] bf16 | g/bt: [NH, Cout, 1] f32.
    """
    for h in range(n_heads):
        acc = jnp.dot(w_ref[h], c_ref[h], preferred_element_type=jnp.float32)
        scale, shift = _bn_scale_shift([acc], g_ref[h], bt_ref[h])
        o_ref[h] = _leaky(acc * scale + shift).astype(o_ref.dtype)


def _deconv_bn_kernel(w_ref, c_ref, g_ref, bt_ref, o_ref):
    """Sub-pixel ConvTranspose2d(k3,s2,p1,op1) + BN + LeakyReLU.

    w: [4, Cout, 4*Cin] bf16 (per output parity) | c: [4*Cin, M] bf16 (2x2
    im2col of the bottom/right padded input) | o: [4, Cout, M].
    BN stats are joint across the 4 parities (== all N*2H*2W outputs).
    """
    accs = [jnp.dot(w_ref[p], c_ref[...], preferred_element_type=jnp.float32)
            for p in range(4)]
    scale, shift = _bn_scale_shift(accs, g_ref[...], bt_ref[...])
    for p in range(4):
        o_ref[p] = _leaky(accs[p] * scale + shift).astype(o_ref.dtype)


def _conv_tanh_kernel(w_ref, c_ref, b_ref, o_ref):
    """Final Conv2d(k3, s1, p1) + bias + Tanh.  w: [Cout, K] | c: [K, M]."""
    acc = jnp.dot(w_ref[...], c_ref[...], preferred_element_type=jnp.float32)
    o_ref[...] = jnp.tanh(acc + b_ref[...])


def _latent_tail_kernel(flat_ref, cf_ref, eps_ref, wmv_ref, bmv_ref,
                        wc_ref, bc_ref, wdz_ref, wdc_ref, bd_ref,
                        mv_ref, probs_ref, dec_ref, *, latent_dim, n_concepts):
    """fc_mu|fc_var + reparameterize + concept Linear/LeakyReLU/softmax +
    decoder_input Linear on [z ; concepts], fused into one kernel."""
    mv = jnp.dot(flat_ref[...], wmv_ref[...],
                 preferred_element_type=jnp.float32) + bmv_ref[...]
    mv_ref[...] = mv
    mu = mv[:, :latent_dim]
    log_var = mv[:, latent_dim:]
    z = eps_ref[...] * jnp.exp(0.5 * log_var) + mu                  # [B, L]
    # decoder_input on the concatenated latent, without materializing a concat:
    # d = z @ Wd[:L] + sum_h probs_h @ Wd[L+h*CD : L+(h+1)*CD] + bd
    d = jnp.dot(z, wdz_ref[...], preferred_element_type=jnp.float32) + bd_ref[...]
    for h in range(n_concepts):
        a = jnp.dot(cf_ref[h], wc_ref[h],
                    preferred_element_type=jnp.float32) + bc_ref[h]
        a = _leaky(a)
        m = jnp.max(a, axis=-1, keepdims=True)
        e = jnp.exp(a - m)
        prob = e * pl.reciprocal(jnp.sum(e, axis=-1, keepdims=True), approx=True)
        probs_ref[h] = prob
        d = d + jnp.dot(prob, wdc_ref[h], preferred_element_type=jnp.float32)
    dec_ref[...] = d


# --------------------------- XLA-side thin wrappers --------------------------

def _im2col(x, k, stride):
    """x: [..., C, N, Hp, Wp] (already padded) -> cols [..., C*k*k, N*Ho*Wo].

    K ordering is (c, ki, kj), matching w.reshape(Cout, Cin*k*k); no transposes
    are needed (taps are stacked right after the channel axis)."""
    *lead, C, N, Hp, Wp = x.shape
    Ho = (Hp - k) // stride + 1
    Wo = (Wp - k) // stride + 1
    taps = []
    for di in range(k):
        for dj in range(k):
            taps.append(x[..., di:di + stride * (Ho - 1) + 1:stride,
                              dj:dj + stride * (Wo - 1) + 1:stride])
    t = jnp.stack(taps, axis=x.ndim - 3)       # [..., C, k*k, N, Ho, Wo]
    return t.reshape(*lead, C * k * k, N * Ho * Wo), (Ho, Wo)


def conv_layer0_all_heads(x_cm, blocks):
    """First conv layer of the encoder + the 4 concept chains (5 heads) sharing
    one im2col(x); heads folded into the sublane axis -> lane-dense output."""
    Cin, N, H, W = x_cm.shape
    NH = len(blocks)
    C1 = blocks[0]["w"].shape[0]
    xp = jnp.pad(x_cm, ((0, 0), (0, 0), (1, 1), (1, 1)))
    cols, (Ho, Wo) = _im2col(xp, 3, 2)                           # [9*Cin, M] bf16
    w = jnp.stack([b["w"] for b in blocks]).reshape(NH * C1, 9 * Cin)
    g = jnp.stack([b["gamma"] for b in blocks]).reshape(NH * C1, 1)
    bt = jnp.stack([b["beta"] for b in blocks]).reshape(NH * C1, 1)
    out = pl.pallas_call(
        _conv_shared_bn_kernel,
        out_shape=jax.ShapeDtypeStruct((NH * C1, N * Ho * Wo), jnp.bfloat16),
    )(w.astype(jnp.bfloat16), cols, g, bt)
    return out.reshape(NH, C1, N, Ho, Wo)


def conv_heads_bn_leaky(h, w_stack, g_stack, bt_stack):
    """One conv layer for all heads (each head has its own activation)."""
    NH, Cin, N, H, W = h.shape
    Cout = w_stack.shape[1]
    hp = jnp.pad(h, ((0, 0), (0, 0), (0, 0), (1, 1), (1, 1)))
    cols, (Ho, Wo) = _im2col(hp, 3, 2)                           # [NH, 9*Cin, M]
    w = w_stack.reshape(NH, Cout, 9 * Cin).astype(jnp.bfloat16)
    out = pl.pallas_call(
        functools.partial(_conv_heads_bn_kernel, n_heads=NH),
        out_shape=jax.ShapeDtypeStruct((NH, Cout, N * Ho * Wo), jnp.bfloat16),
    )(w, cols, g_stack.reshape(NH, Cout, 1), bt_stack.reshape(NH, Cout, 1))
    return out.reshape(NH, Cout, N, Ho, Wo)


def _subpixel_weights(w):
    """ConvTranspose2d weight [Cin, Cout, 3, 3] -> per-parity sub-kernels
    [4, Cout, 4*Cin] matching a 2x2 stride-1 im2col of the (0,1)-padded input.

    out[2m+pr, 2n+pc] = sum_{dr,dc in {0,1}} W_par[(pr,pc)][:, (ci,dr,dc)] *
                        x[ci, m+dr, n+dc]   (zero sub-taps where no kernel tap
    maps to that (parity, shift) combination)."""
    Cin, Cout = w.shape[0], w.shape[1]
    wt = jnp.transpose(w, (1, 0, 2, 3))                          # [Cout, Cin, 3, 3]
    zero = jnp.zeros((Cout, Cin), w.dtype)
    kmap = {(0, 0): 1, (1, 0): 2, (1, 1): 0}                     # (parity, shift) -> k
    parities = []
    for pr in range(2):
        for pc in range(2):
            taps = []
            for dr in range(2):
                for dc in range(2):
                    ky = kmap.get((pr, dr))
                    kx = kmap.get((pc, dc))
                    taps.append(zero if ky is None or kx is None
                                else wt[:, :, ky, kx])
            parities.append(jnp.stack(taps, axis=-1).reshape(Cout, Cin * 4))
    return jnp.stack(parities, axis=0)                           # [4, Cout, 4*Cin]


def deconv_bn_leaky(x, p):
    """ConvTranspose2d(k3,s2,p1,op1) + BN + LeakyReLU via sub-pixel decomposition.
    x: [Cin, N, H, W] bf16 (channel-major) -> [Cout, N, 2H, 2W] bf16."""
    Cin, N, H, W = x.shape
    Cout = p["w"].shape[1]
    xp = jnp.pad(x, ((0, 0), (0, 0), (0, 1), (0, 1)))            # pad bottom/right
    cols, _ = _im2col(xp, 2, 1)                                  # [4*Cin, N*H*W]
    w_par = _subpixel_weights(p["w"]).astype(jnp.bfloat16)
    out = pl.pallas_call(
        _deconv_bn_kernel,
        out_shape=jax.ShapeDtypeStruct((4, Cout, N * H * W), jnp.bfloat16),
    )(w_par, cols, p["gamma"].reshape(Cout, 1), p["beta"].reshape(Cout, 1))
    out = out.reshape(2, 2, Cout, N, H, W)
    out = jnp.transpose(out, (2, 3, 4, 0, 5, 1)).reshape(Cout, N, 2 * H, 2 * W)
    return out


def final_conv_tanh(x, p):
    """Conv2d(k3, s1, p1) + Tanh.  x: [Cin, N, H, W] -> [Cout, N, H, W] f32."""
    Cin, N, H, W = x.shape
    Cout = p["w"].shape[0]
    xp = jnp.pad(x, ((0, 0), (0, 0), (1, 1), (1, 1)))
    cols, _ = _im2col(xp, 3, 1)                                  # [9*Cin, N*H*W]
    out = pl.pallas_call(
        _conv_tanh_kernel,
        out_shape=jax.ShapeDtypeStruct((Cout, N * H * W), jnp.float32),
    )(p["w"].reshape(Cout, 9 * Cin).astype(jnp.bfloat16), cols,
      p["b"].reshape(Cout, 1))
    return out.reshape(Cout, N, H, W)


def latent_tail(params, flat, cfeat, eps, latent_dim):
    """Fused fc_mu|fc_var + reparameterize + concept heads + decoder_input."""
    B, F = flat.shape
    NC = cfeat.shape[0]
    CD = params["concept_linears"][0]["w"].shape[1]
    wmv = jnp.concatenate([params["fc_mu"]["w"], params["fc_var"]["w"]], axis=1)
    bmv = jnp.concatenate([params["fc_mu"]["b"], params["fc_var"]["b"]])[None]
    wc = jnp.stack([q["w"] for q in params["concept_linears"]])   # [NC, F, CD]
    bc = jnp.stack([q["b"] for q in params["concept_linears"]])[:, None, :]
    wd = params["decoder_input"]["w"]                             # [L+NC*CD, F]
    wdz = wd[:latent_dim]                                         # [L, F]
    wdc = wd[latent_dim:].reshape(NC, CD, F)                      # [NC, CD, F]
    bd = params["decoder_input"]["b"].reshape(1, F)
    kernel = functools.partial(_latent_tail_kernel,
                               latent_dim=latent_dim, n_concepts=NC)
    return pl.pallas_call(
        kernel,
        out_shape=(jax.ShapeDtypeStruct((B, 2 * latent_dim), jnp.float32),
                   jax.ShapeDtypeStruct((NC, B, CD), jnp.float32),
                   jax.ShapeDtypeStruct((B, F), jnp.float32)),
    )(flat.astype(jnp.float32), cfeat.astype(jnp.float32), eps,
      wmv, bmv, wc, bc, wdz, wdc, bd)


# ----------------------------- parameter creation ---------------------------

def _init_conv_block(key, cin, cout):
    k1, k2 = jax.random.split(key)
    return {"w": jax.random.normal(k1, (cout, cin, 3, 3), jnp.float32) * 0.1,
            # conv bias kept for parity with nn.Conv2d but never fed to the
            # BN-path kernels: BatchNorm's mean subtraction cancels it exactly.
            "b": jax.random.normal(k2, (cout,), jnp.float32) * 0.01,
            "gamma": jnp.ones((cout,), jnp.float32),
            "beta": jnp.zeros((cout,), jnp.float32)}


def _init_deconv_block(key, cin, cout):
    k1, k2 = jax.random.split(key)
    return {"w": jax.random.normal(k1, (cin, cout, 3, 3), jnp.float32) * 0.1,
            "b": jax.random.normal(k2, (cout,), jnp.float32) * 0.01,
            "gamma": jnp.ones((cout,), jnp.float32),
            "beta": jnp.zeros((cout,), jnp.float32)}


def _init_linear(key, din, dout):
    k1, k2 = jax.random.split(key)
    return {"w": jax.random.normal(k1, (din, dout), jnp.float32) / jnp.sqrt(din),
            "b": jax.random.normal(k2, (dout,), jnp.float32) * 0.01}


def init_params(key, in_channels, input_size, latent_dim, concept_dims,
                hidden_dims):
    keys = iter(jax.random.split(key, 128))
    fms = input_size
    enc, cin = [], in_channels
    for h in hidden_dims:
        enc.append(_init_conv_block(next(keys), cin, h))
        cin = h
        fms = (fms + 2 - 3) // 2 + 1
    flat_dim = hidden_dims[-1] * fms * fms
    params = {"encoder": enc,
              "fc_mu": _init_linear(next(keys), flat_dim, latent_dim),
              "fc_var": _init_linear(next(keys), flat_dim, latent_dim),
              "concept_classifiers": [], "concept_linears": []}
    # NOTE: the PyTorch __init__ shadows `i` in the classifier loop, so every
    # concept linear effectively gets the same output dim; equal concept_dims
    # make the two readings identical and let the 4 heads batch into one pass.
    for cdim in concept_dims:
        cls = [_init_conv_block(next(keys), in_channels, hidden_dims[0])]
        for i in range(len(hidden_dims) - 1):
            cls.append(_init_conv_block(next(keys), hidden_dims[i],
                                        hidden_dims[i + 1]))
        params["concept_classifiers"].append(cls)
        params["concept_linears"].append(_init_linear(next(keys), flat_dim, cdim))
    dec_latent = sum(concept_dims) + latent_dim
    params["decoder_input"] = _init_linear(next(keys), dec_latent, flat_dim)
    rev = hidden_dims[::-1]
    params["decoder"] = [_init_deconv_block(next(keys), rev[i], rev[i + 1])
                         for i in range(len(rev) - 1)]
    params["final_deconv"] = _init_deconv_block(next(keys), rev[-1], rev[-1])
    k1, k2 = jax.random.split(next(keys))
    params["final_conv"] = {
        "w": jax.random.normal(k1, (in_channels, rev[-1], 3, 3), jnp.float32) * 0.1,
        "b": jax.random.normal(k2, (in_channels,), jnp.float32) * 0.01}
    return params, fms


# ---------------------------------- forward ---------------------------------

@functools.partial(jax.jit, static_argnames=("latent_dim",))
def forward(params, x_nchw, eps_key, *, latent_dim):
    B = x_nchw.shape[0]

    # channel-major bf16 input shared by the encoder and the 4 concept chains
    x_cm = jnp.transpose(x_nchw, (1, 0, 2, 3)).astype(jnp.bfloat16)

    # ---- encode: encoder + 4 concept chains fused as 5 heads, 1 launch/layer
    n_layers = len(params["encoder"])
    heads = lambda l: ([params["encoder"][l]] +
                       [c[l] for c in params["concept_classifiers"]])
    h = conv_layer0_all_heads(x_cm, heads(0))
    for l in range(1, n_layers):
        blks = heads(l)
        h = conv_heads_bn_leaky(h,
                                jnp.stack([b["w"] for b in blks]),
                                jnp.stack([b["gamma"] for b in blks]),
                                jnp.stack([b["beta"] for b in blks]))
    NH, Chl, _, f, _ = h.shape
    # flatten in torch (N, C*H*W) order; this is the only transpose per branch
    feat = jnp.transpose(h, (0, 2, 1, 3, 4)).reshape(NH, B, Chl * f * f)

    # ---- fused linear tail (mu/var + reparameterize + concepts + dec_input)
    eps = jax.random.normal(eps_key, (B, latent_dim), jnp.float32)
    mv, probs, dec_in = latent_tail(params, feat[0], feat[1:], eps, latent_dim)
    mu, log_var = mv[:, :latent_dim], mv[:, latent_dim:]
    concept_classes = [probs[i] for i in range(probs.shape[0])]

    # ---- decode (channel-major bf16 throughout)
    d = jnp.transpose(dec_in.reshape(B, Chl, f, f),
                      (1, 0, 2, 3)).astype(jnp.bfloat16)         # .view then C-major
    for blk in params["decoder"]:
        d = deconv_bn_leaky(d, blk)
    d = deconv_bn_leaky(d, params["final_deconv"])
    recons = jnp.transpose(final_conv_tanh(d, params["final_conv"]),
                           (1, 0, 2, 3))                         # [B, C, H, W]
    return recons, x_nchw, mu, log_var, concept_classes


# ----------------------------------- main ------------------------------------

if __name__ == "__main__":
    in_channels, input_size = 4, 16
    latent_dim = 8
    concept_dims = [5, 5, 5, 5]
    hidden_dims = [8, 16, 32]        # feature map: 16 -> 8 -> 4 -> 2
    assert len(set(concept_dims)) == 1   # see shadowed-`i` note in init_params

    key = jax.random.PRNGKey(0)
    kp, kx, ke = jax.random.split(key, 3)
    params, _fms = init_params(kp, in_channels, input_size, latent_dim,
                               concept_dims, hidden_dims)
    x = jax.random.normal(kx, (2, in_channels, input_size, input_size),
                          jnp.float32)

    recons, inp, mu, log_var, concept_classes = forward(
        params, x, ke, latent_dim=latent_dim)
    jax.block_until_ready((recons, mu, log_var, concept_classes))

    assert recons.shape == x.shape
    assert mu.shape == (2, latent_dim) and log_var.shape == (2, latent_dim)
    assert all(c.shape == (2, d) for c, d in zip(concept_classes, concept_dims))
    print("KERNEL_OK")
</pallas_src>

<mosaic_0001>
module attributes {stable_mosaic.version = 11 : i64} {
  func.func @_conv_shared_bn_kernel(%arg0: memref<40x36xbf16, #tpu.memory_space<vmem>>, %arg1: memref<36x128xbf16, #tpu.memory_space<vmem>>, %arg2: memref<40x1xf32, #tpu.memory_space<vmem>>, %arg3: memref<40x1xf32, #tpu.memory_space<vmem>>, %arg4: memref<40x128xbf16, #tpu.memory_space<vmem>>) attributes {dimension_semantics = [], scalar_prefetch = 0 : i64, scratch_operands = 0 : i64, tpu.core_type = #tpu.core_type<tc>} {
    %c0 = arith.constant 0 : index
    %c0_0 = arith.constant 0 : index
    %0 = vector.load %arg0[%c0, %c0_0] : memref<40x36xbf16, #tpu.memory_space<vmem>>, vector<40x36xbf16>
    %c0_1 = arith.constant 0 : index
    %c0_2 = arith.constant 0 : index
    %1 = vector.load %arg1[%c0_1, %c0_2] : memref<36x128xbf16, #tpu.memory_space<vmem>>, vector<36x128xbf16>
    %cst = arith.constant dense<0.000000e+00> : vector<40x128xf32>
    %2 = tpu.matmul %0, %1, %cst {dimension_numbers = #tpu.dot_dimension_numbers<[1], [0], [0], [1], [0, 0, 1, 1], [], []>} : vector<40x36xbf16>, vector<36x128xbf16>, vector<40x128xf32> -> vector<40x128xf32>
    %c0_3 = arith.constant 0 : index
    %c0_4 = arith.constant 0 : index
    %3 = vector.load %arg2[%c0_3, %c0_4] : memref<40x1xf32, #tpu.memory_space<vmem>>, vector<40x1xf32>
    %c0_5 = arith.constant 0 : index
    %c0_6 = arith.constant 0 : index
    %4 = vector.load %arg3[%c0_5, %c0_6] : memref<40x1xf32, #tpu.memory_space<vmem>>, vector<40x1xf32>
    %cst_7 = arith.constant dense<0.000000e+00> : vector<40xf32>
    %5 = vector.multi_reduction <add>, %2, %cst_7 [1] : vector<40x128xf32> to vector<40xf32>
    %6 = vector.shape_cast %5 : vector<40xf32> to vector<40x1xf32>
    %cst_8 = arith.constant 0.000000e+00 : f32
    %7 = vector.broadcast %cst_8 : f32 to vector<40x1xf32>
    %8 = arith.addf %7, %6 : vector<40x1xf32>
    %9 = arith.mulf %2, %2 : vector<40x128xf32>
    %cst_9 = arith.constant dense<0.000000e+00> : vector<40xf32>
    %10 = vector.multi_reduction <add>, %9, %cst_9 [1] : vector<40x128xf32> to vector<40xf32>
    %11 = vector.shape_cast %10 : vector<40xf32> to vector<40x1xf32>
    %cst_10 = arith.constant 0.000000e+00 : f32
    %12 = vector.broadcast %cst_10 : f32 to vector<40x1xf32>
    %13 = arith.addf %12, %11 : vector<40x1xf32>
    %cst_11 = arith.constant 7.812500e-03 : f32
    %14 = vector.broadcast %cst_11 : f32 to vector<40x1xf32>
    %15 = arith.mulf %8, %14 : vector<40x1xf32>
    %cst_12 = arith.constant 7.812500e-03 : f32
    %16 = vector.broadcast %cst_12 : f32 to vector<40x1xf32>
    %17 = arith.mulf %13, %16 : vector<40x1xf32>
    %18 = arith.mulf %15, %15 : vector<40x1xf32>
    %19 = arith.subf %17, %18 : vector<40x1xf32>
    %cst_13 = arith.constant 0.000000e+00 : f32
    %20 = vector.broadcast %cst_13 : f32 to vector<40x1xf32>
    %21 = arith.maximumf %19, %20 : vector<40x1xf32>
    %cst_14 = arith.constant 9.99999974E-6 : f32
    %22 = vector.broadcast %cst_14 : f32 to vector<40x1xf32>
    %23 = arith.addf %21, %22 : vector<40x1xf32>
    %24 = math.rsqrt %23 : vector<40x1xf32>
    %25 = arith.mulf %3, %24 : vector<40x1xf32>
    %26 = arith.mulf %15, %25 : vector<40x1xf32>
    %27 = arith.subf %4, %26 : vector<40x1xf32>
    %28 = vector.broadcast %25 : vector<40x1xf32> to vector<40x128xf32>
    %29 = arith.mulf %2, %28 : vector<40x128xf32>
    %30 = vector.broadcast %27 : vector<40x1xf32> to vector<40x128xf32>
    %31 = arith.addf %29, %30 : vector<40x128xf32>
    %cst_15 = arith.constant 0.000000e+00 : f32
    %32 = vector.broadcast %cst_15 : f32 to vector<40x128xf32>
    %33 = arith.cmpf ogt, %31, %32 : vector<40x128xf32>
    %cst_16 = arith.constant 0.00999999977 : f32
    %34 = vector.broadcast %cst_16 : f32 to vector<40x128xf32>
    %35 = arith.mulf %34, %31 : vector<40x128xf32>
    %36 = arith.select %33, %31, %35 : vector<40x128xi1>, vector<40x128xf32>
    %37 = arith.truncf %36 : vector<40x128xf32> to vector<40x128xbf16>
    %c0_17 = arith.constant 0 : index
    %c0_18 = arith.constant 0 : index
    %38 = vector.load %arg4[%c0_17, %c0_18] : memref<40x128xbf16, #tpu.memory_space<vmem>>, vector<40x128xbf16>
    tpu.vector_store %arg4[%c0_17, %c0_18], %37 {strides = array<i32>} : memref<40x128xbf16, #tpu.memory_space<vmem>>, vector<40x128xbf16>,
    return
  }
}

module attributes {stable_mosaic.version = 11 : i64} {
  func.func @_conv_heads_bn_kernel(%arg0: memref<5x16x72xbf16, #tpu.memory_space<vmem>>, %arg1: memref<5x72x32xbf16, #tpu.memory_space<vmem>>, %arg2: memref<5x16x1xf32, #tpu.memory_space<vmem>>, %arg3: memref<5x16x1xf32, #tpu.memory_space<vmem>>, %arg4: memref<5x16x32xbf16, #tpu.memory_space<vmem>>) attributes {dimension_semantics = [], scalar_prefetch = 0 : i64, scratch_operands = 0 : i64, tpu.core_type = #tpu.core_type<tc>} {
    %c0 = arith.constant 0 : index
    %c0_0 = arith.constant 0 : index
    %c0_1 = arith.constant 0 : index
    %0 = vector.load %arg0[%c0, %c0_0, %c0_1] : memref<5x16x72xbf16, #tpu.memory_space<vmem>>, vector<1x16x72xbf16>
    %1 = vector.shape_cast %0 : vector<1x16x72xbf16> to vector<16x72xbf16>
    %c0_2 = arith.constant 0 : index
    %c0_3 = arith.constant 0 : index
    %c0_4 = arith.constant 0 : index
    %2 = vector.load %arg1[%c0_2, %c0_3, %c0_4] : memref<5x72x32xbf16, #tpu.memory_space<vmem>>, vector<1x72x32xbf16>
    %3 = vector.shape_cast %2 : vector<1x72x32xbf16> to vector<72x32xbf16>
    %cst = arith.constant dense<0.000000e+00> : vector<16x32xf32>
    %4 = tpu.matmul %1, %3, %cst {dimension_numbers = #tpu.dot_dimension_numbers<[1], [0], [0], [1], [0, 0, 1, 1], [], []>} : vector<16x72xbf16>, vector<72x32xbf16>, vector<16x32xf32> -> vector<16x32xf32>
    %c0_5 = arith.constant 0 : index
    %c0_6 = arith.constant 0 : index
    %c0_7 = arith.constant 0 : index
    %5 = vector.load %arg2[%c0_5, %c0_6, %c0_7] : memref<5x16x1xf32, #tpu.memory_space<vmem>>, vector<1x16x1xf32>
    %6 = vector.shape_cast %5 : vector<1x16x1xf32> to vector<16x1xf32>
    %c0_8 = arith.constant 0 : index
    %c0_9 = arith.constant 0 : index
    %c0_10 = arith.constant 0 : index
    %7 = vector.load %arg3[%c0_8, %c0_9, %c0_10] : memref<5x16x1xf32, #tpu.memory_space<vmem>>, vector<1x16x1xf32>
    %8 = vector.shape_cast %7 : vector<1x16x1xf32> to vector<16x1xf32>
    %cst_11 = arith.constant dense<0.000000e+00> : vector<16xf32>
    %9 = vector.multi_reduction <add>, %4, %cst_11 [1] : vector<16x32xf32> to vector<16xf32>
    %10 = vector.shape_cast %9 : vector<16xf32> to vector<16x1xf32>
    %cst_12 = arith.constant 0.000000e+00 : f32
    %11 = vector.broadcast %cst_12 : f32 to vector<16x1xf32>
    %12 = arith.addf %11, %10 : vector<16x1xf32>
    %13 = arith.mulf %4, %4 : vector<16x32xf32>
    %cst_13 = arith.constant dense<0.000000e+00> : vector<16xf32>
    %14 = vector.multi_reduction <add>, %13, %cst_13 [1] : vector<16x32xf32> to vector<16xf32>
    %15 = vector.shape_cast %14 : vector<16xf32> to vector<16x1xf32>
    %cst_14 = arith.constant 0.000000e+00 : f32
    %16 = vector.broadcast %cst_14 : f32 to vector<16x1xf32>
    %17 = arith.addf %16, %15 : vector<16x1xf32>
    %cst_15 = arith.constant 3.125000e-02 : f32
    %18 = vector.broadcast %cst_15 : f32 to vector<16x1xf32>
    %19 = arith.mulf %12, %18 : vector<16x1xf32>
    %cst_16 = arith.constant 3.125000e-02 : f32
    %20 = vector.broadcast %cst_16 : f32 to vector<16x1xf32>
    %21 = arith.mulf %17, %20 : vector<16x1xf32>
    %22 = arith.mulf %19, %19 : vector<16x1xf32>
    %23 = arith.subf %21, %22 : vector<16x1xf32>
    %cst_17 = arith.constant 0.000000e+00 : f32
    %24 = vector.broadcast %cst_17 : f32 to vector<16x1xf32>
    %25 = arith.maximumf %23, %24 : vector<16x1xf32>
    %cst_18 = arith.constant 9.99999974E-6 : f32
    %26 = vector.broadcast %cst_18 : f32 to vector<16x1xf32>
    %27 = arith.addf %25, %26 : vector<16x1xf32>
    %28 = math.rsqrt %27 : vector<16x1xf32>
    %29 = arith.mulf %6, %28 : vector<16x1xf32>
    %30 = arith.mulf %19, %29 : vector<16x1xf32>
    %31 = arith.subf %8, %30 : vector<16x1xf32>
    %32 = vector.broadcast %29 : vector<16x1xf32> to vector<16x32xf32>
    %33 = arith.mulf %4, %32 : vector<16x32xf32>
    %34 = vector.broadcast %31 : vector<16x1xf32> to vector<16x32xf32>
    %35 = arith.addf %33, %34 : vector<16x32xf32>
    %cst_19 = arith.constant 0.000000e+00 : f32
    %36 = vector.broadcast %cst_19 : f32 to vector<16x32xf32>
    %37 = arith.cmpf ogt, %35, %36 : vector<16x32xf32>
    %cst_20 = arith.constant 0.00999999977 : f32
    %38 = vector.broadcast %cst_20 : f32 to vector<16x32xf32>
    %39 = arith.mulf %38, %35 : vector<16x32xf32>
    %40 = arith.select %37, %35, %39 : vector<16x32xi1>, vector<16x32xf32>
    %41 = arith.truncf %40 : vector<16x32xf32> to vector<16x32xbf16>
    %c0_21 = arith.constant 0 : index
    %c0_22 = arith.constant 0 : index
    %c0_23 = arith.constant 0 : index
    %42 = vector.load %arg4[%c0_21, %c0_22, %c0_23] : memref<5x16x32xbf16, #tpu.memory_space<vmem>>, vector<1x16x32xbf16>
    %43 = vector.shape_cast %42 : vector<1x16x32xbf16> to vector<16x32xbf16>
    %44 = vector.shape_cast %41 : vector<16x32xbf16> to vector<1x16x32xbf16>
    tpu.vector_store %arg4[%c0_21, %c0_22, %c0_23], %44 {strides = array<i32>} : memref<5x16x32xbf16, #tpu.memory_space<vmem>>, vector<1x16x32xbf16>,
    %c1 = arith.constant 1 : index
    %c0_24 = arith.constant 0 : index
    %c0_25 = arith.constant 0 : index
    %45 = vector.load %arg0[%c1, %c0_24, %c0_25] : memref<5x16x72xbf16, #tpu.memory_space<vmem>>, vector<1x16x72xbf16>
    %46 = vector.shape_cast %45 : vector<1x16x72xbf16> to vector<16x72xbf16>
    %c1_26 = arith.constant 1 : index
    %c0_27 = arith.constant 0 : index
    %c0_28 = arith.constant 0 : index
    %47 = vector.load %arg1[%c1_26, %c0_27, %c0_28] : memref<5x72x32xbf16, #tpu.memory_space<vmem>>, vector<1x72x32xbf16>
    %48 = vector.shape_cast %47 : vector<1x72x32xbf16> to vector<72x32xbf16>
    %cst_29 = arith.constant dense<0.000000e+00> : vector<16x32xf32>
    %49 = tpu.matmul %46, %48, %cst_29 {dimension_numbers = #tpu.dot_dimension_numbers<[1], [0], [0], [1], [0, 0, 1, 1], [], []>} : vector<16x72xbf16>, vector<72x32xbf16>, vector<16x32xf32> -> vector<16x32xf32>
    %c1_30 = arith.constant 1 : index
    %c0_31 = arith.constant 0 : index
    %c0_32 = arith.constant 0 : index
    %50 = vector.load %arg2[%c1_30, %c0_31, %c0_32] : memref<5x16x1xf32, #tpu.memory_space<vmem>>, vector<1x16x1xf32>
    %51 = vector.shape_cast %50 : vector<1x16x1xf32> to vector<16x1xf32>
    %c1_33 = arith.constant 1 : index
    %c0_34 = arith.constant 0 : index
    %c0_35 = arith.constant 0 : index
    %52 = vector.load %arg3[%c1_33, %c0_34, %c0_35] : memref<5x16x1xf32, #tpu.memory_space<vmem>>, vector<1x16x1xf32>
    %53 = vector.shape_cast %52 : vector<1x16x1xf32> to vector<16x1xf32>
    %cst_36 = arith.constant dense<0.000000e+00> : vector<16xf32>
    %54 = vector.multi_reduction <add>, %49, %cst_36 [1] : vector<16x32xf32> to vector<16xf32>
    %55 = vector.shape_cast %54 : vector<16xf32> to vector<16x1xf32>
    %cst_37 = arith.constant 0.000000e+00 : f32
    %56 = vector.broadcast %cst_37 : f32 to vector<16x1xf32>
    %57 = arith.addf %56, %55 : vector<16x1xf32>
    %58 = arith.mulf %49, %49 : vector<16x32xf32>
    %cst_38 = arith.constant dense<0.000000e+00> : vector<16xf32>
    %59 = vector.multi_reduction <add>, %58, %cst_38 [1] : vector<16x32xf32> to vector<16xf32>
    %60 = vector.shape_cast %59 : vector<16xf32> to vector<16x1xf32>
    %cst_39 = arith.constant 0.000000e+00 : f32
    %61 = vector.broadcast %cst_39 : f32 to vector<16x1xf32>
    %62 = arith.addf %61, %60 : vector<16x1xf32>
    %cst_40 = arith.constant 3.125000e-02 : f32
    %63 = vector.broadcast %cst_40 : f32 to vector<16x1xf32>
    %64 = arith.mulf %57, %63 : vector<16x1xf32>
    %cst_41 = arith.constant 3.125000e-02 : f32
    %65 = vector.broadcast %cst_41 : f32 to vector<16x1xf32>
    %66 = arith.mulf %62, %65 : vector<16x1xf32>
    %67 = arith.mulf %64, %64 : vector<16x1xf32>
    %68 = arith.subf %66, %67 : vector<16x1xf32>
    %cst_42 = arith.constant 0.000000e+00 : f32
    %69 = vector.broadcast %cst_42 : f32 to vector<16x1xf32>
    %70 = arith.maximumf %68, %69 : vector<16x1xf32>
    %cst_43 = arith.constant 9.99999974E-6 : f32
    %71 = vector.broadcast %cst_43 : f32 to vector<16x1xf32>
    %72 = arith.addf %70, %71 : vector<16x1xf32>
    %73 = math.rsqrt %72 : vector<16x1xf32>
    %74 = arith.mulf %51, %73 : vector<16x1xf32>
    %75 = arith.mulf %64, %74 : vector<16x1xf32>
    %76 = arith.subf %53, %75 : vector<16x1xf32>
    %77 = vector.broadcast %74 : vector<16x1xf32> to vector<16x32xf32>
    %78 = arith.mulf %49, %77 : vector<16x32xf32>
    %79 = vector.broadcast %76 : vector<16x1xf32> to vector<16x32xf32>
    %80 = arith.addf %78, %79 : vector<16x32xf32>
    %cst_44 = arith.constant 0.000000e+00 : f32
    %81 = vector.broadcast %cst_44 : f32 to vector<16x32xf32>
    %82 = arith.cmpf ogt, %80, %81 : vector<16x32xf32>
    %cst_45 = arith.constant 0.00999999977 : f32
    %83 = vector.broadcast %cst_45 : f32 to vector<16x32xf32>
    %84 = arith.mulf %83, %80 : vector<16x32xf32>
    %85 = arith.select %82, %80, %84 : vector<16x32xi1>, vector<16x32xf32>
    %86 = arith.truncf %85 : vector<16x32xf32> to vector<16x32xbf16>
    %c1_46 = arith.constant 1 : index
    %c0_47 = arith.constant 0 : index
    %c0_48 = arith.constant 0 : index
    %87 = vector.load %arg4[%c1_46, %c0_47, %c0_48] : memref<5x16x32xbf16, #tpu.memory_space<vmem>>, vector<1x16x32xbf16>
    %88 = vector.shape_cast %87 : vector<1x16x32xbf16> to vector<16x32xbf16>
    %89 = vector.shape_cast %86 : vector<16x32xbf16> to vector<1x16x32xbf16>
    tpu.vector_store %arg4[%c1_46, %c0_47, %c0_48], %89 {strides = array<i32>} : memref<5x16x32xbf16, #tpu.memory_space<vmem>>, vector<1x16x32xbf16>,
    %c2 = arith.constant 2 : index
    %c0_49 = arith.constant 0 : index
    %c0_50 = arith.constant 0 : index
    %90 = vector.load %arg0[%c2, %c0_49, %c0_50] : memref<5x16x72xbf16, #tpu.memory_space<vmem>>, vector<1x16x72xbf16>
    %91 = vector.shape_cast %90 : vector<1x16x72xbf16> to vector<16x72xbf16>
    %c2_51 = arith.constant 2 : index
    %c0_52 = arith.constant 0 : index
    %c0_53 = arith.constant 0 : index
    %92 = vector.load %arg1[%c2_51, %c0_52, %c0_53] : memref<5x72x32xbf16, #tpu.memory_space<vmem>>, vector<1x72x32xbf16>
    %93 = vector.shape_cast %92 : vector<1x72x32xbf16> to vector<72x32xbf16>
    %cst_54 = arith.constant dense<0.000000e+00> : vector<16x32xf32>
    %94 = tpu.matmul %91, %93, %cst_54 {dimension_numbers = #tpu.dot_dimension_numbers<[1], [0], [0], [1], [0, 0, 1, 1], [], []>} : vector<16x72xbf16>, vector<72x32xbf16>, vector<16x32xf32> -> vector<16x32xf32>
    %c2_55 = arith.constant 2 : index
    %c0_56 = arith.constant 0 : index
    %c0_57 = arith.constant 0 : index
    %95 = vector.load %arg2[%c2_55, %c0_56, %c0_57] : memref<5x16x1xf32, #tpu.memory_space<vmem>>, vector<1x16x1xf32>
    %96 = vector.shape_cast %95 : vector<1x16x1xf32> to vector<16x1xf32>
    %c2_58 = arith.constant 2 : index
    %c0_59 = arith.constant 0 : index
    %c0_60 = arith.constant 0 : index
    %97 = vector.load %arg3[%c2_58, %c0_59, %c0_60] : memref<5x16x1xf32, #tpu.memory_space<vmem>>, vector<1x16x1xf32>
    %98 = vector.shape_cast %97 : vector<1x16x1xf32> to vector<16x1xf32>
    %cst_61 = arith.constant dense<0.000000e+00> : vector<16xf32>
    %99 = vector.multi_reduction <add>, %94, %cst_61 [1] : vector<16x32xf32> to vector<16xf32>
    %100 = vector.shape_cast %99 : vector<16xf32> to vector<16x1xf32>
    %cst_62 = arith.constant 0.000000e+00 : f32
    %101 = vector.broadcast %cst_62 : f32 to vector<16x1xf32>
    %102 = arith.addf %101, %100 : vector<16x1xf32>
    %103 = arith.mulf %94, %94 : vector<16x32xf32>
    %cst_63 = arith.constant dense<0.000000e+00> : vector<16xf32>
    %104 = vector.multi_reduction <add>, %103, %cst_63 [1] : vector<16x32xf32> to vector<16xf32>
    %105 = vector.shape_cast %104 : vector<16xf32> to vector<16x1xf32>
    %cst_64 = arith.constant 0.000000e+00 : f32
    %106 = vector.broadcast %cst_64 : f32 to vector<16x1xf32>
    %107 = arith.addf %106, %105 : vector<16x1xf32>
    %cst_65 = arith.constant 3.125000e-02 : f32
    %108 = vector.broadcast %cst_65 : f32 to vector<16x1xf32>
    %109 = arith.mulf %102, %108 : vector<16x1xf32>
    %cst_66 = arith.constant 3.125000e-02 : f32
    %110 = vector.broadcast %cst_66 : f32 to vector<16x1xf32>
    %111 = arith.mulf %107, %110 : vector<16x1xf32>
    %112 = arith.mulf %109, %109 : vector<16x1xf32>
    %113 = arith.subf %111, %112 : vector<16x1xf32>
    %cst_67 = arith.constant 0.000000e+00 : f32
    %114 = vector.broadcast %cst_67 : f32 to vector<16x1xf32>
    %115 = arith.maximumf %113, %114 : vector<16x1xf32>
    %cst_68 = arith.constant 9.99999974E-6 : f32
    %116 = vector.broadcast %cst_68 : f32 to vector<16x1xf32>
    %117 = arith.addf %115, %116 : vector<16x1xf32>
    %118 = math.rsqrt %117 : vector<16x1xf32>
    %119 = arith.mulf %96, %118 : vector<16x1xf32>
    %120 = arith.mulf %109, %119 : vector<16x1xf32>
    %121 = arith.subf %98, %120 : vector<16x1xf32>
    %122 = vector.broadcast %119 : vector<16x1xf32> to vector<16x32xf32>
    %123 = arith.mulf %94, %122 : vector<16x32xf32>
    %124 = vector.broadcast %121 : vector<16x1xf32> to vector<16x32xf32>
    %125 = arith.addf %123, %124 : vector<16x32xf32>
    %cst_69 = arith.constant 0.000000e+00 : f32
    %126 = vector.broadcast %cst_69 : f32 to vector<16x32xf32>
    %127 = arith.cmpf ogt, %125, %126 : vector<16x32xf32>
    %cst_70 = arith.constant 0.00999999977 : f32
    %128 = vector.broadcast %cst_70 : f32 to vector<16x32xf32>
    %129 = arith.mulf %128, %125 : vector<16x32xf32>
    %130 = arith.select %127, %125, %129 : vector<16x32xi1>, vector<16x32xf32>
    %131 = arith.truncf %130 : vector<16x32xf32> to vector<16x32xbf16>
    %c2_71 = arith.constant 2 : index
    %c0_72 = arith.constant 0 : index
    %c0_73 = arith.constant 0 : index
    %132 = vector.load %arg4[%c2_71, %c0_72, %c0_73] : memref<5x16x32xbf16, #tpu.memory_space<vmem>>, vector<1x16x32xbf16>
    %133 = vector.shape_cast %132 : vector<1x16x32xbf16> to vector<16x32xbf16>
    %134 = vector.shape_cast %131 : vector<16x32xbf16> to vector<1x16x32xbf16>
    tpu.vector_store %arg4[%c2_71, %c0_72, %c0_73], %134 {strides = array<i32>} : memref<5x16x32xbf16, #tpu.memory_space<vmem>>, vector<1x16x32xbf16>,
    %c3 = arith.constant 3 : index
    %c0_74 = arith.constant 0 : index
    %c0_75 = arith.constant 0 : index
    %135 = vector.load %arg0[%c3, %c0_74, %c0_75] : memref<5x16x72xbf16, #tpu.memory_space<vmem>>, vector<1x16x72xbf16>
    %136 = vector.shape_cast %135 : vector<1x16x72xbf16> to vector<16x72xbf16>
    %c3_76 = arith.constant 3 : index
    %c0_77 = arith.constant 0 : index
    %c0_78 = arith.constant 0 : index
    %137 = vector.load %arg1[%c3_76, %c0_77, %c0_78] : memref<5x72x32xbf16, #tpu.memory_space<vmem>>, vector<1x72x32xbf16>
    %138 = vector.shape_cast %137 : vector<1x72x32xbf16> to vector<72x32xbf16>
    %cst_79 = arith.constant dense<0.000000e+00> : vector<16x32xf32>
    %139 = tpu.matmul %136, %138, %cst_79 {dimension_numbers = #tpu.dot_dimension_numbers<[1], [0], [0], [1], [0, 0, 1, 1], [], []>} : vector<16x72xbf16>, vector<72x32xbf16>, vector<16x32xf32> -> vector<16x32xf32>
    %c3_80 = arith.constant 3 : index
    %c0_81 = arith.constant 0 : index
    %c0_82 = arith.constant 0 : index
    %140 = vector.load %arg2[%c3_80, %c0_81, %c0_82] : memref<5x16x1xf32, #tpu.memory_space<vmem>>, vector<1x16x1xf32>
    %141 = vector.shape_cast %140 : vector<1x16x1xf32> to vector<16x1xf32>
    %c3_83 = arith.constant 3 : index
    %c0_84 = arith.constant 0 : index
    %c0_85 = arith.constant 0 : index
    %142 = vector.load %arg3[%c3_83, %c0_84, %c0_85] : memref<5x16x1xf32, #tpu.memory_space<vmem>>, vector<1x16x1xf32>
    %143 = vector.shape_cast %142 : vector<1x16x1xf32> to vector<16x1xf32>
    %cst_86 = arith.constant dense<0.000000e+00> : vector<16xf32>
    %144 = vector.multi_reduction <add>, %139, %cst_86 [1] : vector<16x32xf32> to vector<16xf32>
    %145 = vector.shape_cast %144 : vector<16xf32> to vector<16x1xf32>
    %cst_87 = arith.constant 0.000000e+00 : f32
    %146 = vector.broadcast %cst_87 : f32 to vector<16x1xf32>
    %147 = arith.addf %146, %145 : vector<16x1xf32>
    %148 = arith.mulf %139, %139 : vector<16x32xf32>
    %cst_88 = arith.constant dense<0.000000e+00> : vector<16xf32>
    %149 = vector.multi_reduction <add>, %148, %cst_88 [1] : vector<16x32xf32> to vector<16xf32>
    %150 = vector.shape_cast %149 : vector<16xf32> to vector<16x1xf32>
    %cst_89 = arith.constant 0.000000e+00 : f32
    %151 = vector.broadcast %cst_89 : f32 to vector<16x1xf32>
    %152 = arith.addf %151, %150 : vector<16x1xf32>
    %cst_90 = arith.constant 3.125000e-02 : f32
    %153 = vector.broadcast %cst_90 : f32 to vector<16x1xf32>
    %154 = arith.mulf %147, %153 : vector<16x1xf32>
    %cst_91 = arith.constant 3.125000e-02 : f32
    %155 = vector.broadcast %cst_91 : f32 to vector<16x1xf32>
    %156 = arith.mulf %152, %155 : vector<16x1xf32>
    %157 = arith.mulf %154, %154 : vector<16x1xf32>
    %158 = arith.subf %156, %157 : vector<16x1xf32>
    %cst_92 = arith.constant 0.000000e+00 : f32
    %159 = vector.broadcast %cst_92 : f32 to vector<16x1xf32>
    %160 = arith.maximumf %158, %159 : vector<16x1xf32>
    %cst_93 = arith.constant 9.99999974E-6 : f32
    %161 = vector.broadcast %cst_93 : f32 to vector<16x1xf32>
    %162 = arith.addf %160, %161 : vector<16x1xf32>
    %163 = math.rsqrt %162 : vector<16x1xf32>
    %164 = arith.mulf %141, %163 : vector<16x1xf32>
    %165 = arith.mulf %154, %164 : vector<16x1xf32>
    %166 = arith.subf %143, %165 : vector<16x1xf32>
    %167 = vector.broadcast %164 : vector<16x1xf32> to vector<16x32xf32>
    %168 = arith.mulf %139, %167 : vector<16x32xf32>
    %169 = vector.broadcast %166 : vector<16x1xf32> to vector<16x32xf32>
    %170 = arith.addf %168, %169 : vector<16x32xf32>
    %cst_94 = arith.constant 0.000000e+00 : f32
    %171 = vector.broadcast %cst_94 : f32 to vector<16x32xf32>
    %172 = arith.cmpf ogt, %170, %171 : vector<16x32xf32>
    %cst_95 = arith.constant 0.00999999977 : f32
    %173 = vector.broadcast %cst_95 : f32 to vector<16x32xf32>
    %174 = arith.mulf %173, %170 : vector<16x32xf32>
    %175 = arith.select %172, %170, %174 : vector<16x32xi1>, vector<16x32xf32>
    %176 = arith.truncf %175 : vector<16x32xf32> to vector<16x32xbf16>
    %c3_96 = arith.constant 3 : index
    %c0_97 = arith.constant 0 : index
    %c0_98 = arith.constant 0 : index
    %177 = vector.load %arg4[%c3_96, %c0_97, %c0_98] : memref<5x16x32xbf16, #tpu.memory_space<vmem>>, vector<1x16x32xbf16>
    %178 = vector.shape_cast %177 : vector<1x16x32xbf16> to vector<16x32xbf16>
    %179 = vector.shape_cast %176 : vector<16x32xbf16> to vector<1x16x32xbf16>
    tpu.vector_store %arg4[%c3_96, %c0_97, %c0_98], %179 {strides = array<i32>} : memref<5x16x32xbf16, #tpu.memory_space<vmem>>, vector<1x16x32xbf16>,
    %c4 = arith.constant 4 : index
    %c0_99 = arith.constant 0 : index
    %c0_100 = arith.constant 0 : index
    %180 = vector.load %arg0[%c4, %c0_99, %c0_100] : memref<5x16x72xbf16, #tpu.memory_space<vmem>>, vector<1x16x72xbf16>
    %181 = vector.shape_cast %180 : vector<1x16x72xbf16> to vector<16x72xbf16>
    %c4_101 = arith.constant 4 : index
    %c0_102 = arith.constant 0 : index
    %c0_103 = arith.constant 0 : index
    %182 = vector.load %arg1[%c4_101, %c0_102, %c0_103] : memref<5x72x32xbf16, #tpu.memory_space<vmem>>, vector<1x72x32xbf16>
    %183 = vector.shape_cast %182 : vector<1x72x32xbf16> to vector<72x32xbf16>
    %cst_104 = arith.constant dense<0.000000e+00> : vector<16x32xf32>
    %184 = tpu.matmul %181, %183, %cst_104 {dimension_numbers = #tpu.dot_dimension_numbers<[1], [0], [0], [1], [0, 0, 1, 1], [], []>} : vector<16x72xbf16>, vector<72x32xbf16>, vector<16x32xf32> -> vector<16x32xf32>
    %c4_105 = arith.constant 4 : index
    %c0_106 = arith.constant 0 : index
    %c0_107 = arith.constant 0 : index
    %185 = vector.load %arg2[%c4_105, %c0_106, %c0_107] : memref<5x16x1xf32, #tpu.memory_space<vmem>>, vector<1x16x1xf32>
    %186 = vector.shape_cast %185 : vector<1x16x1xf32> to vector<16x1xf32>
    %c4_108 = arith.constant 4 : index
    %c0_109 = arith.constant 0 : index
    %c0_110 = arith.constant 0 : index
    %187 = vector.load %arg3[%c4_108, %c0_109, %c0_110] : memref<5x16x1xf32, #tpu.memory_space<vmem>>, vector<1x16x1xf32>
    %188 = vector.shape_cast %187 : vector<1x16x1xf32> to vector<16x1xf32>
    %cst_111 = arith.constant dense<0.000000e+00> : vector<16xf32>
    %189 = vector.multi_reduction <add>, %184, %cst_111 [1] : vector<16x32xf32> to vector<16xf32>
    %190 = vector.shape_cast %189 : vector<16xf32> to vector<16x1xf32>
    %cst_112 = arith.constant 0.000000e+00 : f32
    %191 = vector.broadcast %cst_112 : f32 to vector<16x1xf32>
    %192 = arith.addf %191, %190 : vector<16x1xf32>
    %193 = arith.mulf %184, %184 : vector<16x32xf32>
    %cst_113 = arith.constant dense<0.000000e+00> : vector<16xf32>
    %194 = vector.multi_reduction <add>, %193, %cst_113 [1] : vector<16x32xf32> to vector<16xf32>
    %195 = vector.shape_cast %194 : vector<16xf32> to vector<16x1xf32>
    %cst_114 = arith.constant 0.000000e+00 : f32
    %196 = vector.broadcast %cst_114 : f32 to vector<16x1xf32>
    %197 = arith.addf %196, %195 : vector<16x1xf32>
    %cst_115 = arith.constant 3.125000e-02 : f32
    %198 = vector.broadcast %cst_115 : f32 to vector<16x1xf32>
    %199 = arith.mulf %192, %198 : vector<16x1xf32>
    %cst_116 = arith.constant 3.125000e-02 : f32
    %200 = vector.broadcast %cst_116 : f32 to vector<16x1xf32>
    %201 = arith.mulf %197, %200 : vector<16x1xf32>
    %202 = arith.mulf %199, %199 : vector<16x1xf32>
    %203 = arith.subf %201, %202 : vector<16x1xf32>
    %cst_117 = arith.constant 0.000000e+00 : f32
    %204 = vector.broadcast %cst_117 : f32 to vector<16x1xf32>
    %205 = arith.maximumf %203, %204 : vector<16x1xf32>
    %cst_118 = arith.constant 9.99999974E-6 : f32
    %206 = vector.broadcast %cst_118 : f32 to vector<16x1xf32>
    %207 = arith.addf %205, %206 : vector<16x1xf32>
    %208 = math.rsqrt %207 : vector<16x1xf32>
    %209 = arith.mulf %186, %208 : vector<16x1xf32>
    %210 = arith.mulf %199, %209 : vector<16x1xf32>
    %211 = arith.subf %188, %210 : vector<16x1xf32>
    %212 = vector.broadcast %209 : vector<16x1xf32> to vector<16x32xf32>
    %213 = arith.mulf %184, %212 : vector<16x32xf32>
    %214 = vector.broadcast %211 : vector<16x1xf32> to vector<16x32xf32>
    %215 = arith.addf %213, %214 : vector<16x32xf32>
    %cst_119 = arith.constant 0.000000e+00 : f32
    %216 = vector.broadcast %cst_119 : f32 to vector<16x32xf32>
    %217 = arith.cmpf ogt, %215, %216 : vector<16x32xf32>
    %cst_120 = arith.constant 0.00999999977 : f32
    %218 = vector.broadcast %cst_120 : f32 to vector<16x32xf32>
    %219 = arith.mulf %218, %215 : vector<16x32xf32>
    %220 = arith.select %217, %215, %219 : vector<16x32xi1>, vector<16x32xf32>
    %221 = arith.truncf %220 : vector<16x32xf32> to vector<16x32xbf16>
    %c4_121 = arith.constant 4 : index
    %c0_122 = arith.constant 0 : index
    %c0_123 = arith.constant 0 : index
    %222 = vector.load %arg4[%c4_121, %c0_122, %c0_123] : memref<5x16x32xbf16, #tpu.memory_space<vmem>>, vector<1x16x32xbf16>
    %223 = vector.shape_cast %222 : vector<1x16x32xbf16> to vector<16x32xbf16>
    %224 = vector.shape_cast %221 : vector<16x32xbf16> to vector<1x16x32xbf16>
    tpu.vector_store %arg4[%c4_121, %c0_122, %c0_123], %224 {strides = array<i32>} : memref<5x16x32xbf16, #tpu.memory_space<vmem>>, vector<1x16x32xbf16>,
    return
  }
}

module attributes {stable_mosaic.version = 11 : i64} {
  func.func @_conv_heads_bn_kernel(%arg0: memref<5x32x144xbf16, #tpu.memory_space<vmem>>, %arg1: memref<5x144x8xbf16, #tpu.memory_space<vmem>>, %arg2: memref<5x32x1xf32, #tpu.memory_space<vmem>>, %arg3: memref<5x32x1xf32, #tpu.memory_space<vmem>>, %arg4: memref<5x32x8xbf16, #tpu.memory_space<vmem>>) attributes {dimension_semantics = [], scalar_prefetch = 0 : i64, scratch_operands = 0 : i64, tpu.core_type = #tpu.core_type<tc>} {
    %c0 = arith.constant 0 : index
    %c0_0 = arith.constant 0 : index
    %c0_1 = arith.constant 0 : index
    %0 = vector.load %arg0[%c0, %c0_0, %c0_1] : memref<5x32x144xbf16, #tpu.memory_space<vmem>>, vector<1x32x144xbf16>
    %1 = vector.shape_cast %0 : vector<1x32x144xbf16> to vector<32x144xbf16>
    %c0_2 = arith.constant 0 : index
    %c0_3 = arith.constant 0 : index
    %c0_4 = arith.constant 0 : index
    %2 = vector.load %arg1[%c0_2, %c0_3, %c0_4] : memref<5x144x8xbf16, #tpu.memory_space<vmem>>, vector<1x144x8xbf16>
    %3 = vector.shape_cast %2 : vector<1x144x8xbf16> to vector<144x8xbf16>
    %cst = arith.constant dense<0.000000e+00> : vector<32x8xf32>
    %4 = tpu.matmul %1, %3, %cst {dimension_numbers = #tpu.dot_dimension_numbers<[1], [0], [0], [1], [0, 0, 1, 1], [], []>} : vector<32x144xbf16>, vector<144x8xbf16>, vector<32x8xf32> -> vector<32x8xf32>
    %c0_5 = arith.constant 0 : index
    %c0_6 = arith.constant 0 : index
    %c0_7 = arith.constant 0 : index
    %5 = vector.load %arg2[%c0_5, %c0_6, %c0_7] : memref<5x32x1xf32, #tpu.memory_space<vmem>>, vector<1x32x1xf32>
    %6 = vector.shape_cast %5 : vector<1x32x1xf32> to vector<32x1xf32>
    %c0_8 = arith.constant 0 : index
    %c0_9 = arith.constant 0 : index
    %c0_10 = arith.constant 0 : index
    %7 = vector.load %arg3[%c0_8, %c0_9, %c0_10] : memref<5x32x1xf32, #tpu.memory_space<vmem>>, vector<1x32x1xf32>
    %8 = vector.shape_cast %7 : vector<1x32x1xf32> to vector<32x1xf32>
    %cst_11 = arith.constant dense<0.000000e+00> : vector<32xf32>
    %9 = vector.multi_reduction <add>, %4, %cst_11 [1] : vector<32x8xf32> to vector<32xf32>
    %10 = vector.shape_cast %9 : vector<32xf32> to vector<32x1xf32>
    %cst_12 = arith.constant 0.000000e+00 : f32
    %11 = vector.broadcast %cst_12 : f32 to vector<32x1xf32>
    %12 = arith.addf %11, %10 : vector<32x1xf32>
    %13 = arith.mulf %4, %4 : vector<32x8xf32>
    %cst_13 = arith.constant dense<0.000000e+00> : vector<32xf32>
    %14 = vector.multi_reduction <add>, %13, %cst_13 [1] : vector<32x8xf32> to vector<32xf32>
    %15 = vector.shape_cast %14 : vector<32xf32> to vector<32x1xf32>
    %cst_14 = arith.constant 0.000000e+00 : f32
    %16 = vector.broadcast %cst_14 : f32 to vector<32x1xf32>
    %17 = arith.addf %16, %15 : vector<32x1xf32>
    %cst_15 = arith.constant 1.250000e-01 : f32
    %18 = vector.broadcast %cst_15 : f32 to vector<32x1xf32>
    %19 = arith.mulf %12, %18 : vector<32x1xf32>
    %cst_16 = arith.constant 1.250000e-01 : f32
    %20 = vector.broadcast %cst_16 : f32 to vector<32x1xf32>
    %21 = arith.mulf %17, %20 : vector<32x1xf32>
    %22 = arith.mulf %19, %19 : vector<32x1xf32>
    %23 = arith.subf %21, %22 : vector<32x1xf32>
    %cst_17 = arith.constant 0.000000e+00 : f32
    %24 = vector.broadcast %cst_17 : f32 to vector<32x1xf32>
    %25 = arith.maximumf %23, %24 : vector<32x1xf32>
    %cst_18 = arith.constant 9.99999974E-6 : f32
    %26 = vector.broadcast %cst_18 : f32 to vector<32x1xf32>
    %27 = arith.addf %25, %26 : vector<32x1xf32>
    %28 = math.rsqrt %27 : vector<32x1xf32>
    %29 = arith.mulf %6, %28 : vector<32x1xf32>
    %30 = arith.mulf %19, %29 : vector<32x1xf32>
    %31 = arith.subf %8, %30 : vector<32x1xf32>
    %32 = vector.broadcast %29 : vector<32x1xf32> to vector<32x8xf32>
    %33 = arith.mulf %4, %32 : vector<32x8xf32>
    %34 = vector.broadcast %31 : vector<32x1xf32> to vector<32x8xf32>
    %35 = arith.addf %33, %34 : vector<32x8xf32>
    %cst_19 = arith.constant 0.000000e+00 : f32
    %36 = vector.broadcast %cst_19 : f32 to vector<32x8xf32>
    %37 = arith.cmpf ogt, %35, %36 : vector<32x8xf32>
    %cst_20 = arith.constant 0.00999999977 : f32
    %38 = vector.broadcast %cst_20 : f32 to vector<32x8xf32>
    %39 = arith.mulf %38, %35 : vector<32x8xf32>
    %40 = arith.select %37, %35, %39 : vector<32x8xi1>, vector<32x8xf32>
    %41 = arith.truncf %40 : vector<32x8xf32> to vector<32x8xbf16>
    %c0_21 = arith.constant 0 : index
    %c0_22 = arith.constant 0 : index
    %c0_23 = arith.constant 0 : index
    %42 = vector.load %arg4[%c0_21, %c0_22, %c0_23] : memref<5x32x8xbf16, #tpu.memory_space<vmem>>, vector<1x32x8xbf16>
    %43 = vector.shape_cast %42 : vector<1x32x8xbf16> to vector<32x8xbf16>
    %44 = vector.shape_cast %41 : vector<32x8xbf16> to vector<1x32x8xbf16>
    tpu.vector_store %arg4[%c0_21, %c0_22, %c0_23], %44 {strides = array<i32>} : memref<5x32x8xbf16, #tpu.memory_space<vmem>>, vector<1x32x8xbf16>,
    %c1 = arith.constant 1 : index
    %c0_24 = arith.constant 0 : index
    %c0_25 = arith.constant 0 : index
    %45 = vector.load %arg0[%c1, %c0_24, %c0_25] : memref<5x32x144xbf16, #tpu.memory_space<vmem>>, vector<1x32x144xbf16>
    %46 = vector.shape_cast %45 : vector<1x32x144xbf16> to vector<32x144xbf16>
    %c1_26 = arith.constant 1 : index
    %c0_27 = arith.constant 0 : index
    %c0_28 = arith.constant 0 : index
    %47 = vector.load %arg1[%c1_26, %c0_27, %c0_28] : memref<5x144x8xbf16, #tpu.memory_space<vmem>>, vector<1x144x8xbf16>
    %48 = vector.shape_cast %47 : vector<1x144x8xbf16> to vector<144x8xbf16>
    %cst_29 = arith.constant dense<0.000000e+00> : vector<32x8xf32>
    %49 = tpu.matmul %46, %48, %cst_29 {dimension_numbers = #tpu.dot_dimension_numbers<[1], [0], [0], [1], [0, 0, 1, 1], [], []>} : vector<32x144xbf16>, vector<144x8xbf16>, vector<32x8xf32> -> vector<32x8xf32>
    %c1_30 = arith.constant 1 : index
    %c0_31 = arith.constant 0 : index
    %c0_32 = arith.constant 0 : index
    %50 = vector.load %arg2[%c1_30, %c0_31, %c0_32] : memref<5x32x1xf32, #tpu.memory_space<vmem>>, vector<1x32x1xf32>
    %51 = vector.shape_cast %50 : vector<1x32x1xf32> to vector<32x1xf32>
    %c1_33 = arith.constant 1 : index
    %c0_34 = arith.constant 0 : index
    %c0_35 = arith.constant 0 : index
    %52 = vector.load %arg3[%c1_33, %c0_34, %c0_35] : memref<5x32x1xf32, #tpu.memory_space<vmem>>, vector<1x32x1xf32>
    %53 = vector.shape_cast %52 : vector<1x32x1xf32> to vector<32x1xf32>
    %cst_36 = arith.constant dense<0.000000e+00> : vector<32xf32>
    %54 = vector.multi_reduction <add>, %49, %cst_36 [1] : vector<32x8xf32> to vector<32xf32>
    %55 = vector.shape_cast %54 : vector<32xf32> to vector<32x1xf32>
    %cst_37 = arith.constant 0.000000e+00 : f32
    %56 = vector.broadcast %cst_37 : f32 to vector<32x1xf32>
    %57 = arith.addf %56, %55 : vector<32x1xf32>
    %58 = arith.mulf %49, %49 : vector<32x8xf32>
    %cst_38 = arith.constant dense<0.000000e+00> : vector<32xf32>
    %59 = vector.multi_reduction <add>, %58, %cst_38 [1] : vector<32x8xf32> to vector<32xf32>
    %60 = vector.shape_cast %59 : vector<32xf32> to vector<32x1xf32>
    %cst_39 = arith.constant 0.000000e+00 : f32
    %61 = vector.broadcast %cst_39 : f32 to vector<32x1xf32>
    %62 = arith.addf %61, %60 : vector<32x1xf32>
    %cst_40 = arith.constant 1.250000e-01 : f32
    %63 = vector.broadcast %cst_40 : f32 to vector<32x1xf32>
    %64 = arith.mulf %57, %63 : vector<32x1xf32>
    %cst_41 = arith.constant 1.250000e-01 : f32
    %65 = vector.broadcast %cst_41 : f32 to vector<32x1xf32>
    %66 = arith.mulf %62, %65 : vector<32x1xf32>
    %67 = arith.mulf %64, %64 : vector<32x1xf32>
    %68 = arith.subf %66, %67 : vector<32x1xf32>
    %cst_42 = arith.constant 0.000000e+00 : f32
    %69 = vector.broadcast %cst_42 : f32 to vector<32x1xf32>
    %70 = arith.maximumf %68, %69 : vector<32x1xf32>
    %cst_43 = arith.constant 9.99999974E-6 : f32
    %71 = vector.broadcast %cst_43 : f32 to vector<32x1xf32>
    %72 = arith.addf %70, %71 : vector<32x1xf32>
    %73 = math.rsqrt %72 : vector<32x1xf32>
    %74 = arith.mulf %51, %73 : vector<32x1xf32>
    %75 = arith.mulf %64, %74 : vector<32x1xf32>
    %76 = arith.subf %53, %75 : vector<32x1xf32>
    %77 = vector.broadcast %74 : vector<32x1xf32> to vector<32x8xf32>
    %78 = arith.mulf %49, %77 : vector<32x8xf32>
    %79 = vector.broadcast %76 : vector<32x1xf32> to vector<32x8xf32>
    %80 = arith.addf %78, %79 : vector<32x8xf32>
    %cst_44 = arith.constant 0.000000e+00 : f32
    %81 = vector.broadcast %cst_44 : f32 to vector<32x8xf32>
    %82 = arith.cmpf ogt, %80, %81 : vector<32x8xf32>
    %cst_45 = arith.constant 0.00999999977 : f32
    %83 = vector.broadcast %cst_45 : f32 to vector<32x8xf32>
    %84 = arith.mulf %83, %80 : vector<32x8xf32>
    %85 = arith.select %82, %80, %84 : vector<32x8xi1>, vector<32x8xf32>
    %86 = arith.truncf %85 : vector<32x8xf32> to vector<32x8xbf16>
    %c1_46 = arith.constant 1 : index
    %c0_47 = arith.constant 0 : index
    %c0_48 = arith.constant 0 : index
    %87 = vector.load %arg4[%c1_46, %c0_47, %c0_48] : memref<5x32x8xbf16, #tpu.memory_space<vmem>>, vector<1x32x8xbf16>
    %88 = vector.shape_cast %87 : vector<1x32x8xbf16> to vector<32x8xbf16>
    %89 = vector.shape_cast %86 : vector<32x8xbf16> to vector<1x32x8xbf16>
    tpu.vector_store %arg4[%c1_46, %c0_47, %c0_48], %89 {strides = array<i32>} : memref<5x32x8xbf16, #tpu.memory_space<vmem>>, vector<1x32x8xbf16>,
    %c2 = arith.constant 2 : index
    %c0_49 = arith.constant 0 : index
    %c0_50 = arith.constant 0 : index
    %90 = vector.load %arg0[%c2, %c0_49, %c0_50] : memref<5x32x144xbf16, #tpu.memory_space<vmem>>, vector<1x32x144xbf16>
    %91 = vector.shape_cast %90 : vector<1x32x144xbf16> to vector<32x144xbf16>
    %c2_51 = arith.constant 2 : index
    %c0_52 = arith.constant 0 : index
    %c0_53 = arith.constant 0 : index
    %92 = vector.load %arg1[%c2_51, %c0_52, %c0_53] : memref<5x144x8xbf16, #tpu.memory_space<vmem>>, vector<1x144x8xbf16>
    %93 = vector.shape_cast %92 : vector<1x144x8xbf16> to vector<144x8xbf16>
    %cst_54 = arith.constant dense<0.000000e+00> : vector<32x8xf32>
    %94 = tpu.matmul %91, %93, %cst_54 {dimension_numbers = #tpu.dot_dimension_numbers<[1], [0], [0], [1], [0, 0, 1, 1], [], []>} : vector<32x144xbf16>, vector<144x8xbf16>, vector<32x8xf32> -> vector<32x8xf32>
    %c2_55 = arith.constant 2 : index
    %c0_56 = arith.constant 0 : index
    %c0_57 = arith.constant 0 : index
    %95 = vector.load %arg2[%c2_55, %c0_56, %c0_57] : memref<5x32x1xf32, #tpu.memory_space<vmem>>, vector<1x32x1xf32>
    %96 = vector.shape_cast %95 : vector<1x32x1xf32> to vector<32x1xf32>
    %c2_58 = arith.constant 2 : index
    %c0_59 = arith.constant 0 : index
    %c0_60 = arith.constant 0 : index
    %97 = vector.load %arg3[%c2_58, %c0_59, %c0_60] : memref<5x32x1xf32, #tpu.memory_space<vmem>>, vector<1x32x1xf32>
    %98 = vector.shape_cast %97 : vector<1x32x1xf32> to vector<32x1xf32>
    %cst_61 = arith.constant dense<0.000000e+00> : vector<32xf32>
    %99 = vector.multi_reduction <add>, %94, %cst_61 [1] : vector<32x8xf32> to vector<32xf32>
    %100 = vector.shape_cast %99 : vector<32xf32> to vector<32x1xf32>
    %cst_62 = arith.constant 0.000000e+00 : f32
    %101 = vector.broadcast %cst_62 : f32 to vector<32x1xf32>
    %102 = arith.addf %101, %100 : vector<32x1xf32>
    %103 = arith.mulf %94, %94 : vector<32x8xf32>
    %cst_63 = arith.constant dense<0.000000e+00> : vector<32xf32>
    %104 = vector.multi_reduction <add>, %103, %cst_63 [1] : vector<32x8xf32> to vector<32xf32>
    %105 = vector.shape_cast %104 : vector<32xf32> to vector<32x1xf32>
    %cst_64 = arith.constant 0.000000e+00 : f32
    %106 = vector.broadcast %cst_64 : f32 to vector<32x1xf32>
    %107 = arith.addf %106, %105 : vector<32x1xf32>
    %cst_65 = arith.constant 1.250000e-01 : f32
    %108 = vector.broadcast %cst_65 : f32 to vector<32x1xf32>
    %109 = arith.mulf %102, %108 : vector<32x1xf32>
    %cst_66 = arith.constant 1.250000e-01 : f32
    %110 = vector.broadcast %cst_66 : f32 to vector<32x1xf32>
    %111 = arith.mulf %107, %110 : vector<32x1xf32>
    %112 = arith.mulf %109, %109 : vector<32x1xf32>
    %113 = arith.subf %111, %112 : vector<32x1xf32>
    %cst_67 = arith.constant 0.000000e+00 : f32
    %114 = vector.broadcast %cst_67 : f32 to vector<32x1xf32>
    %115 = arith.maximumf %113, %114 : vector<32x1xf32>
    %cst_68 = arith.constant 9.99999974E-6 : f32
    %116 = vector.broadcast %cst_68 : f32 to vector<32x1xf32>
    %117 = arith.addf %115, %116 : vector<32x1xf32>
    %118 = math.rsqrt %117 : vector<32x1xf32>
    %119 = arith.mulf %96, %118 : vector<32x1xf32>
    %120 = arith.mulf %109, %119 : vector<32x1xf32>
    %121 = arith.subf %98, %120 : vector<32x1xf32>
    %122 = vector.broadcast %119 : vector<32x1xf32> to vector<32x8xf32>
    %123 = arith.mulf %94, %122 : vector<32x8xf32>
    %124 = vector.broadcast %121 : vector<32x1xf32> to vector<32x8xf32>
    %125 = arith.addf %123, %124 : vector<32x8xf32>
    %cst_69 = arith.constant 0.000000e+00 : f32
    %126 = vector.broadcast %cst_69 : f32 to vector<32x8xf32>
    %127 = arith.cmpf ogt, %125, %126 : vector<32x8xf32>
    %cst_70 = arith.constant 0.00999999977 : f32
    %128 = vector.broadcast %cst_70 : f32 to vector<32x8xf32>
    %129 = arith.mulf %128, %125 : vector<32x8xf32>
    %130 = arith.select %127, %125, %129 : vector<32x8xi1>, vector<32x8xf32>
    %131 = arith.truncf %130 : vector<32x8xf32> to vector<32x8xbf16>
    %c2_71 = arith.constant 2 : index
    %c0_72 = arith.constant 0 : index
    %c0_73 = arith.constant 0 : index
    %132 = vector.load %arg4[%c2_71, %c0_72, %c0_73] : memref<5x32x8xbf16, #tpu.memory_space<vmem>>, vector<1x32x8xbf16>
    %133 = vector.shape_cast %132 : vector<1x32x8xbf16> to vector<32x8xbf16>
    %134 = vector.shape_cast %131 : vector<32x8xbf16> to vector<1x32x8xbf16>
    tpu.vector_store %arg4[%c2_71, %c0_72, %c0_73], %134 {strides = array<i32>} : memref<5x32x8xbf16, #tpu.memory_space<vmem>>, vector<1x32x8xbf16>,
    %c3 = arith.constant 3 : index
    %c0_74 = arith.constant 0 : index
    %c0_75 = arith.constant 0 : index
    %135 = vector.load %arg0[%c3, %c0_74, %c0_75] : memref<5x32x144xbf16, #tpu.memory_space<vmem>>, vector<1x32x144xbf16>
    %136 = vector.shape_cast %135 : vector<1x32x144xbf16> to vector<32x144xbf16>
    %c3_76 = arith.constant 3 : index
    %c0_77 = arith.constant 0 : index
    %c0_78 = arith.constant 0 : index
    %137 = vector.load %arg1[%c3_76, %c0_77, %c0_78] : memref<5x144x8xbf16, #tpu.memory_space<vmem>>, vector<1x144x8xbf16>
    %138 = vector.shape_cast %137 : vector<1x144x8xbf16> to vector<144x8xbf16>
    %cst_79 = arith.constant dense<0.000000e+00> : vector<32x8xf32>
    %139 = tpu.matmul %136, %138, %cst_79 {dimension_numbers = #tpu.dot_dimension_numbers<[1], [0], [0], [1], [0, 0, 1, 1], [], []>} : vector<32x144xbf16>, vector<144x8xbf16>, vector<32x8xf32> -> vector<32x8xf32>
    %c3_80 = arith.constant 3 : index
    %c0_81 = arith.constant 0 : index
    %c0_82 = arith.constant 0 : index
    %140 = vector.load %arg2[%c3_80, %c0_81, %c0_82] : memref<5x32x1xf32, #tpu.memory_space<vmem>>, vector<1x32x1xf32>
    %141 = vector.shape_cast %140 : vector<1x32x1xf32> to vector<32x1xf32>
    %c3_83 = arith.constant 3 : index
    %c0_84 = arith.constant 0 : index
    %c0_85 = arith.constant 0 : index
    %142 = vector.load %arg3[%c3_83, %c0_84, %c0_85] : memref<5x32x1xf32, #tpu.memory_space<vmem>>, vector<1x32x1xf32>
    %143 = vector.shape_cast %142 : vector<1x32x1xf32> to vector<32x1xf32>
    %cst_86 = arith.constant dense<0.000000e+00> : vector<32xf32>
    %144 = vector.multi_reduction <add>, %139, %cst_86 [1] : vector<32x8xf32> to vector<32xf32>
    %145 = vector.shape_cast %144 : vector<32xf32> to vector<32x1xf32>
    %cst_87 = arith.constant 0.000000e+00 : f32
    %146 = vector.broadcast %cst_87 : f32 to vector<32x1xf32>
    %147 = arith.addf %146, %145 : vector<32x1xf32>
    %148 = arith.mulf %139, %139 : vector<32x8xf32>
    %cst_88 = arith.constant dense<0.000000e+00> : vector<32xf32>
    %149 = vector.multi_reduction <add>, %148, %cst_88 [1] : vector<32x8xf32> to vector<32xf32>
    %150 = vector.shape_cast %149 : vector<32xf32> to vector<32x1xf32>
    %cst_89 = arith.constant 0.000000e+00 : f32
    %151 = vector.broadcast %cst_89 : f32 to vector<32x1xf32>
    %152 = arith.addf %151, %150 : vector<32x1xf32>
    %cst_90 = arith.constant 1.250000e-01 : f32
    %153 = vector.broadcast %cst_90 : f32 to vector<32x1xf32>
    %154 = arith.mulf %147, %153 : vector<32x1xf32>
    %cst_91 = arith.constant 1.250000e-01 : f32
    %155 = vector.broadcast %cst_91 : f32 to vector<32x1xf32>
    %156 = arith.mulf %152, %155 : vector<32x1xf32>
    %157 = arith.mulf %154, %154 : vector<32x1xf32>
    %158 = arith.subf %156, %157 : vector<32x1xf32>
    %cst_92 = arith.constant 0.000000e+00 : f32
    %159 = vector.broadcast %cst_92 : f32 to vector<32x1xf32>
    %160 = arith.maximumf %158, %159 : vector<32x1xf32>
    %cst_93 = arith.constant 9.99999974E-6 : f32
    %161 = vector.broadcast %cst_93 : f32 to vector<32x1xf32>
    %162 = arith.addf %160, %161 : vector<32x1xf32>
    %163 = math.rsqrt %162 : vector<32x1xf32>
    %164 = arith.mulf %141, %163 : vector<32x1xf32>
    %165 = arith.mulf %154, %164 : vector<32x1xf32>
    %166 = arith.subf %143, %165 : vector<32x1xf32>
    %167 = vector.broadcast %164 : vector<32x1xf32> to vector<32x8xf32>
    %168 = arith.mulf %139, %167 : vector<32x8xf32>
    %169 = vector.broadcast %166 : vector<32x1xf32> to vector<32x8xf32>
    %170 = arith.addf %168, %169 : vector<32x8xf32>
    %cst_94 = arith.constant 0.000000e+00 : f32
    %171 = vector.broadcast %cst_94 : f32 to vector<32x8xf32>
    %172 = arith.cmpf ogt, %170, %171 : vector<32x8xf32>
    %cst_95 = arith.constant 0.00999999977 : f32
    %173 = vector.broadcast %cst_95 : f32 to vector<32x8xf32>
    %174 = arith.mulf %173, %170 : vector<32x8xf32>
    %175 = arith.select %172, %170, %174 : vector<32x8xi1>, vector<32x8xf32>
    %176 = arith.truncf %175 : vector<32x8xf32> to vector<32x8xbf16>
    %c3_96 = arith.constant 3 : index
    %c0_97 = arith.constant 0 : index
    %c0_98 = arith.constant 0 : index
    %177 = vector.load %arg4[%c3_96, %c0_97, %c0_98] : memref<5x32x8xbf16, #tpu.memory_space<vmem>>, vector<1x32x8xbf16>
    %178 = vector.shape_cast %177 : vector<1x32x8xbf16> to vector<32x8xbf16>
    %179 = vector.shape_cast %176 : vector<32x8xbf16> to vector<1x32x8xbf16>
    tpu.vector_store %arg4[%c3_96, %c0_97, %c0_98], %179 {strides = array<i32>} : memref<5x32x8xbf16, #tpu.memory_space<vmem>>, vector<1x32x8xbf16>,
    %c4 = arith.constant 4 : index
    %c0_99 = arith.constant 0 : index
    %c0_100 = arith.constant 0 : index
    %180 = vector.load %arg0[%c4, %c0_99, %c0_100] : memref<5x32x144xbf16, #tpu.memory_space<vmem>>, vector<1x32x144xbf16>
    %181 = vector.shape_cast %180 : vector<1x32x144xbf16> to vector<32x144xbf16>
    %c4_101 = arith.constant 4 : index
    %c0_102 = arith.constant 0 : index
    %c0_103 = arith.constant 0 : index
    %182 = vector.load %arg1[%c4_101, %c0_102, %c0_103] : memref<5x144x8xbf16, #tpu.memory_space<vmem>>, vector<1x144x8xbf16>
    %183 = vector.shape_cast %182 : vector<1x144x8xbf16> to vector<144x8xbf16>
    %cst_104 = arith.constant dense<0.000000e+00> : vector<32x8xf32>
    %184 = tpu.matmul %181, %183, %cst_104 {dimension_numbers = #tpu.dot_dimension_numbers<[1], [0], [0], [1], [0, 0, 1, 1], [], []>} : vector<32x144xbf16>, vector<144x8xbf16>, vector<32x8xf32> -> vector<32x8xf32>
    %c4_105 = arith.constant 4 : index
    %c0_106 = arith.constant 0 : index
    %c0_107 = arith.constant 0 : index
    %185 = vector.load %arg2[%c4_105, %c0_106, %c0_107] : memref<5x32x1xf32, #tpu.memory_space<vmem>>, vector<1x32x1xf32>
    %186 = vector.shape_cast %185 : vector<1x32x1xf32> to vector<32x1xf32>
    %c4_108 = arith.constant 4 : index
    %c0_109 = arith.constant 0 : index
    %c0_110 = arith.constant 0 : index
    %187 = vector.load %arg3[%c4_108, %c0_109, %c0_110] : memref<5x32x1xf32, #tpu.memory_space<vmem>>, vector<1x32x1xf32>
    %188 = vector.shape_cast %187 : vector<1x32x1xf32> to vector<32x1xf32>
    %cst_111 = arith.constant dense<0.000000e+00> : vector<32xf32>
    %189 = vector.multi_reduction <add>, %184, %cst_111 [1] : vector<32x8xf32> to vector<32xf32>
    %190 = vector.shape_cast %189 : vector<32xf32> to vector<32x1xf32>
    %cst_112 = arith.constant 0.000000e+00 : f32
    %191 = vector.broadcast %cst_112 : f32 to vector<32x1xf32>
    %192 = arith.addf %191, %190 : vector<32x1xf32>
    %193 = arith.mulf %184, %184 : vector<32x8xf32>
    %cst_113 = arith.constant dense<0.000000e+00> : vector<32xf32>
    %194 = vector.multi_reduction <add>, %193, %cst_113 [1] : vector<32x8xf32> to vector<32xf32>
    %195 = vector.shape_cast %194 : vector<32xf32> to vector<32x1xf32>
    %cst_114 = arith.constant 0.000000e+00 : f32
    %196 = vector.broadcast %cst_114 : f32 to vector<32x1xf32>
    %197 = arith.addf %196, %195 : vector<32x1xf32>
    %cst_115 = arith.constant 1.250000e-01 : f32
    %198 = vector.broadcast %cst_115 : f32 to vector<32x1xf32>
    %199 = arith.mulf %192, %198 : vector<32x1xf32>
    %cst_116 = arith.constant 1.250000e-01 : f32
    %200 = vector.broadcast %cst_116 : f32 to vector<32x1xf32>
    %201 = arith.mulf %197, %200 : vector<32x1xf32>
    %202 = arith.mulf %199, %199 : vector<32x1xf32>
    %203 = arith.subf %201, %202 : vector<32x1xf32>
    %cst_117 = arith.constant 0.000000e+00 : f32
    %204 = vector.broadcast %cst_117 : f32 to vector<32x1xf32>
    %205 = arith.maximumf %203, %204 : vector<32x1xf32>
    %cst_118 = arith.constant 9.99999974E-6 : f32
    %206 = vector.broadcast %cst_118 : f32 to vector<32x1xf32>
    %207 = arith.addf %205, %206 : vector<32x1xf32>
    %208 = math.rsqrt %207 : vector<32x1xf32>
    %209 = arith.mulf %186, %208 : vector<32x1xf32>
    %210 = arith.mulf %199, %209 : vector<32x1xf32>
    %211 = arith.subf %188, %210 : vector<32x1xf32>
    %212 = vector.broadcast %209 : vector<32x1xf32> to vector<32x8xf32>
    %213 = arith.mulf %184, %212 : vector<32x8xf32>
    %214 = vector.broadcast %211 : vector<32x1xf32> to vector<32x8xf32>
    %215 = arith.addf %213, %214 : vector<32x8xf32>
    %cst_119 = arith.constant 0.000000e+00 : f32
    %216 = vector.broadcast %cst_119 : f32 to vector<32x8xf32>
    %217 = arith.cmpf ogt, %215, %216 : vector<32x8xf32>
    %cst_120 = arith.constant 0.00999999977 : f32
    %218 = vector.broadcast %cst_120 : f32 to vector<32x8xf32>
    %219 = arith.mulf %218, %215 : vector<32x8xf32>
    %220 = arith.select %217, %215, %219 : vector<32x8xi1>, vector<32x8xf32>
    %221 = arith.truncf %220 : vector<32x8xf32> to vector<32x8xbf16>
    %c4_121 = arith.constant 4 : index
    %c0_122 = arith.constant 0 : index
    %c0_123 = arith.constant 0 : index
    %222 = vector.load %arg4[%c4_121, %c0_122, %c0_123] : memref<5x32x8xbf16, #tpu.memory_space<vmem>>, vector<1x32x8xbf16>
    %223 = vector.shape_cast %222 : vector<1x32x8xbf16> to vector<32x8xbf16>
    %224 = vector.shape_cast %221 : vector<32x8xbf16> to vector<1x32x8xbf16>
    tpu.vector_store %arg4[%c4_121, %c0_122, %c0_123], %224 {strides = array<i32>} : memref<5x32x8xbf16, #tpu.memory_space<vmem>>, vector<1x32x8xbf16>,
    return
  }
}

module attributes {stable_mosaic.version = 11 : i64} {
  func.func @_latent_tail_kernel(%arg0: memref<2x128xf32, #tpu.memory_space<vmem>>, %arg1: memref<4x2x128xf32, #tpu.memory_space<vmem>>, %arg2: memref<2x8xf32, #tpu.memory_space<vmem>>, %arg3: memref<128x16xf32, #tpu.memory_space<vmem>>, %arg4: memref<1x16xf32, #tpu.memory_space<vmem>>, %arg5: memref<4x128x5xf32, #tpu.memory_space<vmem>>, %arg6: memref<4x1x5xf32, #tpu.memory_space<vmem>>, %arg7: memref<8x128xf32, #tpu.memory_space<vmem>>, %arg8: memref<4x5x128xf32, #tpu.memory_space<vmem>>, %arg9: memref<1x128xf32, #tpu.memory_space<vmem>>, %arg10: memref<2x16xf32, #tpu.memory_space<vmem>>, %arg11: memref<4x2x5xf32, #tpu.memory_space<vmem>>, %arg12: memref<2x128xf32, #tpu.memory_space<vmem>>) attributes {dimension_semantics = [], scalar_prefetch = 0 : i64, scratch_operands = 0 : i64, tpu.core_type = #tpu.core_type<tc>} {
    %c0 = arith.constant 0 : index
    %c0_0 = arith.constant 0 : index
    %0 = vector.load %arg0[%c0, %c0_0] : memref<2x128xf32, #tpu.memory_space<vmem>>, vector<2x128xf32>
    %c0_1 = arith.constant 0 : index
    %c0_2 = arith.constant 0 : index
    %1 = vector.load %arg3[%c0_1, %c0_2] : memref<128x16xf32, #tpu.memory_space<vmem>>, vector<128x16xf32>
    %cst = arith.constant dense<0.000000e+00> : vector<2x16xf32>
    %2 = tpu.matmul %0, %1, %cst {dimension_numbers = #tpu.dot_dimension_numbers<[1], [0], [0], [1], [0, 0, 1, 1], [], []>} : vector<2x128xf32>, vector<128x16xf32>, vector<2x16xf32> -> vector<2x16xf32>
    %c0_3 = arith.constant 0 : index
    %c0_4 = arith.constant 0 : index
    %3 = vector.load %arg4[%c0_3, %c0_4] : memref<1x16xf32, #tpu.memory_space<vmem>>, vector<1x16xf32>
    %4 = vector.broadcast %3 : vector<1x16xf32> to vector<2x16xf32>
    %5 = arith.addf %2, %4 : vector<2x16xf32>
    %c0_5 = arith.constant 0 : index
    %c0_6 = arith.constant 0 : index
    %6 = vector.load %arg10[%c0_5, %c0_6] : memref<2x16xf32, #tpu.memory_space<vmem>>, vector<2x16xf32>
    tpu.vector_store %arg10[%c0_5, %c0_6], %5 {strides = array<i32>} : memref<2x16xf32, #tpu.memory_space<vmem>>, vector<2x16xf32>,
    %7 = vector.extract_strided_slice %5 {offsets = [0, 0], sizes = [2, 8], strides = [1, 1]} : vector<2x16xf32> to vector<2x8xf32>
    %8 = vector.extract_strided_slice %5 {offsets = [0, 8], sizes = [2, 8], strides = [1, 1]} : vector<2x16xf32> to vector<2x8xf32>
    %c0_7 = arith.constant 0 : index
    %c0_8 = arith.constant 0 : index
    %9 = vector.load %arg2[%c0_7, %c0_8] : memref<2x8xf32, #tpu.memory_space<vmem>>, vector<2x8xf32>
    %cst_9 = arith.constant 5.000000e-01 : f32
    %10 = vector.broadcast %cst_9 : f32 to vector<2x8xf32>
    %11 = arith.mulf %10, %8 : vector<2x8xf32>
    %12 = math.exp %11 : vector<2x8xf32>
    %13 = arith.mulf %9, %12 : vector<2x8xf32>
    %14 = arith.addf %13, %7 : vector<2x8xf32>
    %c0_10 = arith.constant 0 : index
    %c0_11 = arith.constant 0 : index
    %15 = vector.load %arg7[%c0_10, %c0_11] : memref<8x128xf32, #tpu.memory_space<vmem>>, vector<8x128xf32>
    %cst_12 = arith.constant dense<0.000000e+00> : vector<2x128xf32>
    %16 = tpu.matmul %14, %15, %cst_12 {dimension_numbers = #tpu.dot_dimension_numbers<[1], [0], [0], [1], [0, 0, 1, 1], [], []>} : vector<2x8xf32>, vector<8x128xf32>, vector<2x128xf32> -> vector<2x128xf32>
    %c0_13 = arith.constant 0 : index
    %c0_14 = arith.constant 0 : index
    %17 = vector.load %arg9[%c0_13, %c0_14] : memref<1x128xf32, #tpu.memory_space<vmem>>, vector<1x128xf32>
    %18 = vector.broadcast %17 : vector<1x128xf32> to vector<2x128xf32>
    %19 = arith.addf %16, %18 : vector<2x128xf32>
    %c0_15 = arith.constant 0 : index
    %c0_16 = arith.constant 0 : index
    %c0_17 = arith.constant 0 : index
    %20 = vector.load %arg1[%c0_15, %c0_16, %c0_17] : memref<4x2x128xf32, #tpu.memory_space<vmem>>, vector<1x2x128xf32>
    %21 = vector.shape_cast %20 : vector<1x2x128xf32> to vector<2x128xf32>
    %c0_18 = arith.constant 0 : index
    %c0_19 = arith.constant 0 : index
    %c0_20 = arith.constant 0 : index
    %22 = vector.load %arg5[%c0_18, %c0_19, %c0_20] : memref<4x128x5xf32, #tpu.memory_space<vmem>>, vector<1x128x5xf32>
    %23 = vector.shape_cast %22 : vector<1x128x5xf32> to vector<128x5xf32>
    %cst_21 = arith.constant dense<0.000000e+00> : vector<2x5xf32>
    %24 = tpu.matmul %21, %23, %cst_21 {dimension_numbers = #tpu.dot_dimension_numbers<[1], [0], [0], [1], [0, 0, 1, 1], [], []>} : vector<2x128xf32>, vector<128x5xf32>, vector<2x5xf32> -> vector<2x5xf32>
    %c0_22 = arith.constant 0 : index
    %c0_23 = arith.constant 0 : index
    %c0_24 = arith.constant 0 : index
    %25 = vector.load %arg6[%c0_22, %c0_23, %c0_24] : memref<4x1x5xf32, #tpu.memory_space<vmem>>, vector<1x1x5xf32>
    %26 = vector.shape_cast %25 : vector<1x1x5xf32> to vector<1x5xf32>
    %27 = vector.broadcast %26 : vector<1x5xf32> to vector<2x5xf32>
    %28 = arith.addf %24, %27 : vector<2x5xf32>
    %cst_25 = arith.constant 0.000000e+00 : f32
    %29 = vector.broadcast %cst_25 : f32 to vector<2x5xf32>
    %30 = arith.cmpf ogt, %28, %29 : vector<2x5xf32>
    %cst_26 = arith.constant 0.00999999977 : f32
    %31 = vector.broadcast %cst_26 : f32 to vector<2x5xf32>
    %32 = arith.mulf %31, %28 : vector<2x5xf32>
    %33 = arith.select %30, %28, %32 : vector<2x5xi1>, vector<2x5xf32>
    %cst_27 = arith.constant dense<0xFF800000> : vector<2xf32>
    %34 = vector.multi_reduction <maximumf>, %33, %cst_27 [1] : vector<2x5xf32> to vector<2xf32>
    %35 = vector.shape_cast %34 : vector<2xf32> to vector<2x1xf32>
    %36 = vector.broadcast %35 : vector<2x1xf32> to vector<2x5xf32>
    %37 = arith.subf %33, %36 : vector<2x5xf32>
    %38 = math.exp %37 : vector<2x5xf32>
    %cst_28 = arith.constant dense<0.000000e+00> : vector<2xf32>
    %39 = vector.multi_reduction <add>, %38, %cst_28 [1] : vector<2x5xf32> to vector<2xf32>
    %40 = vector.shape_cast %39 : vector<2xf32> to vector<2x1xf32>
    %41 = tpu.reciprocal %40 {approx = true} : vector<2x1xf32> -> vector<2x1xf32>
    %42 = vector.broadcast %41 : vector<2x1xf32> to vector<2x5xf32>
    %43 = arith.mulf %38, %42 : vector<2x5xf32>
    %c0_29 = arith.constant 0 : index
    %c0_30 = arith.constant 0 : index
    %c0_31 = arith.constant 0 : index
    %44 = vector.load %arg11[%c0_29, %c0_30, %c0_31] : memref<4x2x5xf32, #tpu.memory_space<vmem>>, vector<1x2x5xf32>
    %45 = vector.shape_cast %44 : vector<1x2x5xf32> to vector<2x5xf32>
    %46 = vector.shape_cast %43 : vector<2x5xf32> to vector<1x2x5xf32>
    tpu.vector_store %arg11[%c0_29, %c0_30, %c0_31], %46 {strides = array<i32>} : memref<4x2x5xf32, #tpu.memory_space<vmem>>, vector<1x2x5xf32>,
    %c0_32 = arith.constant 0 : index
    %c0_33 = arith.constant 0 : index
    %c0_34 = arith.constant 0 : index
    %47 = vector.load %arg8[%c0_32, %c0_33, %c0_34] : memref<4x5x128xf32, #tpu.memory_space<vmem>>, vector<1x5x128xf32>
    %48 = vector.shape_cast %47 : vector<1x5x128xf32> to vector<5x128xf32>
    %cst_35 = arith.constant dense<0.000000e+00> : vector<2x128xf32>
    %49 = tpu.matmul %43, %48, %cst_35 {dimension_numbers = #tpu.dot_dimension_numbers<[1], [0], [0], [1], [0, 0, 1, 1], [], []>} : vector<2x5xf32>, vector<5x128xf32>, vector<2x128xf32> -> vector<2x128xf32>
    %50 = arith.addf %19, %49 : vector<2x128xf32>
    %c1 = arith.constant 1 : index
    %c0_36 = arith.constant 0 : index
    %c0_37 = arith.constant 0 : index
    %51 = vector.load %arg1[%c1, %c0_36, %c0_37] : memref<4x2x128xf32, #tpu.memory_space<vmem>>, vector<1x2x128xf32>
    %52 = vector.shape_cast %51 : vector<1x2x128xf32> to vector<2x128xf32>
    %c1_38 = arith.constant 1 : index
    %c0_39 = arith.constant 0 : index
    %c0_40 = arith.constant 0 : index
    %53 = vector.load %arg5[%c1_38, %c0_39, %c0_40] : memref<4x128x5xf32, #tpu.memory_space<vmem>>, vector<1x128x5xf32>
    %54 = vector.shape_cast %53 : vector<1x128x5xf32> to vector<128x5xf32>
    %cst_41 = arith.constant dense<0.000000e+00> : vector<2x5xf32>
    %55 = tpu.matmul %52, %54, %cst_41 {dimension_numbers = #tpu.dot_dimension_numbers<[1], [0], [0], [1], [0, 0, 1, 1], [], []>} : vector<2x128xf32>, vector<128x5xf32>, vector<2x5xf32> -> vector<2x5xf32>
    %c1_42 = arith.constant 1 : index
    %c0_43 = arith.constant 0 : index
    %c0_44 = arith.constant 0 : index
    %56 = vector.load %arg6[%c1_42, %c0_43, %c0_44] : memref<4x1x5xf32, #tpu.memory_space<vmem>>, vector<1x1x5xf32>
    %57 = vector.shape_cast %56 : vector<1x1x5xf32> to vector<1x5xf32>
    %58 = vector.broadcast %57 : vector<1x5xf32> to vector<2x5xf32>
    %59 = arith.addf %55, %58 : vector<2x5xf32>
    %cst_45 = arith.constant 0.000000e+00 : f32
    %60 = vector.broadcast %cst_45 : f32 to vector<2x5xf32>
    %61 = arith.cmpf ogt, %59, %60 : vector<2x5xf32>
    %cst_46 = arith.constant 0.00999999977 : f32
    %62 = vector.broadcast %cst_46 : f32 to vector<2x5xf32>
    %63 = arith.mulf %62, %59 : vector<2x5xf32>
    %64 = arith.select %61, %59, %63 : vector<2x5xi1>, vector<2x5xf32>
    %cst_47 = arith.constant dense<0xFF800000> : vector<2xf32>
    %65 = vector.multi_reduction <maximumf>, %64, %cst_47 [1] : vector<2x5xf32> to vector<2xf32>
    %66 = vector.shape_cast %65 : vector<2xf32> to vector<2x1xf32>
    %67 = vector.broadcast %66 : vector<2x1xf32> to vector<2x5xf32>
    %68 = arith.subf %64, %67 : vector<2x5xf32>
    %69 = math.exp %68 : vector<2x5xf32>
    %cst_48 = arith.constant dense<0.000000e+00> : vector<2xf32>
    %70 = vector.multi_reduction <add>, %69, %cst_48 [1] : vector<2x5xf32> to vector<2xf32>
    %71 = vector.shape_cast %70 : vector<2xf32> to vector<2x1xf32>
    %72 = tpu.reciprocal %71 {approx = true} : vector<2x1xf32> -> vector<2x1xf32>
    %73 = vector.broadcast %72 : vector<2x1xf32> to vector<2x5xf32>
    %74 = arith.mulf %69, %73 : vector<2x5xf32>
    %c1_49 = arith.constant 1 : index
    %c0_50 = arith.constant 0 : index
    %c0_51 = arith.constant 0 : index
    %75 = vector.load %arg11[%c1_49, %c0_50, %c0_51] : memref<4x2x5xf32, #tpu.memory_space<vmem>>, vector<1x2x5xf32>
    %76 = vector.shape_cast %75 : vector<1x2x5xf32> to vector<2x5xf32>
    %77 = vector.shape_cast %74 : vector<2x5xf32> to vector<1x2x5xf32>
    tpu.vector_store %arg11[%c1_49, %c0_50, %c0_51], %77 {strides = array<i32>} : memref<4x2x5xf32, #tpu.memory_space<vmem>>, vector<1x2x5xf32>,
    %c1_52 = arith.constant 1 : index
    %c0_53 = arith.constant 0 : index
    %c0_54 = arith.constant 0 : index
    %78 = vector.load %arg8[%c1_52, %c0_53, %c0_54] : memref<4x5x128xf32, #tpu.memory_space<vmem>>, vector<1x5x128xf32>
    %79 = vector.shape_cast %78 : vector<1x5x128xf32> to vector<5x128xf32>
    %cst_55 = arith.constant dense<0.000000e+00> : vector<2x128xf32>
    %80 = tpu.matmul %74, %79, %cst_55 {dimension_numbers = #tpu.dot_dimension_numbers<[1], [0], [0], [1], [0, 0, 1, 1], [], []>} : vector<2x5xf32>, vector<5x128xf32>, vector<2x128xf32> -> vector<2x128xf32>
    %81 = arith.addf %50, %80 : vector<2x128xf32>
    %c2 = arith.constant 2 : index
    %c0_56 = arith.constant 0 : index
    %c0_57 = arith.constant 0 : index
    %82 = vector.load %arg1[%c2, %c0_56, %c0_57] : memref<4x2x128xf32, #tpu.memory_space<vmem>>, vector<1x2x128xf32>
    %83 = vector.shape_cast %82 : vector<1x2x128xf32> to vector<2x128xf32>
    %c2_58 = arith.constant 2 : index
    %c0_59 = arith.constant 0 : index
    %c0_60 = arith.constant 0 : index
    %84 = vector.load %arg5[%c2_58, %c0_59, %c0_60] : memref<4x128x5xf32, #tpu.memory_space<vmem>>, vector<1x128x5xf32>
    %85 = vector.shape_cast %84 : vector<1x128x5xf32> to vector<128x5xf32>
    %cst_61 = arith.constant dense<0.000000e+00> : vector<2x5xf32>
    %86 = tpu.matmul %83, %85, %cst_61 {dimension_numbers = #tpu.dot_dimension_numbers<[1], [0], [0], [1], [0, 0, 1, 1], [], []>} : vector<2x128xf32>, vector<128x5xf32>, vector<2x5xf32> -> vector<2x5xf32>
    %c2_62 = arith.constant 2 : index
    %c0_63 = arith.constant 0 : index
    %c0_64 = arith.constant 0 : index
    %87 = vector.load %arg6[%c2_62, %c0_63, %c0_64] : memref<4x1x5xf32, #tpu.memory_space<vmem>>, vector<1x1x5xf32>
    %88 = vector.shape_cast %87 : vector<1x1x5xf32> to vector<1x5xf32>
    %89 = vector.broadcast %88 : vector<1x5xf32> to vector<2x5xf32>
    %90 = arith.addf %86, %89 : vector<2x5xf32>
    %cst_65 = arith.constant 0.000000e+00 : f32
    %91 = vector.broadcast %cst_65 : f32 to vector<2x5xf32>
    %92 = arith.cmpf ogt, %90, %91 : vector<2x5xf32>
    %cst_66 = arith.constant 0.00999999977 : f32
    %93 = vector.broadcast %cst_66 : f32 to vector<2x5xf32>
    %94 = arith.mulf %93, %90 : vector<2x5xf32>
    %95 = arith.select %92, %90, %94 : vector<2x5xi1>, vector<2x5xf32>
    %cst_67 = arith.constant dense<0xFF800000> : vector<2xf32>
    %96 = vector.multi_reduction <maximumf>, %95, %cst_67 [1] : vector<2x5xf32> to vector<2xf32>
    %97 = vector.shape_cast %96 : vector<2xf32> to vector<2x1xf32>
    %98 = vector.broadcast %97 : vector<2x1xf32> to vector<2x5xf32>
    %99 = arith.subf %95, %98 : vector<2x5xf32>
    %100 = math.exp %99 : vector<2x5xf32>
    %cst_68 = arith.constant dense<0.000000e+00> : vector<2xf32>
    %101 = vector.multi_reduction <add>, %100, %cst_68 [1] : vector<2x5xf32> to vector<2xf32>
    %102 = vector.shape_cast %101 : vector<2xf32> to vector<2x1xf32>
    %103 = tpu.reciprocal %102 {approx = true} : vector<2x1xf32> -> vector<2x1xf32>
    %104 = vector.broadcast %103 : vector<2x1xf32> to vector<2x5xf32>
    %105 = arith.mulf %100, %104 : vector<2x5xf32>
    %c2_69 = arith.constant 2 : index
    %c0_70 = arith.constant 0 : index
    %c0_71 = arith.constant 0 : index
    %106 = vector.load %arg11[%c2_69, %c0_70, %c0_71] : memref<4x2x5xf32, #tpu.memory_space<vmem>>, vector<1x2x5xf32>
    %107 = vector.shape_cast %106 : vector<1x2x5xf32> to vector<2x5xf32>
    %108 = vector.shape_cast %105 : vector<2x5xf32> to vector<1x2x5xf32>
    tpu.vector_store %arg11[%c2_69, %c0_70, %c0_71], %108 {strides = array<i32>} : memref<4x2x5xf32, #tpu.memory_space<vmem>>, vector<1x2x5xf32>,
    %c2_72 = arith.constant 2 : index
    %c0_73 = arith.constant 0 : index
    %c0_74 = arith.constant 0 : index
    %109 = vector.load %arg8[%c2_72, %c0_73, %c0_74] : memref<4x5x128xf32, #tpu.memory_space<vmem>>, vector<1x5x128xf32>
    %110 = vector.shape_cast %109 : vector<1x5x128xf32> to vector<5x128xf32>
    %cst_75 = arith.constant dense<0.000000e+00> : vector<2x128xf32>
    %111 = tpu.matmul %105, %110, %cst_75 {dimension_numbers = #tpu.dot_dimension_numbers<[1], [0], [0], [1], [0, 0, 1, 1], [], []>} : vector<2x5xf32>, vector<5x128xf32>, vector<2x128xf32> -> vector<2x128xf32>
    %112 = arith.addf %81, %111 : vector<2x128xf32>
    %c3 = arith.constant 3 : index
    %c0_76 = arith.constant 0 : index
    %c0_77 = arith.constant 0 : index
    %113 = vector.load %arg1[%c3, %c0_76, %c0_77] : memref<4x2x128xf32, #tpu.memory_space<vmem>>, vector<1x2x128xf32>
    %114 = vector.shape_cast %113 : vector<1x2x128xf32> to vector<2x128xf32>
    %c3_78 = arith.constant 3 : index
    %c0_79 = arith.constant 0 : index
    %c0_80 = arith.constant 0 : index
    %115 = vector.load %arg5[%c3_78, %c0_79, %c0_80] : memref<4x128x5xf32, #tpu.memory_space<vmem>>, vector<1x128x5xf32>
    %116 = vector.shape_cast %115 : vector<1x128x5xf32> to vector<128x5xf32>
    %cst_81 = arith.constant dense<0.000000e+00> : vector<2x5xf32>
    %117 = tpu.matmul %114, %116, %cst_81 {dimension_numbers = #tpu.dot_dimension_numbers<[1], [0], [0], [1], [0, 0, 1, 1], [], []>} : vector<2x128xf32>, vector<128x5xf32>, vector<2x5xf32> -> vector<2x5xf32>
    %c3_82 = arith.constant 3 : index
    %c0_83 = arith.constant 0 : index
    %c0_84 = arith.constant 0 : index
    %118 = vector.load %arg6[%c3_82, %c0_83, %c0_84] : memref<4x1x5xf32, #tpu.memory_space<vmem>>, vector<1x1x5xf32>
    %119 = vector.shape_cast %118 : vector<1x1x5xf32> to vector<1x5xf32>
    %120 = vector.broadcast %119 : vector<1x5xf32> to vector<2x5xf32>
    %121 = arith.addf %117, %120 : vector<2x5xf32>
    %cst_85 = arith.constant 0.000000e+00 : f32
    %122 = vector.broadcast %cst_85 : f32 to vector<2x5xf32>
    %123 = arith.cmpf ogt, %121, %122 : vector<2x5xf32>
    %cst_86 = arith.constant 0.00999999977 : f32
    %124 = vector.broadcast %cst_86 : f32 to vector<2x5xf32>
    %125 = arith.mulf %124, %121 : vector<2x5xf32>
    %126 = arith.select %123, %121, %125 : vector<2x5xi1>, vector<2x5xf32>
    %cst_87 = arith.constant dense<0xFF800000> : vector<2xf32>
    %127 = vector.multi_reduction <maximumf>, %126, %cst_87 [1] : vector<2x5xf32> to vector<2xf32>
    %128 = vector.shape_cast %127 : vector<2xf32> to vector<2x1xf32>
    %129 = vector.broadcast %128 : vector<2x1xf32> to vector<2x5xf32>
    %130 = arith.subf %126, %129 : vector<2x5xf32>
    %131 = math.exp %130 : vector<2x5xf32>
    %cst_88 = arith.constant dense<0.000000e+00> : vector<2xf32>
    %132 = vector.multi_reduction <add>, %131, %cst_88 [1] : vector<2x5xf32> to vector<2xf32>
    %133 = vector.shape_cast %132 : vector<2xf32> to vector<2x1xf32>
    %134 = tpu.reciprocal %133 {approx = true} : vector<2x1xf32> -> vector<2x1xf32>
    %135 = vector.broadcast %134 : vector<2x1xf32> to vector<2x5xf32>
    %136 = arith.mulf %131, %135 : vector<2x5xf32>
    %c3_89 = arith.constant 3 : index
    %c0_90 = arith.constant 0 : index
    %c0_91 = arith.constant 0 : index
    %137 = vector.load %arg11[%c3_89, %c0_90, %c0_91] : memref<4x2x5xf32, #tpu.memory_space<vmem>>, vector<1x2x5xf32>
    %138 = vector.shape_cast %137 : vector<1x2x5xf32> to vector<2x5xf32>
    %139 = vector.shape_cast %136 : vector<2x5xf32> to vector<1x2x5xf32>
    tpu.vector_store %arg11[%c3_89, %c0_90, %c0_91], %139 {strides = array<i32>} : memref<4x2x5xf32, #tpu.memory_space<vmem>>, vector<1x2x5xf32>,
    %c3_92 = arith.constant 3 : index
    %c0_93 = arith.constant 0 : index
    %c0_94 = arith.constant 0 : index
    %140 = vector.load %arg8[%c3_92, %c0_93, %c0_94] : memref<4x5x128xf32, #tpu.memory_space<vmem>>, vector<1x5x128xf32>
    %141 = vector.shape_cast %140 : vector<1x5x128xf32> to vector<5x128xf32>
    %cst_95 = arith.constant dense<0.000000e+00> : vector<2x128xf32>
    %142 = tpu.matmul %136, %141, %cst_95 {dimension_numbers = #tpu.dot_dimension_numbers<[1], [0], [0], [1], [0, 0, 1, 1], [], []>} : vector<2x5xf32>, vector<5x128xf32>, vector<2x128xf32> -> vector<2x128xf32>
    %143 = arith.addf %112, %142 : vector<2x128xf32>
    %c0_96 = arith.constant 0 : index
    %c0_97 = arith.constant 0 : index
    %144 = vector.load %arg12[%c0_96, %c0_97] : memref<2x128xf32, #tpu.memory_space<vmem>>, vector<2x128xf32>
    tpu.vector_store %arg12[%c0_96, %c0_97], %143 {strides = array<i32>} : memref<2x128xf32, #tpu.memory_space<vmem>>, vector<2x128xf32>,
    return
  }
}

module attributes {stable_mosaic.version = 11 : i64} {
  func.func @_deconv_bn_kernel(%arg0: memref<4x16x128xbf16, #tpu.memory_space<vmem>>, %arg1: memref<128x8xbf16, #tpu.memory_space<vmem>>, %arg2: memref<16x1xf32, #tpu.memory_space<vmem>>, %arg3: memref<16x1xf32, #tpu.memory_space<vmem>>, %arg4: memref<4x16x8xbf16, #tpu.memory_space<vmem>>) attributes {dimension_semantics = [], scalar_prefetch = 0 : i64, scratch_operands = 0 : i64, tpu.core_type = #tpu.core_type<tc>} {
    %c0 = arith.constant 0 : index
    %c0_0 = arith.constant 0 : index
    %c0_1 = arith.constant 0 : index
    %0 = vector.load %arg0[%c0, %c0_0, %c0_1] : memref<4x16x128xbf16, #tpu.memory_space<vmem>>, vector<1x16x128xbf16>
    %1 = vector.shape_cast %0 : vector<1x16x128xbf16> to vector<16x128xbf16>
    %c0_2 = arith.constant 0 : index
    %c0_3 = arith.constant 0 : index
    %2 = vector.load %arg1[%c0_2, %c0_3] : memref<128x8xbf16, #tpu.memory_space<vmem>>, vector<128x8xbf16>
    %cst = arith.constant dense<0.000000e+00> : vector<16x8xf32>
    %3 = tpu.matmul %1, %2, %cst {dimension_numbers = #tpu.dot_dimension_numbers<[1], [0], [0], [1], [0, 0, 1, 1], [], []>} : vector<16x128xbf16>, vector<128x8xbf16>, vector<16x8xf32> -> vector<16x8xf32>
    %c1 = arith.constant 1 : index
    %c0_4 = arith.constant 0 : index
    %c0_5 = arith.constant 0 : index
    %4 = vector.load %arg0[%c1, %c0_4, %c0_5] : memref<4x16x128xbf16, #tpu.memory_space<vmem>>, vector<1x16x128xbf16>
    %5 = vector.shape_cast %4 : vector<1x16x128xbf16> to vector<16x128xbf16>
    %c0_6 = arith.constant 0 : index
    %c0_7 = arith.constant 0 : index
    %6 = vector.load %arg1[%c0_6, %c0_7] : memref<128x8xbf16, #tpu.memory_space<vmem>>, vector<128x8xbf16>
    %cst_8 = arith.constant dense<0.000000e+00> : vector<16x8xf32>
    %7 = tpu.matmul %5, %6, %cst_8 {dimension_numbers = #tpu.dot_dimension_numbers<[1], [0], [0], [1], [0, 0, 1, 1], [], []>} : vector<16x128xbf16>, vector<128x8xbf16>, vector<16x8xf32> -> vector<16x8xf32>
    %c2 = arith.constant 2 : index
    %c0_9 = arith.constant 0 : index
    %c0_10 = arith.constant 0 : index
    %8 = vector.load %arg0[%c2, %c0_9, %c0_10] : memref<4x16x128xbf16, #tpu.memory_space<vmem>>, vector<1x16x128xbf16>
    %9 = vector.shape_cast %8 : vector<1x16x128xbf16> to vector<16x128xbf16>
    %c0_11 = arith.constant 0 : index
    %c0_12 = arith.constant 0 : index
    %10 = vector.load %arg1[%c0_11, %c0_12] : memref<128x8xbf16, #tpu.memory_space<vmem>>, vector<128x8xbf16>
    %cst_13 = arith.constant dense<0.000000e+00> : vector<16x8xf32>
    %11 = tpu.matmul %9, %10, %cst_13 {dimension_numbers = #tpu.dot_dimension_numbers<[1], [0], [0], [1], [0, 0, 1, 1], [], []>} : vector<16x128xbf16>, vector<128x8xbf16>, vector<16x8xf32> -> vector<16x8xf32>
    %c3 = arith.constant 3 : index
    %c0_14 = arith.constant 0 : index
    %c0_15 = arith.constant 0 : index
    %12 = vector.load %arg0[%c3, %c0_14, %c0_15] : memref<4x16x128xbf16, #tpu.memory_space<vmem>>, vector<1x16x128xbf16>
    %13 = vector.shape_cast %12 : vector<1x16x128xbf16> to vector<16x128xbf16>
    %c0_16 = arith.constant 0 : index
    %c0_17 = arith.constant 0 : index
    %14 = vector.load %arg1[%c0_16, %c0_17] : memref<128x8xbf16, #tpu.memory_space<vmem>>, vector<128x8xbf16>
    %cst_18 = arith.constant dense<0.000000e+00> : vector<16x8xf32>
    %15 = tpu.matmul %13, %14, %cst_18 {dimension_numbers = #tpu.dot_dimension_numbers<[1], [0], [0], [1], [0, 0, 1, 1], [], []>} : vector<16x128xbf16>, vector<128x8xbf16>, vector<16x8xf32> -> vector<16x8xf32>
    %c0_19 = arith.constant 0 : index
    %c0_20 = arith.constant 0 : index
    %16 = vector.load %arg2[%c0_19, %c0_20] : memref<16x1xf32, #tpu.memory_space<vmem>>, vector<16x1xf32>
    %c0_21 = arith.constant 0 : index
    %c0_22 = arith.constant 0 : index
    %17 = vector.load %arg3[%c0_21, %c0_22] : memref<16x1xf32, #tpu.memory_space<vmem>>, vector<16x1xf32>
    %cst_23 = arith.constant dense<0.000000e+00> : vector<16xf32>
    %18 = vector.multi_reduction <add>, %3, %cst_23 [1] : vector<16x8xf32> to vector<16xf32>
    %19 = vector.shape_cast %18 : vector<16xf32> to vector<16x1xf32>
    %cst_24 = arith.constant 0.000000e+00 : f32
    %20 = vector.broadcast %cst_24 : f32 to vector<16x1xf32>
    %21 = arith.addf %20, %19 : vector<16x1xf32>
    %cst_25 = arith.constant dense<0.000000e+00> : vector<16xf32>
    %22 = vector.multi_reduction <add>, %7, %cst_25 [1] : vector<16x8xf32> to vector<16xf32>
    %23 = vector.shape_cast %22 : vector<16xf32> to vector<16x1xf32>
    %24 = arith.addf %21, %23 : vector<16x1xf32>
    %cst_26 = arith.constant dense<0.000000e+00> : vector<16xf32>
    %25 = vector.multi_reduction <add>, %11, %cst_26 [1] : vector<16x8xf32> to vector<16xf32>
    %26 = vector.shape_cast %25 : vector<16xf32> to vector<16x1xf32>
    %27 = arith.addf %24, %26 : vector<16x1xf32>
    %cst_27 = arith.constant dense<0.000000e+00> : vector<16xf32>
    %28 = vector.multi_reduction <add>, %15, %cst_27 [1] : vector<16x8xf32> to vector<16xf32>
    %29 = vector.shape_cast %28 : vector<16xf32> to vector<16x1xf32>
    %30 = arith.addf %27, %29 : vector<16x1xf32>
    %31 = arith.mulf %3, %3 : vector<16x8xf32>
    %cst_28 = arith.constant dense<0.000000e+00> : vector<16xf32>
    %32 = vector.multi_reduction <add>, %31, %cst_28 [1] : vector<16x8xf32> to vector<16xf32>
    %33 = vector.shape_cast %32 : vector<16xf32> to vector<16x1xf32>
    %cst_29 = arith.constant 0.000000e+00 : f32
    %34 = vector.broadcast %cst_29 : f32 to vector<16x1xf32>
    %35 = arith.addf %34, %33 : vector<16x1xf32>
    %36 = arith.mulf %7, %7 : vector<16x8xf32>
    %cst_30 = arith.constant dense<0.000000e+00> : vector<16xf32>
    %37 = vector.multi_reduction <add>, %36, %cst_30 [1] : vector<16x8xf32> to vector<16xf32>
    %38 = vector.shape_cast %37 : vector<16xf32> to vector<16x1xf32>
    %39 = arith.addf %35, %38 : vector<16x1xf32>
    %40 = arith.mulf %11, %11 : vector<16x8xf32>
    %cst_31 = arith.constant dense<0.000000e+00> : vector<16xf32>
    %41 = vector.multi_reduction <add>, %40, %cst_31 [1] : vector<16x8xf32> to vector<16xf32>
    %42 = vector.shape_cast %41 : vector<16xf32> to vector<16x1xf32>
    %43 = arith.addf %39, %42 : vector<16x1xf32>
    %44 = arith.mulf %15, %15 : vector<16x8xf32>
    %cst_32 = arith.constant dense<0.000000e+00> : vector<16xf32>
    %45 = vector.multi_reduction <add>, %44, %cst_32 [1] : vector<16x8xf32> to vector<16xf32>
    %46 = vector.shape_cast %45 : vector<16xf32> to vector<16x1xf32>
    %47 = arith.addf %43, %46 : vector<16x1xf32>
    %cst_33 = arith.constant 3.125000e-02 : f32
    %48 = vector.broadcast %cst_33 : f32 to vector<16x1xf32>
    %49 = arith.mulf %30, %48 : vector<16x1xf32>
    %cst_34 = arith.constant 3.125000e-02 : f32
    %50 = vector.broadcast %cst_34 : f32 to vector<16x1xf32>
    %51 = arith.mulf %47, %50 : vector<16x1xf32>
    %52 = arith.mulf %49, %49 : vector<16x1xf32>
    %53 = arith.subf %51, %52 : vector<16x1xf32>
    %cst_35 = arith.constant 0.000000e+00 : f32
    %54 = vector.broadcast %cst_35 : f32 to vector<16x1xf32>
    %55 = arith.maximumf %53, %54 : vector<16x1xf32>
    %cst_36 = arith.constant 9.99999974E-6 : f32
    %56 = vector.broadcast %cst_36 : f32 to vector<16x1xf32>
    %57 = arith.addf %55, %56 : vector<16x1xf32>
    %58 = math.rsqrt %57 : vector<16x1xf32>
    %59 = arith.mulf %16, %58 : vector<16x1xf32>
    %60 = arith.mulf %49, %59 : vector<16x1xf32>
    %61 = arith.subf %17, %60 : vector<16x1xf32>
    %62 = vector.broadcast %59 : vector<16x1xf32> to vector<16x8xf32>
    %63 = arith.mulf %3, %62 : vector<16x8xf32>
    %64 = vector.broadcast %61 : vector<16x1xf32> to vector<16x8xf32>
    %65 = arith.addf %63, %64 : vector<16x8xf32>
    %cst_37 = arith.constant 0.000000e+00 : f32
    %66 = vector.broadcast %cst_37 : f32 to vector<16x8xf32>
    %67 = arith.cmpf ogt, %65, %66 : vector<16x8xf32>
    %cst_38 = arith.constant 0.00999999977 : f32
    %68 = vector.broadcast %cst_38 : f32 to vector<16x8xf32>
    %69 = arith.mulf %68, %65 : vector<16x8xf32>
    %70 = arith.select %67, %65, %69 : vector<16x8xi1>, vector<16x8xf32>
    %71 = arith.truncf %70 : vector<16x8xf32> to vector<16x8xbf16>
    %c0_39 = arith.constant 0 : index
    %c0_40 = arith.constant 0 : index
    %c0_41 = arith.constant 0 : index
    %72 = vector.load %arg4[%c0_39, %c0_40, %c0_41] : memref<4x16x8xbf16, #tpu.memory_space<vmem>>, vector<1x16x8xbf16>
    %73 = vector.shape_cast %72 : vector<1x16x8xbf16> to vector<16x8xbf16>
    %74 = vector.shape_cast %71 : vector<16x8xbf16> to vector<1x16x8xbf16>
    tpu.vector_store %arg4[%c0_39, %c0_40, %c0_41], %74 {strides = array<i32>} : memref<4x16x8xbf16, #tpu.memory_space<vmem>>, vector<1x16x8xbf16>,
    %75 = vector.broadcast %59 : vector<16x1xf32> to vector<16x8xf32>
    %76 = arith.mulf %7, %75 : vector<16x8xf32>
    %77 = vector.broadcast %61 : vector<16x1xf32> to vector<16x8xf32>
    %78 = arith.addf %76, %77 : vector<16x8xf32>
    %cst_42 = arith.constant 0.000000e+00 : f32
    %79 = vector.broadcast %cst_42 : f32 to vector<16x8xf32>
    %80 = arith.cmpf ogt, %78, %79 : vector<16x8xf32>
    %cst_43 = arith.constant 0.00999999977 : f32
    %81 = vector.broadcast %cst_43 : f32 to vector<16x8xf32>
    %82 = arith.mulf %81, %78 : vector<16x8xf32>
    %83 = arith.select %80, %78, %82 : vector<16x8xi1>, vector<16x8xf32>
    %84 = arith.truncf %83 : vector<16x8xf32> to vector<16x8xbf16>
    %c1_44 = arith.constant 1 : index
    %c0_45 = arith.constant 0 : index
    %c0_46 = arith.constant 0 : index
    %85 = vector.load %arg4[%c1_44, %c0_45, %c0_46] : memref<4x16x8xbf16, #tpu.memory_space<vmem>>, vector<1x16x8xbf16>
    %86 = vector.shape_cast %85 : vector<1x16x8xbf16> to vector<16x8xbf16>
    %87 = vector.shape_cast %84 : vector<16x8xbf16> to vector<1x16x8xbf16>
    tpu.vector_store %arg4[%c1_44, %c0_45, %c0_46], %87 {strides = array<i32>} : memref<4x16x8xbf16, #tpu.memory_space<vmem>>, vector<1x16x8xbf16>,
    %88 = vector.broadcast %59 : vector<16x1xf32> to vector<16x8xf32>
    %89 = arith.mulf %11, %88 : vector<16x8xf32>
    %90 = vector.broadcast %61 : vector<16x1xf32> to vector<16x8xf32>
    %91 = arith.addf %89, %90 : vector<16x8xf32>
    %cst_47 = arith.constant 0.000000e+00 : f32
    %92 = vector.broadcast %cst_47 : f32 to vector<16x8xf32>
    %93 = arith.cmpf ogt, %91, %92 : vector<16x8xf32>
    %cst_48 = arith.constant 0.00999999977 : f32
    %94 = vector.broadcast %cst_48 : f32 to vector<16x8xf32>
    %95 = arith.mulf %94, %91 : vector<16x8xf32>
    %96 = arith.select %93, %91, %95 : vector<16x8xi1>, vector<16x8xf32>
    %97 = arith.truncf %96 : vector<16x8xf32> to vector<16x8xbf16>
    %c2_49 = arith.constant 2 : index
    %c0_50 = arith.constant 0 : index
    %c0_51 = arith.constant 0 : index
    %98 = vector.load %arg4[%c2_49, %c0_50, %c0_51] : memref<4x16x8xbf16, #tpu.memory_space<vmem>>, vector<1x16x8xbf16>
    %99 = vector.shape_cast %98 : vector<1x16x8xbf16> to vector<16x8xbf16>
    %100 = vector.shape_cast %97 : vector<16x8xbf16> to vector<1x16x8xbf16>
    tpu.vector_store %arg4[%c2_49, %c0_50, %c0_51], %100 {strides = array<i32>} : memref<4x16x8xbf16, #tpu.memory_space<vmem>>, vector<1x16x8xbf16>,
    %101 = vector.broadcast %59 : vector<16x1xf32> to vector<16x8xf32>
    %102 = arith.mulf %15, %101 : vector<16x8xf32>
    %103 = vector.broadcast %61 : vector<16x1xf32> to vector<16x8xf32>
    %104 = arith.addf %102, %103 : vector<16x8xf32>
    %cst_52 = arith.constant 0.000000e+00 : f32
    %105 = vector.broadcast %cst_52 : f32 to vector<16x8xf32>
    %106 = arith.cmpf ogt, %104, %105 : vector<16x8xf32>
    %cst_53 = arith.constant 0.00999999977 : f32
    %107 = vector.broadcast %cst_53 : f32 to vector<16x8xf32>
    %108 = arith.mulf %107, %104 : vector<16x8xf32>
    %109 = arith.select %106, %104, %108 : vector<16x8xi1>, vector<16x8xf32>
    %110 = arith.truncf %109 : vector<16x8xf32> to vector<16x8xbf16>
    %c3_54 = arith.constant 3 : index
    %c0_55 = arith.constant 0 : index
    %c0_56 = arith.constant 0 : index
    %111 = vector.load %arg4[%c3_54, %c0_55, %c0_56] : memref<4x16x8xbf16, #tpu.memory_space<vmem>>, vector<1x16x8xbf16>
    %112 = vector.shape_cast %111 : vector<1x16x8xbf16> to vector<16x8xbf16>
    %113 = vector.shape_cast %110 : vector<16x8xbf16> to vector<1x16x8xbf16>
    tpu.vector_store %arg4[%c3_54, %c0_55, %c0_56], %113 {strides = array<i32>} : memref<4x16x8xbf16, #tpu.memory_space<vmem>>, vector<1x16x8xbf16>,
    return
  }
}

module attributes {stable_mosaic.version = 11 : i64} {
  func.func @_deconv_bn_kernel(%arg0: memref<4x8x64xbf16, #tpu.memory_space<vmem>>, %arg1: memref<64x32xbf16, #tpu.memory_space<vmem>>, %arg2: memref<8x1xf32, #tpu.memory_space<vmem>>, %arg3: memref<8x1xf32, #tpu.memory_space<vmem>>, %arg4: memref<4x8x32xbf16, #tpu.memory_space<vmem>>) attributes {dimension_semantics = [], scalar_prefetch = 0 : i64, scratch_operands = 0 : i64, tpu.core_type = #tpu.core_type<tc>} {
    %c0 = arith.constant 0 : index
    %c0_0 = arith.constant 0 : index
    %c0_1 = arith.constant 0 : index
    %0 = vector.load %arg0[%c0, %c0_0, %c0_1] : memref<4x8x64xbf16, #tpu.memory_space<vmem>>, vector<1x8x64xbf16>
    %1 = vector.shape_cast %0 : vector<1x8x64xbf16> to vector<8x64xbf16>
    %c0_2 = arith.constant 0 : index
    %c0_3 = arith.constant 0 : index
    %2 = vector.load %arg1[%c0_2, %c0_3] : memref<64x32xbf16, #tpu.memory_space<vmem>>, vector<64x32xbf16>
    %cst = arith.constant dense<0.000000e+00> : vector<8x32xf32>
    %3 = tpu.matmul %1, %2, %cst {dimension_numbers = #tpu.dot_dimension_numbers<[1], [0], [0], [1], [0, 0, 1, 1], [], []>} : vector<8x64xbf16>, vector<64x32xbf16>, vector<8x32xf32> -> vector<8x32xf32>
    %c1 = arith.constant 1 : index
    %c0_4 = arith.constant 0 : index
    %c0_5 = arith.constant 0 : index
    %4 = vector.load %arg0[%c1, %c0_4, %c0_5] : memref<4x8x64xbf16, #tpu.memory_space<vmem>>, vector<1x8x64xbf16>
    %5 = vector.shape_cast %4 : vector<1x8x64xbf16> to vector<8x64xbf16>
    %c0_6 = arith.constant 0 : index
    %c0_7 = arith.constant 0 : index
    %6 = vector.load %arg1[%c0_6, %c0_7] : memref<64x32xbf16, #tpu.memory_space<vmem>>, vector<64x32xbf16>
    %cst_8 = arith.constant dense<0.000000e+00> : vector<8x32xf32>
    %7 = tpu.matmul %5, %6, %cst_8 {dimension_numbers = #tpu.dot_dimension_numbers<[1], [0], [0], [1], [0, 0, 1, 1], [], []>} : vector<8x64xbf16>, vector<64x32xbf16>, vector<8x32xf32> -> vector<8x32xf32>
    %c2 = arith.constant 2 : index
    %c0_9 = arith.constant 0 : index
    %c0_10 = arith.constant 0 : index
    %8 = vector.load %arg0[%c2, %c0_9, %c0_10] : memref<4x8x64xbf16, #tpu.memory_space<vmem>>, vector<1x8x64xbf16>
    %9 = vector.shape_cast %8 : vector<1x8x64xbf16> to vector<8x64xbf16>
    %c0_11 = arith.constant 0 : index
    %c0_12 = arith.constant 0 : index
    %10 = vector.load %arg1[%c0_11, %c0_12] : memref<64x32xbf16, #tpu.memory_space<vmem>>, vector<64x32xbf16>
    %cst_13 = arith.constant dense<0.000000e+00> : vector<8x32xf32>
    %11 = tpu.matmul %9, %10, %cst_13 {dimension_numbers = #tpu.dot_dimension_numbers<[1], [0], [0], [1], [0, 0, 1, 1], [], []>} : vector<8x64xbf16>, vector<64x32xbf16>, vector<8x32xf32> -> vector<8x32xf32>
    %c3 = arith.constant 3 : index
    %c0_14 = arith.constant 0 : index
    %c0_15 = arith.constant 0 : index
    %12 = vector.load %arg0[%c3, %c0_14, %c0_15] : memref<4x8x64xbf16, #tpu.memory_space<vmem>>, vector<1x8x64xbf16>
    %13 = vector.shape_cast %12 : vector<1x8x64xbf16> to vector<8x64xbf16>
    %c0_16 = arith.constant 0 : index
    %c0_17 = arith.constant 0 : index
    %14 = vector.load %arg1[%c0_16, %c0_17] : memref<64x32xbf16, #tpu.memory_space<vmem>>, vector<64x32xbf16>
    %cst_18 = arith.constant dense<0.000000e+00> : vector<8x32xf32>
    %15 = tpu.matmul %13, %14, %cst_18 {dimension_numbers = #tpu.dot_dimension_numbers<[1], [0], [0], [1], [0, 0, 1, 1], [], []>} : vector<8x64xbf16>, vector<64x32xbf16>, vector<8x32xf32> -> vector<8x32xf32>
    %c0_19 = arith.constant 0 : index
    %c0_20 = arith.constant 0 : index
    %16 = vector.load %arg2[%c0_19, %c0_20] : memref<8x1xf32, #tpu.memory_space<vmem>>, vector<8x1xf32>
    %c0_21 = arith.constant 0 : index
    %c0_22 = arith.constant 0 : index
    %17 = vector.load %arg3[%c0_21, %c0_22] : memref<8x1xf32, #tpu.memory_space<vmem>>, vector<8x1xf32>
    %cst_23 = arith.constant dense<0.000000e+00> : vector<8xf32>
    %18 = vector.multi_reduction <add>, %3, %cst_23 [1] : vector<8x32xf32> to vector<8xf32>
    %19 = vector.shape_cast %18 : vector<8xf32> to vector<8x1xf32>
    %cst_24 = arith.constant 0.000000e+00 : f32
    %20 = vector.broadcast %cst_24 : f32 to vector<8x1xf32>
    %21 = arith.addf %20, %19 : vector<8x1xf32>
    %cst_25 = arith.constant dense<0.000000e+00> : vector<8xf32>
    %22 = vector.multi_reduction <add>, %7, %cst_25 [1] : vector<8x32xf32> to vector<8xf32>
    %23 = vector.shape_cast %22 : vector<8xf32> to vector<8x1xf32>
    %24 = arith.addf %21, %23 : vector<8x1xf32>
    %cst_26 = arith.constant dense<0.000000e+00> : vector<8xf32>
    %25 = vector.multi_reduction <add>, %11, %cst_26 [1] : vector<8x32xf32> to vector<8xf32>
    %26 = vector.shape_cast %25 : vector<8xf32> to vector<8x1xf32>
    %27 = arith.addf %24, %26 : vector<8x1xf32>
    %cst_27 = arith.constant dense<0.000000e+00> : vector<8xf32>
    %28 = vector.multi_reduction <add>, %15, %cst_27 [1] : vector<8x32xf32> to vector<8xf32>
    %29 = vector.shape_cast %28 : vector<8xf32> to vector<8x1xf32>
    %30 = arith.addf %27, %29 : vector<8x1xf32>
    %31 = arith.mulf %3, %3 : vector<8x32xf32>
    %cst_28 = arith.constant dense<0.000000e+00> : vector<8xf32>
    %32 = vector.multi_reduction <add>, %31, %cst_28 [1] : vector<8x32xf32> to vector<8xf32>
    %33 = vector.shape_cast %32 : vector<8xf32> to vector<8x1xf32>
    %cst_29 = arith.constant 0.000000e+00 : f32
    %34 = vector.broadcast %cst_29 : f32 to vector<8x1xf32>
    %35 = arith.addf %34, %33 : vector<8x1xf32>
    %36 = arith.mulf %7, %7 : vector<8x32xf32>
    %cst_30 = arith.constant dense<0.000000e+00> : vector<8xf32>
    %37 = vector.multi_reduction <add>, %36, %cst_30 [1] : vector<8x32xf32> to vector<8xf32>
    %38 = vector.shape_cast %37 : vector<8xf32> to vector<8x1xf32>
    %39 = arith.addf %35, %38 : vector<8x1xf32>
    %40 = arith.mulf %11, %11 : vector<8x32xf32>
    %cst_31 = arith.constant dense<0.000000e+00> : vector<8xf32>
    %41 = vector.multi_reduction <add>, %40, %cst_31 [1] : vector<8x32xf32> to vector<8xf32>
    %42 = vector.shape_cast %41 : vector<8xf32> to vector<8x1xf32>
    %43 = arith.addf %39, %42 : vector<8x1xf32>
    %44 = arith.mulf %15, %15 : vector<8x32xf32>
    %cst_32 = arith.constant dense<0.000000e+00> : vector<8xf32>
    %45 = vector.multi_reduction <add>, %44, %cst_32 [1] : vector<8x32xf32> to vector<8xf32>
    %46 = vector.shape_cast %45 : vector<8xf32> to vector<8x1xf32>
    %47 = arith.addf %43, %46 : vector<8x1xf32>
    %cst_33 = arith.constant 7.812500e-03 : f32
    %48 = vector.broadcast %cst_33 : f32 to vector<8x1xf32>
    %49 = arith.mulf %30, %48 : vector<8x1xf32>
    %cst_34 = arith.constant 7.812500e-03 : f32
    %50 = vector.broadcast %cst_34 : f32 to vector<8x1xf32>
    %51 = arith.mulf %47, %50 : vector<8x1xf32>
    %52 = arith.mulf %49, %49 : vector<8x1xf32>
    %53 = arith.subf %51, %52 : vector<8x1xf32>
    %cst_35 = arith.constant 0.000000e+00 : f32
    %54 = vector.broadcast %cst_35 : f32 to vector<8x1xf32>
    %55 = arith.maximumf %53, %54 : vector<8x1xf32>
    %cst_36 = arith.constant 9.99999974E-6 : f32
    %56 = vector.broadcast %cst_36 : f32 to vector<8x1xf32>
    %57 = arith.addf %55, %56 : vector<8x1xf32>
    %58 = math.rsqrt %57 : vector<8x1xf32>
    %59 = arith.mulf %16, %58 : vector<8x1xf32>
    %60 = arith.mulf %49, %59 : vector<8x1xf32>
    %61 = arith.subf %17, %60 : vector<8x1xf32>
    %62 = vector.broadcast %59 : vector<8x1xf32> to vector<8x32xf32>
    %63 = arith.mulf %3, %62 : vector<8x32xf32>
    %64 = vector.broadcast %61 : vector<8x1xf32> to vector<8x32xf32>
    %65 = arith.addf %63, %64 : vector<8x32xf32>
    %cst_37 = arith.constant 0.000000e+00 : f32
    %66 = vector.broadcast %cst_37 : f32 to vector<8x32xf32>
    %67 = arith.cmpf ogt, %65, %66 : vector<8x32xf32>
    %cst_38 = arith.constant 0.00999999977 : f32
    %68 = vector.broadcast %cst_38 : f32 to vector<8x32xf32>
    %69 = arith.mulf %68, %65 : vector<8x32xf32>
    %70 = arith.select %67, %65, %69 : vector<8x32xi1>, vector<8x32xf32>
    %71 = arith.truncf %70 : vector<8x32xf32> to vector<8x32xbf16>
    %c0_39 = arith.constant 0 : index
    %c0_40 = arith.constant 0 : index
    %c0_41 = arith.constant 0 : index
    %72 = vector.load %arg4[%c0_39, %c0_40, %c0_41] : memref<4x8x32xbf16, #tpu.memory_space<vmem>>, vector<1x8x32xbf16>
    %73 = vector.shape_cast %72 : vector<1x8x32xbf16> to vector<8x32xbf16>
    %74 = vector.shape_cast %71 : vector<8x32xbf16> to vector<1x8x32xbf16>
    tpu.vector_store %arg4[%c0_39, %c0_40, %c0_41], %74 {strides = array<i32>} : memref<4x8x32xbf16, #tpu.memory_space<vmem>>, vector<1x8x32xbf16>,
    %75 = vector.broadcast %59 : vector<8x1xf32> to vector<8x32xf32>
    %76 = arith.mulf %7, %75 : vector<8x32xf32>
    %77 = vector.broadcast %61 : vector<8x1xf32> to vector<8x32xf32>
    %78 = arith.addf %76, %77 : vector<8x32xf32>
    %cst_42 = arith.constant 0.000000e+00 : f32
    %79 = vector.broadcast %cst_42 : f32 to vector<8x32xf32>
    %80 = arith.cmpf ogt, %78, %79 : vector<8x32xf32>
    %cst_43 = arith.constant 0.00999999977 : f32
    %81 = vector.broadcast %cst_43 : f32 to vector<8x32xf32>
    %82 = arith.mulf %81, %78 : vector<8x32xf32>
    %83 = arith.select %80, %78, %82 : vector<8x32xi1>, vector<8x32xf32>
    %84 = arith.truncf %83 : vector<8x32xf32> to vector<8x32xbf16>
    %c1_44 = arith.constant 1 : index
    %c0_45 = arith.constant 0 : index
    %c0_46 = arith.constant 0 : index
    %85 = vector.load %arg4[%c1_44, %c0_45, %c0_46] : memref<4x8x32xbf16, #tpu.memory_space<vmem>>, vector<1x8x32xbf16>
    %86 = vector.shape_cast %85 : vector<1x8x32xbf16> to vector<8x32xbf16>
    %87 = vector.shape_cast %84 : vector<8x32xbf16> to vector<1x8x32xbf16>
    tpu.vector_store %arg4[%c1_44, %c0_45, %c0_46], %87 {strides = array<i32>} : memref<4x8x32xbf16, #tpu.memory_space<vmem>>, vector<1x8x32xbf16>,
    %88 = vector.broadcast %59 : vector<8x1xf32> to vector<8x32xf32>
    %89 = arith.mulf %11, %88 : vector<8x32xf32>
    %90 = vector.broadcast %61 : vector<8x1xf32> to vector<8x32xf32>
    %91 = arith.addf %89, %90 : vector<8x32xf32>
    %cst_47 = arith.constant 0.000000e+00 : f32
    %92 = vector.broadcast %cst_47 : f32 to vector<8x32xf32>
    %93 = arith.cmpf ogt, %91, %92 : vector<8x32xf32>
    %cst_48 = arith.constant 0.00999999977 : f32
    %94 = vector.broadcast %cst_48 : f32 to vector<8x32xf32>
    %95 = arith.mulf %94, %91 : vector<8x32xf32>
    %96 = arith.select %93, %91, %95 : vector<8x32xi1>, vector<8x32xf32>
    %97 = arith.truncf %96 : vector<8x32xf32> to vector<8x32xbf16>
    %c2_49 = arith.constant 2 : index
    %c0_50 = arith.constant 0 : index
    %c0_51 = arith.constant 0 : index
    %98 = vector.load %arg4[%c2_49, %c0_50, %c0_51] : memref<4x8x32xbf16, #tpu.memory_space<vmem>>, vector<1x8x32xbf16>
    %99 = vector.shape_cast %98 : vector<1x8x32xbf16> to vector<8x32xbf16>
    %100 = vector.shape_cast %97 : vector<8x32xbf16> to vector<1x8x32xbf16>
    tpu.vector_store %arg4[%c2_49, %c0_50, %c0_51], %100 {strides = array<i32>} : memref<4x8x32xbf16, #tpu.memory_space<vmem>>, vector<1x8x32xbf16>,
    %101 = vector.broadcast %59 : vector<8x1xf32> to vector<8x32xf32>
    %102 = arith.mulf %15, %101 : vector<8x32xf32>
    %103 = vector.broadcast %61 : vector<8x1xf32> to vector<8x32xf32>
    %104 = arith.addf %102, %103 : vector<8x32xf32>
    %cst_52 = arith.constant 0.000000e+00 : f32
    %105 = vector.broadcast %cst_52 : f32 to vector<8x32xf32>
    %106 = arith.cmpf ogt, %104, %105 : vector<8x32xf32>
    %cst_53 = arith.constant 0.00999999977 : f32
    %107 = vector.broadcast %cst_53 : f32 to vector<8x32xf32>
    %108 = arith.mulf %107, %104 : vector<8x32xf32>
    %109 = arith.select %106, %104, %108 : vector<8x32xi1>, vector<8x32xf32>
    %110 = arith.truncf %109 : vector<8x32xf32> to vector<8x32xbf16>
    %c3_54 = arith.constant 3 : index
    %c0_55 = arith.constant 0 : index
    %c0_56 = arith.constant 0 : index
    %111 = vector.load %arg4[%c3_54, %c0_55, %c0_56] : memref<4x8x32xbf16, #tpu.memory_space<vmem>>, vector<1x8x32xbf16>
    %112 = vector.shape_cast %111 : vector<1x8x32xbf16> to vector<8x32xbf16>
    %113 = vector.shape_cast %110 : vector<8x32xbf16> to vector<1x8x32xbf16>
    tpu.vector_store %arg4[%c3_54, %c0_55, %c0_56], %113 {strides = array<i32>} : memref<4x8x32xbf16, #tpu.memory_space<vmem>>, vector<1x8x32xbf16>,
    return
  }
}

module attributes {stable_mosaic.version = 11 : i64} {
  func.func @_deconv_bn_kernel(%arg0: memref<4x8x32xbf16, #tpu.memory_space<vmem>>, %arg1: memref<32x128xbf16, #tpu.memory_space<vmem>>, %arg2: memref<8x1xf32, #tpu.memory_space<vmem>>, %arg3: memref<8x1xf32, #tpu.memory_space<vmem>>, %arg4: memref<4x8x128xbf16, #tpu.memory_space<vmem>>) attributes {dimension_semantics = [], scalar_prefetch = 0 : i64, scratch_operands = 0 : i64, tpu.core_type = #tpu.core_type<tc>} {
    %c0 = arith.constant 0 : index
    %c0_0 = arith.constant 0 : index
    %c0_1 = arith.constant 0 : index
    %0 = vector.load %arg0[%c0, %c0_0, %c0_1] : memref<4x8x32xbf16, #tpu.memory_space<vmem>>, vector<1x8x32xbf16>
    %1 = vector.shape_cast %0 : vector<1x8x32xbf16> to vector<8x32xbf16>
    %c0_2 = arith.constant 0 : index
    %c0_3 = arith.constant 0 : index
    %2 = vector.load %arg1[%c0_2, %c0_3] : memref<32x128xbf16, #tpu.memory_space<vmem>>, vector<32x128xbf16>
    %cst = arith.constant dense<0.000000e+00> : vector<8x128xf32>
    %3 = tpu.matmul %1, %2, %cst {dimension_numbers = #tpu.dot_dimension_numbers<[1], [0], [0], [1], [0, 0, 1, 1], [], []>} : vector<8x32xbf16>, vector<32x128xbf16>, vector<8x128xf32> -> vector<8x128xf32>
    %c1 = arith.constant 1 : index
    %c0_4 = arith.constant 0 : index
    %c0_5 = arith.constant 0 : index
    %4 = vector.load %arg0[%c1, %c0_4, %c0_5] : memref<4x8x32xbf16, #tpu.memory_space<vmem>>, vector<1x8x32xbf16>
    %5 = vector.shape_cast %4 : vector<1x8x32xbf16> to vector<8x32xbf16>
    %c0_6 = arith.constant 0 : index
    %c0_7 = arith.constant 0 : index
    %6 = vector.load %arg1[%c0_6, %c0_7] : memref<32x128xbf16, #tpu.memory_space<vmem>>, vector<32x128xbf16>
    %cst_8 = arith.constant dense<0.000000e+00> : vector<8x128xf32>
    %7 = tpu.matmul %5, %6, %cst_8 {dimension_numbers = #tpu.dot_dimension_numbers<[1], [0], [0], [1], [0, 0, 1, 1], [], []>} : vector<8x32xbf16>, vector<32x128xbf16>, vector<8x128xf32> -> vector<8x128xf32>
    %c2 = arith.constant 2 : index
    %c0_9 = arith.constant 0 : index
    %c0_10 = arith.constant 0 : index
    %8 = vector.load %arg0[%c2, %c0_9, %c0_10] : memref<4x8x32xbf16, #tpu.memory_space<vmem>>, vector<1x8x32xbf16>
    %9 = vector.shape_cast %8 : vector<1x8x32xbf16> to vector<8x32xbf16>
    %c0_11 = arith.constant 0 : index
    %c0_12 = arith.constant 0 : index
    %10 = vector.load %arg1[%c0_11, %c0_12] : memref<32x128xbf16, #tpu.memory_space<vmem>>, vector<32x128xbf16>
    %cst_13 = arith.constant dense<0.000000e+00> : vector<8x128xf32>
    %11 = tpu.matmul %9, %10, %cst_13 {dimension_numbers = #tpu.dot_dimension_numbers<[1], [0], [0], [1], [0, 0, 1, 1], [], []>} : vector<8x32xbf16>, vector<32x128xbf16>, vector<8x128xf32> -> vector<8x128xf32>
    %c3 = arith.constant 3 : index
    %c0_14 = arith.constant 0 : index
    %c0_15 = arith.constant 0 : index
    %12 = vector.load %arg0[%c3, %c0_14, %c0_15] : memref<4x8x32xbf16, #tpu.memory_space<vmem>>, vector<1x8x32xbf16>
    %13 = vector.shape_cast %12 : vector<1x8x32xbf16> to vector<8x32xbf16>
    %c0_16 = arith.constant 0 : index
    %c0_17 = arith.constant 0 : index
    %14 = vector.load %arg1[%c0_16, %c0_17] : memref<32x128xbf16, #tpu.memory_space<vmem>>, vector<32x128xbf16>
    %cst_18 = arith.constant dense<0.000000e+00> : vector<8x128xf32>
    %15 = tpu.matmul %13, %14, %cst_18 {dimension_numbers = #tpu.dot_dimension_numbers<[1], [0], [0], [1], [0, 0, 1, 1], [], []>} : vector<8x32xbf16>, vector<32x128xbf16>, vector<8x128xf32> -> vector<8x128xf32>
    %c0_19 = arith.constant 0 : index
    %c0_20 = arith.constant 0 : index
    %16 = vector.load %arg2[%c0_19, %c0_20] : memref<8x1xf32, #tpu.memory_space<vmem>>, vector<8x1xf32>
    %c0_21 = arith.constant 0 : index
    %c0_22 = arith.constant 0 : index
    %17 = vector.load %arg3[%c0_21, %c0_22] : memref<8x1xf32, #tpu.memory_space<vmem>>, vector<8x1xf32>
    %cst_23 = arith.constant dense<0.000000e+00> : vector<8xf32>
    %18 = vector.multi_reduction <add>, %3, %cst_23 [1] : vector<8x128xf32> to vector<8xf32>
    %19 = vector.shape_cast %18 : vector<8xf32> to vector<8x1xf32>
    %cst_24 = arith.constant 0.000000e+00 : f32
    %20 = vector.broadcast %cst_24 : f32 to vector<8x1xf32>
    %21 = arith.addf %20, %19 : vector<8x1xf32>
    %cst_25 = arith.constant dense<0.000000e+00> : vector<8xf32>
    %22 = vector.multi_reduction <add>, %7, %cst_25 [1] : vector<8x128xf32> to vector<8xf32>
    %23 = vector.shape_cast %22 : vector<8xf32> to vector<8x1xf32>
    %24 = arith.addf %21, %23 : vector<8x1xf32>
    %cst_26 = arith.constant dense<0.000000e+00> : vector<8xf32>
    %25 = vector.multi_reduction <add>, %11, %cst_26 [1] : vector<8x128xf32> to vector<8xf32>
    %26 = vector.shape_cast %25 : vector<8xf32> to vector<8x1xf32>
    %27 = arith.addf %24, %26 : vector<8x1xf32>
    %cst_27 = arith.constant dense<0.000000e+00> : vector<8xf32>
    %28 = vector.multi_reduction <add>, %15, %cst_27 [1] : vector<8x128xf32> to vector<8xf32>
    %29 = vector.shape_cast %28 : vector<8xf32> to vector<8x1xf32>
    %30 = arith.addf %27, %29 : vector<8x1xf32>
    %31 = arith.mulf %3, %3 : vector<8x128xf32>
    %cst_28 = arith.constant dense<0.000000e+00> : vector<8xf32>
    %32 = vector.multi_reduction <add>, %31, %cst_28 [1] : vector<8x128xf32> to vector<8xf32>
    %33 = vector.shape_cast %32 : vector<8xf32> to vector<8x1xf32>
    %cst_29 = arith.constant 0.000000e+00 : f32
    %34 = vector.broadcast %cst_29 : f32 to vector<8x1xf32>
    %35 = arith.addf %34, %33 : vector<8x1xf32>
    %36 = arith.mulf %7, %7 : vector<8x128xf32>
    %cst_30 = arith.constant dense<0.000000e+00> : vector<8xf32>
    %37 = vector.multi_reduction <add>, %36, %cst_30 [1] : vector<8x128xf32> to vector<8xf32>
    %38 = vector.shape_cast %37 : vector<8xf32> to vector<8x1xf32>
    %39 = arith.addf %35, %38 : vector<8x1xf32>
    %40 = arith.mulf %11, %11 : vector<8x128xf32>
    %cst_31 = arith.constant dense<0.000000e+00> : vector<8xf32>
    %41 = vector.multi_reduction <add>, %40, %cst_31 [1] : vector<8x128xf32> to vector<8xf32>
    %42 = vector.shape_cast %41 : vector<8xf32> to vector<8x1xf32>
    %43 = arith.addf %39, %42 : vector<8x1xf32>
    %44 = arith.mulf %15, %15 : vector<8x128xf32>
    %cst_32 = arith.constant dense<0.000000e+00> : vector<8xf32>
    %45 = vector.multi_reduction <add>, %44, %cst_32 [1] : vector<8x128xf32> to vector<8xf32>
    %46 = vector.shape_cast %45 : vector<8xf32> to vector<8x1xf32>
    %47 = arith.addf %43, %46 : vector<8x1xf32>
    %cst_33 = arith.constant 0.001953125 : f32
    %48 = vector.broadcast %cst_33 : f32 to vector<8x1xf32>
    %49 = arith.mulf %30, %48 : vector<8x1xf32>
    %cst_34 = arith.constant 0.001953125 : f32
    %50 = vector.broadcast %cst_34 : f32 to vector<8x1xf32>
    %51 = arith.mulf %47, %50 : vector<8x1xf32>
    %52 = arith.mulf %49, %49 : vector<8x1xf32>
    %53 = arith.subf %51, %52 : vector<8x1xf32>
    %cst_35 = arith.constant 0.000000e+00 : f32
    %54 = vector.broadcast %cst_35 : f32 to vector<8x1xf32>
    %55 = arith.maximumf %53, %54 : vector<8x1xf32>
    %cst_36 = arith.constant 9.99999974E-6 : f32
    %56 = vector.broadcast %cst_36 : f32 to vector<8x1xf32>
    %57 = arith.addf %55, %56 : vector<8x1xf32>
    %58 = math.rsqrt %57 : vector<8x1xf32>
    %59 = arith.mulf %16, %58 : vector<8x1xf32>
    %60 = arith.mulf %49, %59 : vector<8x1xf32>
    %61 = arith.subf %17, %60 : vector<8x1xf32>
    %62 = vector.broadcast %59 : vector<8x1xf32> to vector<8x128xf32>
    %63 = arith.mulf %3, %62 : vector<8x128xf32>
    %64 = vector.broadcast %61 : vector<8x1xf32> to vector<8x128xf32>
    %65 = arith.addf %63, %64 : vector<8x128xf32>
    %cst_37 = arith.constant 0.000000e+00 : f32
    %66 = vector.broadcast %cst_37 : f32 to vector<8x128xf32>
    %67 = arith.cmpf ogt, %65, %66 : vector<8x128xf32>
    %cst_38 = arith.constant 0.00999999977 : f32
    %68 = vector.broadcast %cst_38 : f32 to vector<8x128xf32>
    %69 = arith.mulf %68, %65 : vector<8x128xf32>
    %70 = arith.select %67, %65, %69 : vector<8x128xi1>, vector<8x128xf32>
    %71 = arith.truncf %70 : vector<8x128xf32> to vector<8x128xbf16>
    %c0_39 = arith.constant 0 : index
    %c0_40 = arith.constant 0 : index
    %c0_41 = arith.constant 0 : index
    %72 = vector.load %arg4[%c0_39, %c0_40, %c0_41] : memref<4x8x128xbf16, #tpu.memory_space<vmem>>, vector<1x8x128xbf16>
    %73 = vector.shape_cast %72 : vector<1x8x128xbf16> to vector<8x128xbf16>
    %74 = vector.shape_cast %71 : vector<8x128xbf16> to vector<1x8x128xbf16>
    tpu.vector_store %arg4[%c0_39, %c0_40, %c0_41], %74 {strides = array<i32>} : memref<4x8x128xbf16, #tpu.memory_space<vmem>>, vector<1x8x128xbf16>,
    %75 = vector.broadcast %59 : vector<8x1xf32> to vector<8x128xf32>
    %76 = arith.mulf %7, %75 : vector<8x128xf32>
    %77 = vector.broadcast %61 : vector<8x1xf32> to vector<8x128xf32>
    %78 = arith.addf %76, %77 : vector<8x128xf32>
    %cst_42 = arith.constant 0.000000e+00 : f32
    %79 = vector.broadcast %cst_42 : f32 to vector<8x128xf32>
    %80 = arith.cmpf ogt, %78, %79 : vector<8x128xf32>
    %cst_43 = arith.constant 0.00999999977 : f32
    %81 = vector.broadcast %cst_43 : f32 to vector<8x128xf32>
    %82 = arith.mulf %81, %78 : vector<8x128xf32>
    %83 = arith.select %80, %78, %82 : vector<8x128xi1>, vector<8x128xf32>
    %84 = arith.truncf %83 : vector<8x128xf32> to vector<8x128xbf16>
    %c1_44 = arith.constant 1 : index
    %c0_45 = arith.constant 0 : index
    %c0_46 = arith.constant 0 : index
    %85 = vector.load %arg4[%c1_44, %c0_45, %c0_46] : memref<4x8x128xbf16, #tpu.memory_space<vmem>>, vector<1x8x128xbf16>
    %86 = vector.shape_cast %85 : vector<1x8x128xbf16> to vector<8x128xbf16>
    %87 = vector.shape_cast %84 : vector<8x128xbf16> to vector<1x8x128xbf16>
    tpu.vector_store %arg4[%c1_44, %c0_45, %c0_46], %87 {strides = array<i32>} : memref<4x8x128xbf16, #tpu.memory_space<vmem>>, vector<1x8x128xbf16>,
    %88 = vector.broadcast %59 : vector<8x1xf32> to vector<8x128xf32>
    %89 = arith.mulf %11, %88 : vector<8x128xf32>
    %90 = vector.broadcast %61 : vector<8x1xf32> to vector<8x128xf32>
    %91 = arith.addf %89, %90 : vector<8x128xf32>
    %cst_47 = arith.constant 0.000000e+00 : f32
    %92 = vector.broadcast %cst_47 : f32 to vector<8x128xf32>
    %93 = arith.cmpf ogt, %91, %92 : vector<8x128xf32>
    %cst_48 = arith.constant 0.00999999977 : f32
    %94 = vector.broadcast %cst_48 : f32 to vector<8x128xf32>
    %95 = arith.mulf %94, %91 : vector<8x128xf32>
    %96 = arith.select %93, %91, %95 : vector<8x128xi1>, vector<8x128xf32>
    %97 = arith.truncf %96 : vector<8x128xf32> to vector<8x128xbf16>
    %c2_49 = arith.constant 2 : index
    %c0_50 = arith.constant 0 : index
    %c0_51 = arith.constant 0 : index
    %98 = vector.load %arg4[%c2_49, %c0_50, %c0_51] : memref<4x8x128xbf16, #tpu.memory_space<vmem>>, vector<1x8x128xbf16>
    %99 = vector.shape_cast %98 : vector<1x8x128xbf16> to vector<8x128xbf16>
    %100 = vector.shape_cast %97 : vector<8x128xbf16> to vector<1x8x128xbf16>
    tpu.vector_store %arg4[%c2_49, %c0_50, %c0_51], %100 {strides = array<i32>} : memref<4x8x128xbf16, #tpu.memory_space<vmem>>, vector<1x8x128xbf16>,
    %101 = vector.broadcast %59 : vector<8x1xf32> to vector<8x128xf32>
    %102 = arith.mulf %15, %101 : vector<8x128xf32>
    %103 = vector.broadcast %61 : vector<8x1xf32> to vector<8x128xf32>
    %104 = arith.addf %102, %103 : vector<8x128xf32>
    %cst_52 = arith.constant 0.000000e+00 : f32
    %105 = vector.broadcast %cst_52 : f32 to vector<8x128xf32>
    %106 = arith.cmpf ogt, %104, %105 : vector<8x128xf32>
    %cst_53 = arith.constant 0.00999999977 : f32
    %107 = vector.broadcast %cst_53 : f32 to vector<8x128xf32>
    %108 = arith.mulf %107, %104 : vector<8x128xf32>
    %109 = arith.select %106, %104, %108 : vector<8x128xi1>, vector<8x128xf32>
    %110 = arith.truncf %109 : vector<8x128xf32> to vector<8x128xbf16>
    %c3_54 = arith.constant 3 : index
    %c0_55 = arith.constant 0 : index
    %c0_56 = arith.constant 0 : index
    %111 = vector.load %arg4[%c3_54, %c0_55, %c0_56] : memref<4x8x128xbf16, #tpu.memory_space<vmem>>, vector<1x8x128xbf16>
    %112 = vector.shape_cast %111 : vector<1x8x128xbf16> to vector<8x128xbf16>
    %113 = vector.shape_cast %110 : vector<8x128xbf16> to vector<1x8x128xbf16>
    tpu.vector_store %arg4[%c3_54, %c0_55, %c0_56], %113 {strides = array<i32>} : memref<4x8x128xbf16, #tpu.memory_space<vmem>>, vector<1x8x128xbf16>,
    return
  }
}

module attributes {stable_mosaic.version = 11 : i64} {
  func.func @_conv_tanh_kernel(%arg0: memref<4x72xbf16, #tpu.memory_space<vmem>>, %arg1: memref<72x512xbf16, #tpu.memory_space<vmem>>, %arg2: memref<4x1xf32, #tpu.memory_space<vmem>>, %arg3: memref<4x512xf32, #tpu.memory_space<vmem>>) attributes {dimension_semantics = [], scalar_prefetch = 0 : i64, scratch_operands = 0 : i64, tpu.core_type = #tpu.core_type<tc>} {
    %c0 = arith.constant 0 : index
    %c0_0 = arith.constant 0 : index
    %0 = vector.load %arg0[%c0, %c0_0] : memref<4x72xbf16, #tpu.memory_space<vmem>>, vector<4x72xbf16>
    %c0_1 = arith.constant 0 : index
    %c0_2 = arith.constant 0 : index
    %1 = vector.load %arg1[%c0_1, %c0_2] : memref<72x512xbf16, #tpu.memory_space<vmem>>, vector<72x512xbf16>
    %cst = arith.constant dense<0.000000e+00> : vector<4x512xf32>
    %2 = tpu.matmul %0, %1, %cst {dimension_numbers = #tpu.dot_dimension_numbers<[1], [0], [0], [1], [0, 0, 1, 1], [], []>} : vector<4x72xbf16>, vector<72x512xbf16>, vector<4x512xf32> -> vector<4x512xf32>
    %c0_3 = arith.constant 0 : index
    %c0_4 = arith.constant 0 : index
    %3 = vector.load %arg2[%c0_3, %c0_4] : memref<4x1xf32, #tpu.memory_space<vmem>>, vector<4x1xf32>
    %4 = vector.broadcast %3 : vector<4x1xf32> to vector<4x512xf32>
    %5 = arith.addf %2, %4 : vector<4x512xf32>
    %6 = math.tanh %5 : vector<4x512xf32>
    %c0_5 = arith.constant 0 : index
    %c0_6 = arith.constant 0 : index
    %7 = vector.load %arg3[%c0_5, %c0_6] : memref<4x512xf32, #tpu.memory_space<vmem>>, vector<4x512xf32>
    tpu.vector_store %arg3[%c0_5, %c0_6], %6 {strides = array<i32>} : memref<4x512xf32, #tpu.memory_space<vmem>>, vector<4x512xf32>,
    return
  }
}

</mosaic_0001>

<llo_original>
// kernel: forward.8
$region0: #{forward.8}
  #allocation0 [shape = 'u32[]', space=smem, size = 0x4, offset = 0x4, fixed_abs, tag = 'smem constant byte address 0x4 - core index']
  #allocation1 [shape = 'u32[144,128]{1,0:T(1,128)}', space=vmem, size = 0x12000, scoped, tag = 'internal scratch']
  %s0 = inlined_call_operand.vmem [shape: bf16[40,36], index: 0, kind: input, shape index: {}]
  %s1 = inlined_call_operand.vmem [shape: bf16[36,128], index: 1, kind: input, shape index: {}]
  %s2 = inlined_call_operand.vmem [shape: f32[40,1], index: 2, kind: input, shape index: {}]
  %s3 = inlined_call_operand.vmem [shape: f32[40,1], index: 3, kind: input, shape index: {}]
  %s4 = inlined_call_operand.vmem [shape: bf16[40,128], index: 4, kind: output, shape index: {}]
  %s5 = sld [smem:[#allocation0]]
  $region26: #{forward.8} parent=0
    _
  %s7 = ssub.s32 1, %s5
  %s8 = scalar_select 0, %s7, %s5
  // Predicated region
  $region2: #{forward.8} parent=0 // pred_check
    _
  $region3: #{forward.8} parent=0 // pred_check_branch
    %10 = sbr.rel (0) target = $region5
  $region4: #{forward.8} parent=0 // pred_region
    _
  $region5: #{forward.8} parent=0 // pred_fallthru
    _
  // Predicated region
  $region6: #{forward.8} parent=0 // pred_check
    _
  $region7: #{forward.8} parent=0 // pred_check_branch
    %12 = sbr.rel (0) target = $region9
  $region8: #{forward.8} parent=0 // pred_region
    _
  $region9: #{forward.8} parent=0 // pred_fallthru
    _
  // Predicated region
  $region10: #{forward.8} parent=0 // pred_check
    _
  $region11: #{forward.8} parent=0 // pred_check_branch
    %14 = sbr.rel (0) target = $region13
  $region12: #{forward.8} parent=0 // pred_region
    _
  $region13: #{forward.8} parent=0 // pred_fallthru
    _
  // Predicated region
  $region14: #{forward.8} parent=0 // pred_check
    _
  $region15: #{forward.8} parent=0 // pred_check_branch
    %16 = sbr.rel (0) target = $region17
  $region16: #{forward.8} parent=0 // pred_region
    _
  $region17: #{forward.8} parent=0 // pred_fallthru
    _
  %v18 = vld [vmem:[%s0] sm:$0xf]
  %v19 = vld [vmem:[%s0 + $0x4] sm:$0xf]
  %v20 = vld [vmem:[%s0 + $0x8] sm:$0xf]
  %v21 = vld [vmem:[%s0 + $0xc] sm:$0xf]
  %v22 = vld [vmem:[%s0 + $0x10] sm:$0xf]
  %v23 = vld [vmem:[%s1] sm:$0xf]
  %v24 = vld [vmem:[%s1 + $0x4] sm:$0xf]
  %v25 = vld [vmem:[%s1 + $0x8] sm:$0xf]
  %v26 = vld [vmem:[%s1 + $0xc] sm:$0xf]
  %v27 = vld [vmem:[%s1 + $0x10] sm:$0x3]
  %v33 = vunpack.c.l.b16 %v18
  %v34 = vunpack.c.l.b16 %v19
  %v35 = vunpack.c.l.b16 %v20
  %v36 = vunpack.c.l.b16 %v21
  %v37 = vunpack.c.l.b16 %v22
  %v38 = vpack.c.b16 %v34, %v33
  %v39 = vpack.c.b16 %v36, %v35
  %v40 = vpack.c.b16 %v37, %v37
  %v46 = vunpack.c.l.b16 %v23
  %v47 = vunpack.c.l.b16 %v24
  %v48 = vunpack.c.l.b16 %v25
  %v49 = vunpack.c.l.b16 %v26
  %v50 = vunpack.c.l.b16 %v27
  %v51 = vpack.c.b16 %v47, %v46
  %v52 = vpack.c.b16 %v49, %v48
  %v53 = vpack.c.b16 %v50, %v50
  %vm56 = vcmask 293888
  %v58 = vsel %vm56, %v38, 0
  %v61 = vsel %vm56, %v39, 0
  %v64 = vsel %vm56, %v40, 0
  %vm66 = vcmask 1041408
  %v68 = vsel %vm66, %v53, 0
  %70 = vmatprep.subr.bf16.mxu0 0
  %71 = vmatpush1.bf16.msra.mxu0 %v51
  %72 = vmatprep.subr.bf16.mxu0 0
  %73 = vmatpush1.bf16.msra.mxu0 %v52
  %74 = vmatprep.subr.bf16.mxu0 0
  %75 = vmatpush1.bf16.msra.mxu0 %v68
  %76 = vmatprep.subr.bf16.mxu0 0
  %77 = vmatpush1.bf16.msra.mxu0 0
  %78 = vmatprep.subr.bf16.mxu0 0
  %79 = vmatpush1.bf16.msra.mxu0 0
  %80 = vmatprep.subr.bf16.mxu0 0
  %81 = vmatpush1.bf16.msra.mxu0 0
  %82 = vmatprep.subr.bf16.mxu0 0
  %83 = vmatpush1.bf16.msra.mxu0 0
  %84 = vmatprep.subr.bf16.mxu0 0
  %85 = vmatpush1.bf16.msra.mxu0 0
  %86 = vmatprep.subr.bf16.mxu0 0
  %87 = vmatpush1.bf16.msra.mxu0 0
  %88 = vmatprep.subr.bf16.mxu0 0
  %89 = vmatpush1.bf16.msra.mxu0 0
  %90 = vmatprep.subr.bf16.mxu0 0
  %91 = vmatpush1.bf16.msra.mxu0 0
  %92 = vmatprep.subr.bf16.mxu0 0
  %93 = vmatpush1.bf16.msra.mxu0 0
  %94 = vmatprep.subr.bf16.mxu0 0
  %95 = vmatpush1.bf16.msra.mxu0 0
  %96 = vmatprep.subr.bf16.mxu0 0
  %97 = vmatpush1.bf16.msra.mxu0 0
  %98 = vmatprep.subr.bf16.mxu0 0
  %99 = vmatpush1.bf16.msra.mxu0 0
  %100 = vmatprep.subr.bf16.mxu0 0
  %101 = vmatpush1.bf16.msra.mxu0 0
  %102 = vmatprep.mubr.bf16.mxu0 0
  %103 = vmatmul.mubr.bf16.gmra.mrb[0].mxu0 %v58
  %v104 = vpop.f32.mrb[0].mxu0
  %v105 = vadd.f32 0.0, %v104
  %v106 = vpop.f32.mrb[0].mxu0
  %v107 = vpop.f32.mrb[0].mxu0
  %v108 = vadd.f32 0.0, %v107
  %v109 = vpop.f32.mrb[0].mxu0
  %110 = vmatprep.mubr.bf16.mxu0 0
  %111 = vmatmul.mubr.bf16.gmra.mrb[0].mxu0 %v61
  %v112 = vpop.f32.mrb[0].mxu0
  %v113 = vadd.f32 0.0, %v112
  %v114 = vpop.f32.mrb[0].mxu0
  %v115 = vpop.f32.mrb[0].mxu0
  %v116 = vadd.f32 0.0, %v115
  %v117 = vpop.f32.mrb[0].mxu0
  %118 = vmatprep.mubr.bf16.mxu0 0
  %119 = vmatmul.mubr.bf16.gmra.mrb[0].mxu0 %v64
  %v120 = vpop.f32.mrb[0].mxu0
  %v121 = vadd.f32 0.0, %v120
  %v122 = vpop.f32.mrb[0].mxu0
  %v123 = vpop.f32.mrb[0].mxu0
  %v124 = vpop.f32.mrb[0].mxu0
  %125 = vdwg.mxu0
  %v126 = vld [vmem:[%s2] sm:$0xff]
  %v127 = vld [vmem:[%s2 + $0x8] sm:$0xff]
  %v128 = vld [vmem:[%s2 + $0x10] sm:$0xff]
  %v129 = vld [vmem:[%s2 + $0x18] sm:$0xff]
  %v130 = vld [vmem:[%s2 + $0x20] sm:$0xff]
  %v131 = vld [vmem:[%s3] sm:$0xff]
  %v132 = vld [vmem:[%s3 + $0x8] sm:$0xff]
  %v133 = vld [vmem:[%s3 + $0x10] sm:$0xff]
  %v134 = vld [vmem:[%s3 + $0x18] sm:$0xff]
  %v135 = vld [vmem:[%s3 + $0x20] sm:$0xff]
  %136 = vadd.xlane.f32.xlu0 %v105
  %v137 = vpop.xlane.xlu0 %136
  %138 = vadd.xlane.f32.xlu0 %v108
  %v139 = vpop.xlane.xlu0 %138
  %140 = vadd.xlane.f32.xlu0 %v113
  %v141 = vpop.xlane.xlu0 %140
  %142 = vadd.xlane.f32.xlu0 %v116
  %v143 = vpop.xlane.xlu0 %142
  %144 = vadd.xlane.f32.xlu0 %v121
  %v145 = vpop.xlane.xlu0 %144
  %v146 = vadd.f32 %v137, 0.0
  %v147 = vadd.f32 %v139, 0.0
  %v148 = vadd.f32 %v141, 0.0
  %v149 = vadd.f32 %v143, 0.0
  %v150 = vadd.f32 %v145, 0.0
  %v151 = vmul.f32 %v105, %v105
  %v152 = vmul.f32 %v108, %v108
  %v153 = vmul.f32 %v113, %v113
  %v154 = vmul.f32 %v116, %v116
  %v155 = vmul.f32 %v121, %v121
  %156 = vadd.xlane.f32.xlu0 %v151
  %v157 = vpop.xlane.xlu0 %156
  %158 = vadd.xlane.f32.xlu0 %v152
  %v159 = vpop.xlane.xlu0 %158
  %160 = vadd.xlane.f32.xlu0 %v153
  %v161 = vpop.xlane.xlu0 %160
  %162 = vadd.xlane.f32.xlu0 %v154
  %v163 = vpop.xlane.xlu0 %162
  %164 = vadd.xlane.f32.xlu0 %v155
  %v165 = vpop.xlane.xlu0 %164
  %v166 = vadd.f32 %v157, 0.0
  %v167 = vadd.f32 %v159, 0.0
  %v168 = vadd.f32 %v161, 0.0
  %v169 = vadd.f32 %v163, 0.0
  %v170 = vadd.f32 %v165, 0.0
  %v171 = vmul.f32 %v146, 0.0078125
  %v172 = vmul.f32 %v147, 0.0078125
  %v173 = vmul.f32 %v148, 0.0078125
  %v174 = vmul.f32 %v149, 0.0078125
  %v175 = vmul.f32 %v150, 0.0078125
  %v176 = vmul.f32 %v166, 0.0078125
  %v177 = vmul.f32 %v167, 0.0078125
  %v178 = vmul.f32 %v168, 0.0078125
  %v179 = vmul.f32 %v169, 0.0078125
  %v180 = vmul.f32 %v170, 0.0078125
  %v181 = vmul.f32 %v171, %v171
  %v182 = vmul.f32 %v172, %v172
  %v183 = vmul.f32 %v173, %v173
  %v184 = vmul.f32 %v174, %v174
  %v185 = vmul.f32 %v175, %v175
  %v186 = vsub.f32 %v176, %v181
  %v187 = vsub.f32 %v177, %v182
  %v188 = vsub.f32 %v178, %v183
  %v189 = vsub.f32 %v179, %v184
  %v190 = vsub.f32 %v180, %v185
  %v191 = vmax.f32 %v186, 0.0
  %v192 = vmax.f32 %v187, 0.0
  %v193 = vmax.f32 %v188, 0.0
  %v194 = vmax.f32 %v189, 0.0
  %v195 = vmax.f32 %v190, 0.0
  %v196 = vadd.f32 %v191, 1e-05
  %v197 = vadd.f32 %v192, 1e-05
  %v198 = vadd.f32 %v193, 1e-05
  %v199 = vadd.f32 %v194, 1e-05
  %v200 = vadd.f32 %v195, 1e-05
  %v201 = vrsqrt.pop %v196
  %v202 = vrsqrt.pop %v197
  %v203 = vrsqrt.pop %v198
  %v204 = vrsqrt.pop %v199
  %v205 = vrsqrt.pop %v200
  %v206 = vmul.f32 %v126, %v201
  %v207 = vmul.f32 %v127, %v202
  %v208 = vmul.f32 %v128, %v203
  %v209 = vmul.f32 %v129, %v204
  %v210 = vmul.f32 %v130, %v205
  %v211 = vmul.f32 %v171, %v206
  %v212 = vmul.f32 %v172, %v207
  %v213 = vmul.f32 %v173, %v208
  %v214 = vmul.f32 %v174, %v209
  %v215 = vmul.f32 %v175, %v210
  %v216 = vsub.f32 %v131, %v211
  %v217 = vsub.f32 %v132, %v212
  %v218 = vsub.f32 %v133, %v213
  %v219 = vsub.f32 %v134, %v214
  %v220 = vsub.f32 %v135, %v215
  %222 = vset.pattern.permute.xlu0 0
  %223 = vperm.xlu0 %222, %v206
  %v224 = vpop.permute.xlu0 %223
  %227 = vset.pattern.permute.xlu0 0
  %228 = vperm.xlu0 %227, %v207
  %v229 = vpop.permute.xlu0 %228
  %232 = vset.pattern.permute.xlu0 0
  %233 = vperm.xlu0 %232, %v208
  %v234 = vpop.permute.xlu0 %233
  %237 = vset.pattern.permute.xlu0 0
  %238 = vperm.xlu0 %237, %v209
  %v239 = vpop.permute.xlu0 %238
  %242 = vset.pattern.permute.xlu0 0
  %243 = vperm.xlu0 %242, %v210
  %v244 = vpop.permute.xlu0 %243
  %v246 = vmul.f32 %v105, %v224
  %v247 = vmul.f32 %v108, %v229
  %v248 = vmul.f32 %v113, %v234
  %v249 = vmul.f32 %v116, %v239
  %v250 = vmul.f32 %v121, %v244
  %252 = vset.pattern.permute.xlu0 0
  %253 = vperm.xlu0 %252, %v216
  %v254 = vpop.permute.xlu0 %253
  %257 = vset.pattern.permute.xlu0 0
  %258 = vperm.xlu0 %257, %v217
  %v259 = vpop.permute.xlu0 %258
  %262 = vset.pattern.permute.xlu0 0
  %263 = vperm.xlu0 %262, %v218
  %v264 = vpop.permute.xlu0 %263
  %267 = vset.pattern.permute.xlu0 0
  %268 = vperm.xlu0 %267, %v219
  %v269 = vpop.permute.xlu0 %268
  %272 = vset.pattern.permute.xlu0 0
  %273 = vperm.xlu0 %272, %v220
  %v274 = vpop.permute.xlu0 %273
  %v276 = vadd.f32 %v246, %v254
  %v277 = vadd.f32 %v247, %v259
  %v278 = vadd.f32 %v248, %v264
  %v279 = vadd.f32 %v249, %v269
  %v280 = vadd.f32 %v250, %v274
  %vm281 = vcmp.gt.f32.partialorder %v276, 0.0
  %vm282 = vcmp.gt.f32.partialorder %v277, 0.0
  %vm283 = vcmp.gt.f32.partialorder %v278, 0.0
  %vm284 = vcmp.gt.f32.partialorder %v279, 0.0
  %vm285 = vcmp.gt.f32.partialorder %v280, 0.0
  %v286 = vmul.f32 %v276, 0.01
  %v287 = vmul.f32 %v277, 0.01
  %v288 = vmul.f32 %v278, 0.01
  %v289 = vmul.f32 %v279, 0.01
  %v290 = vmul.f32 %v280, 0.01
  %v291 = vsel %vm281, %v276, %v286
  %v292 = vsel %vm282, %v277, %v287
  %v293 = vsel %vm283, %v278, %v288
  %v294 = vsel %vm284, %v279, %v289
  %v295 = vsel %vm285, %v280, %v290
  %v296 = vpack.c.bf16 %v292, %v291
  %v297 = vpack.c.bf16 %v294, %v293
  %v298 = vpack.c.bf16 %v295, %v295
  %v302 = vunpack.c.l.b16 %v296
  %v303 = vunpack.c.h.b16 %v296
  %v304 = vunpack.c.l.b16 %v297
  %v305 = vunpack.c.h.b16 %v297
  %v306 = vunpack.c.l.b16 %v298
  %v307 = vpack.c.b16 %v302, %v302
  %v308 = vpack.c.b16 %v303, %v303
  %v309 = vpack.c.b16 %v304, %v304
  %v310 = vpack.c.b16 %v305, %v305
  %v311 = vpack.c.b16 %v306, %v306
  %317 = vst [vmem:[%s4] sm:$0xf] %v307
  %318 = vst [vmem:[%s4 + $0x4] sm:$0xf] %v308
  %319 = vst [vmem:[%s4 + $0x8] sm:$0xf] %v309
  %320 = vst [vmem:[%s4 + $0xc] sm:$0xf] %v310
  %321 = vst [vmem:[%s4 + $0x10] sm:$0xf] %v311
  // Predicated region
  $region18: #{forward.8} parent=0 // pred_check
    _
  $region19: #{forward.8} parent=0 // pred_check_branch
    %323 = sbr.rel (0) target = $region21
  $region20: #{forward.8} parent=0 // pred_region
    _
  $region21: #{forward.8} parent=0 // pred_fallthru
    _
  // Predicated region
  $region22: #{forward.8} parent=0 // pred_check
    _
  $region23: #{forward.8} parent=0 // pred_check_branch
    %325 = sbr.rel (0) target = $region25
  $region24: #{forward.8} parent=0 // pred_region
    _
  $region25: #{forward.8} parent=0 // pred_fallthru
    _

// kernel: forward.9
$region0: #{forward.9}
  #allocation0 [shape = 'u32[]', space=smem, size = 0x4, offset = 0x4, fixed_abs, tag = 'smem constant byte address 0x4 - core index']
  #allocation1 [shape = 'u32[144,128]{1,0:T(1,128)}', space=vmem, size = 0x12000, scoped, tag = 'internal scratch']
  %s0 = inlined_call_operand.vmem [shape: bf16[5,16,72], index: 0, kind: input, shape index: {}]
  %s1 = inlined_call_operand.vmem [shape: bf16[5,72,32], index: 1, kind: input, shape index: {}]
  %s2 = inlined_call_operand.vmem [shape: f32[5,16,1], index: 2, kind: input, shape index: {}]
  %s3 = inlined_call_operand.vmem [shape: f32[5,16,1], index: 3, kind: input, shape index: {}]
  %s4 = inlined_call_operand.vmem [shape: bf16[5,16,32], index: 4, kind: output, shape index: {}]
  %s5 = sld [smem:[#allocation0]]
  $region26: #{forward.9} parent=0
    _
  %s7 = ssub.s32 1, %s5
  %s8 = scalar_select 0, %s7, %s5
  // Predicated region
  $region2: #{forward.9} parent=0 // pred_check
    _
  $region3: #{forward.9} parent=0 // pred_check_branch
    %10 = sbr.rel (0) target = $region5
  $region4: #{forward.9} parent=0 // pred_region
    _
  $region5: #{forward.9} parent=0 // pred_fallthru
    _
  // Predicated region
  $region6: #{forward.9} parent=0 // pred_check
    _
  $region7: #{forward.9} parent=0 // pred_check_branch
    %12 = sbr.rel (0) target = $region9
  $region8: #{forward.9} parent=0 // pred_region
    _
  $region9: #{forward.9} parent=0 // pred_fallthru
    _
  // Predicated region
  $region10: #{forward.9} parent=0 // pred_check
    _
  $region11: #{forward.9} parent=0 // pred_check_branch
    %14 = sbr.rel (0) target = $region13
  $region12: #{forward.9} parent=0 // pred_region
    _
  $region13: #{forward.9} parent=0 // pred_fallthru
    _
  // Predicated region
  $region14: #{forward.9} parent=0 // pred_check
    _
  $region15: #{forward.9} parent=0 // pred_check_branch
    %16 = sbr.rel (0) target = $region17
  $region16: #{forward.9} parent=0 // pred_region
    _
  $region17: #{forward.9} parent=0 // pred_fallthru
    _
  %v18 = vld [vmem:[%s0] sm:$0xf]
  %v19 = vld [vmem:[%s0 + $0x4] sm:$0xf]
  %v20 = vld [vmem:[%s1] sm:$0xf]
  %v21 = vld [vmem:[%s1 + $0x4] sm:$0xf]
  %v22 = vld [vmem:[%s1 + $0x8] sm:$0xf]
  %v23 = vld [vmem:[%s1 + $0xc] sm:$0xf]
  %v24 = vld [vmem:[%s1 + $0x10] sm:$0xf]
  %v25 = vld [vmem:[%s1 + $0x14] sm:$0xf]
  %v26 = vld [vmem:[%s1 + $0x18] sm:$0xf]
  %v27 = vld [vmem:[%s1 + $0x1c] sm:$0xf]
  %v28 = vld [vmem:[%s1 + $0x20] sm:$0xf]
  %v31 = vunpack.c.l.b16 %v18
  %v32 = vunpack.c.l.b16 %v19
  %v33 = vpack.c.b16 %v32, %v31
  %v43 = vunpack.c.l.b16 %v20
  %v44 = vunpack.c.l.b16 %v21
  %v45 = vunpack.c.l.b16 %v22
  %v46 = vunpack.c.l.b16 %v23
  %v47 = vunpack.c.l.b16 %v24
  %v48 = vunpack.c.l.b16 %v25
  %v49 = vunpack.c.l.b16 %v26
  %v50 = vunpack.c.l.b16 %v27
  %v51 = vunpack.c.l.b16 %v28
  %v52 = vpack.c.b16 %v44, %v43
  %v53 = vpack.c.b16 %v46, %v45
  %v54 = vpack.c.b16 %v48, %v47
  %v55 = vpack.c.b16 %v50, %v49
  %v56 = vpack.c.b16 %v51, %v51
  %vm61 = vcmask 588800
  %v63 = vsel %vm61, %v33, 0
  %vm65 = vcmask 1043456
  %v67 = vsel %vm65, %v56, 0
  %69 = vmatprep.subr.bf16.mxu0 0
  %70 = vmatpush1.bf16.msra.mxu0 %v52
  %71 = vmatprep.subr.bf16.mxu0 0
  %72 = vmatpush1.bf16.msra.mxu0 %v53
  %73 = vmatprep.subr.bf16.mxu0 0
  %74 = vmatpush1.bf16.msra.mxu0 %v54
  %75 = vmatprep.subr.bf16.mxu0 0
  %76 = vmatpush1.bf16.msra.mxu0 %v55
  %77 = vmatprep.subr.bf16.mxu0 0
  %78 = vmatpush1.bf16.msra.mxu0 %v67
  %79 = vmatprep.subr.bf16.mxu0 0
  %80 = vmatpush1.bf16.msra.mxu0 0
  %81 = vmatprep.subr.bf16.mxu0 0
  %82 = vmatpush1.bf16.msra.mxu0 0
  %83 = vmatprep.subr.bf16.mxu0 0
  %84 = vmatpush1.bf16.msra.mxu0 0
  %85 = vmatprep.subr.bf16.mxu0 0
  %86 = vmatpush1.bf16.msra.mxu0 0
  %87 = vmatprep.subr.bf16.mxu0 0
  %88 = vmatpush1.bf16.msra.mxu0 0
  %89 = vmatprep.subr.bf16.mxu0 0
  %90 = vmatpush1.bf16.msra.mxu0 0
  %91 = vmatprep.subr.bf16.mxu0 0
  %92 = vmatpush1.bf16.msra.mxu0 0
  %93 = vmatprep.subr.bf16.mxu0 0
  %94 = vmatpush1.bf16.msra.mxu0 0
  %95 = vmatprep.subr.bf16.mxu0 0
  %96 = vmatpush1.bf16.msra.mxu0 0
  %97 = vmatprep.subr.bf16.mxu0 0
  %98 = vmatpush1.bf16.msra.mxu0 0
  %99 = vmatprep.subr.bf16.mxu0 0
  %100 = vmatpush1.bf16.msra.mxu0 0
  %101 = vmatprep.mubr.bf16.mxu0 0
  %102 = vmatmul.mubr.bf16.gmra.mrb[0].mxu0 %v63
  %v103 = vpop.f32.mrb[0].mxu0
  %v104 = vadd.f32 0.0, %v103
  %v105 = vpop.f32.mrb[0].mxu0
  %v106 = vpop.f32.mrb[0].mxu0
  %v107 = vadd.f32 0.0, %v106
  %v108 = vpop.f32.mrb[0].mxu0
  %109 = vdwg.mxu0
  %v110 = vld [vmem:[%s2] sm:$0xff]
  %v111 = vld [vmem:[%s2 + $0x8] sm:$0xff]
  %v112 = vld [vmem:[%s3] sm:$0xff]
  %v113 = vld [vmem:[%s3 + $0x8] sm:$0xff]
  %vm114 = vcmask 261120
  %v115 = vsel %vm114, %v104, 0.0
  %116 = vadd.xlane.f32.xlu0 %v115
  %v117 = vpop.xlane.xlu0 %116
  %v118 = vsel %vm114, %v107, 0.0
  %119 = vadd.xlane.f32.xlu0 %v118
  %v120 = vpop.xlane.xlu0 %119
  %v121 = vadd.f32 %v117, 0.0
  %v122 = vadd.f32 %v120, 0.0
  %v123 = vmul.f32 %v104, %v104
  %v124 = vmul.f32 %v107, %v107
  %v125 = vsel %vm114, %v123, 0.0
  %126 = vadd.xlane.f32.xlu0 %v125
  %v127 = vpop.xlane.xlu0 %126
  %v128 = vsel %vm114, %v124, 0.0
  %129 = vadd.xlane.f32.xlu0 %v128
  %v130 = vpop.xlane.xlu0 %129
  %v131 = vadd.f32 %v127, 0.0
  %v132 = vadd.f32 %v130, 0.0
  %v133 = vmul.f32 %v121, 0.03125
  %v134 = vmul.f32 %v122, 0.03125
  %v135 = vmul.f32 %v131, 0.03125
  %v136 = vmul.f32 %v132, 0.03125
  %v137 = vmul.f32 %v133, %v133
  %v138 = vmul.f32 %v134, %v134
  %v139 = vsub.f32 %v135, %v137
  %v140 = vsub.f32 %v136, %v138
  %v141 = vmax.f32 %v139, 0.0
  %v142 = vmax.f32 %v140, 0.0
  %v143 = vadd.f32 %v141, 1e-05
  %v144 = vadd.f32 %v142, 1e-05
  %v145 = vrsqrt.pop %v143
  %v146 = vrsqrt.pop %v144
  %v147 = vmul.f32 %v110, %v145
  %v148 = vmul.f32 %v111, %v146
  %v149 = vmul.f32 %v133, %v147
  %v150 = vmul.f32 %v134, %v148
  %v151 = vsub.f32 %v112, %v149
  %v152 = vsub.f32 %v113, %v150
  %154 = vset.pattern.permute.xlu0 0
  %155 = vperm.xlu0 %154, %v147
  %v156 = vpop.permute.xlu0 %155
  %159 = vset.pattern.permute.xlu0 0
  %160 = vperm.xlu0 %159, %v148
  %v161 = vpop.permute.xlu0 %160
  %v163 = vmul.f32 %v104, %v156
  %v164 = vmul.f32 %v107, %v161
  %166 = vset.pattern.permute.xlu0 0
  %167 = vperm.xlu0 %166, %v151
  %v168 = vpop.permute.xlu0 %167
  %171 = vset.pattern.permute.xlu0 0
  %172 = vperm.xlu0 %171, %v152
  %v173 = vpop.permute.xlu0 %172
  %v175 = vadd.f32 %v163, %v168
  %v176 = vadd.f32 %v164, %v173
  %vm177 = vcmp.gt.f32.partialorder %v175, 0.0
  %vm178 = vcmp.gt.f32.partialorder %v176, 0.0
  %v179 = vmul.f32 %v175, 0.01
  %v180 = vmul.f32 %v176, 0.01
  %v181 = vsel %vm177, %v175, %v179
  %v182 = vsel %vm178, %v176, %v180
  %v183 = vpack.c.bf16 %v182, %v181
  %v185 = vunpack.c.l.b16 %v183
  %v186 = vunpack.c.h.b16 %v183
  %v187 = vpack.c.b16 %v185, %v185
  %v188 = vpack.c.b16 %v186, %v186
  %vm191 = vcmask 257024
  %192 = vst.msk [vmem:[%s4] sm:$0xf] %vm191, %v187
  %193 = vst.msk [vmem:[%s4 + $0x4] sm:$0xf] %vm191, %v188
  %s194 = scalar_lea.vmem %s0, 8
  %v195 = vld [vmem:[%s194] sm:$0xf]
  %v196 = vld [vmem:[%s194 + $0x4] sm:$0xf]
  %s197 = scalar_lea.vmem %s1, 36
  %v198 = vld [vmem:[%s197] sm:$0xf]
  %v199 = vld [vmem:[%s197 + $0x4] sm:$0xf]
  %v200 = vld [vmem:[%s197 + $0x8] sm:$0xf]
  %v201 = vld [vmem:[%s197 + $0xc] sm:$0xf]
  %v202 = vld [vmem:[%s197 + $0x10] sm:$0xf]
  %v203 = vld [vmem:[%s197 + $0x14] sm:$0xf]
  %v204 = vld [vmem:[%s197 + $0x18] sm:$0xf]
  %v205 = vld [vmem:[%s197 + $0x1c] sm:$0xf]
  %v206 = vld [vmem:[%s197 + $0x20] sm:$0xf]
  %v209 = vunpack.c.l.b16 %v195
  %v210 = vunpack.c.l.b16 %v196
  %v211 = vpack.c.b16 %v210, %v209
  %v221 = vunpack.c.l.b16 %v198
  %v222 = vunpack.c.l.b16 %v199
  %v223 = vunpack.c.l.b16 %v200
  %v224 = vunpack.c.l.b16 %v201
  %v225 = vunpack.c.l.b16 %v202
  %v226 = vunpack.c.l.b16 %v203
  %v227 = vunpack.c.l.b16 %v204
  %v228 = vunpack.c.l.b16 %v205
  %v229 = vunpack.c.l.b16 %v206
  %v230 = vpack.c.b16 %v222, %v221
  %v231 = vpack.c.b16 %v224, %v223
  %v232 = vpack.c.b16 %v226, %v225
  %v233 = vpack.c.b16 %v228, %v227
  %v234 = vpack.c.b16 %v229, %v229
  %v240 = vsel %vm61, %v211, 0
  %v243 = vsel %vm65, %v234, 0
  %245 = vmatprep.subr.bf16.mxu0 0
  %246 = vmatpush1.bf16.msra.mxu0 %v230
  %247 = vmatprep.subr.bf16.mxu0 0
  %248 = vmatpush1.bf16.msra.mxu0 %v231
  %249 = vmatprep.subr.bf16.mxu0 0
  %250 = vmatpush1.bf16.msra.mxu0 %v232
  %251 = vmatprep.subr.bf16.mxu0 0
  %252 = vmatpush1.bf16.msra.mxu0 %v233
  %253 = vmatprep.subr.bf16.mxu0 0
  %254 = vmatpush1.bf16.msra.mxu0 %v243
  %255 = vmatprep.subr.bf16.mxu0 0
  %256 = vmatpush1.bf16.msra.mxu0 0
  %257 = vmatprep.subr.bf16.mxu0 0
  %258 = vmatpush1.bf16.msra.mxu0 0
  %259 = vmatprep.subr.bf16.mxu0 0
  %260 = vmatpush1.bf16.msra.mxu0 0
  %261 = vmatprep.subr.bf16.mxu0 0
  %262 = vmatpush1.bf16.msra.mxu0 0
  %263 = vmatprep.subr.bf16.mxu0 0
  %264 = vmatpush1.bf16.msra.mxu0 0
  %265 = vmatprep.subr.bf16.mxu0 0
  %266 = vmatpush1.bf16.msra.mxu0 0
  %267 = vmatprep.subr.bf16.mxu0 0
  %268 = vmatpush1.bf16.msra.mxu0 0
  %269 = vmatprep.subr.bf16.mxu0 0
  %270 = vmatpush1.bf16.msra.mxu0 0
  %271 = vmatprep.subr.bf16.mxu0 0
  %272 = vmatpush1.bf16.msra.mxu0 0
  %273 = vmatprep.subr.bf16.mxu0 0
  %274 = vmatpush1.bf16.msra.mxu0 0
  %275 = vmatprep.subr.bf16.mxu0 0
  %276 = vmatpush1.bf16.msra.mxu0 0
  %277 = vmatprep.mubr.bf16.mxu0 0
  %278 = vmatmul.mubr.bf16.gmra.mrb[0].mxu0 %v240
  %v279 = vpop.f32.mrb[0].mxu0
  %v280 = vadd.f32 0.0, %v279
  %v281 = vpop.f32.mrb[0].mxu0
  %v282 = vpop.f32.mrb[0].mxu0
  %v283 = vadd.f32 0.0, %v282
  %v284 = vpop.f32.mrb[0].mxu0
  %285 = vdwg.mxu0
  %s286 = scalar_lea.vmem %s2, 16
  %v287 = vld [vmem:[%s286] sm:$0xff]
  %v288 = vld [vmem:[%s286 + $0x8] sm:$0xff]
  %s289 = scalar_lea.vmem %s3, 16
  %v290 = vld [vmem:[%s289] sm:$0xff]
  %v291 = vld [vmem:[%s289 + $0x8] sm:$0xff]
  %v292 = vsel %vm114, %v280, 0.0
  %293 = vadd.xlane.f32.xlu0 %v292
  %v294 = vpop.xlane.xlu0 %293
  %v295 = vsel %vm114, %v283, 0.0
  %296 = vadd.xlane.f32.xlu0 %v295
  %v297 = vpop.xlane.xlu0 %296
  %v298 = vadd.f32 %v294, 0.0
  %v299 = vadd.f32 %v297, 0.0
  %v300 = vmul.f32 %v280, %v280
  %v301 = vmul.f32 %v283, %v283
  %v302 = vsel %vm114, %v300, 0.0
  %303 = vadd.xlane.f32.xlu0 %v302
  %v304 = vpop.xlane.xlu0 %303
  %v305 = vsel %vm114, %v301, 0.0
  %306 = vadd.xlane.f32.xlu0 %v305
  %v307 = vpop.xlane.xlu0 %306
  %v308 = vadd.f32 %v304, 0.0
  %v309 = vadd.f32 %v307, 0.0
  %v310 = vmul.f32 %v298, 0.03125
  %v311 = vmul.f32 %v299, 0.03125
  %v312 = vmul.f32 %v308, 0.03125
  %v313 = vmul.f32 %v309, 0.03125
  %v314 = vmul.f32 %v310, %v310
  %v315 = vmul.f32 %v311, %v311
  %v316 = vsub.f32 %v312, %v314
  %v317 = vsub.f32 %v313, %v315
  %v318 = vmax.f32 %v316, 0.0
  %v319 = vmax.f32 %v317, 0.0
  %v320 = vadd.f32 %v318, 1e-05
  %v321 = vadd.f32 %v319, 1e-05
  %v322 = vrsqrt.pop %v320
  %v323 = vrsqrt.pop %v321
  %v324 = vmul.f32 %v287, %v322
  %v325 = vmul.f32 %v288, %v323
  %v326 = vmul.f32 %v310, %v324
  %v327 = vmul.f32 %v311, %v325
  %v328 = vsub.f32 %v290, %v326
  %v329 = vsub.f32 %v291, %v327
  %331 = vset.pattern.permute.xlu0 0
  %332 = vperm.xlu0 %331, %v324
  %v333 = vpop.permute.xlu0 %332
  %336 = vset.pattern.permute.xlu0 0
  %337 = vperm.xlu0 %336, %v325
  %v338 = vpop.permute.xlu0 %337
  %v340 = vmul.f32 %v280, %v333
  %v341 = vmul.f32 %v283, %v338
  %343 = vset.pattern.permute.xlu0 0
  %344 = vperm.xlu0 %343, %v328
  %v345 = vpop.permute.xlu0 %344
  %348 = vset.pattern.permute.xlu0 0
  %349 = vperm.xlu0 %348, %v329
  %v350 = vpop.permute.xlu0 %349
  %v352 = vadd.f32 %v340, %v345
  %v353 = vadd.f32 %v341, %v350
  %vm354 = vcmp.gt.f32.partialorder %v352, 0.0
  %vm355 = vcmp.gt.f32.partialorder %v353, 0.0
  %v356 = vmul.f32 %v352, 0.01
  %v357 = vmul.f32 %v353, 0.01
  %v358 = vsel %vm354, %v352, %v356
  %v359 = vsel %vm355, %v353, %v357
  %v360 = vpack.c.bf16 %v359, %v358
  %v362 = vunpack.c.l.b16 %v360
  %v363 = vunpack.c.h.b16 %v360
  %v364 = vpack.c.b16 %v362, %v362
  %v365 = vpack.c.b16 %v363, %v363
  %s368 = scalar_lea.vmem %s4, 8
  %369 = vst.msk [vmem:[%s368] sm:$0xf] %vm191, %v364
  %370 = vst.msk [vmem:[%s368 + $0x4] sm:$0xf] %vm191, %v365
  %s371 = scalar_lea.vmem %s0, 16
  %v372 = vld [vmem:[%s371] sm:$0xf]
  %v373 = vld [vmem:[%s371 + $0x4] sm:$0xf]
  %s374 = scalar_lea.vmem %s1, 72
  %v375 = vld [vmem:[%s374] sm:$0xf]
  %v376 = vld [vmem:[%s374 + $0x4] sm:$0xf]
  %v377 = vld [vmem:[%s374 + $0x8] sm:$0xf]
  %v378 = vld [vmem:[%s374 + $0xc] sm:$0xf]
  %v379 = vld [vmem:[%s374 + $0x10] sm:$0xf]
  %v380 = vld [vmem:[%s374 + $0x14] sm:$0xf]
  %v381 = vld [vmem:[%s374 + $0x18] sm:$0xf]
  %v382 = vld [vmem:[%s374 + $0x1c] sm:$0xf]
  %v383 = vld [vmem:[%s374 + $0x20] sm:$0xf]
  %v386 = vunpack.c.l.b16 %v372
  %v387 = vunpack.c.l.b16 %v373
  %v388 = vpack.c.b16 %v387, %v386
  %v398 = vunpack.c.l.b16 %v375
  %v399 = vunpack.c.l.b16 %v376
  %v400 = vunpack.c.l.b16 %v377
  %v401 = vunpack.c.l.b16 %v378
  %v402 = vunpack.c.l.b16 %v379
  %v403 = vunpack.c.l.b16 %v380
  %v404 = vunpack.c.l.b16 %v381
  %v405 = vunpack.c.l.b16 %v382
  %v406 = vunpack.c.l.b16 %v383
  %v407 = vpack.c.b16 %v399, %v398
  %v408 = vpack.c.b16 %v401, %v400
  %v409 = vpack.c.b16 %v403, %v402
  %v410 = vpack.c.b16 %v405, %v404
  %v411 = vpack.c.b16 %v406, %v406
  %v417 = vsel %vm61, %v388, 0
  %v420 = vsel %vm65, %v411, 0
  %422 = vmatprep.subr.bf16.mxu0 0
  %423 = vmatpush1.bf16.msra.mxu0 %v407
  %424 = vmatprep.subr.bf16.mxu0 0
  %425 = vmatpush1.bf16.msra.mxu0 %v408
  %426 = vmatprep.subr.bf16.mxu0 0
  %427 = vmatpush1.bf16.msra.mxu0 %v409
  %428 = vmatprep.subr.bf16.mxu0 0
  %429 = vmatpush1.bf16.msra.mxu0 %v410
  %430 = vmatprep.subr.bf16.mxu0 0
  %431 = vmatpush1.bf16.msra.mxu0 %v420
  %432 = vmatprep.subr.bf16.mxu0 0
  %433 = vmatpush1.bf16.msra.mxu0 0
  %434 = vmatprep.subr.bf16.mxu0 0
  %435 = vmatpush1.bf16.msra.mxu0 0
  %436 = vmatprep.subr.bf16.mxu0 0
  %437 = vmatpush1.bf16.msra.mxu0 0
  %438 = vmatprep.subr.bf16.mxu0 0
  %439 = vmatpush1.bf16.msra.mxu0 0
  %440 = vmatprep.subr.bf16.mxu0 0
  %441 = vmatpush1.bf16.msra.mxu0 0
  %442 = vmatprep.subr.bf16.mxu0 0
  %443 = vmatpush1.bf16.msra.mxu0 0
  %444 = vmatprep.subr.bf16.mxu0 0
  %445 = vmatpush1.bf16.msra.mxu0 0
  %446 = vmatprep.subr.bf16.mxu0 0
  %447 = vmatpush1.bf16.msra.mxu0 0
  %448 = vmatprep.subr.bf16.mxu0 0
  %449 = vmatpush1.bf16.msra.mxu0 0
  %450 = vmatprep.subr.bf16.mxu0 0
  %451 = vmatpush1.bf16.msra.mxu0 0
  %452 = vmatprep.subr.bf16.mxu0 0
  %453 = vmatpush1.bf16.msra.mxu0 0
  %454 = vmatprep.mubr.bf16.mxu0 0
  %455 = vmatmul.mubr.bf16.gmra.mrb[0].mxu0 %v417
  %v456 = vpop.f32.mrb[0].mxu0
  %v457 = vadd.f32 0.0, %v456
  %v458 = vpop.f32.mrb[0].mxu0
  %v459 = vpop.f32.mrb[0].mxu0
  %v460 = vadd.f32 0.0, %v459
  %v461 = vpop.f32.mrb[0].mxu0
  %462 = vdwg.mxu0
  %s463 = scalar_lea.vmem %s2, 32
  %v464 = vld [vmem:[%s463] sm:$0xff]
  %v465 = vld [vmem:[%s463 + $0x8] sm:$0xff]
  %s466 = scalar_lea.vmem %s3, 32
  %v467 = vld [vmem:[%s466] sm:$0xff]
  %v468 = vld [vmem:[%s466 + $0x8] sm:$0xff]
  %v469 = vsel %vm114, %v457, 0.0
  %470 = vadd.xlane.f32.xlu0 %v469
  %v471 = vpop.xlane.xlu0 %470
  %v472 = vsel %vm114, %v460, 0.0
  %473 = vadd.xlane.f32.xlu0 %v472
  %v474 = vpop.xlane.xlu0 %473
  %v475 = vadd.f32 %v471, 0.0
  %v476 = vadd.f32 %v474, 0.0
  %v477 = vmul.f32 %v457, %v457
  %v478 = vmul.f32 %v460, %v460
  %v479 = vsel %vm114, %v477, 0.0
  %480 = vadd.xlane.f32.xlu0 %v479
  %v481 = vpop.xlane.xlu0 %480
  %v482 = vsel %vm114, %v478, 0.0
  %483 = vadd.xlane.f32.xlu0 %v482
  %v484 = vpop.xlane.xlu0 %483
  %v485 = vadd.f32 %v481, 0.0
  %v486 = vadd.f32 %v484, 0.0
  %v487 = vmul.f32 %v475, 0.03125
  %v488 = vmul.f32 %v476, 0.03125
  %v489 = vmul.f32 %v485, 0.03125
  %v490 = vmul.f32 %v486, 0.03125
  %v491 = vmul.f32 %v487, %v487
  %v492 = vmul.f32 %v488, %v488
  %v493 = vsub.f32 %v489, %v491
  %v494 = vsub.f32 %v490, %v492
  %v495 = vmax.f32 %v493, 0.0
  %v496 = vmax.f32 %v494, 0.0
  %v497 = vadd.f32 %v495, 1e-05
  %v498 = vadd.f32 %v496, 1e-05
  %v499 = vrsqrt.pop %v497
  %v500 = vrsqrt.pop %v498
  %v501 = vmul.f32 %v464, %v499
  %v502 = vmul.f32 %v465, %v500
  %v503 = vmul.f32 %v487, %v501
  %v504 = vmul.f32 %v488, %v502
  %v505 = vsub.f32 %v467, %v503
  %v506 = vsub.f32 %v468, %v504
  %508 = vset.pattern.permute.xlu0 0
  %509 = vperm.xlu0 %508, %v501
  %v510 = vpop.permute.xlu0 %509
  %513 = vset.pattern.permute.xlu0 0
  %514 = vperm.xlu0 %513, %v502
  %v515 = vpop.permute.xlu0 %514
  %v517 = vmul.f32 %v457, %v510
  %v518 = vmul.f32 %v460, %v515
  %520 = vset.pattern.permute.xlu0 0
  %521 = vperm.xlu0 %520, %v505
  %v522 = vpop.permute.xlu0 %521
  %525 = vset.pattern.permute.xlu0 0
  %526 = vperm.xlu0 %525, %v506
  %v527 = vpop.permute.xlu0 %526
  %v529 = vadd.f32 %v517, %v522
  %v530 = vadd.f32 %v518, %v527
  %vm531 = vcmp.gt.f32.partialorder %v529, 0.0
  %vm532 = vcmp.gt.f32.partialorder %v530, 0.0
  %v533 = vmul.f32 %v529, 0.01
  %v534 = vmul.f32 %v530, 0.01
  %v535 = vsel %vm531, %v529, %v533
  %v536 = vsel %vm532, %v530, %v534
  %v537 = vpack.c.bf16 %v536, %v535
  %v539 = vunpack.c.l.b16 %v537
  %v540 = vunpack.c.h.b16 %v537
  %v541 = vpack.c.b16 %v539, %v539
  %v542 = vpack.c.b16 %v540, %v540
  %s545 = scalar_lea.vmem %s4, 16
  %546 = vst.msk [vmem:[%s545] sm:$0xf] %vm191, %v541
  %547 = vst.msk [vmem:[%s545 + $0x4] sm:$0xf] %vm191, %v542
  %s548 = scalar_lea.vmem %s0, 24
  %v549 = vld [vmem:[%s548] sm:$0xf]
  %v550 = vld [vmem:[%s548 + $0x4] sm:$0xf]
  %s551 = scalar_lea.vmem %s1, 108
  %v552 = vld [vmem:[%s551] sm:$0xf]
  %v553 = vld [vmem:[%s551 + $0x4] sm:$0xf]
  %v554 = vld [vmem:[%s551 + $0x8] sm:$0xf]
  %v555 = vld [vmem:[%s551 + $0xc] sm:$0xf]
  %v556 = vld [vmem:[%s551 + $0x10] sm:$0xf]
  %v557 = vld [vmem:[%s551 + $0x14] sm:$0xf]
  %v558 = vld [vmem:[%s551 + $0x18] sm:$0xf]
  %v559 = vld [vmem:[%s551 + $0x1c] sm:$0xf]
  %v560 = vld [vmem:[%s551 + $0x20] sm:$0xf]
  %v563 = vunpack.c.l.b16 %v549
  %v564 = vunpack.c.l.b16 %v550
  %v565 = vpack.c.b16 %v564, %v563
  %v575 = vunpack.c.l.b16 %v552
  %v576 = vunpack.c.l.b16 %v553
  %v577 = vunpack.c.l.b16 %v554
  %v578 = vunpack.c.l.b16 %v555
  %v579 = vunpack.c.l.b16 %v556
  %v580 = vunpack.c.l.b16 %v557
  %v581 = vunpack.c.l.b16 %v558
  %v582 = vunpack.c.l.b16 %v559
  %v583 = vunpack.c.l.b16 %v560
  %v584 = vpack.c.b16 %v576, %v575
  %v585 = vpack.c.b16 %v578, %v577
  %v586 = vpack.c.b16 %v580, %v579
  %v587 = vpack.c.b16 %v582, %v581
  %v588 = vpack.c.b16 %v583, %v583
  %v594 = vsel %vm61, %v565, 0
  %v597 = vsel %vm65, %v588, 0
  %599 = vmatprep.subr.bf16.mxu0 0
  %600 = vmatpush1.bf16.msra.mxu0 %v584
  %601 = vmatprep.subr.bf16.mxu0 0
  %602 = vmatpush1.bf16.msra.mxu0 %v585
  %603 = vmatprep.subr.bf16.mxu0 0
  %604 = vmatpush1.bf16.msra.mxu0 %v586
  %605 = vmatprep.subr.bf16.mxu0 0
  %606 = vmatpush1.bf16.msra.mxu0 %v587
  %607 = vmatprep.subr.bf16.mxu0 0
  %608 = vmatpush1.bf16.msra.mxu0 %v597
  %609 = vmatprep.subr.bf16.mxu0 0
  %610 = vmatpush1.bf16.msra.mxu0 0
  %611 = vmatprep.subr.bf16.mxu0 0
  %612 = vmatpush1.bf16.msra.mxu0 0
  %613 = vmatprep.subr.bf16.mxu0 0
  %614 = vmatpush1.bf16.msra.mxu0 0
  %615 = vmatprep.subr.bf16.mxu0 0
  %616 = vmatpush1.bf16.msra.mxu0 0
  %617 = vmatprep.subr.bf16.mxu0 0
  %618 = vmatpush1.bf16.msra.mxu0 0
  %619 = vmatprep.subr.bf16.mxu0 0
  %620 = vmatpush1.bf16.msra.mxu0 0
  %621 = vmatprep.subr.bf16.mxu0 0
  %622 = vmatpush1.bf16.msra.mxu0 0
  %623 = vmatprep.subr.bf16.mxu0 0
  %624 = vmatpush1.bf16.msra.mxu0 0
  %625 = vmatprep.subr.bf16.mxu0 0
  %626 = vmatpush1.bf16.msra.mxu0 0
  %627 = vmatprep.subr.bf16.mxu0 0
  %628 = vmatpush1.bf16.msra.mxu0 0
  %629 = vmatprep.subr.bf16.mxu0 0
  %630 = vmatpush1.bf16.msra.mxu0 0
  %631 = vmatprep.mubr.bf16.mxu0 0
  %632 = vmatmul.mubr.bf16.gmra.mrb[0].mxu0 %v594
  %v633 = vpop.f32.mrb[0].mxu0
  %v634 = vadd.f32 0.0, %v633
  %v635 = vpop.f32.mrb[0].mxu0
  %v636 = vpop.f32.mrb[0].mxu0
  %v637 = vadd.f32 0.0, %v636
  %v638 = vpop.f32.mrb[0].mxu0
  %639 = vdwg.mxu0
  %s640 = scalar_lea.vmem %s2, 48
  %v641 = vld [vmem:[%s640] sm:$0xff]
  %v642 = vld [vmem:[%s640 + $0x8] sm:$0xff]
  %s643 = scalar_lea.vmem %s3, 48
  %v644 = vld [vmem:[%s643] sm:$0xff]
  %v645 = vld [vmem:[%s643 + $0x8] sm:$0xff]
  %v646 = vsel %vm114, %v634, 0.0
  %647 = vadd.xlane.f32.xlu0 %v646
  %v648 = vpop.xlane.xlu0 %647
  %v649 = vsel %vm114, %v637, 0.0
  %650 = vadd.xlane.f32.xlu0 %v649
  %v651 = vpop.xlane.xlu0 %650
  %v652 = vadd.f32 %v648, 0.0
  %v653 = vadd.f32 %v651, 0.0
  %v654 = vmul.f32 %v634, %v634
  %v655 = vmul.f32 %v637, %v637
  %v656 = vsel %vm114, %v654, 0.0
  %657 = vadd.xlane.f32.xlu0 %v656
  %v658 = vpop.xlane.xlu0 %657
  %v659 = vsel %vm114, %v655, 0.0
  %660 = vadd.xlane.f32.xlu0 %v659
  %v661 = vpop.xlane.xlu0 %660
  %v662 = vadd.f32 %v658, 0.0
  %v663 = vadd.f32 %v661, 0.0
  %v664 = vmul.f32 %v652, 0.03125
  %v665 = vmul.f32 %v653, 0.03125
  %v666 = vmul.f32 %v662, 0.03125
  %v667 = vmul.f32 %v663, 0.03125
  %v668 = vmul.f32 %v664, %v664
  %v669 = vmul.f32 %v665, %v665
  %v670 = vsub.f32 %v666, %v668
  %v671 = vsub.f32 %v667, %v669
  %v672 = vmax.f32 %v670, 0.0
  %v673 = vmax.f32 %v671, 0.0
  %v674 = vadd.f32 %v672, 1e-05
  %v675 = vadd.f32 %v673, 1e-05
  %v676 = vrsqrt.pop %v674
  %v677 = vrsqrt.pop %v675
  %v678 = vmul.f32 %v641, %v676
  %v679 = vmul.f32 %v642, %v677
  %v680 = vmul.f32 %v664, %v678
  %v681 = vmul.f32 %v665, %v679
  %v682 = vsub.f32 %v644, %v680
  %v683 = vsub.f32 %v645, %v681
  %685 = vset.pattern.permute.xlu0 0
  %686 = vperm.xlu0 %685, %v678
  %v687 = vpop.permute.xlu0 %686
  %690 = vset.pattern.permute.xlu0 0
  %691 = vperm.xlu0 %690, %v679
  %v692 = vpop.permute.xlu0 %691
  %v694 = vmul.f32 %v634, %v687
  %v695 = vmul.f32 %v637, %v692
  %697 = vset.pattern.permute.xlu0 0
  %698 = vperm.xlu0 %697, %v682
  %v699 = vpop.permute.xlu0 %698
  %702 = vset.pattern.permute.xlu0 0
  %703 = vperm.xlu0 %702, %v683
  %v704 = vpop.permute.xlu0 %703
  %v706 = vadd.f32 %v694, %v699
  %v707 = vadd.f32 %v695, %v704
  %vm708 = vcmp.gt.f32.partialorder %v706, 0.0
  %vm709 = vcmp.gt.f32.partialorder %v707, 0.0
  %v710 = vmul.f32 %v706, 0.01
  %v711 = vmul.f32 %v707, 0.01
  %v712 = vsel %vm708, %v706, %v710
  %v713 = vsel %vm709, %v707, %v711
  %v714 = vpack.c.bf16 %v713, %v712
  %v716 = vunpack.c.l.b16 %v714
  %v717 = vunpack.c.h.b16 %v714
  %v718 = vpack.c.b16 %v716, %v716
  %v719 = vpack.c.b16 %v717, %v717
  %s722 = scalar_lea.vmem %s4, 24
  %723 = vst.msk [vmem:[%s722] sm:$0xf] %vm191, %v718
  %724 = vst.msk [vmem:[%s722 + $0x4] sm:$0xf] %vm191, %v719
  %s725 = scalar_lea.vmem %s0, 32
  %v726 = vld [vmem:[%s725] sm:$0xf]
  %v727 = vld [vmem:[%s725 + $0x4] sm:$0xf]
  %s728 = scalar_lea.vmem %s1, 144
  %v729 = vld [vmem:[%s728] sm:$0xf]
  %v730 = vld [vmem:[%s728 + $0x4] sm:$0xf]
  %v731 = vld [vmem:[%s728 + $0x8] sm:$0xf]
  %v732 = vld [vmem:[%s728 + $0xc] sm:$0xf]
  %v733 = vld [vmem:[%s728 + $0x10] sm:$0xf]
  %v734 = vld [vmem:[%s728 + $0x14] sm:$0xf]
  %v735 = vld [vmem:[%s728 + $0x18] sm:$0xf]
  %v736 = vld [vmem:[%s728 + $0x1c] sm:$0xf]
  %v737 = vld [vmem:[%s728 + $0x20] sm:$0xf]
  %v740 = vunpack.c.l.b16 %v726
  %v741 = vunpack.c.l.b16 %v727
  %v742 = vpack.c.b16 %v741, %v740
  %v752 = vunpack.c.l.b16 %v729
  %v753 = vunpack.c.l.b16 %v730
  %v754 = vunpack.c.l.b16 %v731
  %v755 = vunpack.c.l.b16 %v732
  %v756 = vunpack.c.l.b16 %v733
  %v757 = vunpack.c.l.b16 %v734
  %v758 = vunpack.c.l.b16 %v735
  %v759 = vunpack.c.l.b16 %v736
  %v760 = vunpack.c.l.b16 %v737
  %v761 = vpack.c.b16 %v753, %v752
  %v762 = vpack.c.b16 %v755, %v754
  %v763 = vpack.c.b16 %v757, %v756
  %v764 = vpack.c.b16 %v759, %v758
  %v765 = vpack.c.b16 %v760, %v760
  %v771 = vsel %vm61, %v742, 0
  %v774 = vsel %vm65, %v765, 0
  %776 = vmatprep.subr.bf16.mxu0 0
  %777 = vmatpush1.bf16.msra.mxu0 %v761
  %778 = vmatprep.subr.bf16.mxu0 0
  %779 = vmatpush1.bf16.msra.mxu0 %v762
  %780 = vmatprep.subr.bf16.mxu0 0
  %781 = vmatpush1.bf16.msra.mxu0 %v763
  %782 = vmatprep.subr.bf16.mxu0 0
  %783 = vmatpush1.bf16.msra.mxu0 %v764
  %784 = vmatprep.subr.bf16.mxu0 0
  %785 = vmatpush1.bf16.msra.mxu0 %v774
  %786 = vmatprep.subr.bf16.mxu0 0
  %787 = vmatpush1.bf16.msra.mxu0 0
  %788 = vmatprep.subr.bf16.mxu0 0
  %789 = vmatpush1.bf16.msra.mxu0 0
  %790 = vmatprep.subr.bf16.mxu0 0
  %791 = vmatpush1.bf16.msra.mxu0 0
  %792 = vmatprep.subr.bf16.mxu0 0
  %793 = vmatpush1.bf16.msra.mxu0 0
  %794 = vmatprep.subr.bf16.mxu0 0
  %795 = vmatpush1.bf16.msra.mxu0 0
  %796 = vmatprep.subr.bf16.mxu0 0
  %797 = vmatpush1.bf16.msra.mxu0 0
  %798 = vmatprep.subr.bf16.mxu0 0
  %799 = vmatpush1.bf16.msra.mxu0 0
  %800 = vmatprep.subr.bf16.mxu0 0
  %801 = vmatpush1.bf16.msra.mxu0 0
  %802 = vmatprep.subr.bf16.mxu0 0
  %803 = vmatpush1.bf16.msra.mxu0 0
  %804 = vmatprep.subr.bf16.mxu0 0
  %805 = vmatpush1.bf16.msra.mxu0 0
  %806 = vmatprep.subr.bf16.mxu0 0
  %807 = vmatpush1.bf16.msra.mxu0 0
  %808 = vmatprep.mubr.bf16.mxu0 0
  %809 = vmatmul.mubr.bf16.gmra.mrb[0].mxu0 %v771
  %v810 = vpop.f32.mrb[0].mxu0
  %v811 = vadd.f32 0.0, %v810
  %v812 = vpop.f32.mrb[0].mxu0
  %v813 = vpop.f32.mrb[0].mxu0
  %v814 = vadd.f32 0.0, %v813
  %v815 = vpop.f32.mrb[0].mxu0
  %816 = vdwg.mxu0
  %s817 = scalar_lea.vmem %s2, 64
  %v818 = vld [vmem:[%s817] sm:$0xff]
  %v819 = vld [vmem:[%s817 + $0x8] sm:$0xff]
  %s820 = scalar_lea.vmem %s3, 64
  %v821 = vld [vmem:[%s820] sm:$0xff]
  %v822 = vld [vmem:[%s820 + $0x8] sm:$0xff]
  %v823 = vsel %vm114, %v811, 0.0
  %824 = vadd.xlane.f32.xlu0 %v823
  %v825 = vpop.xlane.xlu0 %824
  %v826 = vsel %vm114, %v814, 0.0
  %827 = vadd.xlane.f32.xlu0 %v826
  %v828 = vpop.xlane.xlu0 %827
  %v829 = vadd.f32 %v825, 0.0
  %v830 = vadd.f32 %v828, 0.0
  %v831 = vmul.f32 %v811, %v811
  %v832 = vmul.f32 %v814, %v814
  %v833 = vsel %vm114, %v831, 0.0
  %834 = vadd.xlane.f32.xlu0 %v833
  %v835 = vpop.xlane.xlu0 %834
  %v836 = vsel %vm114, %v832, 0.0
  %837 = vadd.xlane.f32.xlu0 %v836
  %v838 = vpop.xlane.xlu0 %837
  %v839 = vadd.f32 %v835, 0.0
  %v840 = vadd.f32 %v838, 0.0
  %v841 = vmul.f32 %v829, 0.03125
  %v842 = vmul.f32 %v830, 0.03125
  %v843 = vmul.f32 %v839, 0.03125
  %v844 = vmul.f32 %v840, 0.03125
  %v845 = vmul.f32 %v841, %v841
  %v846 = vmul.f32 %v842, %v842
  %v847 = vsub.f32 %v843, %v845
  %v848 = vsub.f32 %v844, %v846
  %v849 = vmax.f32 %v847, 0.0
  %v850 = vmax.f32 %v848, 0.0
  %v851 = vadd.f32 %v849, 1e-05
  %v852 = vadd.f32 %v850, 1e-05
  %v853 = vrsqrt.pop %v851
  %v854 = vrsqrt.pop %v852
  %v855 = vmul.f32 %v818, %v853
  %v856 = vmul.f32 %v819, %v854
  %v857 = vmul.f32 %v841, %v855
  %v858 = vmul.f32 %v842, %v856
  %v859 = vsub.f32 %v821, %v857
  %v860 = vsub.f32 %v822, %v858
  %862 = vset.pattern.permute.xlu0 0
  %863 = vperm.xlu0 %862, %v855
  %v864 = vpop.permute.xlu0 %863
  %867 = vset.pattern.permute.xlu0 0
  %868 = vperm.xlu0 %867, %v856
  %v869 = vpop.permute.xlu0 %868
  %v871 = vmul.f32 %v811, %v864
  %v872 = vmul.f32 %v814, %v869
  %874 = vset.pattern.permute.xlu0 0
  %875 = vperm.xlu0 %874, %v859
  %v876 = vpop.permute.xlu0 %875
  %879 = vset.pattern.permute.xlu0 0
  %880 = vperm.xlu0 %879, %v860
  %v881 = vpop.permute.xlu0 %880
  %v883 = vadd.f32 %v871, %v876
  %v884 = vadd.f32 %v872, %v881
  %vm885 = vcmp.gt.f32.partialorder %v883, 0.0
  %vm886 = vcmp.gt.f32.partialorder %v884, 0.0
  %v887 = vmul.f32 %v883, 0.01
  %v888 = vmul.f32 %v884, 0.01
  %v889 = vsel %vm885, %v883, %v887
  %v890 = vsel %vm886, %v884, %v888
  %v891 = vpack.c.bf16 %v890, %v889
  %v893 = vunpack.c.l.b16 %v891
  %v894 = vunpack.c.h.b16 %v891
  %v895 = vpack.c.b16 %v893, %v893
  %v896 = vpack.c.b16 %v894, %v894
  %s899 = scalar_lea.vmem %s4, 32
  %900 = vst.msk [vmem:[%s899] sm:$0xf] %vm191, %v895
  %901 = vst.msk [vmem:[%s899 + $0x4] sm:$0xf] %vm191, %v896
  // Predicated region
  $region18: #{forward.9} parent=0 // pred_check
    _
  $region19: #{forward.9} parent=0 // pred_check_branch
    %903 = sbr.rel (0) target = $region21
  $region20: #{forward.9} parent=0 // pred_region
    _
  $region21: #{forward.9} parent=0 // pred_fallthru
    _
  // Predicated region
  $region22: #{forward.9} parent=0 // pred_check
    _
  $region23: #{forward.9} parent=0 // pred_check_branch
    %905 = sbr.rel (0) target = $region25
  $region24: #{forward.9} parent=0 // pred_region
    _
  $region25: #{forward.9} parent=0 // pred_fallthru
    _

// kernel: forward.10
$region0: #{forward.10}
  #allocation0 [shape = 'u32[]', space=smem, size = 0x4, offset = 0x4, fixed_abs, tag = 'smem constant byte address 0x4 - core index']
  #allocation1 [shape = 'u32[144,128]{1,0:T(1,128)}', space=vmem, size = 0x12000, scoped, tag = 'internal scratch']
  %s0 = inlined_call_operand.vmem [shape: bf16[5,32,144], index: 0, kind: input, shape index: {}]
  %s1 = inlined_call_operand.vmem [shape: bf16[5,144,8], index: 1, kind: input, shape index: {}]
  %s2 = inlined_call_operand.vmem [shape: f32[5,32,1], index: 2, kind: input, shape index: {}]
  %s3 = inlined_call_operand.vmem [shape: f32[5,32,1], index: 3, kind: input, shape index: {}]
  %s4 = inlined_call_operand.vmem [shape: bf16[5,32,8], index: 4, kind: output, shape index: {}]
  %s5 = sld [smem:[#allocation0]]
  $region26: #{forward.10} parent=0
    _
  %s7 = ssub.s32 1, %s5
  %s8 = scalar_select 0, %s7, %s5
  // Predicated region
  $region2: #{forward.10} parent=0 // pred_check
    _
  $region3: #{forward.10} parent=0 // pred_check_branch
    %10 = sbr.rel (0) target = $region5
  $region4: #{forward.10} parent=0 // pred_region
    _
  $region5: #{forward.10} parent=0 // pred_fallthru
    _
  // Predicated region
  $region6: #{forward.10} parent=0 // pred_check
    _
  $region7: #{forward.10} parent=0 // pred_check_branch
    %12 = sbr.rel (0) target = $region9
  $region8: #{forward.10} parent=0 // pred_region
    _
  $region9: #{forward.10} parent=0 // pred_fallthru
    _
  // Predicated region
  $region10: #{forward.10} parent=0 // pred_check
    _
  $region11: #{forward.10} parent=0 // pred_check_branch
    %14 = sbr.rel (0) target = $region13
  $region12: #{forward.10} parent=0 // pred_region
    _
  $region13: #{forward.10} parent=0 // pred_fallthru
    _
  // Predicated region
  $region14: #{forward.10} parent=0 // pred_check
    _
  $region15: #{forward.10} parent=0 // pred_check_branch
    %16 = sbr.rel (0) target = $region17
  $region16: #{forward.10} parent=0 // pred_region
    _
  $region17: #{forward.10} parent=0 // pred_fallthru
    _
  %v18 = vld [vmem:[%s0] sm:$0xff]
  %v19 = vld [vmem:[%s0 + $0x8] sm:$0xff]
  %v20 = vld [vmem:[%s0 + $0x10] sm:$0xff]
  %v21 = vld [vmem:[%s0 + $0x18] sm:$0xff]
  %v22 = vld [vmem:[%s1] sm:$0xf]
  %v23 = vld [vmem:[%s1 + $0x4] sm:$0xf]
  %v24 = vld [vmem:[%s1 + $0x8] sm:$0xf]
  %v25 = vld [vmem:[%s1 + $0xc] sm:$0xf]
  %v26 = vld [vmem:[%s1 + $0x10] sm:$0xf]
  %v27 = vld [vmem:[%s1 + $0x14] sm:$0xf]
  %v28 = vld [vmem:[%s1 + $0x18] sm:$0xf]
  %v29 = vld [vmem:[%s1 + $0x1c] sm:$0xf]
  %v30 = vld [vmem:[%s1 + $0x20] sm:$0xf]
  %v31 = vld [vmem:[%s1 + $0x24] sm:$0xf]
  %v32 = vld [vmem:[%s1 + $0x28] sm:$0xf]
  %v33 = vld [vmem:[%s1 + $0x2c] sm:$0xf]
  %v34 = vld [vmem:[%s1 + $0x30] sm:$0xf]
  %v35 = vld [vmem:[%s1 + $0x34] sm:$0xf]
  %v36 = vld [vmem:[%s1 + $0x38] sm:$0xf]
  %v37 = vld [vmem:[%s1 + $0x3c] sm:$0xf]
  %v38 = vld [vmem:[%s1 + $0x40] sm:$0xf]
  %v39 = vld [vmem:[%s1 + $0x44] sm:$0xf]
  %v44 = vunpack.c.l.b16 %v18
  %v45 = vunpack.c.h.b16 %v18
  %v46 = vunpack.c.l.b16 %v19
  %v47 = vunpack.c.h.b16 %v19
  %v48 = vunpack.c.l.b16 %v20
  %v49 = vunpack.c.h.b16 %v20
  %v50 = vunpack.c.l.b16 %v21
  %v51 = vunpack.c.h.b16 %v21
  %v52 = vpack.c.b16 %v46, %v44
  %v53 = vpack.c.b16 %v47, %v45
  %v54 = vpack.c.b16 %v50, %v48
  %v55 = vpack.c.b16 %v51, %v49
  %v76 = vunpack.c.l.b16 %v22
  %v77 = vunpack.c.l.b16 %v23
  %v78 = vunpack.c.l.b16 %v24
  %v79 = vunpack.c.l.b16 %v25
  %v80 = vunpack.c.l.b16 %v26
  %v81 = vunpack.c.l.b16 %v27
  %v82 = vunpack.c.l.b16 %v28
  %v83 = vunpack.c.l.b16 %v29
  %v84 = vunpack.c.l.b16 %v30
  %v85 = vunpack.c.l.b16 %v31
  %v86 = vunpack.c.l.b16 %v32
  %v87 = vunpack.c.l.b16 %v33
  %v88 = vunpack.c.l.b16 %v34
  %v89 = vunpack.c.l.b16 %v35
  %v90 = vunpack.c.l.b16 %v36
  %v91 = vunpack.c.l.b16 %v37
  %v92 = vunpack.c.l.b16 %v38
  %v93 = vunpack.c.l.b16 %v39
  %v94 = vpack.c.b16 %v77, %v76
  %v95 = vpack.c.b16 %v79, %v78
  %v96 = vpack.c.b16 %v81, %v80
  %v97 = vpack.c.b16 %v83, %v82
  %v98 = vpack.c.b16 %v85, %v84
  %v99 = vpack.c.b16 %v87, %v86
  %v100 = vpack.c.b16 %v89, %v88
  %v101 = vpack.c.b16 %v91, %v90
  %v102 = vpack.c.b16 %v93, %v92
  %vm112 = vcmask 130048
  %v114 = vsel %vm112, %v53, 0
  %v117 = vsel %vm112, %v55, 0
  %119 = vmatprep.subr.bf16.mxu0 0
  %120 = vmatpush1.bf16.msra.mxu0 %v94
  %121 = vmatprep.subr.bf16.mxu0 0
  %122 = vmatpush1.bf16.msra.mxu0 %v95
  %123 = vmatprep.subr.bf16.mxu0 0
  %124 = vmatpush1.bf16.msra.mxu0 %v96
  %125 = vmatprep.subr.bf16.mxu0 0
  %126 = vmatpush1.bf16.msra.mxu0 %v97
  %127 = vmatprep.subr.bf16.mxu0 0
  %128 = vmatpush1.bf16.msra.mxu0 %v98
  %129 = vmatprep.subr.bf16.mxu0 0
  %130 = vmatpush1.bf16.msra.mxu0 %v99
  %131 = vmatprep.subr.bf16.mxu0 0
  %132 = vmatpush1.bf16.msra.mxu0 %v100
  %133 = vmatprep.subr.bf16.mxu0 0
  %134 = vmatpush1.bf16.msra.mxu0 %v101
  %135 = vmatprep.subr.bf16.mxu0 0
  %136 = vmatpush1.bf16.msra.mxu0 %v102
  %137 = vmatprep.subr.bf16.mxu0 0
  %138 = vmatpush1.bf16.msra.mxu0 0
  %139 = vmatprep.subr.bf16.mxu0 0
  %140 = vmatpush1.bf16.msra.mxu0 0
  %141 = vmatprep.subr.bf16.mxu0 0
  %142 = vmatpush1.bf16.msra.mxu0 0
  %143 = vmatprep.subr.bf16.mxu0 0
  %144 = vmatpush1.bf16.msra.mxu0 0
  %145 = vmatprep.subr.bf16.mxu0 0
  %146 = vmatpush1.bf16.msra.mxu0 0
  %147 = vmatprep.subr.bf16.mxu0 0
  %148 = vmatpush1.bf16.msra.mxu0 0
  %149 = vmatprep.subr.bf16.mxu0 0
  %150 = vmatpush1.bf16.msra.mxu0 0
  %151 = vmatprep.mubr.bf16.mxu0 %v114
  %152 = vmatmul.mubr.bf16.gmra.mrb[0].mxu0 %v52
  %v153 = vpop.f32.mrb[0].mxu0
  %v154 = vadd.f32 0.0, %v153
  %v155 = vpop.f32.mrb[0].mxu0
  %v156 = vpop.f32.mrb[0].mxu0
  %v157 = vadd.f32 0.0, %v156
  %v158 = vpop.f32.mrb[0].mxu0
  %159 = vmatprep.mubr.bf16.mxu0 %v117
  %160 = vmatmul.mubr.bf16.gmra.mrb[0].mxu0 %v54
  %v161 = vpop.f32.mrb[0].mxu0
  %v162 = vadd.f32 0.0, %v161
  %v163 = vpop.f32.mrb[0].mxu0
  %v164 = vpop.f32.mrb[0].mxu0
  %v165 = vadd.f32 0.0, %v164
  %v166 = vpop.f32.mrb[0].mxu0
  %167 = vdwg.mxu0
  %v168 = vld [vmem:[%s2] sm:$0xff]
  %v169 = vld [vmem:[%s2 + $0x8] sm:$0xff]
  %v170 = vld [vmem:[%s2 + $0x10] sm:$0xff]
  %v171 = vld [vmem:[%s2 + $0x18] sm:$0xff]
  %v172 = vld [vmem:[%s3] sm:$0xff]
  %v173 = vld [vmem:[%s3 + $0x8] sm:$0xff]
  %v174 = vld [vmem:[%s3 + $0x10] sm:$0xff]
  %v175 = vld [vmem:[%s3 + $0x18] sm:$0xff]
  %vm176 = vcmask 64512
  %v177 = vsel %vm176, %v154, 0.0
  %178 = vadd.xlane.f32.xlu0 %v177
  %v179 = vpop.xlane.xlu0 %178
  %v180 = vsel %vm176, %v157, 0.0
  %181 = vadd.xlane.f32.xlu0 %v180
  %v182 = vpop.xlane.xlu0 %181
  %v183 = vsel %vm176, %v162, 0.0
  %184 = vadd.xlane.f32.xlu0 %v183
  %v185 = vpop.xlane.xlu0 %184
  %v186 = vsel %vm176, %v165, 0.0
  %187 = vadd.xlane.f32.xlu0 %v186
  %v188 = vpop.xlane.xlu0 %187
  %v189 = vadd.f32 %v179, 0.0
  %v190 = vadd.f32 %v182, 0.0
  %v191 = vadd.f32 %v185, 0.0
  %v192 = vadd.f32 %v188, 0.0
  %v193 = vmul.f32 %v154, %v154
  %v194 = vmul.f32 %v157, %v157
  %v195 = vmul.f32 %v162, %v162
  %v196 = vmul.f32 %v165, %v165
  %v197 = vsel %vm176, %v193, 0.0
  %198 = vadd.xlane.f32.xlu0 %v197
  %v199 = vpop.xlane.xlu0 %198
  %v200 = vsel %vm176, %v194, 0.0
  %201 = vadd.xlane.f32.xlu0 %v200
  %v202 = vpop.xlane.xlu0 %201
  %v203 = vsel %vm176, %v195, 0.0
  %204 = vadd.xlane.f32.xlu0 %v203
  %v205 = vpop.xlane.xlu0 %204
  %v206 = vsel %vm176, %v196, 0.0
  %207 = vadd.xlane.f32.xlu0 %v206
  %v208 = vpop.xlane.xlu0 %207
  %v209 = vadd.f32 %v199, 0.0
  %v210 = vadd.f32 %v202, 0.0
  %v211 = vadd.f32 %v205, 0.0
  %v212 = vadd.f32 %v208, 0.0
  %v213 = vmul.f32 %v189, 0.125
  %v214 = vmul.f32 %v190, 0.125
  %v215 = vmul.f32 %v191, 0.125
  %v216 = vmul.f32 %v192, 0.125
  %v217 = vmul.f32 %v209, 0.125
  %v218 = vmul.f32 %v210, 0.125
  %v219 = vmul.f32 %v211, 0.125
  %v220 = vmul.f32 %v212, 0.125
  %v221 = vmul.f32 %v213, %v213
  %v222 = vmul.f32 %v214, %v214
  %v223 = vmul.f32 %v215, %v215
  %v224 = vmul.f32 %v216, %v216
  %v225 = vsub.f32 %v217, %v221
  %v226 = vsub.f32 %v218, %v222
  %v227 = vsub.f32 %v219, %v223
  %v228 = vsub.f32 %v220, %v224
  %v229 = vmax.f32 %v225, 0.0
  %v230 = vmax.f32 %v226, 0.0
  %v231 = vmax.f32 %v227, 0.0
  %v232 = vmax.f32 %v228, 0.0
  %v233 = vadd.f32 %v229, 1e-05
  %v234 = vadd.f32 %v230, 1e-05
  %v235 = vadd.f32 %v231, 1e-05
  %v236 = vadd.f32 %v232, 1e-05
  %v237 = vrsqrt.pop %v233
  %v238 = vrsqrt.pop %v234
  %v239 = vrsqrt.pop %v235
  %v240 = vrsqrt.pop %v236
  %v241 = vmul.f32 %v168, %v237
  %v242 = vmul.f32 %v169, %v238
  %v243 = vmul.f32 %v170, %v239
  %v244 = vmul.f32 %v171, %v240
  %v245 = vmul.f32 %v213, %v241
  %v246 = vmul.f32 %v214, %v242
  %v247 = vmul.f32 %v215, %v243
  %v248 = vmul.f32 %v216, %v244
  %v249 = vsub.f32 %v172, %v245
  %v250 = vsub.f32 %v173, %v246
  %v251 = vsub.f32 %v174, %v247
  %v252 = vsub.f32 %v175, %v248
  %254 = vset.pattern.permute.xlu0 0
  %255 = vperm.xlu0 %254, %v241
  %v256 = vpop.permute.xlu0 %255
  %259 = vset.pattern.permute.xlu0 0
  %260 = vperm.xlu0 %259, %v242
  %v261 = vpop.permute.xlu0 %260
  %264 = vset.pattern.permute.xlu0 0
  %265 = vperm.xlu0 %264, %v243
  %v266 = vpop.permute.xlu0 %265
  %269 = vset.pattern.permute.xlu0 0
  %270 = vperm.xlu0 %269, %v244
  %v271 = vpop.permute.xlu0 %270
  %v273 = vmul.f32 %v154, %v256
  %v274 = vmul.f32 %v157, %v261
  %v275 = vmul.f32 %v162, %v266
  %v276 = vmul.f32 %v165, %v271
  %278 = vset.pattern.permute.xlu0 0
  %279 = vperm.xlu0 %278, %v249
  %v280 = vpop.permute.xlu0 %279
  %283 = vset.pattern.permute.xlu0 0
  %284 = vperm.xlu0 %283, %v250
  %v285 = vpop.permute.xlu0 %284
  %288 = vset.pattern.permute.xlu0 0
  %289 = vperm.xlu0 %288, %v251
  %v290 = vpop.permute.xlu0 %289
  %293 = vset.pattern.permute.xlu0 0
  %294 = vperm.xlu0 %293, %v252
  %v295 = vpop.permute.xlu0 %294
  %v297 = vadd.f32 %v273, %v280
  %v298 = vadd.f32 %v274, %v285
  %v299 = vadd.f32 %v275, %v290
  %v300 = vadd.f32 %v276, %v295
  %vm301 = vcmp.gt.f32.partialorder %v297, 0.0
  %vm302 = vcmp.gt.f32.partialorder %v298, 0.0
  %vm303 = vcmp.gt.f32.partialorder %v299, 0.0
  %vm304 = vcmp.gt.f32.partialorder %v300, 0.0
  %v305 = vmul.f32 %v297, 0.01
  %v306 = vmul.f32 %v298, 0.01
  %v307 = vmul.f32 %v299, 0.01
  %v308 = vmul.f32 %v300, 0.01
  %v309 = vsel %vm301, %v297, %v305
  %v310 = vsel %vm302, %v298, %v306
  %v311 = vsel %vm303, %v299, %v307
  %v312 = vsel %vm304, %v300, %v308
  %v313 = vpack.c.bf16 %v310, %v309
  %v314 = vpack.c.bf16 %v312, %v311
  %v317 = vunpack.c.l.b16 %v313
  %v318 = vunpack.c.h.b16 %v313
  %v319 = vunpack.c.l.b16 %v314
  %v320 = vunpack.c.h.b16 %v314
  %v321 = vpack.c.b16 %v317, %v317
  %v322 = vpack.c.b16 %v318, %v318
  %v323 = vpack.c.b16 %v319, %v319
  %v324 = vpack.c.b16 %v320, %v320
  %vm329 = vcmask 60416
  %330 = vst.msk [vmem:[%s4] sm:$0xf] %vm329, %v321
  %331 = vst.msk [vmem:[%s4 + $0x4] sm:$0xf] %vm329, %v322
  %332 = vst.msk [vmem:[%s4 + $0x8] sm:$0xf] %vm329, %v323
  %333 = vst.msk [vmem:[%s4 + $0xc] sm:$0xf] %vm329, %v324
  %s334 = scalar_lea.vmem %s0, 32
  %v335 = vld [vmem:[%s334] sm:$0xff]
  %v336 = vld [vmem:[%s334 + $0x8] sm:$0xff]
  %v337 = vld [vmem:[%s334 + $0x10] sm:$0xff]
  %v338 = vld [vmem:[%s334 + $0x18] sm:$0xff]
  %s339 = scalar_lea.vmem %s1, 72
  %v340 = vld [vmem:[%s339] sm:$0xf]
  %v341 = vld [vmem:[%s339 + $0x4] sm:$0xf]
  %v342 = vld [vmem:[%s339 + $0x8] sm:$0xf]
  %v343 = vld [vmem:[%s339 + $0xc] sm:$0xf]
  %v344 = vld [vmem:[%s339 + $0x10] sm:$0xf]
  %v345 = vld [vmem:[%s339 + $0x14] sm:$0xf]
  %v346 = vld [vmem:[%s339 + $0x18] sm:$0xf]
  %v347 = vld [vmem:[%s339 + $0x1c] sm:$0xf]
  %v348 = vld [vmem:[%s339 + $0x20] sm:$0xf]
  %v349 = vld [vmem:[%s339 + $0x24] sm:$0xf]
  %v350 = vld [vmem:[%s339 + $0x28] sm:$0xf]
  %v351 = vld [vmem:[%s339 + $0x2c] sm:$0xf]
  %v352 = vld [vmem:[%s339 + $0x30] sm:$0xf]
  %v353 = vld [vmem:[%s339 + $0x34] sm:$0xf]
  %v354 = vld [vmem:[%s339 + $0x38] sm:$0xf]
  %v355 = vld [vmem:[%s339 + $0x3c] sm:$0xf]
  %v356 = vld [vmem:[%s339 + $0x40] sm:$0xf]
  %v357 = vld [vmem:[%s339 + $0x44] sm:$0xf]
  %v362 = vunpack.c.l.b16 %v335
  %v363 = vunpack.c.h.b16 %v335
  %v364 = vunpack.c.l.b16 %v336
  %v365 = vunpack.c.h.b16 %v336
  %v366 = vunpack.c.l.b16 %v337
  %v367 = vunpack.c.h.b16 %v337
  %v368 = vunpack.c.l.b16 %v338
  %v369 = vunpack.c.h.b16 %v338
  %v370 = vpack.c.b16 %v364, %v362
  %v371 = vpack.c.b16 %v365, %v363
  %v372 = vpack.c.b16 %v368, %v366
  %v373 = vpack.c.b16 %v369, %v367
  %v394 = vunpack.c.l.b16 %v340
  %v395 = vunpack.c.l.b16 %v341
  %v396 = vunpack.c.l.b16 %v342
  %v397 = vunpack.c.l.b16 %v343
  %v398 = vunpack.c.l.b16 %v344
  %v399 = vunpack.c.l.b16 %v345
  %v400 = vunpack.c.l.b16 %v346
  %v401 = vunpack.c.l.b16 %v347
  %v402 = vunpack.c.l.b16 %v348
  %v403 = vunpack.c.l.b16 %v349
  %v404 = vunpack.c.l.b16 %v350
  %v405 = vunpack.c.l.b16 %v351
  %v406 = vunpack.c.l.b16 %v352
  %v407 = vunpack.c.l.b16 %v353
  %v408 = vunpack.c.l.b16 %v354
  %v409 = vunpack.c.l.b16 %v355
  %v410 = vunpack.c.l.b16 %v356
  %v411 = vunpack.c.l.b16 %v357
  %v412 = vpack.c.b16 %v395, %v394
  %v413 = vpack.c.b16 %v397, %v396
  %v414 = vpack.c.b16 %v399, %v398
  %v415 = vpack.c.b16 %v401, %v400
  %v416 = vpack.c.b16 %v403, %v402
  %v417 = vpack.c.b16 %v405, %v404
  %v418 = vpack.c.b16 %v407, %v406
  %v419 = vpack.c.b16 %v409, %v408
  %v420 = vpack.c.b16 %v411, %v410
  %v431 = vsel %vm112, %v371, 0
  %v434 = vsel %vm112, %v373, 0
  %436 = vmatprep.subr.bf16.mxu0 0
  %437 = vmatpush1.bf16.msra.mxu0 %v412
  %438 = vmatprep.subr.bf16.mxu0 0
  %439 = vmatpush1.bf16.msra.mxu0 %v413
  %440 = vmatprep.subr.bf16.mxu0 0
  %441 = vmatpush1.bf16.msra.mxu0 %v414
  %442 = vmatprep.subr.bf16.mxu0 0
  %443 = vmatpush1.bf16.msra.mxu0 %v415
  %444 = vmatprep.subr.bf16.mxu0 0
  %445 = vmatpush1.bf16.msra.mxu0 %v416
  %446 = vmatprep.subr.bf16.mxu0 0
  %447 = vmatpush1.bf16.msra.mxu0 %v417
  %448 = vmatprep.subr.bf16.mxu0 0
  %449 = vmatpush1.bf16.msra.mxu0 %v418
  %450 = vmatprep.subr.bf16.mxu0 0
  %451 = vmatpush1.bf16.msra.mxu0 %v419
  %452 = vmatprep.subr.bf16.mxu0 0
  %453 = vmatpush1.bf16.msra.mxu0 %v420
  %454 = vmatprep.subr.bf16.mxu0 0
  %455 = vmatpush1.bf16.msra.mxu0 0
  %456 = vmatprep.subr.bf16.mxu0 0
  %457 = vmatpush1.bf16.msra.mxu0 0
  %458 = vmatprep.subr.bf16.mxu0 0
  %459 = vmatpush1.bf16.msra.mxu0 0
  %460 = vmatprep.subr.bf16.mxu0 0
  %461 = vmatpush1.bf16.msra.mxu0 0
  %462 = vmatprep.subr.bf16.mxu0 0
  %463 = vmatpush1.bf16.msra.mxu0 0
  %464 = vmatprep.subr.bf16.mxu0 0
  %465 = vmatpush1.bf16.msra.mxu0 0
  %466 = vmatprep.subr.bf16.mxu0 0
  %467 = vmatpush1.bf16.msra.mxu0 0
  %468 = vmatprep.mubr.bf16.mxu0 %v431
  %469 = vmatmul.mubr.bf16.gmra.mrb[0].mxu0 %v370
  %v470 = vpop.f32.mrb[0].mxu0
  %v471 = vadd.f32 0.0, %v470
  %v472 = vpop.f32.mrb[0].mxu0
  %v473 = vpop.f32.mrb[0].mxu0
  %v474 = vadd.f32 0.0, %v473
  %v475 = vpop.f32.mrb[0].mxu0
  %476 = vmatprep.mubr.bf16.mxu0 %v434
  %477 = vmatmul.mubr.bf16.gmra.mrb[0].mxu0 %v372
  %v478 = vpop.f32.mrb[0].mxu0
  %v479 = vadd.f32 0.0, %v478
  %v480 = vpop.f32.mrb[0].mxu0
  %v481 = vpop.f32.mrb[0].mxu0
  %v482 = vadd.f32 0.0, %v481
  %v483 = vpop.f32.mrb[0].mxu0
  %484 = vdwg.mxu0
  %s485 = scalar_lea.vmem %s2, 32
  %v486 = vld [vmem:[%s485] sm:$0xff]
  %v487 = vld [vmem:[%s485 + $0x8] sm:$0xff]
  %v488 = vld [vmem:[%s485 + $0x10] sm:$0xff]
  %v489 = vld [vmem:[%s485 + $0x18] sm:$0xff]
  %s490 = scalar_lea.vmem %s3, 32
  %v491 = vld [vmem:[%s490] sm:$0xff]
  %v492 = vld [vmem:[%s490 + $0x8] sm:$0xff]
  %v493 = vld [vmem:[%s490 + $0x10] sm:$0xff]
  %v494 = vld [vmem:[%s490 + $0x18] sm:$0xff]
  %v495 = vsel %vm176, %v471, 0.0
  %496 = vadd.xlane.f32.xlu0 %v495
  %v497 = vpop.xlane.xlu0 %496
  %v498 = vsel %vm176, %v474, 0.0
  %499 = vadd.xlane.f32.xlu0 %v498
  %v500 = vpop.xlane.xlu0 %499
  %v501 = vsel %vm176, %v479, 0.0
  %502 = vadd.xlane.f32.xlu0 %v501
  %v503 = vpop.xlane.xlu0 %502
  %v504 = vsel %vm176, %v482, 0.0
  %505 = vadd.xlane.f32.xlu0 %v504
  %v506 = vpop.xlane.xlu0 %505
  %v507 = vadd.f32 %v497, 0.0
  %v508 = vadd.f32 %v500, 0.0
  %v509 = vadd.f32 %v503, 0.0
  %v510 = vadd.f32 %v506, 0.0
  %v511 = vmul.f32 %v471, %v471
  %v512 = vmul.f32 %v474, %v474
  %v513 = vmul.f32 %v479, %v479
  %v514 = vmul.f32 %v482, %v482
  %v515 = vsel %vm176, %v511, 0.0
  %516 = vadd.xlane.f32.xlu0 %v515
  %v517 = vpop.xlane.xlu0 %516
  %v518 = vsel %vm176, %v512, 0.0
  %519 = vadd.xlane.f32.xlu0 %v518
  %v520 = vpop.xlane.xlu0 %519
  %v521 = vsel %vm176, %v513, 0.0
  %522 = vadd.xlane.f32.xlu0 %v521
  %v523 = vpop.xlane.xlu0 %522
  %v524 = vsel %vm176, %v514, 0.0
  %525 = vadd.xlane.f32.xlu0 %v524
  %v526 = vpop.xlane.xlu0 %525
  %v527 = vadd.f32 %v517, 0.0
  %v528 = vadd.f32 %v520, 0.0
  %v529 = vadd.f32 %v523, 0.0
  %v530 = vadd.f32 %v526, 0.0
  %v531 = vmul.f32 %v507, 0.125
  %v532 = vmul.f32 %v508, 0.125
  %v533 = vmul.f32 %v509, 0.125
  %v534 = vmul.f32 %v510, 0.125
  %v535 = vmul.f32 %v527, 0.125
  %v536 = vmul.f32 %v528, 0.125
  %v537 = vmul.f32 %v529, 0.125
  %v538 = vmul.f32 %v530, 0.125
  %v539 = vmul.f32 %v531, %v531
  %v540 = vmul.f32 %v532, %v532
  %v541 = vmul.f32 %v533, %v533
  %v542 = vmul.f32 %v534, %v534
  %v543 = vsub.f32 %v535, %v539
  %v544 = vsub.f32 %v536, %v540
  %v545 = vsub.f32 %v537, %v541
  %v546 = vsub.f32 %v538, %v542
  %v547 = vmax.f32 %v543, 0.0
  %v548 = vmax.f32 %v544, 0.0
  %v549 = vmax.f32 %v545, 0.0
  %v550 = vmax.f32 %v546, 0.0
  %v551 = vadd.f32 %v547, 1e-05
  %v552 = vadd.f32 %v548, 1e-05
  %v553 = vadd.f32 %v549, 1e-05
  %v554 = vadd.f32 %v550, 1e-05
  %v555 = vrsqrt.pop %v551
  %v556 = vrsqrt.pop %v552
  %v557 = vrsqrt.pop %v553
  %v558 = vrsqrt.pop %v554
  %v559 = vmul.f32 %v486, %v555
  %v560 = vmul.f32 %v487, %v556
  %v561 = vmul.f32 %v488, %v557
  %v562 = vmul.f32 %v489, %v558
  %v563 = vmul.f32 %v531, %v559
  %v564 = vmul.f32 %v532, %v560
  %v565 = vmul.f32 %v533, %v561
  %v566 = vmul.f32 %v534, %v562
  %v567 = vsub.f32 %v491, %v563
  %v568 = vsub.f32 %v492, %v564
  %v569 = vsub.f32 %v493, %v565
  %v570 = vsub.f32 %v494, %v566
  %572 = vset.pattern.permute.xlu0 0
  %573 = vperm.xlu0 %572, %v559
  %v574 = vpop.permute.xlu0 %573
  %577 = vset.pattern.permute.xlu0 0
  %578 = vperm.xlu0 %577, %v560
  %v579 = vpop.permute.xlu0 %578
  %582 = vset.pattern.permute.xlu0 0
  %583 = vperm.xlu0 %582, %v561
  %v584 = vpop.permute.xlu0 %583
  %587 = vset.pattern.permute.xlu0 0
  %588 = vperm.xlu0 %587, %v562
  %v589 = vpop.permute.xlu0 %588
  %v591 = vmul.f32 %v471, %v574
  %v592 = vmul.f32 %v474, %v579
  %v593 = vmul.f32 %v479, %v584
  %v594 = vmul.f32 %v482, %v589
  %596 = vset.pattern.permute.xlu0 0
  %597 = vperm.xlu0 %596, %v567
  %v598 = vpop.permute.xlu0 %597
  %601 = vset.pattern.permute.xlu0 0
  %602 = vperm.xlu0 %601, %v568
  %v603 = vpop.permute.xlu0 %602
  %606 = vset.pattern.permute.xlu0 0
  %607 = vperm.xlu0 %606, %v569
  %v608 = vpop.permute.xlu0 %607
  %611 = vset.pattern.permute.xlu0 0
  %612 = vperm.xlu0 %611, %v570
  %v613 = vpop.permute.xlu0 %612
  %v615 = vadd.f32 %v591, %v598
  %v616 = vadd.f32 %v592, %v603
  %v617 = vadd.f32 %v593, %v608
  %v618 = vadd.f32 %v594, %v613
  %vm619 = vcmp.gt.f32.partialorder %v615, 0.0
  %vm620 = vcmp.gt.f32.partialorder %v616, 0.0
  %vm621 = vcmp.gt.f32.partialorder %v617, 0.0
  %vm622 = vcmp.gt.f32.partialorder %v618, 0.0
  %v623 = vmul.f32 %v615, 0.01
  %v624 = vmul.f32 %v616, 0.01
  %v625 = vmul.f32 %v617, 0.01
  %v626 = vmul.f32 %v618, 0.01
  %v627 = vsel %vm619, %v615, %v623
  %v628 = vsel %vm620, %v616, %v624
  %v629 = vsel %vm621, %v617, %v625
  %v630 = vsel %vm622, %v618, %v626
  %v631 = vpack.c.bf16 %v628, %v627
  %v632 = vpack.c.bf16 %v630, %v629
  %v635 = vunpack.c.l.b16 %v631
  %v636 = vunpack.c.h.b16 %v631
  %v637 = vunpack.c.l.b16 %v632
  %v638 = vunpack.c.h.b16 %v632
  %v639 = vpack.c.b16 %v635, %v635
  %v640 = vpack.c.b16 %v636, %v636
  %v641 = vpack.c.b16 %v637, %v637
  %v642 = vpack.c.b16 %v638, %v638
  %s647 = scalar_lea.vmem %s4, 16
  %648 = vst.msk [vmem:[%s647] sm:$0xf] %vm329, %v639
  %649 = vst.msk [vmem:[%s647 + $0x4] sm:$0xf] %vm329, %v640
  %650 = vst.msk [vmem:[%s647 + $0x8] sm:$0xf] %vm329, %v641
  %651 = vst.msk [vmem:[%s647 + $0xc] sm:$0xf] %vm329, %v642
  %s652 = scalar_lea.vmem %s0, 64
  %v653 = vld [vmem:[%s652] sm:$0xff]
  %v654 = vld [vmem:[%s652 + $0x8] sm:$0xff]
  %v655 = vld [vmem:[%s652 + $0x10] sm:$0xff]
  %v656 = vld [vmem:[%s652 + $0x18] sm:$0xff]
  %s657 = scalar_lea.vmem %s1, 144
  %v658 = vld [vmem:[%s657] sm:$0xf]
  %v659 = vld [vmem:[%s657 + $0x4] sm:$0xf]
  %v660 = vld [vmem:[%s657 + $0x8] sm:$0xf]
  %v661 = vld [vmem:[%s657 + $0xc] sm:$0xf]
  %v662 = vld [vmem:[%s657 + $0x10] sm:$0xf]
  %v663 = vld [vmem:[%s657 + $0x14] sm:$0xf]
  %v664 = vld [vmem:[%s657 + $0x18] sm:$0xf]
  %v665 = vld [vmem:[%s657 + $0x1c] sm:$0xf]
  %v666 = vld [vmem:[%s657 + $0x20] sm:$0xf]
  %v667 = vld [vmem:[%s657 + $0x24] sm:$0xf]
  %v668 = vld [vmem:[%s657 + $0x28] sm:$0xf]
  %v669 = vld [vmem:[%s657 + $0x2c] sm:$0xf]
  %v670 = vld [vmem:[%s657 + $0x30] sm:$0xf]
  %v671 = vld [vmem:[%s657 + $0x34] sm:$0xf]
  %v672 = vld [vmem:[%s657 + $0x38] sm:$0xf]
  %v673 = vld [vmem:[%s657 + $0x3c] sm:$0xf]
  %v674 = vld [vmem:[%s657 + $0x40] sm:$0xf]
  %v675 = vld [vmem:[%s657 + $0x44] sm:$0xf]
  %v680 = vunpack.c.l.b16 %v653
  %v681 = vunpack.c.h.b16 %v653
  %v682 = vunpack.c.l.b16 %v654
  %v683 = vunpack.c.h.b16 %v654
  %v684 = vunpack.c.l.b16 %v655
  %v685 = vunpack.c.h.b16 %v655
  %v686 = vunpack.c.l.b16 %v656
  %v687 = vunpack.c.h.b16 %v656
  %v688 = vpack.c.b16 %v682, %v680
  %v689 = vpack.c.b16 %v683, %v681
  %v690 = vpack.c.b16 %v686, %v684
  %v691 = vpack.c.b16 %v687, %v685
  %v712 = vunpack.c.l.b16 %v658
  %v713 = vunpack.c.l.b16 %v659
  %v714 = vunpack.c.l.b16 %v660
  %v715 = vunpack.c.l.b16 %v661
  %v716 = vunpack.c.l.b16 %v662
  %v717 = vunpack.c.l.b16 %v663
  %v718 = vunpack.c.l.b16 %v664
  %v719 = vunpack.c.l.b16 %v665
  %v720 = vunpack.c.l.b16 %v666
  %v721 = vunpack.c.l.b16 %v667
  %v722 = vunpack.c.l.b16 %v668
  %v723 = vunpack.c.l.b16 %v669
  %v724 = vunpack.c.l.b16 %v670
  %v725 = vunpack.c.l.b16 %v671
  %v726 = vunpack.c.l.b16 %v672
  %v727 = vunpack.c.l.b16 %v673
  %v728 = vunpack.c.l.b16 %v674
  %v729 = vunpack.c.l.b16 %v675
  %v730 = vpack.c.b16 %v713, %v712
  %v731 = vpack.c.b16 %v715, %v714
  %v732 = vpack.c.b16 %v717, %v716
  %v733 = vpack.c.b16 %v719, %v718
  %v734 = vpack.c.b16 %v721, %v720
  %v735 = vpack.c.b16 %v723, %v722
  %v736 = vpack.c.b16 %v725, %v724
  %v737 = vpack.c.b16 %v727, %v726
  %v738 = vpack.c.b16 %v729, %v728
  %v749 = vsel %vm112, %v689, 0
  %v752 = vsel %vm112, %v691, 0
  %754 = vmatprep.subr.bf16.mxu0 0
  %755 = vmatpush1.bf16.msra.mxu0 %v730
  %756 = vmatprep.subr.bf16.mxu0 0
  %757 = vmatpush1.bf16.msra.mxu0 %v731
  %758 = vmatprep.subr.bf16.mxu0 0
  %759 = vmatpush1.bf16.msra.mxu0 %v732
  %760 = vmatprep.subr.bf16.mxu0 0
  %761 = vmatpush1.bf16.msra.mxu0 %v733
  %762 = vmatprep.subr.bf16.mxu0 0
  %763 = vmatpush1.bf16.msra.mxu0 %v734
  %764 = vmatprep.subr.bf16.mxu0 0
  %765 = vmatpush1.bf16.msra.mxu0 %v735
  %766 = vmatprep.subr.bf16.mxu0 0
  %767 = vmatpush1.bf16.msra.mxu0 %v736
  %768 = vmatprep.subr.bf16.mxu0 0
  %769 = vmatpush1.bf16.msra.mxu0 %v737
  %770 = vmatprep.subr.bf16.mxu0 0
  %771 = vmatpush1.bf16.msra.mxu0 %v738
  %772 = vmatprep.subr.bf16.mxu0 0
  %773 = vmatpush1.bf16.msra.mxu0 0
  %774 = vmatprep.subr.bf16.mxu0 0
  %775 = vmatpush1.bf16.msra.mxu0 0
  %776 = vmatprep.subr.bf16.mxu0 0
  %777 = vmatpush1.bf16.msra.mxu0 0
  %778 = vmatprep.subr.bf16.mxu0 0
  %779 = vmatpush1.bf16.msra.mxu0 0
  %780 = vmatprep.subr.bf16.mxu0 0
  %781 = vmatpush1.bf16.msra.mxu0 0
  %782 = vmatprep.subr.bf16.mxu0 0
  %783 = vmatpush1.bf16.msra.mxu0 0
  %784 = vmatprep.subr.bf16.mxu0 0
  %785 = vmatpush1.bf16.msra.mxu0 0
  %786 = vmatprep.mubr.bf16.mxu0 %v749
  %787 = vmatmul.mubr.bf16.gmra.mrb[0].mxu0 %v688
  %v788 = vpop.f32.mrb[0].mxu0
  %v789 = vadd.f32 0.0, %v788
  %v790 = vpop.f32.mrb[0].mxu0
  %v791 = vpop.f32.mrb[0].mxu0
  %v792 = vadd.f32 0.0, %v791
  %v793 = vpop.f32.mrb[0].mxu0
  %794 = vmatprep.mubr.bf16.mxu0 %v752
  %795 = vmatmul.mubr.bf16.gmra.mrb[0].mxu0 %v690
  %v796 = vpop.f32.mrb[0].mxu0
  %v797 = vadd.f32 0.0, %v796
  %v798 = vpop.f32.mrb[0].mxu0
  %v799 = vpop.f32.mrb[0].mxu0
  %v800 = vadd.f32 0.0, %v799
  %v801 = vpop.f32.mrb[0].mxu0
  %802 = vdwg.mxu0
  %s803 = scalar_lea.vmem %s2, 64
  %v804 = vld [vmem:[%s803] sm:$0xff]
  %v805 = vld [vmem:[%s803 + $0x8] sm:$0xff]
  %v806 = vld [vmem:[%s803 + $0x10] sm:$0xff]
  %v807 = vld [vmem:[%s803 + $0x18] sm:$0xff]
  %s808 = scalar_lea.vmem %s3, 64
  %v809 = vld [vmem:[%s808] sm:$0xff]
  %v810 = vld [vmem:[%s808 + $0x8] sm:$0xff]
  %v811 = vld [vmem:[%s808 + $0x10] sm:$0xff]
  %v812 = vld [vmem:[%s808 + $0x18] sm:$0xff]
  %v813 = vsel %vm176, %v789, 0.0
  %814 = vadd.xlane.f32.xlu0 %v813
  %v815 = vpop.xlane.xlu0 %814
  %v816 = vsel %vm176, %v792, 0.0
  %817 = vadd.xlane.f32.xlu0 %v816
  %v818 = vpop.xlane.xlu0 %817
  %v819 = vsel %vm176, %v797, 0.0
  %820 = vadd.xlane.f32.xlu0 %v819
  %v821 = vpop.xlane.xlu0 %820
  %v822 = vsel %vm176, %v800, 0.0
  %823 = vadd.xlane.f32.xlu0 %v822
  %v824 = vpop.xlane.xlu0 %823
  %v825 = vadd.f32 %v815, 0.0
  %v826 = vadd.f32 %v818, 0.0
  %v827 = vadd.f32 %v821, 0.0
  %v828 = vadd.f32 %v824, 0.0
  %v829 = vmul.f32 %v789, %v789
  %v830 = vmul.f32 %v792, %v792
  %v831 = vmul.f32 %v797, %v797
  %v832 = vmul.f32 %v800, %v800
  %v833 = vsel %vm176, %v829, 0.0
  %834 = vadd.xlane.f32.xlu0 %v833
  %v835 = vpop.xlane.xlu0 %834
  %v836 = vsel %vm176, %v830, 0.0
  %837 = vadd.xlane.f32.xlu0 %v836
  %v838 = vpop.xlane.xlu0 %837
  %v839 = vsel %vm176, %v831, 0.0
  %840 = vadd.xlane.f32.xlu0 %v839
  %v841 = vpop.xlane.xlu0 %840
  %v842 = vsel %vm176, %v832, 0.0
  %843 = vadd.xlane.f32.xlu0 %v842
  %v844 = vpop.xlane.xlu0 %843
  %v845 = vadd.f32 %v835, 0.0
  %v846 = vadd.f32 %v838, 0.0
  %v847 = vadd.f32 %v841, 0.0
  %v848 = vadd.f32 %v844, 0.0
  %v849 = vmul.f32 %v825, 0.125
  %v850 = vmul.f32 %v826, 0.125
  %v851 = vmul.f32 %v827, 0.125
  %v852 = vmul.f32 %v828, 0.125
  %v853 = vmul.f32 %v845, 0.125
  %v854 = vmul.f32 %v846, 0.125
  %v855 = vmul.f32 %v847, 0.125
  %v856 = vmul.f32 %v848, 0.125
  %v857 = vmul.f32 %v849, %v849
  %v858 = vmul.f32 %v850, %v850
  %v859 = vmul.f32 %v851, %v851
  %v860 = vmul.f32 %v852, %v852
  %v861 = vsub.f32 %v853, %v857
  %v862 = vsub.f32 %v854, %v858
  %v863 = vsub.f32 %v855, %v859
  %v864 = vsub.f32 %v856, %v860
  %v865 = vmax.f32 %v861, 0.0
  %v866 = vmax.f32 %v862, 0.0
  %v867 = vmax.f32 %v863, 0.0
  %v868 = vmax.f32 %v864, 0.0
  %v869 = vadd.f32 %v865, 1e-05
  %v870 = vadd.f32 %v866, 1e-05
  %v871 = vadd.f32 %v867, 1e-05
  %v872 = vadd.f32 %v868, 1e-05
  %v873 = vrsqrt.pop %v869
  %v874 = vrsqrt.pop %v870
  %v875 = vrsqrt.pop %v871
  %v876 = vrsqrt.pop %v872
  %v877 = vmul.f32 %v804, %v873
  %v878 = vmul.f32 %v805, %v874
  %v879 = vmul.f32 %v806, %v875
  %v880 = vmul.f32 %v807, %v876
  %v881 = vmul.f32 %v849, %v877
  %v882 = vmul.f32 %v850, %v878
  %v883 = vmul.f32 %v851, %v879
  %v884 = vmul.f32 %v852, %v880
  %v885 = vsub.f32 %v809, %v881
  %v886 = vsub.f32 %v810, %v882
  %v887 = vsub.f32 %v811, %v883
  %v888 = vsub.f32 %v812, %v884
  %890 = vset.pattern.permute.xlu0 0
  %891 = vperm.xlu0 %890, %v877
  %v892 = vpop.permute.xlu0 %891
  %895 = vset.pattern.permute.xlu0 0
  %896 = vperm.xlu0 %895, %v878
  %v897 = vpop.permute.xlu0 %896
  %900 = vset.pattern.permute.xlu0 0
  %901 = vperm.xlu0 %900, %v879
  %v902 = vpop.permute.xlu0 %901
  %905 = vset.pattern.permute.xlu0 0
  %906 = vperm.xlu0 %905, %v880
  %v907 = vpop.permute.xlu0 %906
  %v909 = vmul.f32 %v789, %v892
  %v910 = vmul.f32 %v792, %v897
  %v911 = vmul.f32 %v797, %v902
  %v912 = vmul.f32 %v800, %v907
  %914 = vset.pattern.permute.xlu0 0
  %915 = vperm.xlu0 %914, %v885
  %v916 = vpop.permute.xlu0 %915
  %919 = vset.pattern.permute.xlu0 0
  %920 = vperm.xlu0 %919, %v886
  %v921 = vpop.permute.xlu0 %920
  %924 = vset.pattern.permute.xlu0 0
  %925 = vperm.xlu0 %924, %v887
  %v926 = vpop.permute.xlu0 %925
  %929 = vset.pattern.permute.xlu0 0
  %930 = vperm.xlu0 %929, %v888
  %v931 = vpop.permute.xlu0 %930
  %v933 = vadd.f32 %v909, %v916
  %v934 = vadd.f32 %v910, %v921
  %v935 = vadd.f32 %v911, %v926
  %v936 = vadd.f32 %v912, %v931
  %vm937 = vcmp.gt.f32.partialorder %v933, 0.0
  %vm938 = vcmp.gt.f32.partialorder %v934, 0.0
  %vm939 = vcmp.gt.f32.partialorder %v935, 0.0
  %vm940 = vcmp.gt.f32.partialorder %v936, 0.0
  %v941 = vmul.f32 %v933, 0.01
  %v942 = vmul.f32 %v934, 0.01
  %v943 = vmul.f32 %v935, 0.01
  %v944 = vmul.f32 %v936, 0.01
  %v945 = vsel %vm937, %v933, %v941
  %v946 = vsel %vm938, %v934, %v942
  %v947 = vsel %vm939, %v935, %v943
  %v948 = vsel %vm940, %v936, %v944
  %v949 = vpack.c.bf16 %v946, %v945
  %v950 = vpack.c.bf16 %v948, %v947
  %v953 = vunpack.c.l.b16 %v949
  %v954 = vunpack.c.h.b16 %v949
  %v955 = vunpack.c.l.b16 %v950
  %v956 = vunpack.c.h.b16 %v950
  %v957 = vpack.c.b16 %v953, %v953
  %v958 = vpack.c.b16 %v954, %v954
  %v959 = vpack.c.b16 %v955, %v955
  %v960 = vpack.c.b16 %v956, %v956
  %s965 = scalar_lea.vmem %s4, 32
  %966 = vst.msk [vmem:[%s965] sm:$0xf] %vm329, %v957
  %967 = vst.msk [vmem:[%s965 + $0x4] sm:$0xf] %vm329, %v958
  %968 = vst.msk [vmem:[%s965 + $0x8] sm:$0xf] %vm329, %v959
  %969 = vst.msk [vmem:[%s965 + $0xc] sm:$0xf] %vm329, %v960
  %s970 = scalar_lea.vmem %s0, 96
  %v971 = vld [vmem:[%s970] sm:$0xff]
  %v972 = vld [vmem:[%s970 + $0x8] sm:$0xff]
  %v973 = vld [vmem:[%s970 + $0x10] sm:$0xff]
  %v974 = vld [vmem:[%s970 + $0x18] sm:$0xff]
  %s975 = scalar_lea.vmem %s1, 216
  %v976 = vld [vmem:[%s975] sm:$0xf]
  %v977 = vld [vmem:[%s975 + $0x4] sm:$0xf]
  %v978 = vld [vmem:[%s975 + $0x8] sm:$0xf]
  %v979 = vld [vmem:[%s975 + $0xc] sm:$0xf]
  %v980 = vld [vmem:[%s975 + $0x10] sm:$0xf]
  %v981 = vld [vmem:[%s975 + $0x14] sm:$0xf]
  %v982 = vld [vmem:[%s975 + $0x18] sm:$0xf]
  %v983 = vld [vmem:[%s975 + $0x1c] sm:$0xf]
  %v984 = vld [vmem:[%s975 + $0x20] sm:$0xf]
  %v985 = vld [vmem:[%s975 + $0x24] sm:$0xf]
  %v986 = vld [vmem:[%s975 + $0x28] sm:$0xf]
  %v987 = vld [vmem:[%s975 + $0x2c] sm:$0xf]
  %v988 = vld [vmem:[%s975 + $0x30] sm:$0xf]
  %v989 = vld [vmem:[%s975 + $0x34] sm:$0xf]
  %v990 = vld [vmem:[%s975 + $0x38] sm:$0xf]
  %v991 = vld [vmem:[%s975 + $0x3c] sm:$0xf]
  %v992 = vld [vmem:[%s975 + $0x40] sm:$0xf]
  %v993 = vld [vmem:[%s975 + $0x44] sm:$0xf]
  %v998 = vunpack.c.l.b16 %v971
  %v999 = vunpack.c.h.b16 %v971
  %v1000 = vunpack.c.l.b16 %v972
  %v1001 = vunpack.c.h.b16 %v972
  %v1002 = vunpack.c.l.b16 %v973
  %v1003 = vunpack.c.h.b16 %v973
  %v1004 = vunpack.c.l.b16 %v974
  %v1005 = vunpack.c.h.b16 %v974
  %v1006 = vpack.c.b16 %v1000, %v998
  %v1007 = vpack.c.b16 %v1001, %v999
  %v1008 = vpack.c.b16 %v1004, %v1002
  %v1009 = vpack.c.b16 %v1005, %v1003
  %v1030 = vunpack.c.l.b16 %v976
  %v1031 = vunpack.c.l.b16 %v977
  %v1032 = vunpack.c.l.b16 %v978
  %v1033 = vunpack.c.l.b16 %v979
  %v1034 = vunpack.c.l.b16 %v980
  %v1035 = vunpack.c.l.b16 %v981
  %v1036 = vunpack.c.l.b16 %v982
  %v1037 = vunpack.c.l.b16 %v983
  %v1038 = vunpack.c.l.b16 %v984
  %v1039 = vunpack.c.l.b16 %v985
  %v1040 = vunpack.c.l.b16 %v986
  %v1041 = vunpack.c.l.b16 %v987
  %v1042 = vunpack.c.l.b16 %v988
  %v1043 = vunpack.c.l.b16 %v989
  %v1044 = vunpack.c.l.b16 %v990
  %v1045 = vunpack.c.l.b16 %v991
  %v1046 = vunpack.c.l.b16 %v992
  %v1047 = vunpack.c.l.b16 %v993
  %v1048 = vpack.c.b16 %v1031, %v1030
  %v1049 = vpack.c.b16 %v1033, %v1032
  %v1050 = vpack.c.b16 %v1035, %v1034
  %v1051 = vpack.c.b16 %v1037, %v1036
  %v1052 = vpack.c.b16 %v1039, %v1038
  %v1053 = vpack.c.b16 %v1041, %v1040
  %v1054 = vpack.c.b16 %v1043, %v1042
  %v1055 = vpack.c.b16 %v1045, %v1044
  %v1056 = vpack.c.b16 %v1047, %v1046
  %v1067 = vsel %vm112, %v1007, 0
  %v1070 = vsel %vm112, %v1009, 0
  %1072 = vmatprep.subr.bf16.mxu0 0
  %1073 = vmatpush1.bf16.msra.mxu0 %v1048
  %1074 = vmatprep.subr.bf16.mxu0 0
  %1075 = vmatpush1.bf16.msra.mxu0 %v1049
  %1076 = vmatprep.subr.bf16.mxu0 0
  %1077 = vmatpush1.bf16.msra.mxu0 %v1050
  %1078 = vmatprep.subr.bf16.mxu0 0
  %1079 = vmatpush1.bf16.msra.mxu0 %v1051
  %1080 = vmatprep.subr.bf16.mxu0 0
  %1081 = vmatpush1.bf16.msra.mxu0 %v1052
  %1082 = vmatprep.subr.bf16.mxu0 0
  %1083 = vmatpush1.bf16.msra.mxu0 %v1053
  %1084 = vmatprep.subr.bf16.mxu0 0
  %1085 = vmatpush1.bf16.msra.mxu0 %v1054
  %1086 = vmatprep.subr.bf16.mxu0 0
  %1087 = vmatpush1.bf16.msra.mxu0 %v1055
  %1088 = vmatprep.subr.bf16.mxu0 0
  %1089 = vmatpush1.bf16.msra.mxu0 %v1056
  %1090 = vmatprep.subr.bf16.mxu0 0
  %1091 = vmatpush1.bf16.msra.mxu0 0
  %1092 = vmatprep.subr.bf16.mxu0 0
  %1093 = vmatpush1.bf16.msra.mxu0 0
  %1094 = vmatprep.subr.bf16.mxu0 0
  %1095 = vmatpush1.bf16.msra.mxu0 0
  %1096 = vmatprep.subr.bf16.mxu0 0
  %1097 = vmatpush1.bf16.msra.mxu0 0
  %1098 = vmatprep.subr.bf16.mxu0 0
  %1099 = vmatpush1.bf16.msra.mxu0 0
  %1100 = vmatprep.subr.bf16.mxu0 0
  %1101 = vmatpush1.bf16.msra.mxu0 0
  %1102 = vmatprep.subr.bf16.mxu0 0
  %1103 = vmatpush1.bf16.msra.mxu0 0
  %1104 = vmatprep.mubr.bf16.mxu0 %v1067
  %1105 = vmatmul.mubr.bf16.gmra.mrb[0].mxu0 %v1006
  %v1106 = vpop.f32.mrb[0].mxu0
  %v1107 = vadd.f32 0.0, %v1106
  %v1108 = vpop.f32.mrb[0].mxu0
  %v1109 = vpop.f32.mrb[0].mxu0
  %v1110 = vadd.f32 0.0, %v1109
  %v1111 = vpop.f32.mrb[0].mxu0
  %1112 = vmatprep.mubr.bf16.mxu0 %v1070
  %1113 = vmatmul.mubr.bf16.gmra.mrb[0].mxu0 %v1008
  %v1114 = vpop.f32.mrb[0].mxu0
  %v1115 = vadd.f32 0.0, %v1114
  %v1116 = vpop.f32.mrb[0].mxu0
  %v1117 = vpop.f32.mrb[0].mxu0
  %v1118 = vadd.f32 0.0, %v1117
  %v1119 = vpop.f32.mrb[0].mxu0
  %1120 = vdwg.mxu0
  %s1121 = scalar_lea.vmem %s2, 96
  %v1122 = vld [vmem:[%s1121] sm:$0xff]
  %v1123 = vld [vmem:[%s1121 + $0x8] sm:$0xff]
  %v1124 = vld [vmem:[%s1121 + $0x10] sm:$0xff]
  %v1125 = vld [vmem:[%s1121 + $0x18] sm:$0xff]
  %s1126 = scalar_lea.vmem %s3, 96
  %v1127 = vld [vmem:[%s1126] sm:$0xff]
  %v1128 = vld [vmem:[%s1126 + $0x8] sm:$0xff]
  %v1129 = vld [vmem:[%s1126 + $0x10] sm:$0xff]
  %v1130 = vld [vmem:[%s1126 + $0x18] sm:$0xff]
  %v1131 = vsel %vm176, %v1107, 0.0
  %1132 = vadd.xlane.f32.xlu0 %v1131
  %v1133 = vpop.xlane.xlu0 %1132
  %v1134 = vsel %vm176, %v1110, 0.0
  %1135 = vadd.xlane.f32.xlu0 %v1134
  %v1136 = vpop.xlane.xlu0 %1135
  %v1137 = vsel %vm176, %v1115, 0.0
  %1138 = vadd.xlane.f32.xlu0 %v1137
  %v1139 = vpop.xlane.xlu0 %1138
  %v1140 = vsel %vm176, %v1118, 0.0
  %1141 = vadd.xlane.f32.xlu0 %v1140
  %v1142 = vpop.xlane.xlu0 %1141
  %v1143 = vadd.f32 %v1133, 0.0
  %v1144 = vadd.f32 %v1136, 0.0
  %v1145 = vadd.f32 %v1139, 0.0
  %v1146 = vadd.f32 %v1142, 0.0
  %v1147 = vmul.f32 %v1107, %v1107
  %v1148 = vmul.f32 %v1110, %v1110
  %v1149 = vmul.f32 %v1115, %v1115
  %v1150 = vmul.f32 %v1118, %v1118
  %v1151 = vsel %vm176, %v1147, 0.0
  %1152 = vadd.xlane.f32.xlu0 %v1151
  %v1153 = vpop.xlane.xlu0 %1152
  %v1154 = vsel %vm176, %v1148, 0.0
  %1155 = vadd.xlane.f32.xlu0 %v1154
  %v1156 = vpop.xlane.xlu0 %1155
  %v1157 = vsel %vm176, %v1149, 0.0
  %1158 = vadd.xlane.f32.xlu0 %v1157
  %v1159 = vpop.xlane.xlu0 %1158
  %v1160 = vsel %vm176, %v1150, 0.0
  %1161 = vadd.xlane.f32.xlu0 %v1160
  %v1162 = vpop.xlane.xlu0 %1161
  %v1163 = vadd.f32 %v1153, 0.0
  %v1164 = vadd.f32 %v1156, 0.0
  %v1165 = vadd.f32 %v1159, 0.0
  %v1166 = vadd.f32 %v1162, 0.0
  %v1167 = vmul.f32 %v1143, 0.125
  %v1168 = vmul.f32 %v1144, 0.125
  %v1169 = vmul.f32 %v1145, 0.125
  %v1170 = vmul.f32 %v1146, 0.125
  %v1171 = vmul.f32 %v1163, 0.125
  %v1172 = vmul.f32 %v1164, 0.125
  %v1173 = vmul.f32 %v1165, 0.125
  %v1174 = vmul.f32 %v1166, 0.125
  %v1175 = vmul.f32 %v1167, %v1167
  %v1176 = vmul.f32 %v1168, %v1168
  %v1177 = vmul.f32 %v1169, %v1169
  %v1178 = vmul.f32 %v1170, %v1170
  %v1179 = vsub.f32 %v1171, %v1175
  %v1180 = vsub.f32 %v1172, %v1176
  %v1181 = vsub.f32 %v1173, %v1177
  %v1182 = vsub.f32 %v1174, %v1178
  %v1183 = vmax.f32 %v1179, 0.0
  %v1184 = vmax.f32 %v1180, 0.0
  %v1185 = vmax.f32 %v1181, 0.0
  %v1186 = vmax.f32 %v1182, 0.0
  %v1187 = vadd.f32 %v1183, 1e-05
  %v1188 = vadd.f32 %v1184, 1e-05
  %v1189 = vadd.f32 %v1185, 1e-05
  %v1190 = vadd.f32 %v1186, 1e-05
  %v1191 = vrsqrt.pop %v1187
  %v1192 = vrsqrt.pop %v1188
  %v1193 = vrsqrt.pop %v1189
  %v1194 = vrsqrt.pop %v1190
  %v1195 = vmul.f32 %v1122, %v1191
  %v1196 = vmul.f32 %v1123, %v1192
  %v1197 = vmul.f32 %v1124, %v1193
  %v1198 = vmul.f32 %v1125, %v1194
  %v1199 = vmul.f32 %v1167, %v1195
  %v1200 = vmul.f32 %v1168, %v1196
  %v1201 = vmul.f32 %v1169, %v1197
  %v1202 = vmul.f32 %v1170, %v1198
  %v1203 = vsub.f32 %v1127, %v1199
  %v1204 = vsub.f32 %v1128, %v1200
  %v1205 = vsub.f32 %v1129, %v1201
  %v1206 = vsub.f32 %v1130, %v1202
  %1208 = vset.pattern.permute.xlu0 0
  %1209 = vperm.xlu0 %1208, %v1195
  %v1210 = vpop.permute.xlu0 %1209
  %1213 = vset.pattern.permute.xlu0 0
  %1214 = vperm.xlu0 %1213, %v1196
  %v1215 = vpop.permute.xlu0 %1214
  %1218 = vset.pattern.permute.xlu0 0
  %1219 = vperm.xlu0 %1218, %v1197
  %v1220 = vpop.permute.xlu0 %1219
  %1223 = vset.pattern.permute.xlu0 0
  %1224 = vperm.xlu0 %1223, %v1198
  %v1225 = vpop.permute.xlu0 %1224
  %v1227 = vmul.f32 %v1107, %v1210
  %v1228 = vmul.f32 %v1110, %v1215
  %v1229 = vmul.f32 %v1115, %v1220
  %v1230 = vmul.f32 %v1118, %v1225
  %1232 = vset.pattern.permute.xlu0 0
  %1233 = vperm.xlu0 %1232, %v1203
  %v1234 = vpop.permute.xlu0 %1233
  %1237 = vset.pattern.permute.xlu0 0
  %1238 = vperm.xlu0 %1237, %v1204
  %v1239 = vpop.permute.xlu0 %1238
  %1242 = vset.pattern.permute.xlu0 0
  %1243 = vperm.xlu0 %1242, %v1205
  %v1244 = vpop.permute.xlu0 %1243
  %1247 = vset.pattern.permute.xlu0 0
  %1248 = vperm.xlu0 %1247, %v1206
  %v1249 = vpop.permute.xlu0 %1248
  %v1251 = vadd.f32 %v1227, %v1234
  %v1252 = vadd.f32 %v1228, %v1239
  %v1253 = vadd.f32 %v1229, %v1244
  %v1254 = vadd.f32 %v1230, %v1249
  %vm1255 = vcmp.gt.f32.partialorder %v1251, 0.0
  %vm1256 = vcmp.gt.f32.partialorder %v1252, 0.0
  %vm1257 = vcmp.gt.f32.partialorder %v1253, 0.0
  %vm1258 = vcmp.gt.f32.partialorder %v1254, 0.0
  %v1259 = vmul.f32 %v1251, 0.01
  %v1260 = vmul.f32 %v1252, 0.01
  %v1261 = vmul.f32 %v1253, 0.01
  %v1262 = vmul.f32 %v1254, 0.01
  %v1263 = vsel %vm1255, %v1251, %v1259
  %v1264 = vsel %vm1256, %v1252, %v1260
  %v1265 = vsel %vm1257, %v1253, %v1261
  %v1266 = vsel %vm1258, %v1254, %v1262
  %v1267 = vpack.c.bf16 %v1264, %v1263
  %v1268 = vpack.c.bf16 %v1266, %v1265
  %v1271 = vunpack.c.l.b16 %v1267
  %v1272 = vunpack.c.h.b16 %v1267
  %v1273 = vunpack.c.l.b16 %v1268
  %v1274 = vunpack.c.h.b16 %v1268
  %v1275 = vpack.c.b16 %v1271, %v1271
  %v1276 = vpack.c.b16 %v1272, %v1272
  %v1277 = vpack.c.b16 %v1273, %v1273
  %v1278 = vpack.c.b16 %v1274, %v1274
  %s1283 = scalar_lea.vmem %s4, 48
  %1284 = vst.msk [vmem:[%s1283] sm:$0xf] %vm329, %v1275
  %1285 = vst.msk [vmem:[%s1283 + $0x4] sm:$0xf] %vm329, %v1276
  %1286 = vst.msk [vmem:[%s1283 + $0x8] sm:$0xf] %vm329, %v1277
  %1287 = vst.msk [vmem:[%s1283 + $0xc] sm:$0xf] %vm329, %v1278
  %s1288 = scalar_lea.vmem %s0, 128
  %v1289 = vld [vmem:[%s1288] sm:$0xff]
  %v1290 = vld [vmem:[%s1288 + $0x8] sm:$0xff]
  %v1291 = vld [vmem:[%s1288 + $0x10] sm:$0xff]
  %v1292 = vld [vmem:[%s1288 + $0x18] sm:$0xff]
  %s1293 = scalar_lea.vmem %s1, 288
  %v1294 = vld [vmem:[%s1293] sm:$0xf]
  %v1295 = vld [vmem:[%s1293 + $0x4] sm:$0xf]
  %v1296 = vld [vmem:[%s1293 + $0x8] sm:$0xf]
  %v1297 = vld [vmem:[%s1293 + $0xc] sm:$0xf]
  %v1298 = vld [vmem:[%s1293 + $0x10] sm:$0xf]
  %v1299 = vld [vmem:[%s1293 + $0x14] sm:$0xf]
  %v1300 = vld [vmem:[%s1293 + $0x18] sm:$0xf]
  %v1301 = vld [vmem:[%s1293 + $0x1c] sm:$0xf]
  %v1302 = vld [vmem:[%s1293 + $0x20] sm:$0xf]
  %v1303 = vld [vmem:[%s1293 + $0x24] sm:$0xf]
  %v1304 = vld [vmem:[%s1293 + $0x28] sm:$0xf]
  %v1305 = vld [vmem:[%s1293 + $0x2c] sm:$0xf]
  %v1306 = vld [vmem:[%s1293 + $0x30] sm:$0xf]
  %v1307 = vld [vmem:[%s1293 + $0x34] sm:$0xf]
  %v1308 = vld [vmem:[%s1293 + $0x38] sm:$0xf]
  %v1309 = vld [vmem:[%s1293 + $0x3c] sm:$0xf]
  %v1310 = vld [vmem:[%s1293 + $0x40] sm:$0xf]
  %v1311 = vld [vmem:[%s1293 + $0x44] sm:$0xf]
  %v1316 = vunpack.c.l.b16 %v1289
  %v1317 = vunpack.c.h.b16 %v1289
  %v1318 = vunpack.c.l.b16 %v1290
  %v1319 = vunpack.c.h.b16 %v1290
  %v1320 = vunpack.c.l.b16 %v1291
  %v1321 = vunpack.c.h.b16 %v1291
  %v1322 = vunpack.c.l.b16 %v1292
  %v1323 = vunpack.c.h.b16 %v1292
  %v1324 = vpack.c.b16 %v1318, %v1316
  %v1325 = vpack.c.b16 %v1319, %v1317
  %v1326 = vpack.c.b16 %v1322, %v1320
  %v1327 = vpack.c.b16 %v1323, %v1321
  %v1348 = vunpack.c.l.b16 %v1294
  %v1349 = vunpack.c.l.b16 %v1295
  %v1350 = vunpack.c.l.b16 %v1296
  %v1351 = vunpack.c.l.b16 %v1297
  %v1352 = vunpack.c.l.b16 %v1298
  %v1353 = vunpack.c.l.b16 %v1299
  %v1354 = vunpack.c.l.b16 %v1300
  %v1355 = vunpack.c.l.b16 %v1301
  %v1356 = vunpack.c.l.b16 %v1302
  %v1357 = vunpack.c.l.b16 %v1303
  %v1358 = vunpack.c.l.b16 %v1304
  %v1359 = vunpack.c.l.b16 %v1305
  %v1360 = vunpack.c.l.b16 %v1306
  %v1361 = vunpack.c.l.b16 %v1307
  %v1362 = vunpack.c.l.b16 %v1308
  %v1363 = vunpack.c.l.b16 %v1309
  %v1364 = vunpack.c.l.b16 %v1310
  %v1365 = vunpack.c.l.b16 %v1311
  %v1366 = vpack.c.b16 %v1349, %v1348
  %v1367 = vpack.c.b16 %v1351, %v1350
  %v1368 = vpack.c.b16 %v1353, %v1352
  %v1369 = vpack.c.b16 %v1355, %v1354
  %v1370 = vpack.c.b16 %v1357, %v1356
  %v1371 = vpack.c.b16 %v1359, %v1358
  %v1372 = vpack.c.b16 %v1361, %v1360
  %v1373 = vpack.c.b16 %v1363, %v1362
  %v1374 = vpack.c.b16 %v1365, %v1364
  %v1385 = vsel %vm112, %v1325, 0
  %v1388 = vsel %vm112, %v1327, 0
  %1390 = vmatprep.subr.bf16.mxu0 0
  %1391 = vmatpush1.bf16.msra.mxu0 %v1366
  %1392 = vmatprep.subr.bf16.mxu0 0
  %1393 = vmatpush1.bf16.msra.mxu0 %v1367
  %1394 = vmatprep.subr.bf16.mxu0 0
  %1395 = vmatpush1.bf16.msra.mxu0 %v1368
  %1396 = vmatprep.subr.bf16.mxu0 0
  %1397 = vmatpush1.bf16.msra.mxu0 %v1369
  %1398 = vmatprep.subr.bf16.mxu0 0
  %1399 = vmatpush1.bf16.msra.mxu0 %v1370
  %1400 = vmatprep.subr.bf16.mxu0 0
  %1401 = vmatpush1.bf16.msra.mxu0 %v1371
  %1402 = vmatprep.subr.bf16.mxu0 0
  %1403 = vmatpush1.bf16.msra.mxu0 %v1372
  %1404 = vmatprep.subr.bf16.mxu0 0
  %1405 = vmatpush1.bf16.msra.mxu0 %v1373
  %1406 = vmatprep.subr.bf16.mxu0 0
  %1407 = vmatpush1.bf16.msra.mxu0 %v1374
  %1408 = vmatprep.subr.bf16.mxu0 0
  %1409 = vmatpush1.bf16.msra.mxu0 0
  %1410 = vmatprep.subr.bf16.mxu0 0
  %1411 = vmatpush1.bf16.msra.mxu0 0
  %1412 = vmatprep.subr.bf16.mxu0 0
  %1413 = vmatpush1.bf16.msra.mxu0 0
  %1414 = vmatprep.subr.bf16.mxu0 0
  %1415 = vmatpush1.bf16.msra.mxu0 0
  %1416 = vmatprep.subr.bf16.mxu0 0
  %1417 = vmatpush1.bf16.msra.mxu0 0
  %1418 = vmatprep.subr.bf16.mxu0 0
  %1419 = vmatpush1.bf16.msra.mxu0 0
  %1420 = vmatprep.subr.bf16.mxu0 0
  %1421 = vmatpush1.bf16.msra.mxu0 0
  %1422 = vmatprep.mubr.bf16.mxu0 %v1385
  %1423 = vmatmul.mubr.bf16.gmra.mrb[0].mxu0 %v1324
  %v1424 = vpop.f32.mrb[0].mxu0
  %v1425 = vadd.f32 0.0, %v1424
  %v1426 = vpop.f32.mrb[0].mxu0
  %v1427 = vpop.f32.mrb[0].mxu0
  %v1428 = vadd.f32 0.0, %v1427
  %v1429 = vpop.f32.mrb[0].mxu0
  %1430 = vmatprep.mubr.bf16.mxu0 %v1388
  %1431 = vmatmul.mubr.bf16.gmra.mrb[0].mxu0 %v1326
  %v1432 = vpop.f32.mrb[0].mxu0
  %v1433 = vadd.f32 0.0, %v1432
  %v1434 = vpop.f32.mrb[0].mxu0
  %v1435 = vpop.f32.mrb[0].mxu0
  %v1436 = vadd.f32 0.0, %v1435
  %v1437 = vpop.f32.mrb[0].mxu0
  %1438 = vdwg.mxu0
  %s1439 = scalar_lea.vmem %s2, 128
  %v1440 = vld [vmem:[%s1439] sm:$0xff]
  %v1441 = vld [vmem:[%s1439 + $0x8] sm:$0xff]
  %v1442 = vld [vmem:[%s1439 + $0x10] sm:$0xff]
  %v1443 = vld [vmem:[%s1439 + $0x18] sm:$0xff]
  %s1444 = scalar_lea.vmem %s3, 128
  %v1445 = vld [vmem:[%s1444] sm:$0xff]
  %v1446 = vld [vmem:[%s1444 + $0x8] sm:$0xff]
  %v1447 = vld [vmem:[%s1444 + $0x10] sm:$0xff]
  %v1448 = vld [vmem:[%s1444 + $0x18] sm:$0xff]
  %v1449 = vsel %vm176, %v1425, 0.0
  %1450 = vadd.xlane.f32.xlu0 %v1449
  %v1451 = vpop.xlane.xlu0 %1450
  %v1452 = vsel %vm176, %v1428, 0.0
  %1453 = vadd.xlane.f32.xlu0 %v1452
  %v1454 = vpop.xlane.xlu0 %1453
  %v1455 = vsel %vm176, %v1433, 0.0
  %1456 = vadd.xlane.f32.xlu0 %v1455
  %v1457 = vpop.xlane.xlu0 %1456
  %v1458 = vsel %vm176, %v1436, 0.0
  %1459 = vadd.xlane.f32.xlu0 %v1458
  %v1460 = vpop.xlane.xlu0 %1459
  %v1461 = vadd.f32 %v1451, 0.0
  %v1462 = vadd.f32 %v1454, 0.0
  %v1463 = vadd.f32 %v1457, 0.0
  %v1464 = vadd.f32 %v1460, 0.0
  %v1465 = vmul.f32 %v1425, %v1425
  %v1466 = vmul.f32 %v1428, %v1428
  %v1467 = vmul.f32 %v1433, %v1433
  %v1468 = vmul.f32 %v1436, %v1436
  %v1469 = vsel %vm176, %v1465, 0.0
  %1470 = vadd.xlane.f32.xlu0 %v1469
  %v1471 = vpop.xlane.xlu0 %1470
  %v1472 = vsel %vm176, %v1466, 0.0
  %1473 = vadd.xlane.f32.xlu0 %v1472
  %v1474 = vpop.xlane.xlu0 %1473
  %v1475 = vsel %vm176, %v1467, 0.0
  %1476 = vadd.xlane.f32.xlu0 %v1475
  %v1477 = vpop.xlane.xlu0 %1476
  %v1478 = vsel %vm176, %v1468, 0.0
  %1479 = vadd.xlane.f32.xlu0 %v1478
  %v1480 = vpop.xlane.xlu0 %1479
  %v1481 = vadd.f32 %v1471, 0.0
  %v1482 = vadd.f32 %v1474, 0.0
  %v1483 = vadd.f32 %v1477, 0.0
  %v1484 = vadd.f32 %v1480, 0.0
  %v1485 = vmul.f32 %v1461, 0.125
  %v1486 = vmul.f32 %v1462, 0.125
  %v1487 = vmul.f32 %v1463, 0.125
  %v1488 = vmul.f32 %v1464, 0.125
  %v1489 = vmul.f32 %v1481, 0.125
  %v1490 = vmul.f32 %v1482, 0.125
  %v1491 = vmul.f32 %v1483, 0.125
  %v1492 = vmul.f32 %v1484, 0.125
  %v1493 = vmul.f32 %v1485, %v1485
  %v1494 = vmul.f32 %v1486, %v1486
  %v1495 = vmul.f32 %v1487, %v1487
  %v1496 = vmul.f32 %v1488, %v1488
  %v1497 = vsub.f32 %v1489, %v1493
  %v1498 = vsub.f32 %v1490, %v1494
  %v1499 = vsub.f32 %v1491, %v1495
  %v1500 = vsub.f32 %v1492, %v1496
  %v1501 = vmax.f32 %v1497, 0.0
  %v1502 = vmax.f32 %v1498, 0.0
  %v1503 = vmax.f32 %v1499, 0.0
  %v1504 = vmax.f32 %v1500, 0.0
  %v1505 = vadd.f32 %v1501, 1e-05
  %v1506 = vadd.f32 %v1502, 1e-05
  %v1507 = vadd.f32 %v1503, 1e-05
  %v1508 = vadd.f32 %v1504, 1e-05
  %v1509 = vrsqrt.pop %v1505
  %v1510 = vrsqrt.pop %v1506
  %v1511 = vrsqrt.pop %v1507
  %v1512 = vrsqrt.pop %v1508
  %v1513 = vmul.f32 %v1440, %v1509
  %v1514 = vmul.f32 %v1441, %v1510
  %v1515 = vmul.f32 %v1442, %v1511
  %v1516 = vmul.f32 %v1443, %v1512
  %v1517 = vmul.f32 %v1485, %v1513
  %v1518 = vmul.f32 %v1486, %v1514
  %v1519 = vmul.f32 %v1487, %v1515
  %v1520 = vmul.f32 %v1488, %v1516
  %v1521 = vsub.f32 %v1445, %v1517
  %v1522 = vsub.f32 %v1446, %v1518
  %v1523 = vsub.f32 %v1447, %v1519
  %v1524 = vsub.f32 %v1448, %v1520
  %1526 = vset.pattern.permute.xlu0 0
  %1527 = vperm.xlu0 %1526, %v1513
  %v1528 = vpop.permute.xlu0 %1527
  %1531 = vset.pattern.permute.xlu0 0
  %1532 = vperm.xlu0 %1531, %v1514
  %v1533 = vpop.permute.xlu0 %1532
  %1536 = vset.pattern.permute.xlu0 0
  %1537 = vperm.xlu0 %1536, %v1515
  %v1538 = vpop.permute.xlu0 %1537
  %1541 = vset.pattern.permute.xlu0 0
  %1542 = vperm.xlu0 %1541, %v1516
  %v1543 = vpop.permute.xlu0 %1542
  %v1545 = vmul.f32 %v1425, %v1528
  %v1546 = vmul.f32 %v1428, %v1533
  %v1547 = vmul.f32 %v1433, %v1538
  %v1548 = vmul.f32 %v1436, %v1543
  %1550 = vset.pattern.permute.xlu0 0
  %1551 = vperm.xlu0 %1550, %v1521
  %v1552 = vpop.permute.xlu0 %1551
  %1555 = vset.pattern.permute.xlu0 0
  %1556 = vperm.xlu0 %1555, %v1522
  %v1557 = vpop.permute.xlu0 %1556
  %1560 = vset.pattern.permute.xlu0 0
  %1561 = vperm.xlu0 %1560, %v1523
  %v1562 = vpop.permute.xlu0 %1561
  %1565 = vset.pattern.permute.xlu0 0
  %1566 = vperm.xlu0 %1565, %v1524
  %v1567 = vpop.permute.xlu0 %1566
  %v1569 = vadd.f32 %v1545, %v1552
  %v1570 = vadd.f32 %v1546, %v1557
  %v1571 = vadd.f32 %v1547, %v1562
  %v1572 = vadd.f32 %v1548, %v1567
  %vm1573 = vcmp.gt.f32.partialorder %v1569, 0.0
  %vm1574 = vcmp.gt.f32.partialorder %v1570, 0.0
  %vm1575 = vcmp.gt.f32.partialorder %v1571, 0.0
  %vm1576 = vcmp.gt.f32.partialorder %v1572, 0.0
  %v1577 = vmul.f32 %v1569, 0.01
  %v1578 = vmul.f32 %v1570, 0.01
  %v1579 = vmul.f32 %v1571, 0.01
  %v1580 = vmul.f32 %v1572, 0.01
  %v1581 = vsel %vm1573, %v1569, %v1577
  %v1582 = vsel %vm1574, %v1570, %v1578
  %v1583 = vsel %vm1575, %v1571, %v1579
  %v1584 = vsel %vm1576, %v1572, %v1580
  %v1585 = vpack.c.bf16 %v1582, %v1581
  %v1586 = vpack.c.bf16 %v1584, %v1583
  %v1589 = vunpack.c.l.b16 %v1585
  %v1590 = vunpack.c.h.b16 %v1585
  %v1591 = vunpack.c.l.b16 %v1586
  %v1592 = vunpack.c.h.b16 %v1586
  %v1593 = vpack.c.b16 %v1589, %v1589
  %v1594 = vpack.c.b16 %v1590, %v1590
  %v1595 = vpack.c.b16 %v1591, %v1591
  %v1596 = vpack.c.b16 %v1592, %v1592
  %s1601 = scalar_lea.vmem %s4, 64
  %1602 = vst.msk [vmem:[%s1601] sm:$0xf] %vm329, %v1593
  %1603 = vst.msk [vmem:[%s1601 + $0x4] sm:$0xf] %vm329, %v1594
  %1604 = vst.msk [vmem:[%s1601 + $0x8] sm:$0xf] %vm329, %v1595
  %1605 = vst.msk [vmem:[%s1601 + $0xc] sm:$0xf] %vm329, %v1596
  // Predicated region
  $region18: #{forward.10} parent=0 // pred_check
    _
  $region19: #{forward.10} parent=0 // pred_check_branch
    %1607 = sbr.rel (0) target = $region21
  $region20: #{forward.10} parent=0 // pred_region
    _
  $region21: #{forward.10} parent=0 // pred_fallthru
    _
  // Predicated region
  $region22: #{forward.10} parent=0 // pred_check
    _
  $region23: #{forward.10} parent=0 // pred_check_branch
    %1609 = sbr.rel (0) target = $region25
  $region24: #{forward.10} parent=0 // pred_region
    _
  $region25: #{forward.10} parent=0 // pred_fallthru
    _

// kernel: forward.11
$region0: #{forward.11}
  #allocation0 [shape = 'u32[]', space=smem, size = 0x4, offset = 0x4, fixed_abs, tag = 'smem constant byte address 0x4 - core index']
  #allocation1 [shape = 'u32[144,128]{1,0:T(1,128)}', space=vmem, size = 0x12000, scoped, tag = 'internal scratch']
  %s0 = inlined_call_operand.vmem [shape: f32[2,128], index: 0, kind: input, shape index: {}]
  %s1 = inlined_call_operand.vmem [shape: f32[4,2,128], index: 1, kind: input, shape index: {}]
  %s2 = inlined_call_operand.vmem [shape: f32[2,8], index: 2, kind: input, shape index: {}]
  %s3 = inlined_call_operand.vmem [shape: f32[128,16], index: 3, kind: input, shape index: {}]
  %s4 = inlined_call_operand.vmem [shape: f32[1,16], index: 4, kind: input, shape index: {}]
  %s5 = inlined_call_operand.vmem [shape: f32[4,128,5], index: 5, kind: input, shape index: {}]
  %s6 = inlined_call_operand.vmem [shape: f32[4,1,5], index: 6, kind: input, shape index: {}]
  %s7 = inlined_call_operand.vmem [shape: f32[8,128], index: 7, kind: input, shape index: {}]
  %s8 = inlined_call_operand.vmem [shape: f32[4,5,128], index: 8, kind: input, shape index: {}]
  %s9 = inlined_call_operand.vmem [shape: f32[1,128], index: 9, kind: input, shape index: {}]
  %s10 = inlined_call_operand.vmem [shape: f32[2,16], index: 10, kind: output, shape index: {0}]
  %s11 = inlined_call_operand.vmem [shape: f32[4,2,5], index: 11, kind: output, shape index: {1}]
  %s12 = inlined_call_operand.vmem [shape: f32[2,128], index: 12, kind: output, shape index: {2}]
  %13 = xla_tuple %s10, %s11, %s12
  %s14 = sld [smem:[#allocation0]]
  $region66: #{forward.11} parent=0
    _
  %s16 = ssub.s32 1, %s14
  %s17 = scalar_select 0, %s16, %s14
  // Predicated region
  $region2: #{forward.11} parent=0 // pred_check
    _
  $region3: #{forward.11} parent=0 // pred_check_branch
    %19 = sbr.rel (0) target = $region5
  $region4: #{forward.11} parent=0 // pred_region
    _
  $region5: #{forward.11} parent=0 // pred_fallthru
    _
  // Predicated region
  $region6: #{forward.11} parent=0 // pred_check
    _
  $region7: #{forward.11} parent=0 // pred_check_branch
    %21 = sbr.rel (0) target = $region9
  $region8: #{forward.11} parent=0 // pred_region
    _
  $region9: #{forward.11} parent=0 // pred_fallthru
    _
  // Predicated region
  $region10: #{forward.11} parent=0 // pred_check
    _
  $region11: #{forward.11} parent=0 // pred_check_branch
    %23 = sbr.rel (0) target = $region13
  $region12: #{forward.11} parent=0 // pred_region
    _
  $region13: #{forward.11} parent=0 // pred_fallthru
    _
  // Predicated region
  $region14: #{forward.11} parent=0 // pred_check
    _
  $region15: #{forward.11} parent=0 // pred_check_branch
    %25 = sbr.rel (0) target = $region17
  $region16: #{forward.11} parent=0 // pred_region
    _
  $region17: #{forward.11} parent=0 // pred_fallthru
    _
  // Predicated region
  $region18: #{forward.11} parent=0 // pred_check
    _
  $region19: #{forward.11} parent=0 // pred_check_branch
    %27 = sbr.rel (0) target = $region21
  $region20: #{forward.11} parent=0 // pred_region
    _
  $region21: #{forward.11} parent=0 // pred_fallthru
    _
  // Predicated region
  $region22: #{forward.11} parent=0 // pred_check
    _
  $region23: #{forward.11} parent=0 // pred_check_branch
    %29 = sbr.rel (0) target = $region25
  $region24: #{forward.11} parent=0 // pred_region
    _
  $region25: #{forward.11} parent=0 // pred_fallthru
    _
  // Predicated region
  $region26: #{forward.11} parent=0 // pred_check
    _
  $region27: #{forward.11} parent=0 // pred_check_branch
    %31 = sbr.rel (0) target = $region29
  $region28: #{forward.11} parent=0 // pred_region
    _
  $region29: #{forward.11} parent=0 // pred_fallthru
    _
  // Predicated region
  $region30: #{forward.11} parent=0 // pred_check
    _
  $region31: #{forward.11} parent=0 // pred_check_branch
    %33 = sbr.rel (0) target = $region33
  $region32: #{forward.11} parent=0 // pred_region
    _
  $region33: #{forward.11} parent=0 // pred_fallthru
    _
  // Predicated region
  $region34: #{forward.11} parent=0 // pred_check
    _
  $region35: #{forward.11} parent=0 // pred_check_branch
    %35 = sbr.rel (0) target = $region37
  $region36: #{forward.11} parent=0 // pred_region
    _
  $region37: #{forward.11} parent=0 // pred_fallthru
    _
  // Predicated region
  $region38: #{forward.11} parent=0 // pred_check
    _
  $region39: #{forward.11} parent=0 // pred_check_branch
    %37 = sbr.rel (0) target = $region41
  $region40: #{forward.11} parent=0 // pred_region
    _
  $region41: #{forward.11} parent=0 // pred_fallthru
    _
  %v38 = vld [vmem:[%s0] sm:$0x3]
  %v39 = vld [vmem:[%s3] sm:$0xff]
  %v40 = vld [vmem:[%s3 + $0x8] sm:$0xff]
  %v41 = vld [vmem:[%s3 + $0x10] sm:$0xff]
  %v42 = vld [vmem:[%s3 + $0x18] sm:$0xff]
  %v43 = vld [vmem:[%s3 + $0x20] sm:$0xff]
  %v44 = vld [vmem:[%s3 + $0x28] sm:$0xff]
  %v45 = vld [vmem:[%s3 + $0x30] sm:$0xff]
  %v46 = vld [vmem:[%s3 + $0x38] sm:$0xff]
  %v47 = vld [vmem:[%s3 + $0x40] sm:$0xff]
  %v48 = vld [vmem:[%s3 + $0x48] sm:$0xff]
  %v49 = vld [vmem:[%s3 + $0x50] sm:$0xff]
  %v50 = vld [vmem:[%s3 + $0x58] sm:$0xff]
  %v51 = vld [vmem:[%s3 + $0x60] sm:$0xff]
  %v52 = vld [vmem:[%s3 + $0x68] sm:$0xff]
  %v53 = vld [vmem:[%s3 + $0x70] sm:$0xff]
  %v54 = vld [vmem:[%s3 + $0x78] sm:$0xff]
  %v55 = vld [vmem:[%s4] sm:$0x1]
  %v57 = vlaneseq
  %v58 = vshrl.u32 %v57, 7
  %v59 = vsub.s32 0, %v58
  %v60 = vrot.slane %v55, %v59
  %62 = vmatprep.subr.mxu0 0.0
  %63 = vmatpush1.msra.mxu0 %v39
  %64 = vmatprep.subr.mxu0 0.0
  %65 = vmatpush1.msra.mxu0 %v40
  %66 = vmatprep.subr.mxu0 0.0
  %67 = vmatpush1.msra.mxu0 %v41
  %68 = vmatprep.subr.mxu0 0.0
  %69 = vmatpush1.msra.mxu0 %v42
  %70 = vmatprep.subr.mxu0 0.0
  %71 = vmatpush1.msra.mxu0 %v43
  %72 = vmatprep.subr.mxu0 0.0
  %73 = vmatpush1.msra.mxu0 %v44
  %74 = vmatprep.subr.mxu0 0.0
  %75 = vmatpush1.msra.mxu0 %v45
  %76 = vmatprep.subr.mxu0 0.0
  %77 = vmatpush1.msra.mxu0 %v46
  %78 = vmatprep.subr.mxu0 0.0
  %79 = vmatpush1.msra.mxu0 %v47
  %80 = vmatprep.subr.mxu0 0.0
  %81 = vmatpush1.msra.mxu0 %v48
  %82 = vmatprep.subr.mxu0 0.0
  %83 = vmatpush1.msra.mxu0 %v49
  %84 = vmatprep.subr.mxu0 0.0
  %85 = vmatpush1.msra.mxu0 %v50
  %86 = vmatprep.subr.mxu0 0.0
  %87 = vmatpush1.msra.mxu0 %v51
  %88 = vmatprep.subr.mxu0 0.0
  %89 = vmatpush1.msra.mxu0 %v52
  %90 = vmatprep.subr.mxu0 0.0
  %91 = vmatpush1.msra.mxu0 %v53
  %92 = vmatprep.subr.mxu0 0.0
  %93 = vmatpush1.msra.mxu0 %v54
  %94 = vmatprep.subr.mxu0 0.0
  %95 = vmatpush1.msra.mxu0 0.0
  %96 = vmatprep.subr.mxu0 0.0
  %97 = vmatpush1.msra.mxu0 0.0
  %98 = vmatprep.subr.mxu0 0.0
  %99 = vmatpush1.msra.mxu0 0.0
  %100 = vmatprep.subr.mxu0 0.0
  %101 = vmatpush1.msra.mxu0 0.0
  %102 = vmatprep.subr.mxu0 0.0
  %103 = vmatpush1.msra.mxu0 0.0
  %104 = vmatprep.subr.mxu0 0.0
  %105 = vmatpush1.msra.mxu0 0.0
  %106 = vmatprep.subr.mxu0 0.0
  %107 = vmatpush1.msra.mxu0 0.0
  %108 = vmatprep.subr.mxu0 0.0
  %109 = vmatpush1.msra.mxu0 0.0
  %110 = vmatprep.subr.mxu0 0.0
  %111 = vmatpush1.msra.mxu0 0.0
  %112 = vmatprep.subr.mxu0 0.0
  %113 = vmatpush1.msra.mxu0 0.0
  %114 = vmatprep.subr.mxu0 0.0
  %115 = vmatpush1.msra.mxu0 0.0
  %116 = vmatprep.subr.mxu0 0.0
  %117 = vmatpush1.msra.mxu0 0.0
  %118 = vmatprep.subr.mxu0 0.0
  %119 = vmatpush1.msra.mxu0 0.0
  %120 = vmatprep.subr.mxu0 0.0
  %121 = vmatpush1.msra.mxu0 0.0
  %122 = vmatprep.subr.mxu0 0.0
  %123 = vmatpush1.msra.mxu0 0.0
  %124 = vmatprep.subr.mxu0 0.0
  %125 = vmatpush1.msra.mxu0 0.0
  %126 = vmatprep.mubr.f32.mxu0 0.0
  %127 = vmatmul.mubr.f32.gmra.mrb[0].mxu0 %v38
  %v128 = vpop.f32.mrb[0].mxu0
  %v129 = vadd.f32 %v60, %v128
  %v130 = vpop.f32.mrb[0].mxu0
  %131 = vdwg.mxu0
  %vm132 = vcmask 123904
  %133 = vst.msk [vmem:[%s10] sm:$0x3] %vm132, %v129
  %v134 = vld [vmem:[%s2] sm:$0x3]
  %v135 = vmul.f32 %v129, 0.5
  %v136 = vmul.f32 %v135, 1.442695
  %v137 = vpow.pop %v136
  %139 = vrot.lane.b32.xlu0 %v137, 120
  %v140 = vpop.permute.xlu0 %139
  %v142 = vmul.f32 %v134, %v140
  %v143 = vadd.f32 %v142, %v129
  %v144 = vld [vmem:[%s7] sm:$0xff]
  %v145 = vld [vmem:[%s9] sm:$0x1]
  %v147 = vlaneseq
  %v148 = vshrl.u32 %v147, 7
  %v149 = vsub.s32 0, %v148
  %v150 = vrot.slane %v145, %v149
  %vm152 = vcmask 64512
  %v154 = vsel %vm152, %v143, 0
  %156 = vmatprep.subr.mxu0 0.0
  %157 = vmatpush1.msra.mxu0 %v144
  %158 = vmatprep.subr.mxu0 0.0
  %159 = vmatpush1.msra.mxu0 0.0
  %160 = vmatprep.subr.mxu0 0.0
  %161 = vmatpush1.msra.mxu0 0.0
  %162 = vmatprep.subr.mxu0 0.0
  %163 = vmatpush1.msra.mxu0 0.0
  %164 = vmatprep.subr.mxu0 0.0
  %165 = vmatpush1.msra.mxu0 0.0
  %166 = vmatprep.subr.mxu0 0.0
  %167 = vmatpush1.msra.mxu0 0.0
  %168 = vmatprep.subr.mxu0 0.0
  %169 = vmatpush1.msra.mxu0 0.0
  %170 = vmatprep.subr.mxu0 0.0
  %171 = vmatpush1.msra.mxu0 0.0
  %172 = vmatprep.subr.mxu0 0.0
  %173 = vmatpush1.msra.mxu0 0.0
  %174 = vmatprep.subr.mxu0 0.0
  %175 = vmatpush1.msra.mxu0 0.0
  %176 = vmatprep.subr.mxu0 0.0
  %177 = vmatpush1.msra.mxu0 0.0
  %178 = vmatprep.subr.mxu0 0.0
  %179 = vmatpush1.msra.mxu0 0.0
  %180 = vmatprep.subr.mxu0 0.0
  %181 = vmatpush1.msra.mxu0 0.0
  %182 = vmatprep.subr.mxu0 0.0
  %183 = vmatpush1.msra.mxu0 0.0
  %184 = vmatprep.subr.mxu0 0.0
  %185 = vmatpush1.msra.mxu0 0.0
  %186 = vmatprep.subr.mxu0 0.0
  %187 = vmatpush1.msra.mxu0 0.0
  %188 = vmatprep.subr.mxu0 0.0
  %189 = vmatpush1.msra.mxu0 0.0
  %190 = vmatprep.subr.mxu0 0.0
  %191 = vmatpush1.msra.mxu0 0.0
  %192 = vmatprep.subr.mxu0 0.0
  %193 = vmatpush1.msra.mxu0 0.0
  %194 = vmatprep.subr.mxu0 0.0
  %195 = vmatpush1.msra.mxu0 0.0
  %196 = vmatprep.subr.mxu0 0.0
  %197 = vmatpush1.msra.mxu0 0.0
  %198 = vmatprep.subr.mxu0 0.0
  %199 = vmatpush1.msra.mxu0 0.0
  %200 = vmatprep.subr.mxu0 0.0
  %201 = vmatpush1.msra.mxu0 0.0
  %202 = vmatprep.subr.mxu0 0.0
  %203 = vmatpush1.msra.mxu0 0.0
  %204 = vmatprep.subr.mxu0 0.0
  %205 = vmatpush1.msra.mxu0 0.0
  %206 = vmatprep.subr.mxu0 0.0
  %207 = vmatpush1.msra.mxu0 0.0
  %208 = vmatprep.subr.mxu0 0.0
  %209 = vmatpush1.msra.mxu0 0.0
  %210 = vmatprep.subr.mxu0 0.0
  %211 = vmatpush1.msra.mxu0 0.0
  %212 = vmatprep.subr.mxu0 0.0
  %213 = vmatpush1.msra.mxu0 0.0
  %214 = vmatprep.subr.mxu0 0.0
  %215 = vmatpush1.msra.mxu0 0.0
  %216 = vmatprep.subr.mxu0 0.0
  %217 = vmatpush1.msra.mxu0 0.0
  %218 = vmatprep.subr.mxu0 0.0
  %219 = vmatpush1.msra.mxu0 0.0
  %220 = vmatprep.mubr.f32.mxu0 0.0
  %221 = vmatmul.mubr.f32.gmra.mrb[0].mxu0 %v154
  %v222 = vpop.f32.mrb[0].mxu0
  %v223 = vadd.f32 %v150, %v222
  %v224 = vpop.f32.mrb[0].mxu0
  %225 = vdwg.mxu0
  %v226 = vld [vmem:[%s1] sm:$0x3]
  %v227 = vld [vmem:[%s5] sm:$0xff]
  %v228 = vld [vmem:[%s5 + $0x8] sm:$0xff]
  %v229 = vld [vmem:[%s5 + $0x10] sm:$0xff]
  %v230 = vld [vmem:[%s5 + $0x18] sm:$0xff]
  %v231 = vld [vmem:[%s5 + $0x20] sm:$0xff]
  %v232 = vld [vmem:[%s5 + $0x28] sm:$0xff]
  %v233 = vld [vmem:[%s5 + $0x30] sm:$0xff]
  %v234 = vld [vmem:[%s5 + $0x38] sm:$0xff]
  %v235 = vld [vmem:[%s5 + $0x40] sm:$0xff]
  %v236 = vld [vmem:[%s5 + $0x48] sm:$0xff]
  %v237 = vld [vmem:[%s5 + $0x50] sm:$0xff]
  %v238 = vld [vmem:[%s5 + $0x58] sm:$0xff]
  %v239 = vld [vmem:[%s5 + $0x60] sm:$0xff]
  %v240 = vld [vmem:[%s5 + $0x68] sm:$0xff]
  %v241 = vld [vmem:[%s5 + $0x70] sm:$0xff]
  %v242 = vld [vmem:[%s5 + $0x78] sm:$0xff]
  %v243 = vld [vmem:[%s6] sm:$0x1]
  %v245 = vlaneseq
  %v246 = vshrl.u32 %v245, 7
  %v247 = vsub.s32 0, %v246
  %v248 = vrot.slane %v243, %v247
  %250 = vmatprep.subr.mxu0 0.0
  %251 = vmatpush1.msra.mxu0 %v227
  %252 = vmatprep.subr.mxu0 0.0
  %253 = vmatpush1.msra.mxu0 %v228
  %254 = vmatprep.subr.mxu0 0.0
  %255 = vmatpush1.msra.mxu0 %v229
  %256 = vmatprep.subr.mxu0 0.0
  %257 = vmatpush1.msra.mxu0 %v230
  %258 = vmatprep.subr.mxu0 0.0
  %259 = vmatpush1.msra.mxu0 %v231
  %260 = vmatprep.subr.mxu0 0.0
  %261 = vmatpush1.msra.mxu0 %v232
  %262 = vmatprep.subr.mxu0 0.0
  %263 = vmatpush1.msra.mxu0 %v233
  %264 = vmatprep.subr.mxu0 0.0
  %265 = vmatpush1.msra.mxu0 %v234
  %266 = vmatprep.subr.mxu0 0.0
  %267 = vmatpush1.msra.mxu0 %v235
  %268 = vmatprep.subr.mxu0 0.0
  %269 = vmatpush1.msra.mxu0 %v236
  %270 = vmatprep.subr.mxu0 0.0
  %271 = vmatpush1.msra.mxu0 %v237
  %272 = vmatprep.subr.mxu0 0.0
  %273 = vmatpush1.msra.mxu0 %v238
  %274 = vmatprep.subr.mxu0 0.0
  %275 = vmatpush1.msra.mxu0 %v239
  %276 = vmatprep.subr.mxu0 0.0
  %277 = vmatpush1.msra.mxu0 %v240
  %278 = vmatprep.subr.mxu0 0.0
  %279 = vmatpush1.msra.mxu0 %v241
  %280 = vmatprep.subr.mxu0 0.0
  %281 = vmatpush1.msra.mxu0 %v242
  %282 = vmatprep.subr.mxu0 0.0
  %283 = vmatpush1.msra.mxu0 0.0
  %284 = vmatprep.subr.mxu0 0.0
  %285 = vmatpush1.msra.mxu0 0.0
  %286 = vmatprep.subr.mxu0 0.0
  %287 = vmatpush1.msra.mxu0 0.0
  %288 = vmatprep.subr.mxu0 0.0
  %289 = vmatpush1.msra.mxu0 0.0
  %290 = vmatprep.subr.mxu0 0.0
  %291 = vmatpush1.msra.mxu0 0.0
  %292 = vmatprep.subr.mxu0 0.0
  %293 = vmatpush1.msra.mxu0 0.0
  %294 = vmatprep.subr.mxu0 0.0
  %295 = vmatpush1.msra.mxu0 0.0
  %296 = vmatprep.subr.mxu0 0.0
  %297 = vmatpush1.msra.mxu0 0.0
  %298 = vmatprep.subr.mxu0 0.0
  %299 = vmatpush1.msra.mxu0 0.0
  %300 = vmatprep.subr.mxu0 0.0
  %301 = vmatpush1.msra.mxu0 0.0
  %302 = vmatprep.subr.mxu0 0.0
  %303 = vmatpush1.msra.mxu0 0.0
  %304 = vmatprep.subr.mxu0 0.0
  %305 = vmatpush1.msra.mxu0 0.0
  %306 = vmatprep.subr.mxu0 0.0
  %307 = vmatpush1.msra.mxu0 0.0
  %308 = vmatprep.subr.mxu0 0.0
  %309 = vmatpush1.msra.mxu0 0.0
  %310 = vmatprep.subr.mxu0 0.0
  %311 = vmatpush1.msra.mxu0 0.0
  %312 = vmatprep.subr.mxu0 0.0
  %313 = vmatpush1.msra.mxu0 0.0
  %314 = vmatprep.mubr.f32.mxu0 0.0
  %315 = vmatmul.mubr.f32.gmra.mrb[0].mxu0 %v226
  %v316 = vpop.f32.mrb[0].mxu0
  %v317 = vadd.f32 %v248, %v316
  %v318 = vpop.f32.mrb[0].mxu0
  %319 = vdwg.mxu0
  %vm320 = vcmp.gt.f32.partialorder %v317, 0.0
  %v321 = vmul.f32 %v317, 0.01
  %v322 = vsel %vm320, %v317, %v321
  %vm323 = vcmask 33792
  %v324 = vsel %vm323, %v322, -inf
  %325 = vmax.xlane.f32.xlu0 %v324
  %v326 = vpop.xlane.xlu0 %325
  %v327 = vsub.f32 %v322, %v326
  %v328 = vmul.f32 %v327, 1.442695
  %v329 = vpow.pop %v328
  %v330 = vsel %vm323, %v329, 0.0
  %331 = vadd.xlane.f32.xlu0 %v330
  %v332 = vpop.xlane.xlu0 %331
  %v333 = vrcp.pop %v332
  %v334 = vmul.f32 %v329, %v333
  %335 = vst.msk [vmem:[%s11] sm:$0x3] %vm323, %v334
  %v336 = vld [vmem:[%s8] sm:$0x1f]
  %vm337 = vcmask 39936
  %v339 = vsel %vm337, %v334, 0
  %vm341 = vcmask 1044480
  %v343 = vsel %vm341, %v336, 0
  %345 = vmatprep.subr.mxu0 0.0
  %346 = vmatpush1.msra.mxu0 %v343
  %347 = vmatprep.subr.mxu0 0.0
  %348 = vmatpush1.msra.mxu0 0.0
  %349 = vmatprep.subr.mxu0 0.0
  %350 = vmatpush1.msra.mxu0 0.0
  %351 = vmatprep.subr.mxu0 0.0
  %352 = vmatpush1.msra.mxu0 0.0
  %353 = vmatprep.subr.mxu0 0.0
  %354 = vmatpush1.msra.mxu0 0.0
  %355 = vmatprep.subr.mxu0 0.0
  %356 = vmatpush1.msra.mxu0 0.0
  %357 = vmatprep.subr.mxu0 0.0
  %358 = vmatpush1.msra.mxu0 0.0
  %359 = vmatprep.subr.mxu0 0.0
  %360 = vmatpush1.msra.mxu0 0.0
  %361 = vmatprep.subr.mxu0 0.0
  %362 = vmatpush1.msra.mxu0 0.0
  %363 = vmatprep.subr.mxu0 0.0
  %364 = vmatpush1.msra.mxu0 0.0
  %365 = vmatprep.subr.mxu0 0.0
  %366 = vmatpush1.msra.mxu0 0.0
  %367 = vmatprep.subr.mxu0 0.0
  %368 = vmatpush1.msra.mxu0 0.0
  %369 = vmatprep.subr.mxu0 0.0
  %370 = vmatpush1.msra.mxu0 0.0
  %371 = vmatprep.subr.mxu0 0.0
  %372 = vmatpush1.msra.mxu0 0.0
  %373 = vmatprep.subr.mxu0 0.0
  %374 = vmatpush1.msra.mxu0 0.0
  %375 = vmatprep.subr.mxu0 0.0
  %376 = vmatpush1.msra.mxu0 0.0
  %377 = vmatprep.subr.mxu0 0.0
  %378 = vmatpush1.msra.mxu0 0.0
  %379 = vmatprep.subr.mxu0 0.0
  %380 = vmatpush1.msra.mxu0 0.0
  %381 = vmatprep.subr.mxu0 0.0
  %382 = vmatpush1.msra.mxu0 0.0
  %383 = vmatprep.subr.mxu0 0.0
  %384 = vmatpush1.msra.mxu0 0.0
  %385 = vmatprep.subr.mxu0 0.0
  %386 = vmatpush1.msra.mxu0 0.0
  %387 = vmatprep.subr.mxu0 0.0
  %388 = vmatpush1.msra.mxu0 0.0
  %389 = vmatprep.subr.mxu0 0.0
  %390 = vmatpush1.msra.mxu0 0.0
  %391 = vmatprep.subr.mxu0 0.0
  %392 = vmatpush1.msra.mxu0 0.0
  %393 = vmatprep.subr.mxu0 0.0
  %394 = vmatpush1.msra.mxu0 0.0
  %395 = vmatprep.subr.mxu0 0.0
  %396 = vmatpush1.msra.mxu0 0.0
  %397 = vmatprep.subr.mxu0 0.0
  %398 = vmatpush1.msra.mxu0 0.0
  %399 = vmatprep.subr.mxu0 0.0
  %400 = vmatpush1.msra.mxu0 0.0
  %401 = vmatprep.subr.mxu0 0.0
  %402 = vmatpush1.msra.mxu0 0.0
  %403 = vmatprep.subr.mxu0 0.0
  %404 = vmatpush1.msra.mxu0 0.0
  %405 = vmatprep.subr.mxu0 0.0
  %406 = vmatpush1.msra.mxu0 0.0
  %407 = vmatprep.subr.mxu0 0.0
  %408 = vmatpush1.msra.mxu0 0.0
  %409 = vmatprep.mubr.f32.mxu0 0.0
  %410 = vmatmul.mubr.f32.gmra.mrb[0].mxu0 %v339
  %v411 = vpop.f32.mrb[0].mxu0
  %v412 = vadd.f32 0.0, %v411
  %v413 = vpop.f32.mrb[0].mxu0
  %414 = vdwg.mxu0
  %v415 = vadd.f32 %v223, %v412
  %s416 = scalar_lea.vmem %s1, 2
  %v417 = vld [vmem:[%s416] sm:$0x3]
  %s418 = scalar_lea.vmem %s5, 128
  %v419 = vld [vmem:[%s418] sm:$0xff]
  %v420 = vld [vmem:[%s418 + $0x8] sm:$0xff]
  %v421 = vld [vmem:[%s418 + $0x10] sm:$0xff]
  %v422 = vld [vmem:[%s418 + $0x18] sm:$0xff]
  %v423 = vld [vmem:[%s418 + $0x20] sm:$0xff]
  %v424 = vld [vmem:[%s418 + $0x28] sm:$0xff]
  %v425 = vld [vmem:[%s418 + $0x30] sm:$0xff]
  %v426 = vld [vmem:[%s418 + $0x38] sm:$0xff]
  %v427 = vld [vmem:[%s418 + $0x40] sm:$0xff]
  %v428 = vld [vmem:[%s418 + $0x48] sm:$0xff]
  %v429 = vld [vmem:[%s418 + $0x50] sm:$0xff]
  %v430 = vld [vmem:[%s418 + $0x58] sm:$0xff]
  %v431 = vld [vmem:[%s418 + $0x60] sm:$0xff]
  %v432 = vld [vmem:[%s418 + $0x68] sm:$0xff]
  %v433 = vld [vmem:[%s418 + $0x70] sm:$0xff]
  %v434 = vld [vmem:[%s418 + $0x78] sm:$0xff]
  %s435 = scalar_lea.vmem %s6, 1
  %v436 = vld [vmem:[%s435] sm:$0x1]
  %v438 = vlaneseq
  %v439 = vshrl.u32 %v438, 7
  %v440 = vsub.s32 0, %v439
  %v441 = vrot.slane %v436, %v440
  %443 = vmatprep.subr.mxu0 0.0
  %444 = vmatpush1.msra.mxu0 %v419
  %445 = vmatprep.subr.mxu0 0.0
  %446 = vmatpush1.msra.mxu0 %v420
  %447 = vmatprep.subr.mxu0 0.0
  %448 = vmatpush1.msra.mxu0 %v421
  %449 = vmatprep.subr.mxu0 0.0
  %450 = vmatpush1.msra.mxu0 %v422
  %451 = vmatprep.subr.mxu0 0.0
  %452 = vmatpush1.msra.mxu0 %v423
  %453 = vmatprep.subr.mxu0 0.0
  %454 = vmatpush1.msra.mxu0 %v424
  %455 = vmatprep.subr.mxu0 0.0
  %456 = vmatpush1.msra.mxu0 %v425
  %457 = vmatprep.subr.mxu0 0.0
  %458 = vmatpush1.msra.mxu0 %v426
  %459 = vmatprep.subr.mxu0 0.0
  %460 = vmatpush1.msra.mxu0 %v427
  %461 = vmatprep.subr.mxu0 0.0
  %462 = vmatpush1.msra.mxu0 %v428
  %463 = vmatprep.subr.mxu0 0.0
  %464 = vmatpush1.msra.mxu0 %v429
  %465 = vmatprep.subr.mxu0 0.0
  %466 = vmatpush1.msra.mxu0 %v430
  %467 = vmatprep.subr.mxu0 0.0
  %468 = vmatpush1.msra.mxu0 %v431
  %469 = vmatprep.subr.mxu0 0.0
  %470 = vmatpush1.msra.mxu0 %v432
  %471 = vmatprep.subr.mxu0 0.0
  %472 = vmatpush1.msra.mxu0 %v433
  %473 = vmatprep.subr.mxu0 0.0
  %474 = vmatpush1.msra.mxu0 %v434
  %475 = vmatprep.subr.mxu0 0.0
  %476 = vmatpush1.msra.mxu0 0.0
  %477 = vmatprep.subr.mxu0 0.0
  %478 = vmatpush1.msra.mxu0 0.0
  %479 = vmatprep.subr.mxu0 0.0
  %480 = vmatpush1.msra.mxu0 0.0
  %481 = vmatprep.subr.mxu0 0.0
  %482 = vmatpush1.msra.mxu0 0.0
  %483 = vmatprep.subr.mxu0 0.0
  %484 = vmatpush1.msra.mxu0 0.0
  %485 = vmatprep.subr.mxu0 0.0
  %486 = vmatpush1.msra.mxu0 0.0
  %487 = vmatprep.subr.mxu0 0.0
  %488 = vmatpush1.msra.mxu0 0.0
  %489 = vmatprep.subr.mxu0 0.0
  %490 = vmatpush1.msra.mxu0 0.0
  %491 = vmatprep.subr.mxu0 0.0
  %492 = vmatpush1.msra.mxu0 0.0
  %493 = vmatprep.subr.mxu0 0.0
  %494 = vmatpush1.msra.mxu0 0.0
  %495 = vmatprep.subr.mxu0 0.0
  %496 = vmatpush1.msra.mxu0 0.0
  %497 = vmatprep.subr.mxu0 0.0
  %498 = vmatpush1.msra.mxu0 0.0
  %499 = vmatprep.subr.mxu0 0.0
  %500 = vmatpush1.msra.mxu0 0.0
  %501 = vmatprep.subr.mxu0 0.0
  %502 = vmatpush1.msra.mxu0 0.0
  %503 = vmatprep.subr.mxu0 0.0
  %504 = vmatpush1.msra.mxu0 0.0
  %505 = vmatprep.subr.mxu0 0.0
  %506 = vmatpush1.msra.mxu0 0.0
  %507 = vmatprep.mubr.f32.mxu0 0.0
  %508 = vmatmul.mubr.f32.gmra.mrb[0].mxu0 %v417
  %v509 = vpop.f32.mrb[0].mxu0
  %v510 = vadd.f32 %v441, %v509
  %v511 = vpop.f32.mrb[0].mxu0
  %512 = vdwg.mxu0
  %vm513 = vcmp.gt.f32.partialorder %v510, 0.0
  %v514 = vmul.f32 %v510, 0.01
  %v515 = vsel %vm513, %v510, %v514
  %v516 = vsel %vm323, %v515, -inf
  %517 = vmax.xlane.f32.xlu0 %v516
  %v518 = vpop.xlane.xlu0 %517
  %v519 = vsub.f32 %v515, %v518
  %v520 = vmul.f32 %v519, 1.442695
  %v521 = vpow.pop %v520
  %v522 = vsel %vm323, %v521, 0.0
  %523 = vadd.xlane.f32.xlu0 %v522
  %v524 = vpop.xlane.xlu0 %523
  %v525 = vrcp.pop %v524
  %v526 = vmul.f32 %v521, %v525
  %s527 = scalar_lea.vmem %s11, 2
  %528 = vst.msk [vmem:[%s527] sm:$0x3] %vm323, %v526
  %s529 = scalar_lea.vmem %s8, 8
  %v530 = vld [vmem:[%s529] sm:$0x1f]
  %v532 = vsel %vm337, %v526, 0
  %v535 = vsel %vm341, %v530, 0
  %537 = vmatprep.subr.mxu0 0.0
  %538 = vmatpush1.msra.mxu0 %v535
  %539 = vmatprep.subr.mxu0 0.0
  %540 = vmatpush1.msra.mxu0 0.0
  %541 = vmatprep.subr.mxu0 0.0
  %542 = vmatpush1.msra.mxu0 0.0
  %543 = vmatprep.subr.mxu0 0.0
  %544 = vmatpush1.msra.mxu0 0.0
  %545 = vmatprep.subr.mxu0 0.0
  %546 = vmatpush1.msra.mxu0 0.0
  %547 = vmatprep.subr.mxu0 0.0
  %548 = vmatpush1.msra.mxu0 0.0
  %549 = vmatprep.subr.mxu0 0.0
  %550 = vmatpush1.msra.mxu0 0.0
  %551 = vmatprep.subr.mxu0 0.0
  %552 = vmatpush1.msra.mxu0 0.0
  %553 = vmatprep.subr.mxu0 0.0
  %554 = vmatpush1.msra.mxu0 0.0
  %555 = vmatprep.subr.mxu0 0.0
  %556 = vmatpush1.msra.mxu0 0.0
  %557 = vmatprep.subr.mxu0 0.0
  %558 = vmatpush1.msra.mxu0 0.0
  %559 = vmatprep.subr.mxu0 0.0
  %560 = vmatpush1.msra.mxu0 0.0
  %561 = vmatprep.subr.mxu0 0.0
  %562 = vmatpush1.msra.mxu0 0.0
  %563 = vmatprep.subr.mxu0 0.0
  %564 = vmatpush1.msra.mxu0 0.0
  %565 = vmatprep.subr.mxu0 0.0
  %566 = vmatpush1.msra.mxu0 0.0
  %567 = vmatprep.subr.mxu0 0.0
  %568 = vmatpush1.msra.mxu0 0.0
  %569 = vmatprep.subr.mxu0 0.0
  %570 = vmatpush1.msra.mxu0 0.0
  %571 = vmatprep.subr.mxu0 0.0
  %572 = vmatpush1.msra.mxu0 0.0
  %573 = vmatprep.subr.mxu0 0.0
  %574 = vmatpush1.msra.mxu0 0.0
  %575 = vmatprep.subr.mxu0 0.0
  %576 = vmatpush1.msra.mxu0 0.0
  %577 = vmatprep.subr.mxu0 0.0
  %578 = vmatpush1.msra.mxu0 0.0
  %579 = vmatprep.subr.mxu0 0.0
  %580 = vmatpush1.msra.mxu0 0.0
  %581 = vmatprep.subr.mxu0 0.0
  %582 = vmatpush1.msra.mxu0 0.0
  %583 = vmatprep.subr.mxu0 0.0
  %584 = vmatpush1.msra.mxu0 0.0
  %585 = vmatprep.subr.mxu0 0.0
  %586 = vmatpush1.msra.mxu0 0.0
  %587 = vmatprep.subr.mxu0 0.0
  %588 = vmatpush1.msra.mxu0 0.0
  %589 = vmatprep.subr.mxu0 0.0
  %590 = vmatpush1.msra.mxu0 0.0
  %591 = vmatprep.subr.mxu0 0.0
  %592 = vmatpush1.msra.mxu0 0.0
  %593 = vmatprep.subr.mxu0 0.0
  %594 = vmatpush1.msra.mxu0 0.0
  %595 = vmatprep.subr.mxu0 0.0
  %596 = vmatpush1.msra.mxu0 0.0
  %597 = vmatprep.subr.mxu0 0.0
  %598 = vmatpush1.msra.mxu0 0.0
  %599 = vmatprep.subr.mxu0 0.0
  %600 = vmatpush1.msra.mxu0 0.0
  %601 = vmatprep.mubr.f32.mxu0 0.0
  %602 = vmatmul.mubr.f32.gmra.mrb[0].mxu0 %v532
  %v603 = vpop.f32.mrb[0].mxu0
  %v604 = vadd.f32 0.0, %v603
  %v605 = vpop.f32.mrb[0].mxu0
  %606 = vdwg.mxu0
  %v607 = vadd.f32 %v415, %v604
  %s608 = scalar_lea.vmem %s1, 4
  %v609 = vld [vmem:[%s608] sm:$0x3]
  %s610 = scalar_lea.vmem %s5, 256
  %v611 = vld [vmem:[%s610] sm:$0xff]
  %v612 = vld [vmem:[%s610 + $0x8] sm:$0xff]
  %v613 = vld [vmem:[%s610 + $0x10] sm:$0xff]
  %v614 = vld [vmem:[%s610 + $0x18] sm:$0xff]
  %v615 = vld [vmem:[%s610 + $0x20] sm:$0xff]
  %v616 = vld [vmem:[%s610 + $0x28] sm:$0xff]
  %v617 = vld [vmem:[%s610 + $0x30] sm:$0xff]
  %v618 = vld [vmem:[%s610 + $0x38] sm:$0xff]
  %v619 = vld [vmem:[%s610 + $0x40] sm:$0xff]
  %v620 = vld [vmem:[%s610 + $0x48] sm:$0xff]
  %v621 = vld [vmem:[%s610 + $0x50] sm:$0xff]
  %v622 = vld [vmem:[%s610 + $0x58] sm:$0xff]
  %v623 = vld [vmem:[%s610 + $0x60] sm:$0xff]
  %v624 = vld [vmem:[%s610 + $0x68] sm:$0xff]
  %v625 = vld [vmem:[%s610 + $0x70] sm:$0xff]
  %v626 = vld [vmem:[%s610 + $0x78] sm:$0xff]
  %s627 = scalar_lea.vmem %s6, 2
  %v628 = vld [vmem:[%s627] sm:$0x1]
  %v630 = vlaneseq
  %v631 = vshrl.u32 %v630, 7
  %v632 = vsub.s32 0, %v631
  %v633 = vrot.slane %v628, %v632
  %635 = vmatprep.subr.mxu0 0.0
  %636 = vmatpush1.msra.mxu0 %v611
  %637 = vmatprep.subr.mxu0 0.0
  %638 = vmatpush1.msra.mxu0 %v612
  %639 = vmatprep.subr.mxu0 0.0
  %640 = vmatpush1.msra.mxu0 %v613
  %641 = vmatprep.subr.mxu0 0.0
  %642 = vmatpush1.msra.mxu0 %v614
  %643 = vmatprep.subr.mxu0 0.0
  %644 = vmatpush1.msra.mxu0 %v615
  %645 = vmatprep.subr.mxu0 0.0
  %646 = vmatpush1.msra.mxu0 %v616
  %647 = vmatprep.subr.mxu0 0.0
  %648 = vmatpush1.msra.mxu0 %v617
  %649 = vmatprep.subr.mxu0 0.0
  %650 = vmatpush1.msra.mxu0 %v618
  %651 = vmatprep.subr.mxu0 0.0
  %652 = vmatpush1.msra.mxu0 %v619
  %653 = vmatprep.subr.mxu0 0.0
  %654 = vmatpush1.msra.mxu0 %v620
  %655 = vmatprep.subr.mxu0 0.0
  %656 = vmatpush1.msra.mxu0 %v621
  %657 = vmatprep.subr.mxu0 0.0
  %658 = vmatpush1.msra.mxu0 %v622
  %659 = vmatprep.subr.mxu0 0.0
  %660 = vmatpush1.msra.mxu0 %v623
  %661 = vmatprep.subr.mxu0 0.0
  %662 = vmatpush1.msra.mxu0 %v624
  %663 = vmatprep.subr.mxu0 0.0
  %664 = vmatpush1.msra.mxu0 %v625
  %665 = vmatprep.subr.mxu0 0.0
  %666 = vmatpush1.msra.mxu0 %v626
  %667 = vmatprep.subr.mxu0 0.0
  %668 = vmatpush1.msra.mxu0 0.0
  %669 = vmatprep.subr.mxu0 0.0
  %670 = vmatpush1.msra.mxu0 0.0
  %671 = vmatprep.subr.mxu0 0.0
  %672 = vmatpush1.msra.mxu0 0.0
  %673 = vmatprep.subr.mxu0 0.0
  %674 = vmatpush1.msra.mxu0 0.0
  %675 = vmatprep.subr.mxu0 0.0
  %676 = vmatpush1.msra.mxu0 0.0
  %677 = vmatprep.subr.mxu0 0.0
  %678 = vmatpush1.msra.mxu0 0.0
  %679 = vmatprep.subr.mxu0 0.0
  %680 = vmatpush1.msra.mxu0 0.0
  %681 = vmatprep.subr.mxu0 0.0
  %682 = vmatpush1.msra.mxu0 0.0
  %683 = vmatprep.subr.mxu0 0.0
  %684 = vmatpush1.msra.mxu0 0.0
  %685 = vmatprep.subr.mxu0 0.0
  %686 = vmatpush1.msra.mxu0 0.0
  %687 = vmatprep.subr.mxu0 0.0
  %688 = vmatpush1.msra.mxu0 0.0
  %689 = vmatprep.subr.mxu0 0.0
  %690 = vmatpush1.msra.mxu0 0.0
  %691 = vmatprep.subr.mxu0 0.0
  %692 = vmatpush1.msra.mxu0 0.0
  %693 = vmatprep.subr.mxu0 0.0
  %694 = vmatpush1.msra.mxu0 0.0
  %695 = vmatprep.subr.mxu0 0.0
  %696 = vmatpush1.msra.mxu0 0.0
  %697 = vmatprep.subr.mxu0 0.0
  %698 = vmatpush1.msra.mxu0 0.0
  %699 = vmatprep.mubr.f32.mxu0 0.0
  %700 = vmatmul.mubr.f32.gmra.mrb[0].mxu0 %v609
  %v701 = vpop.f32.mrb[0].mxu0
  %v702 = vadd.f32 %v633, %v701
  %v703 = vpop.f32.mrb[0].mxu0
  %704 = vdwg.mxu0
  %vm705 = vcmp.gt.f32.partialorder %v702, 0.0
  %v706 = vmul.f32 %v702, 0.01
  %v707 = vsel %vm705, %v702, %v706
  %v708 = vsel %vm323, %v707, -inf
  %709 = vmax.xlane.f32.xlu0 %v708
  %v710 = vpop.xlane.xlu0 %709
  %v711 = vsub.f32 %v707, %v710
  %v712 = vmul.f32 %v711, 1.442695
  %v713 = vpow.pop %v712
  %v714 = vsel %vm323, %v713, 0.0
  %715 = vadd.xlane.f32.xlu0 %v714
  %v716 = vpop.xlane.xlu0 %715
  %v717 = vrcp.pop %v716
  %v718 = vmul.f32 %v713, %v717
  %s719 = scalar_lea.vmem %s11, 4
  %720 = vst.msk [vmem:[%s719] sm:$0x3] %vm323, %v718
  %s721 = scalar_lea.vmem %s8, 16
  %v722 = vld [vmem:[%s721] sm:$0x1f]
  %v724 = vsel %vm337, %v718, 0
  %v727 = vsel %vm341, %v722, 0
  %729 = vmatprep.subr.mxu0 0.0
  %730 = vmatpush1.msra.mxu0 %v727
  %731 = vmatprep.subr.mxu0 0.0
  %732 = vmatpush1.msra.mxu0 0.0
  %733 = vmatprep.subr.mxu0 0.0
  %734 = vmatpush1.msra.mxu0 0.0
  %735 = vmatprep.subr.mxu0 0.0
  %736 = vmatpush1.msra.mxu0 0.0
  %737 = vmatprep.subr.mxu0 0.0
  %738 = vmatpush1.msra.mxu0 0.0
  %739 = vmatprep.subr.mxu0 0.0
  %740 = vmatpush1.msra.mxu0 0.0
  %741 = vmatprep.subr.mxu0 0.0
  %742 = vmatpush1.msra.mxu0 0.0
  %743 = vmatprep.subr.mxu0 0.0
  %744 = vmatpush1.msra.mxu0 0.0
  %745 = vmatprep.subr.mxu0 0.0
  %746 = vmatpush1.msra.mxu0 0.0
  %747 = vmatprep.subr.mxu0 0.0
  %748 = vmatpush1.msra.mxu0 0.0
  %749 = vmatprep.subr.mxu0 0.0
  %750 = vmatpush1.msra.mxu0 0.0
  %751 = vmatprep.subr.mxu0 0.0
  %752 = vmatpush1.msra.mxu0 0.0
  %753 = vmatprep.subr.mxu0 0.0
  %754 = vmatpush1.msra.mxu0 0.0
  %755 = vmatprep.subr.mxu0 0.0
  %756 = vmatpush1.msra.mxu0 0.0
  %757 = vmatprep.subr.mxu0 0.0
  %758 = vmatpush1.msra.mxu0 0.0
  %759 = vmatprep.subr.mxu0 0.0
  %760 = vmatpush1.msra.mxu0 0.0
  %761 = vmatprep.subr.mxu0 0.0
  %762 = vmatpush1.msra.mxu0 0.0
  %763 = vmatprep.subr.mxu0 0.0
  %764 = vmatpush1.msra.mxu0 0.0
  %765 = vmatprep.subr.mxu0 0.0
  %766 = vmatpush1.msra.mxu0 0.0
  %767 = vmatprep.subr.mxu0 0.0
  %768 = vmatpush1.msra.mxu0 0.0
  %769 = vmatprep.subr.mxu0 0.0
  %770 = vmatpush1.msra.mxu0 0.0
  %771 = vmatprep.subr.mxu0 0.0
  %772 = vmatpush1.msra.mxu0 0.0
  %773 = vmatprep.subr.mxu0 0.0
  %774 = vmatpush1.msra.mxu0 0.0
  %775 = vmatprep.subr.mxu0 0.0
  %776 = vmatpush1.msra.mxu0 0.0
  %777 = vmatprep.subr.mxu0 0.0
  %778 = vmatpush1.msra.mxu0 0.0
  %779 = vmatprep.subr.mxu0 0.0
  %780 = vmatpush1.msra.mxu0 0.0
  %781 = vmatprep.subr.mxu0 0.0
  %782 = vmatpush1.msra.mxu0 0.0
  %783 = vmatprep.subr.mxu0 0.0
  %784 = vmatpush1.msra.mxu0 0.0
  %785 = vmatprep.subr.mxu0 0.0
  %786 = vmatpush1.msra.mxu0 0.0
  %787 = vmatprep.subr.mxu0 0.0
  %788 = vmatpush1.msra.mxu0 0.0
  %789 = vmatprep.subr.mxu0 0.0
  %790 = vmatpush1.msra.mxu0 0.0
  %791 = vmatprep.subr.mxu0 0.0
  %792 = vmatpush1.msra.mxu0 0.0
  %793 = vmatprep.mubr.f32.mxu0 0.0
  %794 = vmatmul.mubr.f32.gmra.mrb[0].mxu0 %v724
  %v795 = vpop.f32.mrb[0].mxu0
  %v796 = vadd.f32 0.0, %v795
  %v797 = vpop.f32.mrb[0].mxu0
  %798 = vdwg.mxu0
  %v799 = vadd.f32 %v607, %v796
  %s800 = scalar_lea.vmem %s1, 6
  %v801 = vld [vmem:[%s800] sm:$0x3]
  %s802 = scalar_lea.vmem %s5, 384
  %v803 = vld [vmem:[%s802] sm:$0xff]
  %v804 = vld [vmem:[%s802 + $0x8] sm:$0xff]
  %v805 = vld [vmem:[%s802 + $0x10] sm:$0xff]
  %v806 = vld [vmem:[%s802 + $0x18] sm:$0xff]
  %v807 = vld [vmem:[%s802 + $0x20] sm:$0xff]
  %v808 = vld [vmem:[%s802 + $0x28] sm:$0xff]
  %v809 = vld [vmem:[%s802 + $0x30] sm:$0xff]
  %v810 = vld [vmem:[%s802 + $0x38] sm:$0xff]
  %v811 = vld [vmem:[%s802 + $0x40] sm:$0xff]
  %v812 = vld [vmem:[%s802 + $0x48] sm:$0xff]
  %v813 = vld [vmem:[%s802 + $0x50] sm:$0xff]
  %v814 = vld [vmem:[%s802 + $0x58] sm:$0xff]
  %v815 = vld [vmem:[%s802 + $0x60] sm:$0xff]
  %v816 = vld [vmem:[%s802 + $0x68] sm:$0xff]
  %v817 = vld [vmem:[%s802 + $0x70] sm:$0xff]
  %v818 = vld [vmem:[%s802 + $0x78] sm:$0xff]
  %s819 = scalar_lea.vmem %s6, 3
  %v820 = vld [vmem:[%s819] sm:$0x1]
  %v822 = vlaneseq
  %v823 = vshrl.u32 %v822, 7
  %v824 = vsub.s32 0, %v823
  %v825 = vrot.slane %v820, %v824
  %827 = vmatprep.subr.mxu0 0.0
  %828 = vmatpush1.msra.mxu0 %v803
  %829 = vmatprep.subr.mxu0 0.0
  %830 = vmatpush1.msra.mxu0 %v804
  %831 = vmatprep.subr.mxu0 0.0
  %832 = vmatpush1.msra.mxu0 %v805
  %833 = vmatprep.subr.mxu0 0.0
  %834 = vmatpush1.msra.mxu0 %v806
  %835 = vmatprep.subr.mxu0 0.0
  %836 = vmatpush1.msra.mxu0 %v807
  %837 = vmatprep.subr.mxu0 0.0
  %838 = vmatpush1.msra.mxu0 %v808
  %839 = vmatprep.subr.mxu0 0.0
  %840 = vmatpush1.msra.mxu0 %v809
  %841 = vmatprep.subr.mxu0 0.0
  %842 = vmatpush1.msra.mxu0 %v810
  %843 = vmatprep.subr.mxu0 0.0
  %844 = vmatpush1.msra.mxu0 %v811
  %845 = vmatprep.subr.mxu0 0.0
  %846 = vmatpush1.msra.mxu0 %v812
  %847 = vmatprep.subr.mxu0 0.0
  %848 = vmatpush1.msra.mxu0 %v813
  %849 = vmatprep.subr.mxu0 0.0
  %850 = vmatpush1.msra.mxu0 %v814
  %851 = vmatprep.subr.mxu0 0.0
  %852 = vmatpush1.msra.mxu0 %v815
  %853 = vmatprep.subr.mxu0 0.0
  %854 = vmatpush1.msra.mxu0 %v816
  %855 = vmatprep.subr.mxu0 0.0
  %856 = vmatpush1.msra.mxu0 %v817
  %857 = vmatprep.subr.mxu0 0.0
  %858 = vmatpush1.msra.mxu0 %v818
  %859 = vmatprep.subr.mxu0 0.0
  %860 = vmatpush1.msra.mxu0 0.0
  %861 = vmatprep.subr.mxu0 0.0
  %862 = vmatpush1.msra.mxu0 0.0
  %863 = vmatprep.subr.mxu0 0.0
  %864 = vmatpush1.msra.mxu0 0.0
  %865 = vmatprep.subr.mxu0 0.0
  %866 = vmatpush1.msra.mxu0 0.0
  %867 = vmatprep.subr.mxu0 0.0
  %868 = vmatpush1.msra.mxu0 0.0
  %869 = vmatprep.subr.mxu0 0.0
  %870 = vmatpush1.msra.mxu0 0.0
  %871 = vmatprep.subr.mxu0 0.0
  %872 = vmatpush1.msra.mxu0 0.0
  %873 = vmatprep.subr.mxu0 0.0
  %874 = vmatpush1.msra.mxu0 0.0
  %875 = vmatprep.subr.mxu0 0.0
  %876 = vmatpush1.msra.mxu0 0.0
  %877 = vmatprep.subr.mxu0 0.0
  %878 = vmatpush1.msra.mxu0 0.0
  %879 = vmatprep.subr.mxu0 0.0
  %880 = vmatpush1.msra.mxu0 0.0
  %881 = vmatprep.subr.mxu0 0.0
  %882 = vmatpush1.msra.mxu0 0.0
  %883 = vmatprep.subr.mxu0 0.0
  %884 = vmatpush1.msra.mxu0 0.0
  %885 = vmatprep.subr.mxu0 0.0
  %886 = vmatpush1.msra.mxu0 0.0
  %887 = vmatprep.subr.mxu0 0.0
  %888 = vmatpush1.msra.mxu0 0.0
  %889 = vmatprep.subr.mxu0 0.0
  %890 = vmatpush1.msra.mxu0 0.0
  %891 = vmatprep.mubr.f32.mxu0 0.0
  %892 = vmatmul.mubr.f32.gmra.mrb[0].mxu0 %v801
  %v893 = vpop.f32.mrb[0].mxu0
  %v894 = vadd.f32 %v825, %v893
  %v895 = vpop.f32.mrb[0].mxu0
  %896 = vdwg.mxu0
  %vm897 = vcmp.gt.f32.partialorder %v894, 0.0
  %v898 = vmul.f32 %v894, 0.01
  %v899 = vsel %vm897, %v894, %v898
  %v900 = vsel %vm323, %v899, -inf
  %901 = vmax.xlane.f32.xlu0 %v900
  %v902 = vpop.xlane.xlu0 %901
  %v903 = vsub.f32 %v899, %v902
  %v904 = vmul.f32 %v903, 1.442695
  %v905 = vpow.pop %v904
  %v906 = vsel %vm323, %v905, 0.0
  %907 = vadd.xlane.f32.xlu0 %v906
  %v908 = vpop.xlane.xlu0 %907
  %v909 = vrcp.pop %v908
  %v910 = vmul.f32 %v905, %v909
  %s911 = scalar_lea.vmem %s11, 6
  %912 = vst.msk [vmem:[%s911] sm:$0x3] %vm323, %v910
  %s913 = scalar_lea.vmem %s8, 24
  %v914 = vld [vmem:[%s913] sm:$0x1f]
  %v916 = vsel %vm337, %v910, 0
  %v919 = vsel %vm341, %v914, 0
  %921 = vmatprep.subr.mxu0 0.0
  %922 = vmatpush1.msra.mxu0 %v919
  %923 = vmatprep.subr.mxu0 0.0
  %924 = vmatpush1.msra.mxu0 0.0
  %925 = vmatprep.subr.mxu0 0.0
  %926 = vmatpush1.msra.mxu0 0.0
  %927 = vmatprep.subr.mxu0 0.0
  %928 = vmatpush1.msra.mxu0 0.0
  %929 = vmatprep.subr.mxu0 0.0
  %930 = vmatpush1.msra.mxu0 0.0
  %931 = vmatprep.subr.mxu0 0.0
  %932 = vmatpush1.msra.mxu0 0.0
  %933 = vmatprep.subr.mxu0 0.0
  %934 = vmatpush1.msra.mxu0 0.0
  %935 = vmatprep.subr.mxu0 0.0
  %936 = vmatpush1.msra.mxu0 0.0
  %937 = vmatprep.subr.mxu0 0.0
  %938 = vmatpush1.msra.mxu0 0.0
  %939 = vmatprep.subr.mxu0 0.0
  %940 = vmatpush1.msra.mxu0 0.0
  %941 = vmatprep.subr.mxu0 0.0
  %942 = vmatpush1.msra.mxu0 0.0
  %943 = vmatprep.subr.mxu0 0.0
  %944 = vmatpush1.msra.mxu0 0.0
  %945 = vmatprep.subr.mxu0 0.0
  %946 = vmatpush1.msra.mxu0 0.0
  %947 = vmatprep.subr.mxu0 0.0
  %948 = vmatpush1.msra.mxu0 0.0
  %949 = vmatprep.subr.mxu0 0.0
  %950 = vmatpush1.msra.mxu0 0.0
  %951 = vmatprep.subr.mxu0 0.0
  %952 = vmatpush1.msra.mxu0 0.0
  %953 = vmatprep.subr.mxu0 0.0
  %954 = vmatpush1.msra.mxu0 0.0
  %955 = vmatprep.subr.mxu0 0.0
  %956 = vmatpush1.msra.mxu0 0.0
  %957 = vmatprep.subr.mxu0 0.0
  %958 = vmatpush1.msra.mxu0 0.0
  %959 = vmatprep.subr.mxu0 0.0
  %960 = vmatpush1.msra.mxu0 0.0
  %961 = vmatprep.subr.mxu0 0.0
  %962 = vmatpush1.msra.mxu0 0.0
  %963 = vmatprep.subr.mxu0 0.0
  %964 = vmatpush1.msra.mxu0 0.0
  %965 = vmatprep.subr.mxu0 0.0
  %966 = vmatpush1.msra.mxu0 0.0
  %967 = vmatprep.subr.mxu0 0.0
  %968 = vmatpush1.msra.mxu0 0.0
  %969 = vmatprep.subr.mxu0 0.0
  %970 = vmatpush1.msra.mxu0 0.0
  %971 = vmatprep.subr.mxu0 0.0
  %972 = vmatpush1.msra.mxu0 0.0
  %973 = vmatprep.subr.mxu0 0.0
  %974 = vmatpush1.msra.mxu0 0.0
  %975 = vmatprep.subr.mxu0 0.0
  %976 = vmatpush1.msra.mxu0 0.0
  %977 = vmatprep.subr.mxu0 0.0
  %978 = vmatpush1.msra.mxu0 0.0
  %979 = vmatprep.subr.mxu0 0.0
  %980 = vmatpush1.msra.mxu0 0.0
  %981 = vmatprep.subr.mxu0 0.0
  %982 = vmatpush1.msra.mxu0 0.0
  %983 = vmatprep.subr.mxu0 0.0
  %984 = vmatpush1.msra.mxu0 0.0
  %985 = vmatprep.mubr.f32.mxu0 0.0
  %986 = vmatmul.mubr.f32.gmra.mrb[0].mxu0 %v916
  %v987 = vpop.f32.mrb[0].mxu0
  %v988 = vadd.f32 0.0, %v987
  %v989 = vpop.f32.mrb[0].mxu0
  %990 = vdwg.mxu0
  %v991 = vadd.f32 %v799, %v988
  %992 = vst [vmem:[%s12] sm:$0x3] %v991
  // Predicated region
  $region42: #{forward.11} parent=0 // pred_check
    _
  $region43: #{forward.11} parent=0 // pred_check_branch
    %994 = sbr.rel (0) target = $region45
  $region44: #{forward.11} parent=0 // pred_region
    _
  $region45: #{forward.11} parent=0 // pred_fallthru
    _
  // Predicated region
  $region46: #{forward.11} parent=0 // pred_check
    _
  $region47: #{forward.11} parent=0 // pred_check_branch
    %996 = sbr.rel (0) target = $region49
  $region48: #{forward.11} parent=0 // pred_region
    _
  $region49: #{forward.11} parent=0 // pred_fallthru
    _
  // Predicated region
  $region50: #{forward.11} parent=0 // pred_check
    _
  $region51: #{forward.11} parent=0 // pred_check_branch
    %998 = sbr.rel (0) target = $region53
  $region52: #{forward.11} parent=0 // pred_region
    _
  $region53: #{forward.11} parent=0 // pred_fallthru
    _
  // Predicated region
  $region54: #{forward.11} parent=0 // pred_check
    _
  $region55: #{forward.11} parent=0 // pred_check_branch
    %1000 = sbr.rel (0) target = $region57
  $region56: #{forward.11} parent=0 // pred_region
    _
  $region57: #{forward.11} parent=0 // pred_fallthru
    _
  // Predicated region
  $region58: #{forward.11} parent=0 // pred_check
    _
  $region59: #{forward.11} parent=0 // pred_check_branch
    %1002 = sbr.rel (0) target = $region61
  $region60: #{forward.11} parent=0 // pred_region
    _
  $region61: #{forward.11} parent=0 // pred_fallthru
    _
  // Predicated region
  $region62: #{forward.11} parent=0 // pred_check
    _
  $region63: #{forward.11} parent=0 // pred_check_branch
    %1004 = sbr.rel (0) target = $region65
  $region64: #{forward.11} parent=0 // pred_region
    _
  $region65: #{forward.11} parent=0 // pred_fallthru
    _

// kernel: forward.12
$region0: #{forward.12}
  #allocation0 [shape = 'u32[]', space=smem, size = 0x4, offset = 0x4, fixed_abs, tag = 'smem constant byte address 0x4 - core index']
  #allocation1 [shape = 'u32[144,128]{1,0:T(1,128)}', space=vmem, size = 0x12000, scoped, tag = 'internal scratch']
  %s0 = inlined_call_operand.vmem [shape: bf16[4,16,128], index: 0, kind: input, shape index: {}]
  %s1 = inlined_call_operand.vmem [shape: bf16[128,8], index: 1, kind: input, shape index: {}]
  %s2 = inlined_call_operand.vmem [shape: f32[16,1], index: 2, kind: input, shape index: {}]
  %s3 = inlined_call_operand.vmem [shape: f32[16,1], index: 3, kind: input, shape index: {}]
  %s4 = inlined_call_operand.vmem [shape: bf16[4,16,8], index: 4, kind: output, shape index: {}]
  %s5 = sld [smem:[#allocation0]]
  $region26: #{forward.12} parent=0
    _
  %s7 = ssub.s32 1, %s5
  %s8 = scalar_select 0, %s7, %s5
  // Predicated region
  $region2: #{forward.12} parent=0 // pred_check
    _
  $region3: #{forward.12} parent=0 // pred_check_branch
    %10 = sbr.rel (0) target = $region5
  $region4: #{forward.12} parent=0 // pred_region
    _
  $region5: #{forward.12} parent=0 // pred_fallthru
    _
  // Predicated region
  $region6: #{forward.12} parent=0 // pred_check
    _
  $region7: #{forward.12} parent=0 // pred_check_branch
    %12 = sbr.rel (0) target = $region9
  $region8: #{forward.12} parent=0 // pred_region
    _
  $region9: #{forward.12} parent=0 // pred_fallthru
    _
  // Predicated region
  $region10: #{forward.12} parent=0 // pred_check
    _
  $region11: #{forward.12} parent=0 // pred_check_branch
    %14 = sbr.rel (0) target = $region13
  $region12: #{forward.12} parent=0 // pred_region
    _
  $region13: #{forward.12} parent=0 // pred_fallthru
    _
  // Predicated region
  $region14: #{forward.12} parent=0 // pred_check
    _
  $region15: #{forward.12} parent=0 // pred_check_branch
    %16 = sbr.rel (0) target = $region17
  $region16: #{forward.12} parent=0 // pred_region
    _
  $region17: #{forward.12} parent=0 // pred_fallthru
    _
  %v18 = vld [vmem:[%s0] sm:$0xf]
  %v19 = vld [vmem:[%s0 + $0x4] sm:$0xf]
  %v20 = vld [vmem:[%s1] sm:$0xf]
  %v21 = vld [vmem:[%s1 + $0x4] sm:$0xf]
  %v22 = vld [vmem:[%s1 + $0x8] sm:$0xf]
  %v23 = vld [vmem:[%s1 + $0xc] sm:$0xf]
  %v24 = vld [vmem:[%s1 + $0x10] sm:$0xf]
  %v25 = vld [vmem:[%s1 + $0x14] sm:$0xf]
  %v26 = vld [vmem:[%s1 + $0x18] sm:$0xf]
  %v27 = vld [vmem:[%s1 + $0x1c] sm:$0xf]
  %v28 = vld [vmem:[%s1 + $0x20] sm:$0xf]
  %v29 = vld [vmem:[%s1 + $0x24] sm:$0xf]
  %v30 = vld [vmem:[%s1 + $0x28] sm:$0xf]
  %v31 = vld [vmem:[%s1 + $0x2c] sm:$0xf]
  %v32 = vld [vmem:[%s1 + $0x30] sm:$0xf]
  %v33 = vld [vmem:[%s1 + $0x34] sm:$0xf]
  %v34 = vld [vmem:[%s1 + $0x38] sm:$0xf]
  %v35 = vld [vmem:[%s1 + $0x3c] sm:$0xf]
  %v38 = vunpack.c.l.b16 %v18
  %v39 = vunpack.c.l.b16 %v19
  %v40 = vpack.c.b16 %v39, %v38
  %v58 = vunpack.c.l.b16 %v20
  %v59 = vunpack.c.l.b16 %v21
  %v60 = vunpack.c.l.b16 %v22
  %v61 = vunpack.c.l.b16 %v23
  %v62 = vunpack.c.l.b16 %v24
  %v63 = vunpack.c.l.b16 %v25
  %v64 = vunpack.c.l.b16 %v26
  %v65 = vunpack.c.l.b16 %v27
  %v66 = vunpack.c.l.b16 %v28
  %v67 = vunpack.c.l.b16 %v29
  %v68 = vunpack.c.l.b16 %v30
  %v69 = vunpack.c.l.b16 %v31
  %v70 = vunpack.c.l.b16 %v32
  %v71 = vunpack.c.l.b16 %v33
  %v72 = vunpack.c.l.b16 %v34
  %v73 = vunpack.c.l.b16 %v35
  %v74 = vpack.c.b16 %v59, %v58
  %v75 = vpack.c.b16 %v61, %v60
  %v76 = vpack.c.b16 %v63, %v62
  %v77 = vpack.c.b16 %v65, %v64
  %v78 = vpack.c.b16 %v67, %v66
  %v79 = vpack.c.b16 %v69, %v68
  %v80 = vpack.c.b16 %v71, %v70
  %v81 = vpack.c.b16 %v73, %v72
  %90 = vmatprep.subr.bf16.mxu0 0
  %91 = vmatpush1.bf16.msra.mxu0 %v74
  %92 = vmatprep.subr.bf16.mxu0 0
  %93 = vmatpush1.bf16.msra.mxu0 %v75
  %94 = vmatprep.subr.bf16.mxu0 0
  %95 = vmatpush1.bf16.msra.mxu0 %v76
  %96 = vmatprep.subr.bf16.mxu0 0
  %97 = vmatpush1.bf16.msra.mxu0 %v77
  %98 = vmatprep.subr.bf16.mxu0 0
  %99 = vmatpush1.bf16.msra.mxu0 %v78
  %100 = vmatprep.subr.bf16.mxu0 0
  %101 = vmatpush1.bf16.msra.mxu0 %v79
  %102 = vmatprep.subr.bf16.mxu0 0
  %103 = vmatpush1.bf16.msra.mxu0 %v80
  %104 = vmatprep.subr.bf16.mxu0 0
  %105 = vmatpush1.bf16.msra.mxu0 %v81
  %106 = vmatprep.subr.bf16.mxu0 0
  %107 = vmatpush1.bf16.msra.mxu0 0
  %108 = vmatprep.subr.bf16.mxu0 0
  %109 = vmatpush1.bf16.msra.mxu0 0
  %110 = vmatprep.subr.bf16.mxu0 0
  %111 = vmatpush1.bf16.msra.mxu0 0
  %112 = vmatprep.subr.bf16.mxu0 0
  %113 = vmatpush1.bf16.msra.mxu0 0
  %114 = vmatprep.subr.bf16.mxu0 0
  %115 = vmatpush1.bf16.msra.mxu0 0
  %116 = vmatprep.subr.bf16.mxu0 0
  %117 = vmatpush1.bf16.msra.mxu0 0
  %118 = vmatprep.subr.bf16.mxu0 0
  %119 = vmatpush1.bf16.msra.mxu0 0
  %120 = vmatprep.subr.bf16.mxu0 0
  %121 = vmatpush1.bf16.msra.mxu0 0
  %122 = vmatprep.mubr.bf16.mxu0 0
  %123 = vmatmul.mubr.bf16.gmra.mrb[0].mxu0 %v40
  %v124 = vpop.f32.mrb[0].mxu0
  %v125 = vadd.f32 0.0, %v124
  %v126 = vpop.f32.mrb[0].mxu0
  %v127 = vpop.f32.mrb[0].mxu0
  %v128 = vadd.f32 0.0, %v127
  %v129 = vpop.f32.mrb[0].mxu0
  %130 = vdwg.mxu0
  %s131 = scalar_lea.vmem %s0, 8
  %v132 = vld [vmem:[%s131] sm:$0xf]
  %v133 = vld [vmem:[%s131 + $0x4] sm:$0xf]
  %v136 = vunpack.c.l.b16 %v132
  %v137 = vunpack.c.l.b16 %v133
  %v138 = vpack.c.b16 %v137, %v136
  %140 = vmatprep.subr.bf16.mxu0 0
  %141 = vmatpush1.bf16.msra.mxu0 %v74
  %142 = vmatprep.subr.bf16.mxu0 0
  %143 = vmatpush1.bf16.msra.mxu0 %v75
  %144 = vmatprep.subr.bf16.mxu0 0
  %145 = vmatpush1.bf16.msra.mxu0 %v76
  %146 = vmatprep.subr.bf16.mxu0 0
  %147 = vmatpush1.bf16.msra.mxu0 %v77
  %148 = vmatprep.subr.bf16.mxu0 0
  %149 = vmatpush1.bf16.msra.mxu0 %v78
  %150 = vmatprep.subr.bf16.mxu0 0
  %151 = vmatpush1.bf16.msra.mxu0 %v79
  %152 = vmatprep.subr.bf16.mxu0 0
  %153 = vmatpush1.bf16.msra.mxu0 %v80
  %154 = vmatprep.subr.bf16.mxu0 0
  %155 = vmatpush1.bf16.msra.mxu0 %v81
  %156 = vmatprep.subr.bf16.mxu0 0
  %157 = vmatpush1.bf16.msra.mxu0 0
  %158 = vmatprep.subr.bf16.mxu0 0
  %159 = vmatpush1.bf16.msra.mxu0 0
  %160 = vmatprep.subr.bf16.mxu0 0
  %161 = vmatpush1.bf16.msra.mxu0 0
  %162 = vmatprep.subr.bf16.mxu0 0
  %163 = vmatpush1.bf16.msra.mxu0 0
  %164 = vmatprep.subr.bf16.mxu0 0
  %165 = vmatpush1.bf16.msra.mxu0 0
  %166 = vmatprep.subr.bf16.mxu0 0
  %167 = vmatpush1.bf16.msra.mxu0 0
  %168 = vmatprep.subr.bf16.mxu0 0
  %169 = vmatpush1.bf16.msra.mxu0 0
  %170 = vmatprep.subr.bf16.mxu0 0
  %171 = vmatpush1.bf16.msra.mxu0 0
  %172 = vmatprep.mubr.bf16.mxu0 0
  %173 = vmatmul.mubr.bf16.gmra.mrb[0].mxu0 %v138
  %v174 = vpop.f32.mrb[0].mxu0
  %v175 = vadd.f32 0.0, %v174
  %v176 = vpop.f32.mrb[0].mxu0
  %v177 = vpop.f32.mrb[0].mxu0
  %v178 = vadd.f32 0.0, %v177
  %v179 = vpop.f32.mrb[0].mxu0
  %180 = vdwg.mxu0
  %s181 = scalar_lea.vmem %s0, 16
  %v182 = vld [vmem:[%s181] sm:$0xf]
  %v183 = vld [vmem:[%s181 + $0x4] sm:$0xf]
  %v186 = vunpack.c.l.b16 %v182
  %v187 = vunpack.c.l.b16 %v183
  %v188 = vpack.c.b16 %v187, %v186
  %190 = vmatprep.subr.bf16.mxu0 0
  %191 = vmatpush1.bf16.msra.mxu0 %v74
  %192 = vmatprep.subr.bf16.mxu0 0
  %193 = vmatpush1.bf16.msra.mxu0 %v75
  %194 = vmatprep.subr.bf16.mxu0 0
  %195 = vmatpush1.bf16.msra.mxu0 %v76
  %196 = vmatprep.subr.bf16.mxu0 0
  %197 = vmatpush1.bf16.msra.mxu0 %v77
  %198 = vmatprep.subr.bf16.mxu0 0
  %199 = vmatpush1.bf16.msra.mxu0 %v78
  %200 = vmatprep.subr.bf16.mxu0 0
  %201 = vmatpush1.bf16.msra.mxu0 %v79
  %202 = vmatprep.subr.bf16.mxu0 0
  %203 = vmatpush1.bf16.msra.mxu0 %v80
  %204 = vmatprep.subr.bf16.mxu0 0
  %205 = vmatpush1.bf16.msra.mxu0 %v81
  %206 = vmatprep.subr.bf16.mxu0 0
  %207 = vmatpush1.bf16.msra.mxu0 0
  %208 = vmatprep.subr.bf16.mxu0 0
  %209 = vmatpush1.bf16.msra.mxu0 0
  %210 = vmatprep.subr.bf16.mxu0 0
  %211 = vmatpush1.bf16.msra.mxu0 0
  %212 = vmatprep.subr.bf16.mxu0 0
  %213 = vmatpush1.bf16.msra.mxu0 0
  %214 = vmatprep.subr.bf16.mxu0 0
  %215 = vmatpush1.bf16.msra.mxu0 0
  %216 = vmatprep.subr.bf16.mxu0 0
  %217 = vmatpush1.bf16.msra.mxu0 0
  %218 = vmatprep.subr.bf16.mxu0 0
  %219 = vmatpush1.bf16.msra.mxu0 0
  %220 = vmatprep.subr.bf16.mxu0 0
  %221 = vmatpush1.bf16.msra.mxu0 0
  %222 = vmatprep.mubr.bf16.mxu0 0
  %223 = vmatmul.mubr.bf16.gmra.mrb[0].mxu0 %v188
  %v224 = vpop.f32.mrb[0].mxu0
  %v225 = vadd.f32 0.0, %v224
  %v226 = vpop.f32.mrb[0].mxu0
  %v227 = vpop.f32.mrb[0].mxu0
  %v228 = vadd.f32 0.0, %v227
  %v229 = vpop.f32.mrb[0].mxu0
  %230 = vdwg.mxu0
  %s231 = scalar_lea.vmem %s0, 24
  %v232 = vld [vmem:[%s231] sm:$0xf]
  %v233 = vld [vmem:[%s231 + $0x4] sm:$0xf]
  %v236 = vunpack.c.l.b16 %v232
  %v237 = vunpack.c.l.b16 %v233
  %v238 = vpack.c.b16 %v237, %v236
  %240 = vmatprep.subr.bf16.mxu0 0
  %241 = vmatpush1.bf16.msra.mxu0 %v74
  %242 = vmatprep.subr.bf16.mxu0 0
  %243 = vmatpush1.bf16.msra.mxu0 %v75
  %244 = vmatprep.subr.bf16.mxu0 0
  %245 = vmatpush1.bf16.msra.mxu0 %v76
  %246 = vmatprep.subr.bf16.mxu0 0
  %247 = vmatpush1.bf16.msra.mxu0 %v77
  %248 = vmatprep.subr.bf16.mxu0 0
  %249 = vmatpush1.bf16.msra.mxu0 %v78
  %250 = vmatprep.subr.bf16.mxu0 0
  %251 = vmatpush1.bf16.msra.mxu0 %v79
  %252 = vmatprep.subr.bf16.mxu0 0
  %253 = vmatpush1.bf16.msra.mxu0 %v80
  %254 = vmatprep.subr.bf16.mxu0 0
  %255 = vmatpush1.bf16.msra.mxu0 %v81
  %256 = vmatprep.subr.bf16.mxu0 0
  %257 = vmatpush1.bf16.msra.mxu0 0
  %258 = vmatprep.subr.bf16.mxu0 0
  %259 = vmatpush1.bf16.msra.mxu0 0
  %260 = vmatprep.subr.bf16.mxu0 0
  %261 = vmatpush1.bf16.msra.mxu0 0
  %262 = vmatprep.subr.bf16.mxu0 0
  %263 = vmatpush1.bf16.msra.mxu0 0
  %264 = vmatprep.subr.bf16.mxu0 0
  %265 = vmatpush1.bf16.msra.mxu0 0
  %266 = vmatprep.subr.bf16.mxu0 0
  %267 = vmatpush1.bf16.msra.mxu0 0
  %268 = vmatprep.subr.bf16.mxu0 0
  %269 = vmatpush1.bf16.msra.mxu0 0
  %270 = vmatprep.subr.bf16.mxu0 0
  %271 = vmatpush1.bf16.msra.mxu0 0
  %272 = vmatprep.mubr.bf16.mxu0 0
  %273 = vmatmul.mubr.bf16.gmra.mrb[0].mxu0 %v238
  %v274 = vpop.f32.mrb[0].mxu0
  %v275 = vadd.f32 0.0, %v274
  %v276 = vpop.f32.mrb[0].mxu0
  %v277 = vpop.f32.mrb[0].mxu0
  %v278 = vadd.f32 0.0, %v277
  %v279 = vpop.f32.mrb[0].mxu0
  %280 = vdwg.mxu0
  %v281 = vld [vmem:[%s2] sm:$0xff]
  %v282 = vld [vmem:[%s2 + $0x8] sm:$0xff]
  %v283 = vld [vmem:[%s3] sm:$0xff]
  %v284 = vld [vmem:[%s3 + $0x8] sm:$0xff]
  %vm285 = vcmask 64512
  %v286 = vsel %vm285, %v125, 0.0
  %287 = vadd.xlane.f32.xlu0 %v286
  %v288 = vpop.xlane.xlu0 %287
  %v289 = vsel %vm285, %v128, 0.0
  %290 = vadd.xlane.f32.xlu0 %v289
  %v291 = vpop.xlane.xlu0 %290
  %v292 = vadd.f32 %v288, 0.0
  %v293 = vadd.f32 %v291, 0.0
  %v294 = vsel %vm285, %v175, 0.0
  %295 = vadd.xlane.f32.xlu0 %v294
  %v296 = vpop.xlane.xlu0 %295
  %v297 = vsel %vm285, %v178, 0.0
  %298 = vadd.xlane.f32.xlu0 %v297
  %v299 = vpop.xlane.xlu0 %298
  %v300 = vadd.f32 %v292, %v296
  %v301 = vadd.f32 %v293, %v299
  %v302 = vsel %vm285, %v225, 0.0
  %303 = vadd.xlane.f32.xlu0 %v302
  %v304 = vpop.xlane.xlu0 %303
  %v305 = vsel %vm285, %v228, 0.0
  %306 = vadd.xlane.f32.xlu0 %v305
  %v307 = vpop.xlane.xlu0 %306
  %v308 = vadd.f32 %v300, %v304
  %v309 = vadd.f32 %v301, %v307
  %v310 = vsel %vm285, %v275, 0.0
  %311 = vadd.xlane.f32.xlu0 %v310
  %v312 = vpop.xlane.xlu0 %311
  %v313 = vsel %vm285, %v278, 0.0
  %314 = vadd.xlane.f32.xlu0 %v313
  %v315 = vpop.xlane.xlu0 %314
  %v316 = vadd.f32 %v308, %v312
  %v317 = vadd.f32 %v309, %v315
  %v318 = vmul.f32 %v125, %v125
  %v319 = vmul.f32 %v128, %v128
  %v320 = vsel %vm285, %v318, 0.0
  %321 = vadd.xlane.f32.xlu0 %v320
  %v322 = vpop.xlane.xlu0 %321
  %v323 = vsel %vm285, %v319, 0.0
  %324 = vadd.xlane.f32.xlu0 %v323
  %v325 = vpop.xlane.xlu0 %324
  %v326 = vadd.f32 %v322, 0.0
  %v327 = vadd.f32 %v325, 0.0
  %v328 = vmul.f32 %v175, %v175
  %v329 = vmul.f32 %v178, %v178
  %v330 = vsel %vm285, %v328, 0.0
  %331 = vadd.xlane.f32.xlu0 %v330
  %v332 = vpop.xlane.xlu0 %331
  %v333 = vsel %vm285, %v329, 0.0
  %334 = vadd.xlane.f32.xlu0 %v333
  %v335 = vpop.xlane.xlu0 %334
  %v336 = vadd.f32 %v326, %v332
  %v337 = vadd.f32 %v327, %v335
  %v338 = vmul.f32 %v225, %v225
  %v339 = vmul.f32 %v228, %v228
  %v340 = vsel %vm285, %v338, 0.0
  %341 = vadd.xlane.f32.xlu0 %v340
  %v342 = vpop.xlane.xlu0 %341
  %v343 = vsel %vm285, %v339, 0.0
  %344 = vadd.xlane.f32.xlu0 %v343
  %v345 = vpop.xlane.xlu0 %344
  %v346 = vadd.f32 %v336, %v342
  %v347 = vadd.f32 %v337, %v345
  %v348 = vmul.f32 %v275, %v275
  %v349 = vmul.f32 %v278, %v278
  %v350 = vsel %vm285, %v348, 0.0
  %351 = vadd.xlane.f32.xlu0 %v350
  %v352 = vpop.xlane.xlu0 %351
  %v353 = vsel %vm285, %v349, 0.0
  %354 = vadd.xlane.f32.xlu0 %v353
  %v355 = vpop.xlane.xlu0 %354
  %v356 = vadd.f32 %v346, %v352
  %v357 = vadd.f32 %v347, %v355
  %v358 = vmul.f32 %v316, 0.03125
  %v359 = vmul.f32 %v317, 0.03125
  %v360 = vmul.f32 %v356, 0.03125
  %v361 = vmul.f32 %v357, 0.03125
  %v362 = vmul.f32 %v358, %v358
  %v363 = vmul.f32 %v359, %v359
  %v364 = vsub.f32 %v360, %v362
  %v365 = vsub.f32 %v361, %v363
  %v366 = vmax.f32 %v364, 0.0
  %v367 = vmax.f32 %v365, 0.0
  %v368 = vadd.f32 %v366, 1e-05
  %v369 = vadd.f32 %v367, 1e-05
  %v370 = vrsqrt.pop %v368
  %v371 = vrsqrt.pop %v369
  %v372 = vmul.f32 %v281, %v370
  %v373 = vmul.f32 %v282, %v371
  %v374 = vmul.f32 %v358, %v372
  %v375 = vmul.f32 %v359, %v373
  %v376 = vsub.f32 %v283, %v374
  %v377 = vsub.f32 %v284, %v375
  %379 = vset.pattern.permute.xlu0 0
  %380 = vperm.xlu0 %379, %v372
  %v381 = vpop.permute.xlu0 %380
  %384 = vset.pattern.permute.xlu0 0
  %385 = vperm.xlu0 %384, %v373
  %v386 = vpop.permute.xlu0 %385
  %v388 = vmul.f32 %v125, %v381
  %v389 = vmul.f32 %v128, %v386
  %391 = vset.pattern.permute.xlu0 0
  %392 = vperm.xlu0 %391, %v376
  %v393 = vpop.permute.xlu0 %392
  %396 = vset.pattern.permute.xlu0 0
  %397 = vperm.xlu0 %396, %v377
  %v398 = vpop.permute.xlu0 %397
  %v400 = vadd.f32 %v388, %v393
  %v401 = vadd.f32 %v389, %v398
  %vm402 = vcmp.gt.f32.partialorder %v400, 0.0
  %vm403 = vcmp.gt.f32.partialorder %v401, 0.0
  %v404 = vmul.f32 %v400, 0.01
  %v405 = vmul.f32 %v401, 0.01
  %v406 = vsel %vm402, %v400, %v404
  %v407 = vsel %vm403, %v401, %v405
  %v408 = vpack.c.bf16 %v407, %v406
  %v410 = vunpack.c.l.b16 %v408
  %v411 = vunpack.c.h.b16 %v408
  %v412 = vpack.c.b16 %v410, %v410
  %v413 = vpack.c.b16 %v411, %v411
  %vm416 = vcmask 60416
  %417 = vst.msk [vmem:[%s4] sm:$0xf] %vm416, %v412
  %418 = vst.msk [vmem:[%s4 + $0x4] sm:$0xf] %vm416, %v413
  %v419 = vmul.f32 %v175, %v381
  %v420 = vmul.f32 %v178, %v386
  %v421 = vadd.f32 %v419, %v393
  %v422 = vadd.f32 %v420, %v398
  %vm423 = vcmp.gt.f32.partialorder %v421, 0.0
  %vm424 = vcmp.gt.f32.partialorder %v422, 0.0
  %v425 = vmul.f32 %v421, 0.01
  %v426 = vmul.f32 %v422, 0.01
  %v427 = vsel %vm423, %v421, %v425
  %v428 = vsel %vm424, %v422, %v426
  %v429 = vpack.c.bf16 %v428, %v427
  %v431 = vunpack.c.l.b16 %v429
  %v432 = vunpack.c.h.b16 %v429
  %v433 = vpack.c.b16 %v431, %v431
  %v434 = vpack.c.b16 %v432, %v432
  %s437 = scalar_lea.vmem %s4, 8
  %438 = vst.msk [vmem:[%s437] sm:$0xf] %vm416, %v433
  %439 = vst.msk [vmem:[%s437 + $0x4] sm:$0xf] %vm416, %v434
  %v440 = vmul.f32 %v225, %v381
  %v441 = vmul.f32 %v228, %v386
  %v442 = vadd.f32 %v440, %v393
  %v443 = vadd.f32 %v441, %v398
  %vm444 = vcmp.gt.f32.partialorder %v442, 0.0
  %vm445 = vcmp.gt.f32.partialorder %v443, 0.0
  %v446 = vmul.f32 %v442, 0.01
  %v447 = vmul.f32 %v443, 0.01
  %v448 = vsel %vm444, %v442, %v446
  %v449 = vsel %vm445, %v443, %v447
  %v450 = vpack.c.bf16 %v449, %v448
  %v452 = vunpack.c.l.b16 %v450
  %v453 = vunpack.c.h.b16 %v450
  %v454 = vpack.c.b16 %v452, %v452
  %v455 = vpack.c.b16 %v453, %v453
  %s458 = scalar_lea.vmem %s4, 16
  %459 = vst.msk [vmem:[%s458] sm:$0xf] %vm416, %v454
  %460 = vst.msk [vmem:[%s458 + $0x4] sm:$0xf] %vm416, %v455
  %v461 = vmul.f32 %v275, %v381
  %v462 = vmul.f32 %v278, %v386
  %v463 = vadd.f32 %v461, %v393
  %v464 = vadd.f32 %v462, %v398
  %vm465 = vcmp.gt.f32.partialorder %v463, 0.0
  %vm466 = vcmp.gt.f32.partialorder %v464, 0.0
  %v467 = vmul.f32 %v463, 0.01
  %v468 = vmul.f32 %v464, 0.01
  %v469 = vsel %vm465, %v463, %v467
  %v470 = vsel %vm466, %v464, %v468
  %v471 = vpack.c.bf16 %v470, %v469
  %v473 = vunpack.c.l.b16 %v471
  %v474 = vunpack.c.h.b16 %v471
  %v475 = vpack.c.b16 %v473, %v473
  %v476 = vpack.c.b16 %v474, %v474
  %s479 = scalar_lea.vmem %s4, 24
  %480 = vst.msk [vmem:[%s479] sm:$0xf] %vm416, %v475
  %481 = vst.msk [vmem:[%s479 + $0x4] sm:$0xf] %vm416, %v476
  // Predicated region
  $region18: #{forward.12} parent=0 // pred_check
    _
  $region19: #{forward.12} parent=0 // pred_check_branch
    %483 = sbr.rel (0) target = $region21
  $region20: #{forward.12} parent=0 // pred_region
    _
  $region21: #{forward.12} parent=0 // pred_fallthru
    _
  // Predicated region
  $region22: #{forward.12} parent=0 // pred_check
    _
  $region23: #{forward.12} parent=0 // pred_check_branch
    %485 = sbr.rel (0) target = $region25
  $region24: #{forward.12} parent=0 // pred_region
    _
  $region25: #{forward.12} parent=0 // pred_fallthru
    _

// kernel: forward.13
$region0: #{forward.13}
  #allocation0 [shape = 'u32[]', space=smem, size = 0x4, offset = 0x4, fixed_abs, tag = 'smem constant byte address 0x4 - core index']
  #allocation1 [shape = 'u32[144,128]{1,0:T(1,128)}', space=vmem, size = 0x12000, scoped, tag = 'internal scratch']
  %s0 = inlined_call_operand.vmem [shape: bf16[4,8,64], index: 0, kind: input, shape index: {}]
  %s1 = inlined_call_operand.vmem [shape: bf16[64,32], index: 1, kind: input, shape index: {}]
  %s2 = inlined_call_operand.vmem [shape: f32[8,1], index: 2, kind: input, shape index: {}]
  %s3 = inlined_call_operand.vmem [shape: f32[8,1], index: 3, kind: input, shape index: {}]
  %s4 = inlined_call_operand.vmem [shape: bf16[4,8,32], index: 4, kind: output, shape index: {}]
  %s5 = sld [smem:[#allocation0]]
  $region26: #{forward.13} parent=0
    _
  %s7 = ssub.s32 1, %s5
  %s8 = scalar_select 0, %s7, %s5
  // Predicated region
  $region2: #{forward.13} parent=0 // pred_check
    _
  $region3: #{forward.13} parent=0 // pred_check_branch
    %10 = sbr.rel (0) target = $region5
  $region4: #{forward.13} parent=0 // pred_region
    _
  $region5: #{forward.13} parent=0 // pred_fallthru
    _
  // Predicated region
  $region6: #{forward.13} parent=0 // pred_check
    _
  $region7: #{forward.13} parent=0 // pred_check_branch
    %12 = sbr.rel (0) target = $region9
  $region8: #{forward.13} parent=0 // pred_region
    _
  $region9: #{forward.13} parent=0 // pred_fallthru
    _
  // Predicated region
  $region10: #{forward.13} parent=0 // pred_check
    _
  $region11: #{forward.13} parent=0 // pred_check_branch
    %14 = sbr.rel (0) target = $region13
  $region12: #{forward.13} parent=0 // pred_region
    _
  $region13: #{forward.13} parent=0 // pred_fallthru
    _
  // Predicated region
  $region14: #{forward.13} parent=0 // pred_check
    _
  $region15: #{forward.13} parent=0 // pred_check_branch
    %16 = sbr.rel (0) target = $region17
  $region16: #{forward.13} parent=0 // pred_region
    _
  $region17: #{forward.13} parent=0 // pred_fallthru
    _
  %v18 = vld [vmem:[%s0] sm:$0xf]
  %v19 = vld [vmem:[%s1] sm:$0xf]
  %v20 = vld [vmem:[%s1 + $0x4] sm:$0xf]
  %v21 = vld [vmem:[%s1 + $0x8] sm:$0xf]
  %v22 = vld [vmem:[%s1 + $0xc] sm:$0xf]
  %v23 = vld [vmem:[%s1 + $0x10] sm:$0xf]
  %v24 = vld [vmem:[%s1 + $0x14] sm:$0xf]
  %v25 = vld [vmem:[%s1 + $0x18] sm:$0xf]
  %v26 = vld [vmem:[%s1 + $0x1c] sm:$0xf]
  %v35 = vunpack.c.l.b16 %v19
  %v36 = vunpack.c.l.b16 %v20
  %v37 = vunpack.c.l.b16 %v21
  %v38 = vunpack.c.l.b16 %v22
  %v39 = vunpack.c.l.b16 %v23
  %v40 = vunpack.c.l.b16 %v24
  %v41 = vunpack.c.l.b16 %v25
  %v42 = vunpack.c.l.b16 %v26
  %v43 = vpack.c.b16 %v36, %v35
  %v44 = vpack.c.b16 %v38, %v37
  %v45 = vpack.c.b16 %v40, %v39
  %v46 = vpack.c.b16 %v42, %v41
  %vm51 = vcmask 523264
  %v53 = vsel %vm51, %v18, 0
  %55 = vmatprep.subr.bf16.mxu0 0
  %56 = vmatpush1.bf16.msra.mxu0 %v43
  %57 = vmatprep.subr.bf16.mxu0 0
  %58 = vmatpush1.bf16.msra.mxu0 %v44
  %59 = vmatprep.subr.bf16.mxu0 0
  %60 = vmatpush1.bf16.msra.mxu0 %v45
  %61 = vmatprep.subr.bf16.mxu0 0
  %62 = vmatpush1.bf16.msra.mxu0 %v46
  %63 = vmatprep.subr.bf16.mxu0 0
  %64 = vmatpush1.bf16.msra.mxu0 0
  %65 = vmatprep.subr.bf16.mxu0 0
  %66 = vmatpush1.bf16.msra.mxu0 0
  %67 = vmatprep.subr.bf16.mxu0 0
  %68 = vmatpush1.bf16.msra.mxu0 0
  %69 = vmatprep.subr.bf16.mxu0 0
  %70 = vmatpush1.bf16.msra.mxu0 0
  %71 = vmatprep.subr.bf16.mxu0 0
  %72 = vmatpush1.bf16.msra.mxu0 0
  %73 = vmatprep.subr.bf16.mxu0 0
  %74 = vmatpush1.bf16.msra.mxu0 0
  %75 = vmatprep.subr.bf16.mxu0 0
  %76 = vmatpush1.bf16.msra.mxu0 0
  %77 = vmatprep.subr.bf16.mxu0 0
  %78 = vmatpush1.bf16.msra.mxu0 0
  %79 = vmatprep.subr.bf16.mxu0 0
  %80 = vmatpush1.bf16.msra.mxu0 0
  %81 = vmatprep.subr.bf16.mxu0 0
  %82 = vmatpush1.bf16.msra.mxu0 0
  %83 = vmatprep.subr.bf16.mxu0 0
  %84 = vmatpush1.bf16.msra.mxu0 0
  %85 = vmatprep.subr.bf16.mxu0 0
  %86 = vmatpush1.bf16.msra.mxu0 0
  %87 = vmatprep.mubr.bf16.mxu0 0
  %88 = vmatmul.mubr.bf16.gmra.mrb[0].mxu0 %v53
  %v89 = vpop.f32.mrb[0].mxu0
  %v90 = vadd.f32 0.0, %v89
  %v91 = vpop.f32.mrb[0].mxu0
  %v92 = vpop.f32.mrb[0].mxu0
  %v93 = vpop.f32.mrb[0].mxu0
  %94 = vdwg.mxu0
  %s95 = scalar_lea.vmem %s0, 4
  %v96 = vld [vmem:[%s95] sm:$0xf]
  %v98 = vsel %vm51, %v96, 0
  %100 = vmatprep.subr.bf16.mxu0 0
  %101 = vmatpush1.bf16.msra.mxu0 %v43
  %102 = vmatprep.subr.bf16.mxu0 0
  %103 = vmatpush1.bf16.msra.mxu0 %v44
  %104 = vmatprep.subr.bf16.mxu0 0
  %105 = vmatpush1.bf16.msra.mxu0 %v45
  %106 = vmatprep.subr.bf16.mxu0 0
  %107 = vmatpush1.bf16.msra.mxu0 %v46
  %108 = vmatprep.subr.bf16.mxu0 0
  %109 = vmatpush1.bf16.msra.mxu0 0
  %110 = vmatprep.subr.bf16.mxu0 0
  %111 = vmatpush1.bf16.msra.mxu0 0
  %112 = vmatprep.subr.bf16.mxu0 0
  %113 = vmatpush1.bf16.msra.mxu0 0
  %114 = vmatprep.subr.bf16.mxu0 0
  %115 = vmatpush1.bf16.msra.mxu0 0
  %116 = vmatprep.subr.bf16.mxu0 0
  %117 = vmatpush1.bf16.msra.mxu0 0
  %118 = vmatprep.subr.bf16.mxu0 0
  %119 = vmatpush1.bf16.msra.mxu0 0
  %120 = vmatprep.subr.bf16.mxu0 0
  %121 = vmatpush1.bf16.msra.mxu0 0
  %122 = vmatprep.subr.bf16.mxu0 0
  %123 = vmatpush1.bf16.msra.mxu0 0
  %124 = vmatprep.subr.bf16.mxu0 0
  %125 = vmatpush1.bf16.msra.mxu0 0
  %126 = vmatprep.subr.bf16.mxu0 0
  %127 = vmatpush1.bf16.msra.mxu0 0
  %128 = vmatprep.subr.bf16.mxu0 0
  %129 = vmatpush1.bf16.msra.mxu0 0
  %130 = vmatprep.subr.bf16.mxu0 0
  %131 = vmatpush1.bf16.msra.mxu0 0
  %132 = vmatprep.mubr.bf16.mxu0 0
  %133 = vmatmul.mubr.bf16.gmra.mrb[0].mxu0 %v98
  %v134 = vpop.f32.mrb[0].mxu0
  %v135 = vadd.f32 0.0, %v134
  %v136 = vpop.f32.mrb[0].mxu0
  %v137 = vpop.f32.mrb[0].mxu0
  %v138 = vpop.f32.mrb[0].mxu0
  %139 = vdwg.mxu0
  %s140 = scalar_lea.vmem %s0, 8
  %v141 = vld [vmem:[%s140] sm:$0xf]
  %v143 = vsel %vm51, %v141, 0
  %145 = vmatprep.subr.bf16.mxu0 0
  %146 = vmatpush1.bf16.msra.mxu0 %v43
  %147 = vmatprep.subr.bf16.mxu0 0
  %148 = vmatpush1.bf16.msra.mxu0 %v44
  %149 = vmatprep.subr.bf16.mxu0 0
  %150 = vmatpush1.bf16.msra.mxu0 %v45
  %151 = vmatprep.subr.bf16.mxu0 0
  %152 = vmatpush1.bf16.msra.mxu0 %v46
  %153 = vmatprep.subr.bf16.mxu0 0
  %154 = vmatpush1.bf16.msra.mxu0 0
  %155 = vmatprep.subr.bf16.mxu0 0
  %156 = vmatpush1.bf16.msra.mxu0 0
  %157 = vmatprep.subr.bf16.mxu0 0
  %158 = vmatpush1.bf16.msra.mxu0 0
  %159 = vmatprep.subr.bf16.mxu0 0
  %160 = vmatpush1.bf16.msra.mxu0 0
  %161 = vmatprep.subr.bf16.mxu0 0
  %162 = vmatpush1.bf16.msra.mxu0 0
  %163 = vmatprep.subr.bf16.mxu0 0
  %164 = vmatpush1.bf16.msra.mxu0 0
  %165 = vmatprep.subr.bf16.mxu0 0
  %166 = vmatpush1.bf16.msra.mxu0 0
  %167 = vmatprep.subr.bf16.mxu0 0
  %168 = vmatpush1.bf16.msra.mxu0 0
  %169 = vmatprep.subr.bf16.mxu0 0
  %170 = vmatpush1.bf16.msra.mxu0 0
  %171 = vmatprep.subr.bf16.mxu0 0
  %172 = vmatpush1.bf16.msra.mxu0 0
  %173 = vmatprep.subr.bf16.mxu0 0
  %174 = vmatpush1.bf16.msra.mxu0 0
  %175 = vmatprep.subr.bf16.mxu0 0
  %176 = vmatpush1.bf16.msra.mxu0 0
  %177 = vmatprep.mubr.bf16.mxu0 0
  %178 = vmatmul.mubr.bf16.gmra.mrb[0].mxu0 %v143
  %v179 = vpop.f32.mrb[0].mxu0
  %v180 = vadd.f32 0.0, %v179
  %v181 = vpop.f32.mrb[0].mxu0
  %v182 = vpop.f32.mrb[0].mxu0
  %v183 = vpop.f32.mrb[0].mxu0
  %184 = vdwg.mxu0
  %s185 = scalar_lea.vmem %s0, 12
  %v186 = vld [vmem:[%s185] sm:$0xf]
  %v188 = vsel %vm51, %v186, 0
  %190 = vmatprep.subr.bf16.mxu0 0
  %191 = vmatpush1.bf16.msra.mxu0 %v43
  %192 = vmatprep.subr.bf16.mxu0 0
  %193 = vmatpush1.bf16.msra.mxu0 %v44
  %194 = vmatprep.subr.bf16.mxu0 0
  %195 = vmatpush1.bf16.msra.mxu0 %v45
  %196 = vmatprep.subr.bf16.mxu0 0
  %197 = vmatpush1.bf16.msra.mxu0 %v46
  %198 = vmatprep.subr.bf16.mxu0 0
  %199 = vmatpush1.bf16.msra.mxu0 0
  %200 = vmatprep.subr.bf16.mxu0 0
  %201 = vmatpush1.bf16.msra.mxu0 0
  %202 = vmatprep.subr.bf16.mxu0 0
  %203 = vmatpush1.bf16.msra.mxu0 0
  %204 = vmatprep.subr.bf16.mxu0 0
  %205 = vmatpush1.bf16.msra.mxu0 0
  %206 = vmatprep.subr.bf16.mxu0 0
  %207 = vmatpush1.bf16.msra.mxu0 0
  %208 = vmatprep.subr.bf16.mxu0 0
  %209 = vmatpush1.bf16.msra.mxu0 0
  %210 = vmatprep.subr.bf16.mxu0 0
  %211 = vmatpush1.bf16.msra.mxu0 0
  %212 = vmatprep.subr.bf16.mxu0 0
  %213 = vmatpush1.bf16.msra.mxu0 0
  %214 = vmatprep.subr.bf16.mxu0 0
  %215 = vmatpush1.bf16.msra.mxu0 0
  %216 = vmatprep.subr.bf16.mxu0 0
  %217 = vmatpush1.bf16.msra.mxu0 0
  %218 = vmatprep.subr.bf16.mxu0 0
  %219 = vmatpush1.bf16.msra.mxu0 0
  %220 = vmatprep.subr.bf16.mxu0 0
  %221 = vmatpush1.bf16.msra.mxu0 0
  %222 = vmatprep.mubr.bf16.mxu0 0
  %223 = vmatmul.mubr.bf16.gmra.mrb[0].mxu0 %v188
  %v224 = vpop.f32.mrb[0].mxu0
  %v225 = vadd.f32 0.0, %v224
  %v226 = vpop.f32.mrb[0].mxu0
  %v227 = vpop.f32.mrb[0].mxu0
  %v228 = vpop.f32.mrb[0].mxu0
  %229 = vdwg.mxu0
  %v230 = vld [vmem:[%s2] sm:$0xff]
  %v231 = vld [vmem:[%s3] sm:$0xff]
  %vm232 = vcmask 261120
  %v233 = vsel %vm232, %v90, 0.0
  %234 = vadd.xlane.f32.xlu0 %v233
  %v235 = vpop.xlane.xlu0 %234
  %v236 = vadd.f32 %v235, 0.0
  %v237 = vsel %vm232, %v135, 0.0
  %238 = vadd.xlane.f32.xlu0 %v237
  %v239 = vpop.xlane.xlu0 %238
  %v240 = vadd.f32 %v236, %v239
  %v241 = vsel %vm232, %v180, 0.0
  %242 = vadd.xlane.f32.xlu0 %v241
  %v243 = vpop.xlane.xlu0 %242
  %v244 = vadd.f32 %v240, %v243
  %v245 = vsel %vm232, %v225, 0.0
  %246 = vadd.xlane.f32.xlu0 %v245
  %v247 = vpop.xlane.xlu0 %246
  %v248 = vadd.f32 %v244, %v247
  %v249 = vmul.f32 %v90, %v90
  %v250 = vsel %vm232, %v249, 0.0
  %251 = vadd.xlane.f32.xlu0 %v250
  %v252 = vpop.xlane.xlu0 %251
  %v253 = vadd.f32 %v252, 0.0
  %v254 = vmul.f32 %v135, %v135
  %v255 = vsel %vm232, %v254, 0.0
  %256 = vadd.xlane.f32.xlu0 %v255
  %v257 = vpop.xlane.xlu0 %256
  %v258 = vadd.f32 %v253, %v257
  %v259 = vmul.f32 %v180, %v180
  %v260 = vsel %vm232, %v259, 0.0
  %261 = vadd.xlane.f32.xlu0 %v260
  %v262 = vpop.xlane.xlu0 %261
  %v263 = vadd.f32 %v258, %v262
  %v264 = vmul.f32 %v225, %v225
  %v265 = vsel %vm232, %v264, 0.0
  %266 = vadd.xlane.f32.xlu0 %v265
  %v267 = vpop.xlane.xlu0 %266
  %v268 = vadd.f32 %v263, %v267
  %v269 = vmul.f32 %v248, 0.0078125
  %v270 = vmul.f32 %v268, 0.0078125
  %v271 = vmul.f32 %v269, %v269
  %v272 = vsub.f32 %v270, %v271
  %v273 = vmax.f32 %v272, 0.0
  %v274 = vadd.f32 %v273, 1e-05
  %v275 = vrsqrt.pop %v274
  %v276 = vmul.f32 %v230, %v275
  %v277 = vmul.f32 %v269, %v276
  %v278 = vsub.f32 %v231, %v277
  %280 = vset.pattern.permute.xlu0 0
  %281 = vperm.xlu0 %280, %v276
  %v282 = vpop.permute.xlu0 %281
  %v284 = vmul.f32 %v90, %v282
  %286 = vset.pattern.permute.xlu0 0
  %287 = vperm.xlu0 %286, %v278
  %v288 = vpop.permute.xlu0 %287
  %v290 = vadd.f32 %v284, %v288
  %vm291 = vcmp.gt.f32.partialorder %v290, 0.0
  %v292 = vmul.f32 %v290, 0.01
  %v293 = vsel %vm291, %v290, %v292
  %v294 = vpack.c.bf16 %v293, %v293
  %vm295 = vcmask 257024
  %296 = vst.msk [vmem:[%s4] sm:$0xf] %vm295, %v294
  %v297 = vmul.f32 %v135, %v282
  %v298 = vadd.f32 %v297, %v288
  %vm299 = vcmp.gt.f32.partialorder %v298, 0.0
  %v300 = vmul.f32 %v298, 0.01
  %v301 = vsel %vm299, %v298, %v300
  %v302 = vpack.c.bf16 %v301, %v301
  %s303 = scalar_lea.vmem %s4, 4
  %304 = vst.msk [vmem:[%s303] sm:$0xf] %vm295, %v302
  %v305 = vmul.f32 %v180, %v282
  %v306 = vadd.f32 %v305, %v288
  %vm307 = vcmp.gt.f32.partialorder %v306, 0.0
  %v308 = vmul.f32 %v306, 0.01
  %v309 = vsel %vm307, %v306, %v308
  %v310 = vpack.c.bf16 %v309, %v309
  %s311 = scalar_lea.vmem %s4, 8
  %312 = vst.msk [vmem:[%s311] sm:$0xf] %vm295, %v310
  %v313 = vmul.f32 %v225, %v282
  %v314 = vadd.f32 %v313, %v288
  %vm315 = vcmp.gt.f32.partialorder %v314, 0.0
  %v316 = vmul.f32 %v314, 0.01
  %v317 = vsel %vm315, %v314, %v316
  %v318 = vpack.c.bf16 %v317, %v317
  %s319 = scalar_lea.vmem %s4, 12
  %320 = vst.msk [vmem:[%s319] sm:$0xf] %vm295, %v318
  // Predicated region
  $region18: #{forward.13} parent=0 // pred_check
    _
  $region19: #{forward.13} parent=0 // pred_check_branch
    %322 = sbr.rel (0) target = $region21
  $region20: #{forward.13} parent=0 // pred_region
    _
  $region21: #{forward.13} parent=0 // pred_fallthru
    _
  // Predicated region
  $region22: #{forward.13} parent=0 // pred_check
    _
  $region23: #{forward.13} parent=0 // pred_check_branch
    %324 = sbr.rel (0) target = $region25
  $region24: #{forward.13} parent=0 // pred_region
    _
  $region25: #{forward.13} parent=0 // pred_fallthru
    _

// kernel: forward.14
$region0: #{forward.14}
  #allocation0 [shape = 'u32[]', space=smem, size = 0x4, offset = 0x4, fixed_abs, tag = 'smem constant byte address 0x4 - core index']
  #allocation1 [shape = 'u32[144,128]{1,0:T(1,128)}', space=vmem, size = 0x12000, scoped, tag = 'internal scratch']
  %s0 = inlined_call_operand.vmem [shape: bf16[4,8,32], index: 0, kind: input, shape index: {}]
  %s1 = inlined_call_operand.vmem [shape: bf16[32,128], index: 1, kind: input, shape index: {}]
  %s2 = inlined_call_operand.vmem [shape: f32[8,1], index: 2, kind: input, shape index: {}]
  %s3 = inlined_call_operand.vmem [shape: f32[8,1], index: 3, kind: input, shape index: {}]
  %s4 = inlined_call_operand.vmem [shape: bf16[4,8,128], index: 4, kind: output, shape index: {}]
  %s5 = sld [smem:[#allocation0]]
  $region26: #{forward.14} parent=0
    _
  %s7 = ssub.s32 1, %s5
  %s8 = scalar_select 0, %s7, %s5
  // Predicated region
  $region2: #{forward.14} parent=0 // pred_check
    _
  $region3: #{forward.14} parent=0 // pred_check_branch
    %10 = sbr.rel (0) target = $region5
  $region4: #{forward.14} parent=0 // pred_region
    _
  $region5: #{forward.14} parent=0 // pred_fallthru
    _
  // Predicated region
  $region6: #{forward.14} parent=0 // pred_check
    _
  $region7: #{forward.14} parent=0 // pred_check_branch
    %12 = sbr.rel (0) target = $region9
  $region8: #{forward.14} parent=0 // pred_region
    _
  $region9: #{forward.14} parent=0 // pred_fallthru
    _
  // Predicated region
  $region10: #{forward.14} parent=0 // pred_check
    _
  $region11: #{forward.14} parent=0 // pred_check_branch
    %14 = sbr.rel (0) target = $region13
  $region12: #{forward.14} parent=0 // pred_region
    _
  $region13: #{forward.14} parent=0 // pred_fallthru
    _
  // Predicated region
  $region14: #{forward.14} parent=0 // pred_check
    _
  $region15: #{forward.14} parent=0 // pred_check_branch
    %16 = sbr.rel (0) target = $region17
  $region16: #{forward.14} parent=0 // pred_region
    _
  $region17: #{forward.14} parent=0 // pred_fallthru
    _
  %v18 = vld [vmem:[%s0] sm:$0xf]
  %v19 = vld [vmem:[%s1] sm:$0xf]
  %v20 = vld [vmem:[%s1 + $0x4] sm:$0xf]
  %v21 = vld [vmem:[%s1 + $0x8] sm:$0xf]
  %v22 = vld [vmem:[%s1 + $0xc] sm:$0xf]
  %v27 = vunpack.c.l.b16 %v19
  %v28 = vunpack.c.l.b16 %v20
  %v29 = vunpack.c.l.b16 %v21
  %v30 = vunpack.c.l.b16 %v22
  %v31 = vpack.c.b16 %v28, %v27
  %v32 = vpack.c.b16 %v30, %v29
  %vm35 = vcmask 261120
  %v37 = vsel %vm35, %v18, 0
  %39 = vmatprep.subr.bf16.mxu0 0
  %40 = vmatpush1.bf16.msra.mxu0 %v31
  %41 = vmatprep.subr.bf16.mxu0 0
  %42 = vmatpush1.bf16.msra.mxu0 %v32
  %43 = vmatprep.subr.bf16.mxu0 0
  %44 = vmatpush1.bf16.msra.mxu0 0
  %45 = vmatprep.subr.bf16.mxu0 0
  %46 = vmatpush1.bf16.msra.mxu0 0
  %47 = vmatprep.subr.bf16.mxu0 0
  %48 = vmatpush1.bf16.msra.mxu0 0
  %49 = vmatprep.subr.bf16.mxu0 0
  %50 = vmatpush1.bf16.msra.mxu0 0
  %51 = vmatprep.subr.bf16.mxu0 0
  %52 = vmatpush1.bf16.msra.mxu0 0
  %53 = vmatprep.subr.bf16.mxu0 0
  %54 = vmatpush1.bf16.msra.mxu0 0
  %55 = vmatprep.subr.bf16.mxu0 0
  %56 = vmatpush1.bf16.msra.mxu0 0
  %57 = vmatprep.subr.bf16.mxu0 0
  %58 = vmatpush1.bf16.msra.mxu0 0
  %59 = vmatprep.subr.bf16.mxu0 0
  %60 = vmatpush1.bf16.msra.mxu0 0
  %61 = vmatprep.subr.bf16.mxu0 0
  %62 = vmatpush1.bf16.msra.mxu0 0
  %63 = vmatprep.subr.bf16.mxu0 0
  %64 = vmatpush1.bf16.msra.mxu0 0
  %65 = vmatprep.subr.bf16.mxu0 0
  %66 = vmatpush1.bf16.msra.mxu0 0
  %67 = vmatprep.subr.bf16.mxu0 0
  %68 = vmatpush1.bf16.msra.mxu0 0
  %69 = vmatprep.subr.bf16.mxu0 0
  %70 = vmatpush1.bf16.msra.mxu0 0
  %71 = vmatprep.mubr.bf16.mxu0 0
  %72 = vmatmul.mubr.bf16.gmra.mrb[0].mxu0 %v37
  %v73 = vpop.f32.mrb[0].mxu0
  %v74 = vadd.f32 0.0, %v73
  %v75 = vpop.f32.mrb[0].mxu0
  %v76 = vpop.f32.mrb[0].mxu0
  %v77 = vpop.f32.mrb[0].mxu0
  %78 = vdwg.mxu0
  %s79 = scalar_lea.vmem %s0, 4
  %v80 = vld [vmem:[%s79] sm:$0xf]
  %v82 = vsel %vm35, %v80, 0
  %84 = vmatprep.subr.bf16.mxu0 0
  %85 = vmatpush1.bf16.msra.mxu0 %v31
  %86 = vmatprep.subr.bf16.mxu0 0
  %87 = vmatpush1.bf16.msra.mxu0 %v32
  %88 = vmatprep.subr.bf16.mxu0 0
  %89 = vmatpush1.bf16.msra.mxu0 0
  %90 = vmatprep.subr.bf16.mxu0 0
  %91 = vmatpush1.bf16.msra.mxu0 0
  %92 = vmatprep.subr.bf16.mxu0 0
  %93 = vmatpush1.bf16.msra.mxu0 0
  %94 = vmatprep.subr.bf16.mxu0 0
  %95 = vmatpush1.bf16.msra.mxu0 0
  %96 = vmatprep.subr.bf16.mxu0 0
  %97 = vmatpush1.bf16.msra.mxu0 0
  %98 = vmatprep.subr.bf16.mxu0 0
  %99 = vmatpush1.bf16.msra.mxu0 0
  %100 = vmatprep.subr.bf16.mxu0 0
  %101 = vmatpush1.bf16.msra.mxu0 0
  %102 = vmatprep.subr.bf16.mxu0 0
  %103 = vmatpush1.bf16.msra.mxu0 0
  %104 = vmatprep.subr.bf16.mxu0 0
  %105 = vmatpush1.bf16.msra.mxu0 0
  %106 = vmatprep.subr.bf16.mxu0 0
  %107 = vmatpush1.bf16.msra.mxu0 0
  %108 = vmatprep.subr.bf16.mxu0 0
  %109 = vmatpush1.bf16.msra.mxu0 0
  %110 = vmatprep.subr.bf16.mxu0 0
  %111 = vmatpush1.bf16.msra.mxu0 0
  %112 = vmatprep.subr.bf16.mxu0 0
  %113 = vmatpush1.bf16.msra.mxu0 0
  %114 = vmatprep.subr.bf16.mxu0 0
  %115 = vmatpush1.bf16.msra.mxu0 0
  %116 = vmatprep.mubr.bf16.mxu0 0
  %117 = vmatmul.mubr.bf16.gmra.mrb[0].mxu0 %v82
  %v118 = vpop.f32.mrb[0].mxu0
  %v119 = vadd.f32 0.0, %v118
  %v120 = vpop.f32.mrb[0].mxu0
  %v121 = vpop.f32.mrb[0].mxu0
  %v122 = vpop.f32.mrb[0].mxu0
  %123 = vdwg.mxu0
  %s124 = scalar_lea.vmem %s0, 8
  %v125 = vld [vmem:[%s124] sm:$0xf]
  %v127 = vsel %vm35, %v125, 0
  %129 = vmatprep.subr.bf16.mxu0 0
  %130 = vmatpush1.bf16.msra.mxu0 %v31
  %131 = vmatprep.subr.bf16.mxu0 0
  %132 = vmatpush1.bf16.msra.mxu0 %v32
  %133 = vmatprep.subr.bf16.mxu0 0
  %134 = vmatpush1.bf16.msra.mxu0 0
  %135 = vmatprep.subr.bf16.mxu0 0
  %136 = vmatpush1.bf16.msra.mxu0 0
  %137 = vmatprep.subr.bf16.mxu0 0
  %138 = vmatpush1.bf16.msra.mxu0 0
  %139 = vmatprep.subr.bf16.mxu0 0
  %140 = vmatpush1.bf16.msra.mxu0 0
  %141 = vmatprep.subr.bf16.mxu0 0
  %142 = vmatpush1.bf16.msra.mxu0 0
  %143 = vmatprep.subr.bf16.mxu0 0
  %144 = vmatpush1.bf16.msra.mxu0 0
  %145 = vmatprep.subr.bf16.mxu0 0
  %146 = vmatpush1.bf16.msra.mxu0 0
  %147 = vmatprep.subr.bf16.mxu0 0
  %148 = vmatpush1.bf16.msra.mxu0 0
  %149 = vmatprep.subr.bf16.mxu0 0
  %150 = vmatpush1.bf16.msra.mxu0 0
  %151 = vmatprep.subr.bf16.mxu0 0
  %152 = vmatpush1.bf16.msra.mxu0 0
  %153 = vmatprep.subr.bf16.mxu0 0
  %154 = vmatpush1.bf16.msra.mxu0 0
  %155 = vmatprep.subr.bf16.mxu0 0
  %156 = vmatpush1.bf16.msra.mxu0 0
  %157 = vmatprep.subr.bf16.mxu0 0
  %158 = vmatpush1.bf16.msra.mxu0 0
  %159 = vmatprep.subr.bf16.mxu0 0
  %160 = vmatpush1.bf16.msra.mxu0 0
  %161 = vmatprep.mubr.bf16.mxu0 0
  %162 = vmatmul.mubr.bf16.gmra.mrb[0].mxu0 %v127
  %v163 = vpop.f32.mrb[0].mxu0
  %v164 = vadd.f32 0.0, %v163
  %v165 = vpop.f32.mrb[0].mxu0
  %v166 = vpop.f32.mrb[0].mxu0
  %v167 = vpop.f32.mrb[0].mxu0
  %168 = vdwg.mxu0
  %s169 = scalar_lea.vmem %s0, 12
  %v170 = vld [vmem:[%s169] sm:$0xf]
  %v172 = vsel %vm35, %v170, 0
  %174 = vmatprep.subr.bf16.mxu0 0
  %175 = vmatpush1.bf16.msra.mxu0 %v31
  %176 = vmatprep.subr.bf16.mxu0 0
  %177 = vmatpush1.bf16.msra.mxu0 %v32
  %178 = vmatprep.subr.bf16.mxu0 0
  %179 = vmatpush1.bf16.msra.mxu0 0
  %180 = vmatprep.subr.bf16.mxu0 0
  %181 = vmatpush1.bf16.msra.mxu0 0
  %182 = vmatprep.subr.bf16.mxu0 0
  %183 = vmatpush1.bf16.msra.mxu0 0
  %184 = vmatprep.subr.bf16.mxu0 0
  %185 = vmatpush1.bf16.msra.mxu0 0
  %186 = vmatprep.subr.bf16.mxu0 0
  %187 = vmatpush1.bf16.msra.mxu0 0
  %188 = vmatprep.subr.bf16.mxu0 0
  %189 = vmatpush1.bf16.msra.mxu0 0
  %190 = vmatprep.subr.bf16.mxu0 0
  %191 = vmatpush1.bf16.msra.mxu0 0
  %192 = vmatprep.subr.bf16.mxu0 0
  %193 = vmatpush1.bf16.msra.mxu0 0
  %194 = vmatprep.subr.bf16.mxu0 0
  %195 = vmatpush1.bf16.msra.mxu0 0
  %196 = vmatprep.subr.bf16.mxu0 0
  %197 = vmatpush1.bf16.msra.mxu0 0
  %198 = vmatprep.subr.bf16.mxu0 0
  %199 = vmatpush1.bf16.msra.mxu0 0
  %200 = vmatprep.subr.bf16.mxu0 0
  %201 = vmatpush1.bf16.msra.mxu0 0
  %202 = vmatprep.subr.bf16.mxu0 0
  %203 = vmatpush1.bf16.msra.mxu0 0
  %204 = vmatprep.subr.bf16.mxu0 0
  %205 = vmatpush1.bf16.msra.mxu0 0
  %206 = vmatprep.mubr.bf16.mxu0 0
  %207 = vmatmul.mubr.bf16.gmra.mrb[0].mxu0 %v172
  %v208 = vpop.f32.mrb[0].mxu0
  %v209 = vadd.f32 0.0, %v208
  %v210 = vpop.f32.mrb[0].mxu0
  %v211 = vpop.f32.mrb[0].mxu0
  %v212 = vpop.f32.mrb[0].mxu0
  %213 = vdwg.mxu0
  %v214 = vld [vmem:[%s2] sm:$0xff]
  %v215 = vld [vmem:[%s3] sm:$0xff]
  %216 = vadd.xlane.f32.xlu0 %v74
  %v217 = vpop.xlane.xlu0 %216
  %v218 = vadd.f32 %v217, 0.0
  %219 = vadd.xlane.f32.xlu0 %v119
  %v220 = vpop.xlane.xlu0 %219
  %v221 = vadd.f32 %v218, %v220
  %222 = vadd.xlane.f32.xlu0 %v164
  %v223 = vpop.xlane.xlu0 %222
  %v224 = vadd.f32 %v221, %v223
  %225 = vadd.xlane.f32.xlu0 %v209
  %v226 = vpop.xlane.xlu0 %225
  %v227 = vadd.f32 %v224, %v226
  %v228 = vmul.f32 %v74, %v74
  %229 = vadd.xlane.f32.xlu0 %v228
  %v230 = vpop.xlane.xlu0 %229
  %v231 = vadd.f32 %v230, 0.0
  %v232 = vmul.f32 %v119, %v119
  %233 = vadd.xlane.f32.xlu0 %v232
  %v234 = vpop.xlane.xlu0 %233
  %v235 = vadd.f32 %v231, %v234
  %v236 = vmul.f32 %v164, %v164
  %237 = vadd.xlane.f32.xlu0 %v236
  %v238 = vpop.xlane.xlu0 %237
  %v239 = vadd.f32 %v235, %v238
  %v240 = vmul.f32 %v209, %v209
  %241 = vadd.xlane.f32.xlu0 %v240
  %v242 = vpop.xlane.xlu0 %241
  %v243 = vadd.f32 %v239, %v242
  %v244 = vmul.f32 %v227, 0.001953125
  %v245 = vmul.f32 %v243, 0.001953125
  %v246 = vmul.f32 %v244, %v244
  %v247 = vsub.f32 %v245, %v246
  %v248 = vmax.f32 %v247, 0.0
  %v249 = vadd.f32 %v248, 1e-05
  %v250 = vrsqrt.pop %v249
  %v251 = vmul.f32 %v214, %v250
  %v252 = vmul.f32 %v244, %v251
  %v253 = vsub.f32 %v215, %v252
  %255 = vset.pattern.permute.xlu0 0
  %256 = vperm.xlu0 %255, %v251
  %v257 = vpop.permute.xlu0 %256
  %v259 = vmul.f32 %v74, %v257
  %261 = vset.pattern.permute.xlu0 0
  %262 = vperm.xlu0 %261, %v253
  %v263 = vpop.permute.xlu0 %262
  %v265 = vadd.f32 %v259, %v263
  %vm266 = vcmp.gt.f32.partialorder %v265, 0.0
  %v267 = vmul.f32 %v265, 0.01
  %v268 = vsel %vm266, %v265, %v267
  %v269 = vpack.c.bf16 %v268, %v268
  %270 = vst [vmem:[%s4] sm:$0xf] %v269
  %v271 = vmul.f32 %v119, %v257
  %v272 = vadd.f32 %v271, %v263
  %vm273 = vcmp.gt.f32.partialorder %v272, 0.0
  %v274 = vmul.f32 %v272, 0.01
  %v275 = vsel %vm273, %v272, %v274
  %v276 = vpack.c.bf16 %v275, %v275
  %s277 = scalar_lea.vmem %s4, 4
  %278 = vst [vmem:[%s277] sm:$0xf] %v276
  %v279 = vmul.f32 %v164, %v257
  %v280 = vadd.f32 %v279, %v263
  %vm281 = vcmp.gt.f32.partialorder %v280, 0.0
  %v282 = vmul.f32 %v280, 0.01
  %v283 = vsel %vm281, %v280, %v282
  %v284 = vpack.c.bf16 %v283, %v283
  %s285 = scalar_lea.vmem %s4, 8
  %286 = vst [vmem:[%s285] sm:$0xf] %v284
  %v287 = vmul.f32 %v209, %v257
  %v288 = vadd.f32 %v287, %v263
  %vm289 = vcmp.gt.f32.partialorder %v288, 0.0
  %v290 = vmul.f32 %v288, 0.01
  %v291 = vsel %vm289, %v288, %v290
  %v292 = vpack.c.bf16 %v291, %v291
  %s293 = scalar_lea.vmem %s4, 12
  %294 = vst [vmem:[%s293] sm:$0xf] %v292
  // Predicated region
  $region18: #{forward.14} parent=0 // pred_check
    _
  $region19: #{forward.14} parent=0 // pred_check_branch
    %296 = sbr.rel (0) target = $region21
  $region20: #{forward.14} parent=0 // pred_region
    _
  $region21: #{forward.14} parent=0 // pred_fallthru
    _
  // Predicated region
  $region22: #{forward.14} parent=0 // pred_check
    _
  $region23: #{forward.14} parent=0 // pred_check_branch
    %298 = sbr.rel (0) target = $region25
  $region24: #{forward.14} parent=0 // pred_region
    _
  $region25: #{forward.14} parent=0 // pred_fallthru
    _

// kernel: forward.15
$region0: #{forward.15}
  #allocation0 [shape = 'u32[]', space=smem, size = 0x4, offset = 0x4, fixed_abs, tag = 'smem constant byte address 0x4 - core index']
  #allocation1 [shape = 'u32[144,128]{1,0:T(1,128)}', space=vmem, size = 0x12000, scoped, tag = 'internal scratch']
  %s0 = inlined_call_operand.vmem [shape: bf16[4,72], index: 0, kind: input, shape index: {}]
  %s1 = inlined_call_operand.vmem [shape: bf16[72,512], index: 1, kind: input, shape index: {}]
  %s2 = inlined_call_operand.vmem [shape: f32[4,1], index: 2, kind: input, shape index: {}]
  %s3 = inlined_call_operand.vmem [shape: f32[4,512], index: 3, kind: output, shape index: {}]
  %s4 = sld [smem:[#allocation0]]
  $region22: #{forward.15} parent=0
    _
  %s6 = ssub.s32 1, %s4
  %s7 = scalar_select 0, %s6, %s4
  // Predicated region
  $region2: #{forward.15} parent=0 // pred_check
    _
  $region3: #{forward.15} parent=0 // pred_check_branch
    %9 = sbr.rel (0) target = $region5
  $region4: #{forward.15} parent=0 // pred_region
    _
  $region5: #{forward.15} parent=0 // pred_fallthru
    _
  // Predicated region
  $region6: #{forward.15} parent=0 // pred_check
    _
  $region7: #{forward.15} parent=0 // pred_check_branch
    %11 = sbr.rel (0) target = $region9
  $region8: #{forward.15} parent=0 // pred_region
    _
  $region9: #{forward.15} parent=0 // pred_fallthru
    _
  // Predicated region
  $region10: #{forward.15} parent=0 // pred_check
    _
  $region11: #{forward.15} parent=0 // pred_check_branch
    %13 = sbr.rel (0) target = $region13
  $region12: #{forward.15} parent=0 // pred_region
    _
  $region13: #{forward.15} parent=0 // pred_fallthru
    _
  %v15 = vld [vmem:[%s0] sm:$0x3]
  %v16 = vld [vmem:[%s1] sm:$0xff]
  %v17 = vld [vmem:[%s1 + $0x8] sm:$0xff]
  %v18 = vld [vmem:[%s1 + $0x10] sm:$0xff]
  %v19 = vld [vmem:[%s1 + $0x18] sm:$0xff]
  %v20 = vld [vmem:[%s1 + $0x20] sm:$0xff]
  %v21 = vld [vmem:[%s1 + $0x28] sm:$0xff]
  %v22 = vld [vmem:[%s1 + $0x30] sm:$0xff]
  %v23 = vld [vmem:[%s1 + $0x38] sm:$0xff]
  %v24 = vld [vmem:[%s1 + $0x40] sm:$0xff]
  %v25 = vld [vmem:[%s1 + $0x48] sm:$0xff]
  %v26 = vld [vmem:[%s1 + $0x50] sm:$0xff]
  %v27 = vld [vmem:[%s1 + $0x58] sm:$0xff]
  %v28 = vld [vmem:[%s1 + $0x60] sm:$0xff]
  %v29 = vld [vmem:[%s1 + $0x68] sm:$0xff]
  %v30 = vld [vmem:[%s1 + $0x70] sm:$0xff]
  %v31 = vld [vmem:[%s1 + $0x78] sm:$0xff]
  %v32 = vld [vmem:[%s1 + $0x80] sm:$0xff]
  %v33 = vld [vmem:[%s1 + $0x88] sm:$0xff]
  %v34 = vld [vmem:[%s2] sm:$0xf]
  %36 = vset.pattern.permute.xlu0 0
  %37 = vperm.xlu0 %36, %v34
  %v38 = vpop.permute.xlu0 %37
  %v58 = vunpack.c.l.b16 %v16
  %v59 = vunpack.c.h.b16 %v16
  %v60 = vunpack.c.l.b16 %v17
  %v61 = vunpack.c.h.b16 %v17
  %v62 = vunpack.c.l.b16 %v18
  %v63 = vunpack.c.h.b16 %v18
  %v64 = vunpack.c.l.b16 %v19
  %v65 = vunpack.c.h.b16 %v19
  %v66 = vunpack.c.l.b16 %v20
  %v67 = vunpack.c.h.b16 %v20
  %v68 = vunpack.c.l.b16 %v21
  %v69 = vunpack.c.h.b16 %v21
  %v70 = vunpack.c.l.b16 %v22
  %v71 = vunpack.c.h.b16 %v22
  %v72 = vunpack.c.l.b16 %v23
  %v73 = vunpack.c.h.b16 %v23
  %v74 = vunpack.c.l.b16 %v24
  %v75 = vunpack.c.h.b16 %v24
  %v76 = vunpack.c.l.b16 %v25
  %v77 = vunpack.c.h.b16 %v25
  %v78 = vunpack.c.l.b16 %v26
  %v79 = vunpack.c.h.b16 %v26
  %v80 = vunpack.c.l.b16 %v27
  %v81 = vunpack.c.h.b16 %v27
  %v82 = vunpack.c.l.b16 %v28
  %v83 = vunpack.c.h.b16 %v28
  %v84 = vunpack.c.l.b16 %v29
  %v85 = vunpack.c.h.b16 %v29
  %v86 = vunpack.c.l.b16 %v30
  %v87 = vunpack.c.h.b16 %v30
  %v88 = vunpack.c.l.b16 %v31
  %v89 = vunpack.c.h.b16 %v31
  %v90 = vunpack.c.l.b16 %v32
  %v91 = vunpack.c.h.b16 %v32
  %v92 = vunpack.c.l.b16 %v33
  %v93 = vunpack.c.h.b16 %v33
  %v94 = vpack.c.b16 %v62, %v58
  %v95 = vpack.c.b16 %v63, %v59
  %v96 = vpack.c.b16 %v64, %v60
  %v97 = vpack.c.b16 %v65, %v61
  %v98 = vpack.c.b16 %v70, %v66
  %v99 = vpack.c.b16 %v71, %v67
  %v100 = vpack.c.b16 %v72, %v68
  %v101 = vpack.c.b16 %v73, %v69
  %v102 = vpack.c.b16 %v78, %v74
  %v103 = vpack.c.b16 %v79, %v75
  %v104 = vpack.c.b16 %v80, %v76
  %v105 = vpack.c.b16 %v81, %v77
  %v106 = vpack.c.b16 %v86, %v82
  %v107 = vpack.c.b16 %v87, %v83
  %v108 = vpack.c.b16 %v88, %v84
  %v109 = vpack.c.b16 %v89, %v85
  %v110 = vpack.c.b16 %v90, %v90
  %v111 = vpack.c.b16 %v91, %v91
  %v112 = vpack.c.b16 %v92, %v92
  %v113 = vpack.c.b16 %v93, %v93
  %vm130 = vcmask 588800
  %v132 = vsel %vm130, %v15, 0
  %vm134 = vcmask 1043456
  %v136 = vsel %vm134, %v110, 0
  %v139 = vsel %vm134, %v111, 0
  %v142 = vsel %vm134, %v112, 0
  %v145 = vsel %vm134, %v113, 0
  %147 = vmatprep.subr.bf16.mxu0 %v95
  %148 = vmatpush1.bf16.msra.mxu0 %v94
  %149 = vmatprep.subr.bf16.mxu0 %v99
  %150 = vmatpush1.bf16.msra.mxu0 %v98
  %151 = vmatprep.subr.bf16.mxu0 %v103
  %152 = vmatpush1.bf16.msra.mxu0 %v102
  %153 = vmatprep.subr.bf16.mxu0 %v107
  %154 = vmatpush1.bf16.msra.mxu0 %v106
  %155 = vmatprep.subr.bf16.mxu0 %v139
  %156 = vmatpush1.bf16.msra.mxu0 %v136
  %157 = vmatprep.subr.bf16.mxu0 0
  %158 = vmatpush1.bf16.msra.mxu0 0
  %159 = vmatprep.subr.bf16.mxu0 0
  %160 = vmatpush1.bf16.msra.mxu0 0
  %161 = vmatprep.subr.bf16.mxu0 0
  %162 = vmatpush1.bf16.msra.mxu0 0
  %163 = vmatprep.subr.bf16.mxu0 0
  %164 = vmatpush1.bf16.msra.mxu0 0
  %165 = vmatprep.subr.bf16.mxu0 0
  %166 = vmatpush1.bf16.msra.mxu0 0
  %167 = vmatprep.subr.bf16.mxu0 0
  %168 = vmatpush1.bf16.msra.mxu0 0
  %169 = vmatprep.subr.bf16.mxu0 0
  %170 = vmatpush1.bf16.msra.mxu0 0
  %171 = vmatprep.subr.bf16.mxu0 0
  %172 = vmatpush1.bf16.msra.mxu0 0
  %173 = vmatprep.subr.bf16.mxu0 0
  %174 = vmatpush1.bf16.msra.mxu0 0
  %175 = vmatprep.subr.bf16.mxu0 0
  %176 = vmatpush1.bf16.msra.mxu0 0
  %177 = vmatprep.subr.bf16.mxu0 0
  %178 = vmatpush1.bf16.msra.mxu0 0
  %179 = vmatprep.mubr.bf16.mxu0 0
  %180 = vmatmul.mubr.bf16.gmra.mrb[0].mxu0 %v132
  %v181 = vpop.f32.mrb[0].mxu0
  %v182 = vadd.f32 %v38, %v181
  %v183 = vpop.f32.mrb[0].mxu0
  %v184 = vadd.f32 %v38, %v183
  %v185 = vpop.f32.mrb[0].mxu0
  %v186 = vpop.f32.mrb[0].mxu0
  %187 = vdwg.mxu0
  %188 = vmatprep.subr.bf16.mxu0 %v97
  %189 = vmatpush1.bf16.msra.mxu0 %v96
  %190 = vmatprep.subr.bf16.mxu0 %v101
  %191 = vmatpush1.bf16.msra.mxu0 %v100
  %192 = vmatprep.subr.bf16.mxu0 %v105
  %193 = vmatpush1.bf16.msra.mxu0 %v104
  %194 = vmatprep.subr.bf16.mxu0 %v109
  %195 = vmatpush1.bf16.msra.mxu0 %v108
  %196 = vmatprep.subr.bf16.mxu0 %v145
  %197 = vmatpush1.bf16.msra.mxu0 %v142
  %198 = vmatprep.subr.bf16.mxu0 0
  %199 = vmatpush1.bf16.msra.mxu0 0
  %200 = vmatprep.subr.bf16.mxu0 0
  %201 = vmatpush1.bf16.msra.mxu0 0
  %202 = vmatprep.subr.bf16.mxu0 0
  %203 = vmatpush1.bf16.msra.mxu0 0
  %204 = vmatprep.subr.bf16.mxu0 0
  %205 = vmatpush1.bf16.msra.mxu0 0
  %206 = vmatprep.subr.bf16.mxu0 0
  %207 = vmatpush1.bf16.msra.mxu0 0
  %208 = vmatprep.subr.bf16.mxu0 0
  %209 = vmatpush1.bf16.msra.mxu0 0
  %210 = vmatprep.subr.bf16.mxu0 0
  %211 = vmatpush1.bf16.msra.mxu0 0
  %212 = vmatprep.subr.bf16.mxu0 0
  %213 = vmatpush1.bf16.msra.mxu0 0
  %214 = vmatprep.subr.bf16.mxu0 0
  %215 = vmatpush1.bf16.msra.mxu0 0
  %216 = vmatprep.subr.bf16.mxu0 0
  %217 = vmatpush1.bf16.msra.mxu0 0
  %218 = vmatprep.subr.bf16.mxu0 0
  %219 = vmatpush1.bf16.msra.mxu0 0
  %220 = vmatprep.mubr.bf16.mxu0 0
  %221 = vmatmul.mubr.bf16.gmra.mrb[0].mxu0 %v132
  %v222 = vpop.f32.mrb[0].mxu0
  %v223 = vadd.f32 %v38, %v222
  %v224 = vpop.f32.mrb[0].mxu0
  %v225 = vadd.f32 %v38, %v224
  %v226 = vpop.f32.mrb[0].mxu0
  %v227 = vpop.f32.mrb[0].mxu0
  %228 = vdwg.mxu0
  %v229 = vtanh.pop %v182
  %v230 = vtanh.pop %v184
  %v231 = vtanh.pop %v223
  %v232 = vtanh.pop %v225
  %v237 = vcombine.low %v229, %v230
  %v238 = vcombine.low %v231, %v232
  %241 = vst [vmem:[%s3] sm:$0xff] %v237
  %242 = vst [vmem:[%s3 + $0x8] sm:$0xff] %v238
  // Predicated region
  $region14: #{forward.15} parent=0 // pred_check
    _
  $region15: #{forward.15} parent=0 // pred_check_branch
    %244 = sbr.rel (0) target = $region17
  $region16: #{forward.15} parent=0 // pred_region
    _
  $region17: #{forward.15} parent=0 // pred_fallthru
    _
  // Predicated region
  $region18: #{forward.15} parent=0 // pred_check
    _
  $region19: #{forward.15} parent=0 // pred_check_branch
    %246 = sbr.rel (0) target = $region21
  $region20: #{forward.15} parent=0 // pred_region
    _
  $region21: #{forward.15} parent=0 // pred_fallthru
    _

</llo_original>
